<compile_context>
chip_gen: v7x
topology: tpu7x:2x2x1
jax: 0.10.0
libtpu: 0.0.40
codegen_flags: <defaults>
</compile_context>

<pallas_src>
import functools
import numpy as np

import jax
import jax.numpy as jnp
from jax.experimental import pallas as pl
from jax.experimental.pallas import tpu as pltpu

NUM_WS = 18          # number of style vectors per sample (StyleGAN2 w+ space)
DIM = 512            # latent dim / FC width
N_LAYERS = 4         # layers per DynamicLerper MLP
N_LEVELS = 3         # coarse / medium / fine
LRELU_ALPHA = 0.2
LRELU_GAIN = float(np.sqrt(2.0))   # bias_act gain for 'lrelu'

# style-index ranges per level (contiguous): coarse 0-3, medium 4-7, fine 8-17
LEVEL_SLICES = ((0, 4), (4, 8), (8, 18))
PAD_STYLES = max(e - s for s, e in LEVEL_SLICES)   # 10 (pad every level slab to this)


# ----------------------------------------------------------------------------------
# DynamicLerper.forward on a (R, 512) slab of latents (R = B * PAD_STYLES rows).
# ----------------------------------------------------------------------------------
def _dynamic_lerper_mlp(x, wts_ref, b_ref, *, pixel_norm):
    """x: (R, 512) f32. wts_ref: (4, 512, 512) bf16 (pre-transposed (in,out),
    equalized-lr weight_gain folded in). b_ref: (4, 512) f32 (bias_gain folded in)."""
    h = x
    if pixel_norm:
        h = h * jax.lax.rsqrt(jnp.mean(h * h, axis=-1, keepdims=True) + 1e-8)

    b_all = b_ref[...]                                        # (4, 512)
    for l in range(N_LAYERS):
        # bf16 x bf16 -> f32 accumulation on the MXU.
        h = jnp.dot(h.astype(jnp.bfloat16), wts_ref[l],
                    preferred_element_type=jnp.float32)       # (R,512)@(512,512)
        h = h + b_all[l:l + 1, :]
        if l < N_LAYERS - 1:                                  # 'lrelu' (last is linear)
            h = jnp.where(h > 0, h, LRELU_ALPHA * h) * LRELU_GAIN
    return h


# ----------------------------------------------------------------------------------
# Kernel: one grid step == one level (coarse / medium / fine).  Both lerpers (f1, f2)
# run in the same step; the w1 intermediate never leaves VMEM.
# ----------------------------------------------------------------------------------
def _dual_levels_lerper_kernel(w_ref,        # (R, 512)        level slab of w
                               wt1_ref,      # (4, 512, 512)   f1 level weights (bf16)
                               b1_ref,       # (4, 512)        f1 level biases
                               wt2_ref,      # (4, 512, 512)   f2 level weights (bf16)
                               b2_ref,       # (4, 512)        f2 level biases
                               scale_ref,    # (R, 1)          mult*mag*(gender*2-1)
                               w1_ref,       # (R, 512) out
                               w2_ref,       # (R, 512) out
                               *, pixel_norm):
    x = w_ref[...].astype(jnp.float32)                        # (R, 512)
    scale = scale_ref[...]                                    # (R, 1)

    d1 = _dynamic_lerper_mlp(x, wt1_ref, b1_ref, pixel_norm=pixel_norm)
    w1 = x + d1 * scale
    w1_ref[...] = w1.astype(w1_ref.dtype)

    d2 = _dynamic_lerper_mlp(w1, wt2_ref, b2_ref, pixel_norm=pixel_norm)
    w2_ref[...] = (w1 + d2 * scale).astype(w2_ref.dtype)


# ----------------------------------------------------------------------------------
# Wrapper: fused f1+f2 LevelsDynamicLerper forward.
# (w, gender, magnitude) -> (w1, w2) with w1 = w + f1_delta, w2 = w1 + f2_delta.
# ----------------------------------------------------------------------------------
def dual_levels_lerper_forward(w, gender, magnitude, f1_params, f2_params, *,
                               mult=1.0, gendered=True, pixel_norm=False):
    """w: (B, 18, 512); gender: (B, 1); magnitude: scalar or (B,).
    f*_params = (wts (3,4,512,512) bf16, biases (3,4,512) f32), per-level MLPs."""
    B = w.shape[0]
    assert w.shape == (B, NUM_WS, DIM)
    R = B * PAD_STYLES

    wts1, b1 = f1_params
    wts2, b2 = f2_params

    # Build one (R, 512) slab per level (batch-major rows), zero-padded to PAD_STYLES.
    slabs = []
    for (s, e) in LEVEL_SLICES:
        slab = w[:, s:e, :]                                            # (B, n_l, 512)
        slab = jnp.pad(slab, ((0, 0), (0, PAD_STYLES - (e - s)), (0, 0)))
        slabs.append(slab.reshape(R, DIM))
    w_lvl = jnp.stack(slabs, axis=0)                                   # (3, R, 512)

    # Per-row scale precomputed host-side (one tiny input, no per-step VPU work).
    mag = jnp.broadcast_to(
        jnp.reshape(jnp.asarray(magnitude, jnp.float32), (-1, 1)), (B, 1))
    scale = float(mult) * mag                                          # (B, 1)
    if gendered:
        gen = jnp.reshape(jnp.asarray(gender, jnp.float32), (B, 1))
        scale = scale * (gen * 2.0 - 1.0)
    scale_rows = jnp.broadcast_to(scale[:, None, :],
                                  (B, PAD_STYLES, 1)).reshape(R, 1)    # (R, 1)

    kernel = functools.partial(_dual_levels_lerper_kernel,
                               pixel_norm=bool(pixel_norm))

    out1, out2 = pl.pallas_call(
        kernel,
        out_shape=(jax.ShapeDtypeStruct((N_LEVELS, R, DIM), w.dtype),
                   jax.ShapeDtypeStruct((N_LEVELS, R, DIM), w.dtype)),
        grid_spec=pltpu.PrefetchScalarGridSpec(
            num_scalar_prefetch=0,
            grid=(N_LEVELS,),
            in_specs=[
                pl.BlockSpec((None, R, DIM), lambda l: (l, 0, 0)),                 # w slab
                pl.BlockSpec((None, N_LAYERS, DIM, DIM), lambda l: (l, 0, 0, 0)),  # f1 W
                pl.BlockSpec((None, N_LAYERS, DIM), lambda l: (l, 0, 0)),          # f1 b
                pl.BlockSpec((None, N_LAYERS, DIM, DIM), lambda l: (l, 0, 0, 0)),  # f2 W
                pl.BlockSpec((None, N_LAYERS, DIM), lambda l: (l, 0, 0)),          # f2 b
                pl.BlockSpec((R, 1), lambda l: (0, 0)),                            # scale
            ],
            out_specs=(pl.BlockSpec((None, R, DIM), lambda l: (l, 0, 0)),
                       pl.BlockSpec((None, R, DIM), lambda l: (l, 0, 0))),
        ),
        compiler_params=pltpu.CompilerParams(
            dimension_semantics=("parallel",),        # 3 independent level steps
            vmem_limit_bytes=32 * 1024 * 1024),
    )(w_lvl, wts1, b1, wts2, b2, scale_rows)

    # Drop the padded style rows and restore the native (B, 18, 512) layout.
    def _unscramble(out_lvl):
        out_lvl = out_lvl.reshape(N_LEVELS, B, PAD_STYLES, DIM)
        return jnp.concatenate(
            [out_lvl[l, :, : e - s, :] for l, (s, e) in enumerate(LEVEL_SLICES)],
            axis=1)

    return _unscramble(out1), _unscramble(out2)


# ----------------------------------------------------------------------------------
# Deterministic synthetic parameters for one LevelsDynamicLerper
# (FullyConnectedLayer: weight ~ randn(out,in)/lr_mul, weight_gain = lr_mul/sqrt(in),
#  bias_init = 0, bias_gain = lr_mul  ->  folded / pre-transposed / bf16 here as glue)
# ----------------------------------------------------------------------------------
def make_levels_lerper_params(key, lr_mul=1.0):
    keys = jax.random.split(key, N_LEVELS * N_LAYERS)
    per_level = []
    for lvl in range(N_LEVELS):                                 # coarse, medium, fine
        layer_ws = []
        for l in range(N_LAYERS):
            raw = jax.random.normal(keys[lvl * N_LAYERS + l], (DIM, DIM),
                                    jnp.float32) / lr_mul       # torch randn(out,in)/lr_mul
            # fold weight_gain and transpose to (in, out) so the kernel does h @ W
            layer_ws.append(raw.T * (lr_mul / np.sqrt(DIM)))
        per_level.append(jnp.stack(layer_ws))
    # bf16 weight storage (f32 accumulation in-kernel).
    # TODO(synk): on v7x the weights could additionally be quantized to fp8 for the MXU.
    wts = jnp.stack(per_level).astype(jnp.bfloat16)             # (3, 4, 512, 512) bf16
    biases = jnp.zeros((N_LEVELS, N_LAYERS, DIM), jnp.float32)  # bias_init=0 (* bias_gain)
    return wts, biases


# ----------------------------------------------------------------------------------
# DualLerperAndSegGenerator.forward
# ----------------------------------------------------------------------------------
def dual_lerper_and_seg_generator_forward(w, gender, magnitude, f1_params, f2_params,
                                          *, mult=1.0, gendered=True, pixel_norm=False):
    w1, w2 = dual_levels_lerper_forward(w, gender, magnitude, f1_params, f2_params,
                                        mult=mult, gendered=gendered,
                                        pixel_norm=pixel_norm)
    # TODO(synk): self.g (PretrainedSegGenerator = pretrained StyleGAN2 synthesis + seg
    # head loaded from checkpoints) has no in-script equivalent; returning the lerped
    # latents (w1, w2) instead of (img1, img2).
    return w1, w2


if __name__ == "__main__":
    key = jax.random.PRNGKey(0)
    k_w, k_g, k_m, k_f1, k_f2 = jax.random.split(key, 5)

    B = 2
    w = jax.random.normal(k_w, (B, NUM_WS, DIM), jnp.float32)
    gender = (jax.random.uniform(k_g, (B, 1)) > 0.5).astype(jnp.float32)
    magnitude = jax.random.uniform(k_m, (B,), jnp.float32)

    f1_params = make_levels_lerper_params(k_f1)
    f2_params = make_levels_lerper_params(k_f2)

    w1, w2 = dual_lerper_and_seg_generator_forward(
        w, gender, magnitude, f1_params, f2_params, mult=1.0, gendered=True)
    jax.block_until_ready((w1, w2))

    assert w1.shape == (B, NUM_WS, DIM) and w2.shape == (B, NUM_WS, DIM)
    assert jnp.all(jnp.isfinite(w1)) and jnp.all(jnp.isfinite(w2))
    print("KERNEL_OK")
</pallas_src>

<mosaic_0001>
module attributes {stable_mosaic.version = 11 : i64} {
  func.func @_dual_levels_lerper_kernel(%arg0: i32, %arg1: memref<1x20x512xf32, #tpu.memory_space<vmem>>, %arg2: memref<1x4x512x512xbf16, #tpu.memory_space<vmem>>, %arg3: memref<1x4x512xf32, #tpu.memory_space<vmem>>, %arg4: memref<1x4x512x512xbf16, #tpu.memory_space<vmem>>, %arg5: memref<1x4x512xf32, #tpu.memory_space<vmem>>, %arg6: memref<20x1xf32, #tpu.memory_space<vmem>>, %arg7: memref<1x20x512xf32, #tpu.memory_space<vmem>>, %arg8: memref<1x20x512xf32, #tpu.memory_space<vmem>>) attributes {dimension_semantics = [#tpu.dimension_semantics<parallel>], iteration_bounds = array<i64: 3>, scalar_prefetch = 0 : i64, scratch_operands = 0 : i64, tpu.core_type = #tpu.core_type<tc>, window_params = [{transform_indices = @transform_0, window_bounds = array<i64: 1, 20, 512>}, {transform_indices = @transform_1, window_bounds = array<i64: 1, 4, 512, 512>}, {transform_indices = @transform_2, window_bounds = array<i64: 1, 4, 512>}, {transform_indices = @transform_3, window_bounds = array<i64: 1, 4, 512, 512>}, {transform_indices = @transform_4, window_bounds = array<i64: 1, 4, 512>}, {pipeline_mode = #tpu.pipeline_mode<synchronous>, transform_indices = @transform_5, window_bounds = array<i64: 20, 1>}, {transform_indices = @transform_6, window_bounds = array<i64: 1, 20, 512>}, {transform_indices = @transform_7, window_bounds = array<i64: 1, 20, 512>}]} {
    %c0 = arith.constant 0 : index
    %c0_0 = arith.constant 0 : index
    %c0_1 = arith.constant 0 : index
    %0 = vector.load %arg1[%c0, %c0_0, %c0_1] : memref<1x20x512xf32, #tpu.memory_space<vmem>>, vector<1x20x512xf32>
    %1 = vector.shape_cast %0 : vector<1x20x512xf32> to vector<20x512xf32>
    %c0_2 = arith.constant 0 : index
    %c0_3 = arith.constant 0 : index
    %2 = vector.load %arg6[%c0_2, %c0_3] : memref<20x1xf32, #tpu.memory_space<vmem>>, vector<20x1xf32>
    %c0_4 = arith.constant 0 : index
    %c0_5 = arith.constant 0 : index
    %c0_6 = arith.constant 0 : index
    %3 = vector.load %arg3[%c0_4, %c0_5, %c0_6] : memref<1x4x512xf32, #tpu.memory_space<vmem>>, vector<1x4x512xf32>
    %4 = vector.shape_cast %3 : vector<1x4x512xf32> to vector<4x512xf32>
    %5 = arith.truncf %1 : vector<20x512xf32> to vector<20x512xbf16>
    %c0_7 = arith.constant 0 : index
    %c0_8 = arith.constant 0 : index
    %c0_9 = arith.constant 0 : index
    %c0_10 = arith.constant 0 : index
    %6 = vector.load %arg2[%c0_7, %c0_8, %c0_9, %c0_10] : memref<1x4x512x512xbf16, #tpu.memory_space<vmem>>, vector<1x1x512x512xbf16>
    %7 = vector.shape_cast %6 : vector<1x1x512x512xbf16> to vector<512x512xbf16>
    %cst = arith.constant dense<0.000000e+00> : vector<20x512xf32>
    %8 = tpu.matmul %5, %7, %cst {dimension_numbers = #tpu.dot_dimension_numbers<[1], [0], [0], [1], [0, 0, 1, 1], [], []>} : vector<20x512xbf16>, vector<512x512xbf16>, vector<20x512xf32> -> vector<20x512xf32>
    %9 = vector.extract_strided_slice %4 {offsets = [0, 0], sizes = [1, 512], strides = [1, 1]} : vector<4x512xf32> to vector<1x512xf32>
    %10 = vector.broadcast %9 : vector<1x512xf32> to vector<20x512xf32>
    %11 = arith.addf %8, %10 : vector<20x512xf32>
    %cst_11 = arith.constant 0.000000e+00 : f32
    %12 = vector.broadcast %cst_11 : f32 to vector<20x512xf32>
    %13 = arith.cmpf ogt, %11, %12 : vector<20x512xf32>
    %cst_12 = arith.constant 2.000000e-01 : f32
    %14 = vector.broadcast %cst_12 : f32 to vector<20x512xf32>
    %15 = arith.mulf %14, %11 : vector<20x512xf32>
    %16 = arith.select %13, %11, %15 : vector<20x512xi1>, vector<20x512xf32>
    %cst_13 = arith.constant 1.41421354 : f32
    %17 = vector.broadcast %cst_13 : f32 to vector<20x512xf32>
    %18 = arith.mulf %16, %17 : vector<20x512xf32>
    %19 = arith.truncf %18 : vector<20x512xf32> to vector<20x512xbf16>
    %c0_14 = arith.constant 0 : index
    %c1 = arith.constant 1 : index
    %c0_15 = arith.constant 0 : index
    %c0_16 = arith.constant 0 : index
    %20 = vector.load %arg2[%c0_14, %c1, %c0_15, %c0_16] : memref<1x4x512x512xbf16, #tpu.memory_space<vmem>>, vector<1x1x512x512xbf16>
    %21 = vector.shape_cast %20 : vector<1x1x512x512xbf16> to vector<512x512xbf16>
    %cst_17 = arith.constant dense<0.000000e+00> : vector<20x512xf32>
    %22 = tpu.matmul %19, %21, %cst_17 {dimension_numbers = #tpu.dot_dimension_numbers<[1], [0], [0], [1], [0, 0, 1, 1], [], []>} : vector<20x512xbf16>, vector<512x512xbf16>, vector<20x512xf32> -> vector<20x512xf32>
    %23 = vector.extract_strided_slice %4 {offsets = [1, 0], sizes = [1, 512], strides = [1, 1]} : vector<4x512xf32> to vector<1x512xf32>
    %24 = vector.broadcast %23 : vector<1x512xf32> to vector<20x512xf32>
    %25 = arith.addf %22, %24 : vector<20x512xf32>
    %cst_18 = arith.constant 0.000000e+00 : f32
    %26 = vector.broadcast %cst_18 : f32 to vector<20x512xf32>
    %27 = arith.cmpf ogt, %25, %26 : vector<20x512xf32>
    %cst_19 = arith.constant 2.000000e-01 : f32
    %28 = vector.broadcast %cst_19 : f32 to vector<20x512xf32>
    %29 = arith.mulf %28, %25 : vector<20x512xf32>
    %30 = arith.select %27, %25, %29 : vector<20x512xi1>, vector<20x512xf32>
    %cst_20 = arith.constant 1.41421354 : f32
    %31 = vector.broadcast %cst_20 : f32 to vector<20x512xf32>
    %32 = arith.mulf %30, %31 : vector<20x512xf32>
    %33 = arith.truncf %32 : vector<20x512xf32> to vector<20x512xbf16>
    %c0_21 = arith.constant 0 : index
    %c2 = arith.constant 2 : index
    %c0_22 = arith.constant 0 : index
    %c0_23 = arith.constant 0 : index
    %34 = vector.load %arg2[%c0_21, %c2, %c0_22, %c0_23] : memref<1x4x512x512xbf16, #tpu.memory_space<vmem>>, vector<1x1x512x512xbf16>
    %35 = vector.shape_cast %34 : vector<1x1x512x512xbf16> to vector<512x512xbf16>
    %cst_24 = arith.constant dense<0.000000e+00> : vector<20x512xf32>
    %36 = tpu.matmul %33, %35, %cst_24 {dimension_numbers = #tpu.dot_dimension_numbers<[1], [0], [0], [1], [0, 0, 1, 1], [], []>} : vector<20x512xbf16>, vector<512x512xbf16>, vector<20x512xf32> -> vector<20x512xf32>
    %37 = vector.extract_strided_slice %4 {offsets = [2, 0], sizes = [1, 512], strides = [1, 1]} : vector<4x512xf32> to vector<1x512xf32>
    %38 = vector.broadcast %37 : vector<1x512xf32> to vector<20x512xf32>
    %39 = arith.addf %36, %38 : vector<20x512xf32>
    %cst_25 = arith.constant 0.000000e+00 : f32
    %40 = vector.broadcast %cst_25 : f32 to vector<20x512xf32>
    %41 = arith.cmpf ogt, %39, %40 : vector<20x512xf32>
    %cst_26 = arith.constant 2.000000e-01 : f32
    %42 = vector.broadcast %cst_26 : f32 to vector<20x512xf32>
    %43 = arith.mulf %42, %39 : vector<20x512xf32>
    %44 = arith.select %41, %39, %43 : vector<20x512xi1>, vector<20x512xf32>
    %cst_27 = arith.constant 1.41421354 : f32
    %45 = vector.broadcast %cst_27 : f32 to vector<20x512xf32>
    %46 = arith.mulf %44, %45 : vector<20x512xf32>
    %47 = arith.truncf %46 : vector<20x512xf32> to vector<20x512xbf16>
    %c0_28 = arith.constant 0 : index
    %c3 = arith.constant 3 : index
    %c0_29 = arith.constant 0 : index
    %c0_30 = arith.constant 0 : index
    %48 = vector.load %arg2[%c0_28, %c3, %c0_29, %c0_30] : memref<1x4x512x512xbf16, #tpu.memory_space<vmem>>, vector<1x1x512x512xbf16>
    %49 = vector.shape_cast %48 : vector<1x1x512x512xbf16> to vector<512x512xbf16>
    %cst_31 = arith.constant dense<0.000000e+00> : vector<20x512xf32>
    %50 = tpu.matmul %47, %49, %cst_31 {dimension_numbers = #tpu.dot_dimension_numbers<[1], [0], [0], [1], [0, 0, 1, 1], [], []>} : vector<20x512xbf16>, vector<512x512xbf16>, vector<20x512xf32> -> vector<20x512xf32>
    %51 = vector.extract_strided_slice %4 {offsets = [3, 0], sizes = [1, 512], strides = [1, 1]} : vector<4x512xf32> to vector<1x512xf32>
    %52 = vector.broadcast %51 : vector<1x512xf32> to vector<20x512xf32>
    %53 = arith.addf %50, %52 : vector<20x512xf32>
    %54 = vector.broadcast %2 : vector<20x1xf32> to vector<20x512xf32>
    %55 = arith.mulf %53, %54 : vector<20x512xf32>
    %56 = arith.addf %1, %55 : vector<20x512xf32>
    %c0_32 = arith.constant 0 : index
    %c0_33 = arith.constant 0 : index
    %c0_34 = arith.constant 0 : index
    %57 = vector.load %arg7[%c0_32, %c0_33, %c0_34] : memref<1x20x512xf32, #tpu.memory_space<vmem>>, vector<1x20x512xf32>
    %58 = vector.shape_cast %57 : vector<1x20x512xf32> to vector<20x512xf32>
    %59 = vector.shape_cast %56 : vector<20x512xf32> to vector<1x20x512xf32>
    tpu.vector_store %arg7[%c0_32, %c0_33, %c0_34], %59 {strides = array<i32>} : memref<1x20x512xf32, #tpu.memory_space<vmem>>, vector<1x20x512xf32>,
    %c0_35 = arith.constant 0 : index
    %c0_36 = arith.constant 0 : index
    %c0_37 = arith.constant 0 : index
    %60 = vector.load %arg5[%c0_35, %c0_36, %c0_37] : memref<1x4x512xf32, #tpu.memory_space<vmem>>, vector<1x4x512xf32>
    %61 = vector.shape_cast %60 : vector<1x4x512xf32> to vector<4x512xf32>
    %62 = arith.truncf %56 : vector<20x512xf32> to vector<20x512xbf16>
    %c0_38 = arith.constant 0 : index
    %c0_39 = arith.constant 0 : index
    %c0_40 = arith.constant 0 : index
    %c0_41 = arith.constant 0 : index
    %63 = vector.load %arg4[%c0_38, %c0_39, %c0_40, %c0_41] : memref<1x4x512x512xbf16, #tpu.memory_space<vmem>>, vector<1x1x512x512xbf16>
    %64 = vector.shape_cast %63 : vector<1x1x512x512xbf16> to vector<512x512xbf16>
    %cst_42 = arith.constant dense<0.000000e+00> : vector<20x512xf32>
    %65 = tpu.matmul %62, %64, %cst_42 {dimension_numbers = #tpu.dot_dimension_numbers<[1], [0], [0], [1], [0, 0, 1, 1], [], []>} : vector<20x512xbf16>, vector<512x512xbf16>, vector<20x512xf32> -> vector<20x512xf32>
    %66 = vector.extract_strided_slice %61 {offsets = [0, 0], sizes = [1, 512], strides = [1, 1]} : vector<4x512xf32> to vector<1x512xf32>
    %67 = vector.broadcast %66 : vector<1x512xf32> to vector<20x512xf32>
    %68 = arith.addf %65, %67 : vector<20x512xf32>
    %cst_43 = arith.constant 0.000000e+00 : f32
    %69 = vector.broadcast %cst_43 : f32 to vector<20x512xf32>
    %70 = arith.cmpf ogt, %68, %69 : vector<20x512xf32>
    %cst_44 = arith.constant 2.000000e-01 : f32
    %71 = vector.broadcast %cst_44 : f32 to vector<20x512xf32>
    %72 = arith.mulf %71, %68 : vector<20x512xf32>
    %73 = arith.select %70, %68, %72 : vector<20x512xi1>, vector<20x512xf32>
    %cst_45 = arith.constant 1.41421354 : f32
    %74 = vector.broadcast %cst_45 : f32 to vector<20x512xf32>
    %75 = arith.mulf %73, %74 : vector<20x512xf32>
    %76 = arith.truncf %75 : vector<20x512xf32> to vector<20x512xbf16>
    %c0_46 = arith.constant 0 : index
    %c1_47 = arith.constant 1 : index
    %c0_48 = arith.constant 0 : index
    %c0_49 = arith.constant 0 : index
    %77 = vector.load %arg4[%c0_46, %c1_47, %c0_48, %c0_49] : memref<1x4x512x512xbf16, #tpu.memory_space<vmem>>, vector<1x1x512x512xbf16>
    %78 = vector.shape_cast %77 : vector<1x1x512x512xbf16> to vector<512x512xbf16>
    %cst_50 = arith.constant dense<0.000000e+00> : vector<20x512xf32>
    %79 = tpu.matmul %76, %78, %cst_50 {dimension_numbers = #tpu.dot_dimension_numbers<[1], [0], [0], [1], [0, 0, 1, 1], [], []>} : vector<20x512xbf16>, vector<512x512xbf16>, vector<20x512xf32> -> vector<20x512xf32>
    %80 = vector.extract_strided_slice %61 {offsets = [1, 0], sizes = [1, 512], strides = [1, 1]} : vector<4x512xf32> to vector<1x512xf32>
    %81 = vector.broadcast %80 : vector<1x512xf32> to vector<20x512xf32>
    %82 = arith.addf %79, %81 : vector<20x512xf32>
    %cst_51 = arith.constant 0.000000e+00 : f32
    %83 = vector.broadcast %cst_51 : f32 to vector<20x512xf32>
    %84 = arith.cmpf ogt, %82, %83 : vector<20x512xf32>
    %cst_52 = arith.constant 2.000000e-01 : f32
    %85 = vector.broadcast %cst_52 : f32 to vector<20x512xf32>
    %86 = arith.mulf %85, %82 : vector<20x512xf32>
    %87 = arith.select %84, %82, %86 : vector<20x512xi1>, vector<20x512xf32>
    %cst_53 = arith.constant 1.41421354 : f32
    %88 = vector.broadcast %cst_53 : f32 to vector<20x512xf32>
    %89 = arith.mulf %87, %88 : vector<20x512xf32>
    %90 = arith.truncf %89 : vector<20x512xf32> to vector<20x512xbf16>
    %c0_54 = arith.constant 0 : index
    %c2_55 = arith.constant 2 : index
    %c0_56 = arith.constant 0 : index
    %c0_57 = arith.constant 0 : index
    %91 = vector.load %arg4[%c0_54, %c2_55, %c0_56, %c0_57] : memref<1x4x512x512xbf16, #tpu.memory_space<vmem>>, vector<1x1x512x512xbf16>
    %92 = vector.shape_cast %91 : vector<1x1x512x512xbf16> to vector<512x512xbf16>
    %cst_58 = arith.constant dense<0.000000e+00> : vector<20x512xf32>
    %93 = tpu.matmul %90, %92, %cst_58 {dimension_numbers = #tpu.dot_dimension_numbers<[1], [0], [0], [1], [0, 0, 1, 1], [], []>} : vector<20x512xbf16>, vector<512x512xbf16>, vector<20x512xf32> -> vector<20x512xf32>
    %94 = vector.extract_strided_slice %61 {offsets = [2, 0], sizes = [1, 512], strides = [1, 1]} : vector<4x512xf32> to vector<1x512xf32>
    %95 = vector.broadcast %94 : vector<1x512xf32> to vector<20x512xf32>
    %96 = arith.addf %93, %95 : vector<20x512xf32>
    %cst_59 = arith.constant 0.000000e+00 : f32
    %97 = vector.broadcast %cst_59 : f32 to vector<20x512xf32>
    %98 = arith.cmpf ogt, %96, %97 : vector<20x512xf32>
    %cst_60 = arith.constant 2.000000e-01 : f32
    %99 = vector.broadcast %cst_60 : f32 to vector<20x512xf32>
    %100 = arith.mulf %99, %96 : vector<20x512xf32>
    %101 = arith.select %98, %96, %100 : vector<20x512xi1>, vector<20x512xf32>
    %cst_61 = arith.constant 1.41421354 : f32
    %102 = vector.broadcast %cst_61 : f32 to vector<20x512xf32>
    %103 = arith.mulf %101, %102 : vector<20x512xf32>
    %104 = arith.truncf %103 : vector<20x512xf32> to vector<20x512xbf16>
    %c0_62 = arith.constant 0 : index
    %c3_63 = arith.constant 3 : index
    %c0_64 = arith.constant 0 : index
    %c0_65 = arith.constant 0 : index
    %105 = vector.load %arg4[%c0_62, %c3_63, %c0_64, %c0_65] : memref<1x4x512x512xbf16, #tpu.memory_space<vmem>>, vector<1x1x512x512xbf16>
    %106 = vector.shape_cast %105 : vector<1x1x512x512xbf16> to vector<512x512xbf16>
    %cst_66 = arith.constant dense<0.000000e+00> : vector<20x512xf32>
    %107 = tpu.matmul %104, %106, %cst_66 {dimension_numbers = #tpu.dot_dimension_numbers<[1], [0], [0], [1], [0, 0, 1, 1], [], []>} : vector<20x512xbf16>, vector<512x512xbf16>, vector<20x512xf32> -> vector<20x512xf32>
    %108 = vector.extract_strided_slice %61 {offsets = [3, 0], sizes = [1, 512], strides = [1, 1]} : vector<4x512xf32> to vector<1x512xf32>
    %109 = vector.broadcast %108 : vector<1x512xf32> to vector<20x512xf32>
    %110 = arith.addf %107, %109 : vector<20x512xf32>
    %111 = vector.broadcast %2 : vector<20x1xf32> to vector<20x512xf32>
    %112 = arith.mulf %110, %111 : vector<20x512xf32>
    %113 = arith.addf %56, %112 : vector<20x512xf32>
    %c0_67 = arith.constant 0 : index
    %c0_68 = arith.constant 0 : index
    %c0_69 = arith.constant 0 : index
    %114 = vector.load %arg8[%c0_67, %c0_68, %c0_69] : memref<1x20x512xf32, #tpu.memory_space<vmem>>, vector<1x20x512xf32>
    %115 = vector.shape_cast %114 : vector<1x20x512xf32> to vector<20x512xf32>
    %116 = vector.shape_cast %113 : vector<20x512xf32> to vector<1x20x512xf32>
    tpu.vector_store %arg8[%c0_67, %c0_68, %c0_69], %116 {strides = array<i32>} : memref<1x20x512xf32, #tpu.memory_space<vmem>>, vector<1x20x512xf32>,
    return
  }
  func.func @transform_0(%arg0: i32) -> (i32, i32, i32) {
    %c0_i32 = arith.constant 0 : i32
    %c0_i32_0 = arith.constant 0 : i32
    %c0_i32_1 = arith.constant 0 : i32
    return %arg0, %c0_i32, %c0_i32_0 : i32, i32, i32
  }
  func.func @transform_1(%arg0: i32) -> (i32, i32, i32, i32) {
    %c0_i32 = arith.constant 0 : i32
    %c0_i32_0 = arith.constant 0 : i32
    %c0_i32_1 = arith.constant 0 : i32
    %c0_i32_2 = arith.constant 0 : i32
    return %arg0, %c0_i32, %c0_i32_0, %c0_i32_1 : i32, i32, i32, i32
  }
  func.func @transform_2(%arg0: i32) -> (i32, i32, i32) {
    %c0_i32 = arith.constant 0 : i32
    %c0_i32_0 = arith.constant 0 : i32
    %c0_i32_1 = arith.constant 0 : i32
    return %arg0, %c0_i32, %c0_i32_0 : i32, i32, i32
  }
  func.func @transform_3(%arg0: i32) -> (i32, i32, i32, i32) {
    %c0_i32 = arith.constant 0 : i32
    %c0_i32_0 = arith.constant 0 : i32
    %c0_i32_1 = arith.constant 0 : i32
    %c0_i32_2 = arith.constant 0 : i32
    return %arg0, %c0_i32, %c0_i32_0, %c0_i32_1 : i32, i32, i32, i32
  }
  func.func @transform_4(%arg0: i32) -> (i32, i32, i32) {
    %c0_i32 = arith.constant 0 : i32
    %c0_i32_0 = arith.constant 0 : i32
    %c0_i32_1 = arith.constant 0 : i32
    return %arg0, %c0_i32, %c0_i32_0 : i32, i32, i32
  }
  func.func @transform_5(%arg0: i32) -> (i32, i32) {
    %c0_i32 = arith.constant 0 : i32
    %c0_i32_0 = arith.constant 0 : i32
    %c0_i32_1 = arith.constant 0 : i32
    return %c0_i32, %c0_i32_0 : i32, i32
  }
  func.func @transform_6(%arg0: i32) -> (i32, i32, i32) {
    %c0_i32 = arith.constant 0 : i32
    %c0_i32_0 = arith.constant 0 : i32
    %c0_i32_1 = arith.constant 0 : i32
    return %arg0, %c0_i32, %c0_i32_0 : i32, i32, i32
  }
  func.func @transform_7(%arg0: i32) -> (i32, i32, i32) {
    %c0_i32 = arith.constant 0 : i32
    %c0_i32_0 = arith.constant 0 : i32
    %c0_i32_1 = arith.constant 0 : i32
    return %arg0, %c0_i32, %c0_i32_0 : i32, i32, i32
  }
}

</mosaic_0001>

<llo_original>
// kernel: tpu_custom_call.1
$region0: #{tpu_custom_call.1}
  #allocation0 [shape = 'u32[]', space=smem, size = 0x4, offset = 0x4, fixed_abs, tag = 'smem constant byte address 0x4 - core index']
  #allocation1 [shape = 'u32[144,128]{1,0:T(1,128)}', space=vmem, size = 0x12000, scoped, tag = 'internal scratch']
  %s0 = inlined_call_operand.hbm [shape: f32[3,20,512], index: 0, kind: input, shape index: {}]
  %s1 = inlined_call_operand.hbm [shape: bf16[3,4,512,512], index: 1, kind: input, shape index: {}]
  %s2 = inlined_call_operand.hbm [shape: f32[3,4,512], index: 2, kind: input, shape index: {}]
  %s3 = inlined_call_operand.hbm [shape: bf16[3,4,512,512], index: 3, kind: input, shape index: {}]
  %s4 = inlined_call_operand.hbm [shape: f32[3,4,512], index: 4, kind: input, shape index: {}]
  %s5 = inlined_call_operand.vmem [shape: f32[20,1], index: 5, kind: input, shape index: {}]
  %s6 = inlined_call_operand.hbm [shape: f32[3,20,512], index: 6, kind: output, shape index: {0}]
  %s7 = inlined_call_operand.hbm [shape: f32[3,20,512], index: 7, kind: output, shape index: {1}]
  %8 = xla_tuple %s6, %s7
  %s9 = sld [smem:[#allocation0]]
  $region85: #{tpu_custom_call.1} parent=0
    _
  %s11 = ssub.s32 1, %s9
  %s12 = scalar_select 0, %s11, %s9
  $region1: #{tpu_custom_call.1} parent=0
    #allocation2 [shape = 'u8[98304]{0}', space=vmem, size = 0x18000, scoped, tag = 'input window, operand 0']
    #allocation3 [shape = 's32[2]{0}', space=sflag, size = 0x8, scoped, tag = 'scoped memory for tpu_custom_call.1']
    #allocation4 [shape = 's32[2]{0}', space=sflag, size = 0x8, scoped, tag = 'scoped memory for tpu_custom_call.1']
    #allocation5 [shape = 'u8[4194304]{0}', space=vmem, size = 0x400000, scoped, tag = 'input window, operand 1']
    #allocation6 [shape = 's32[2]{0}', space=sflag, size = 0x8, scoped, tag = 'scoped memory for tpu_custom_call.1']
    #allocation7 [shape = 'u8[16384]{0}', space=vmem, size = 0x4000, scoped, tag = 'input window, operand 2']
    #allocation8 [shape = 'u8[4194304]{0}', space=vmem, size = 0x400000, scoped, tag = 'input window, operand 3']
    #allocation9 [shape = 's32[2]{0}', space=sflag, size = 0x8, scoped, tag = 'scoped memory for tpu_custom_call.1']
    #allocation10 [shape = 'u8[16384]{0}', space=vmem, size = 0x4000, scoped, tag = 'input window, operand 4']
    #allocation11 [shape = 'u8[98304]{0}', space=vmem, size = 0x18000, scoped, tag = 'output window, operand 0']
    #allocation12 [shape = 'u8[98304]{0}', space=vmem, size = 0x18000, scoped, tag = 'output window, operand 1']
    #allocation13 [shape = 's32[2]{0}', space=sflag, size = 0x8, scoped, tag = 'scoped memory for tpu_custom_call.1']
    %13 = vsyncpa [#allocation3], 0
    %s14 = scalar_lea.sflag [#allocation3], 1
    %15 = vsyncpa %s14, 0
    %16 = vsyncpa [#allocation6], 0
    %s17 = scalar_lea.sflag [#allocation6], 1
    %18 = vsyncpa %s17, 0
    %19 = vsyncpa [#allocation9], 0
    %s20 = scalar_lea.sflag [#allocation9], 1
    %21 = vsyncpa %s20, 0
    %22 = vsyncpa [#allocation4], 0
    %s23 = scalar_lea.sflag [#allocation4], 1
    %24 = vsyncpa %s23, 0
    %25 = vsyncpa [#allocation13], 0
    %s26 = scalar_lea.sflag [#allocation13], 1
    %27 = vsyncpa %s26, 0
    loop: start=0, step=1, limit=5
    $region2: #{tpu_custom_call.1} parent=1 // loop_pre_header
      _
    $region3: #{tpu_custom_call.1} parent=1 // loop_header
      %s29 = sphi 0, %s33
      %p30 = scmp.ge.s32.totalorder %s29, 5
      %s39 = sphi 0, %s41
      %s42 = sphi 0, %s39
      %s43 = sphi 0, %s42
      %s59 = sphi 0, %s43
      %s65 = sphi 0, %s67
      %s68 = sphi 0, %s65
      %s69 = sphi 0, %s68
      %s85 = sphi 0, %s69
      %s91 = sphi 0, %s93
      %s94 = sphi 0, %s91
      %s95 = sphi 0, %s94
      %s111 = sphi 0, %s95
      %s117 = sphi 0, %s119
      %s120 = sphi 0, %s117
      %s121 = sphi 0, %s120
      %s137 = sphi 0, %s121
      %s143 = sphi 0, %s145
      %s146 = sphi 0, %s143
      %s147 = sphi 0, %s146
      %s163 = sphi 0, %s147
      %s167 = sphi 0, %s167
      %s169 = sphi 0, %s167
      %s170 = sphi 0, %s169
      %s184 = sphi 0, %s170
      %s190 = sphi 0, %s192
      %s193 = sphi 0, %s190
      %s194 = sphi 0, %s193
      %s210 = sphi 0, %s194
      %s216 = sphi 0, %s218
      %s219 = sphi 0, %s216
      %s220 = sphi 0, %s219
      %s236 = sphi 0, %s220
    $region4: #{tpu_custom_call.1} parent=1 // loop_header_branch
      %32 = sbr.rel (%p30) target = $region8
    $region5: #{tpu_custom_call.1} parent=1 // loop_body
      %s34 = ssub.s32 %s29, 1
      %s35 = ssub.s32 %s29, 2
      %s36 = sadd.s32 %s29, 1
      %s37 = ssub.s32 %s29, %s36
      %p38 = scmp.eq.s32.totalorder %s37, 0
      %s40 = sadd.s32 %s39, 1
      %s41 = scalar_select %p38, %s39, %s40
      %p44 = pneg %p38
      %p45 = scmp.eq.s32.totalorder %s29, 2
      %p46 = por %p44, %p45
      %p47 = scmp.ne.s32.totalorder %s39, %s42
      %p48 = scmp.eq.s32.totalorder %s29, 0
      %p49 = por %p47, %p48
      %p50 = scmp.ne.s32.totalorder %s39, %s42
      %p51 = scmp.eq.s32.totalorder %s34, 2
      %p52 = por %p50, %p51
      %p53 = scmp.ne.s32.totalorder %s42, %s43
      %p54 = scmp.eq.s32.totalorder %s34, 0
      %p55 = por %p53, %p54
      %p56 = scmp.ne.s32.totalorder %s42, %s43
      %p57 = scmp.eq.s32.totalorder %s35, 2
      %p58 = por %p56, %p57
      %p60 = scmp.ne.s32.totalorder %s43, %s59
      %p61 = scmp.eq.s32.totalorder %s35, 0
      %p62 = por %p60, %p61
      %s63 = ssub.s32 %s29, %s36
      %p64 = scmp.eq.s32.totalorder %s63, 0
      %s66 = sadd.s32 %s65, 1
      %s67 = scalar_select %p64, %s65, %s66
      %p70 = pneg %p64
      %p71 = scmp.eq.s32.totalorder %s29, 2
      %p72 = por %p70, %p71
      %p73 = scmp.ne.s32.totalorder %s65, %s68
      %p74 = scmp.eq.s32.totalorder %s29, 0
      %p75 = por %p73, %p74
      %p76 = scmp.ne.s32.totalorder %s65, %s68
      %p77 = scmp.eq.s32.totalorder %s34, 2
      %p78 = por %p76, %p77
      %p79 = scmp.ne.s32.totalorder %s68, %s69
      %p80 = scmp.eq.s32.totalorder %s34, 0
      %p81 = por %p79, %p80
      %p82 = scmp.ne.s32.totalorder %s68, %s69
      %p83 = scmp.eq.s32.totalorder %s35, 2
      %p84 = por %p82, %p83
      %p86 = scmp.ne.s32.totalorder %s69, %s85
      %p87 = scmp.eq.s32.totalorder %s35, 0
      %p88 = por %p86, %p87
      %s89 = ssub.s32 %s29, %s36
      %p90 = scmp.eq.s32.totalorder %s89, 0
      %s92 = sadd.s32 %s91, 1
      %s93 = scalar_select %p90, %s91, %s92
      %p96 = pneg %p90
      %p97 = scmp.eq.s32.totalorder %s29, 2
      %p98 = por %p96, %p97
      %p99 = scmp.ne.s32.totalorder %s91, %s94
      %p100 = scmp.eq.s32.totalorder %s29, 0
      %p101 = por %p99, %p100
      %p102 = scmp.ne.s32.totalorder %s91, %s94
      %p103 = scmp.eq.s32.totalorder %s34, 2
      %p104 = por %p102, %p103
      %p105 = scmp.ne.s32.totalorder %s94, %s95
      %p106 = scmp.eq.s32.totalorder %s34, 0
      %p107 = por %p105, %p106
      %p108 = scmp.ne.s32.totalorder %s94, %s95
      %p109 = scmp.eq.s32.totalorder %s35, 2
      %p110 = por %p108, %p109
      %p112 = scmp.ne.s32.totalorder %s95, %s111
      %p113 = scmp.eq.s32.totalorder %s35, 0
      %p114 = por %p112, %p113
      %s115 = ssub.s32 %s29, %s36
      %p116 = scmp.eq.s32.totalorder %s115, 0
      %s118 = sadd.s32 %s117, 1
      %s119 = scalar_select %p116, %s117, %s118
      %p122 = pneg %p116
      %p123 = scmp.eq.s32.totalorder %s29, 2
      %p124 = por %p122, %p123
      %p125 = scmp.ne.s32.totalorder %s117, %s120
      %p126 = scmp.eq.s32.totalorder %s29, 0
      %p127 = por %p125, %p126
      %p128 = scmp.ne.s32.totalorder %s117, %s120
      %p129 = scmp.eq.s32.totalorder %s34, 2
      %p130 = por %p128, %p129
      %p131 = scmp.ne.s32.totalorder %s120, %s121
      %p132 = scmp.eq.s32.totalorder %s34, 0
      %p133 = por %p131, %p132
      %p134 = scmp.ne.s32.totalorder %s120, %s121
      %p135 = scmp.eq.s32.totalorder %s35, 2
      %p136 = por %p134, %p135
      %p138 = scmp.ne.s32.totalorder %s121, %s137
      %p139 = scmp.eq.s32.totalorder %s35, 0
      %p140 = por %p138, %p139
      %s141 = ssub.s32 %s29, %s36
      %p142 = scmp.eq.s32.totalorder %s141, 0
      %s144 = sadd.s32 %s143, 1
      %s145 = scalar_select %p142, %s143, %s144
      %p148 = pneg %p142
      %p149 = scmp.eq.s32.totalorder %s29, 2
      %p150 = por %p148, %p149
      %p151 = scmp.ne.s32.totalorder %s143, %s146
      %p152 = scmp.eq.s32.totalorder %s29, 0
      %p153 = por %p151, %p152
      %p154 = scmp.ne.s32.totalorder %s143, %s146
      %p155 = scmp.eq.s32.totalorder %s34, 2
      %p156 = por %p154, %p155
      %p157 = scmp.ne.s32.totalorder %s146, %s147
      %p158 = scmp.eq.s32.totalorder %s34, 0
      %p159 = por %p157, %p158
      %p160 = scmp.ne.s32.totalorder %s146, %s147
      %p161 = scmp.eq.s32.totalorder %s35, 2
      %p162 = por %p160, %p161
      %p164 = scmp.ne.s32.totalorder %s147, %s163
      %p165 = scmp.eq.s32.totalorder %s35, 0
      %p166 = por %p164, %p165
      %s168 = sadd.s32 %s167, 1
      %p171 = scmp.eq.s32.totalorder %s29, 2
      %p172 = scmp.ne.s32.totalorder %s167, %s169
      %p173 = scmp.eq.s32.totalorder %s29, 0
      %p174 = por %p172, %p173
      %p175 = scmp.ne.s32.totalorder %s167, %s169
      %p176 = scmp.eq.s32.totalorder %s34, 2
      %p177 = por %p175, %p176
      %p178 = scmp.ne.s32.totalorder %s169, %s170
      %p179 = scmp.eq.s32.totalorder %s34, 0
      %p180 = por %p178, %p179
      %p181 = scmp.ne.s32.totalorder %s169, %s170
      %p182 = scmp.eq.s32.totalorder %s35, 2
      %p183 = por %p181, %p182
      %p185 = scmp.ne.s32.totalorder %s170, %s184
      %p186 = scmp.eq.s32.totalorder %s35, 0
      %p187 = por %p185, %p186
      %s188 = ssub.s32 %s29, %s36
      %p189 = scmp.eq.s32.totalorder %s188, 0
      %s191 = sadd.s32 %s190, 1
      %s192 = scalar_select %p189, %s190, %s191
      %p195 = pneg %p189
      %p196 = scmp.eq.s32.totalorder %s29, 2
      %p197 = por %p195, %p196
      %p198 = scmp.ne.s32.totalorder %s190, %s193
      %p199 = scmp.eq.s32.totalorder %s29, 0
      %p200 = por %p198, %p199
      %p201 = scmp.ne.s32.totalorder %s190, %s193
      %p202 = scmp.eq.s32.totalorder %s34, 2
      %p203 = por %p201, %p202
      %p204 = scmp.ne.s32.totalorder %s193, %s194
      %p205 = scmp.eq.s32.totalorder %s34, 0
      %p206 = por %p204, %p205
      %p207 = scmp.ne.s32.totalorder %s193, %s194
      %p208 = scmp.eq.s32.totalorder %s35, 2
      %p209 = por %p207, %p208
      %p211 = scmp.ne.s32.totalorder %s194, %s210
      %p212 = scmp.eq.s32.totalorder %s35, 0
      %p213 = por %p211, %p212
      %s214 = ssub.s32 %s29, %s36
      %p215 = scmp.eq.s32.totalorder %s214, 0
      %s217 = sadd.s32 %s216, 1
      %s218 = scalar_select %p215, %s216, %s217
      %p221 = pneg %p215
      %p222 = scmp.eq.s32.totalorder %s29, 2
      %p223 = por %p221, %p222
      %p224 = scmp.ne.s32.totalorder %s216, %s219
      %p225 = scmp.eq.s32.totalorder %s29, 0
      %p226 = por %p224, %p225
      %p227 = scmp.ne.s32.totalorder %s216, %s219
      %p228 = scmp.eq.s32.totalorder %s34, 2
      %p229 = por %p227, %p228
      %p230 = scmp.ne.s32.totalorder %s219, %s220
      %p231 = scmp.eq.s32.totalorder %s34, 0
      %p232 = por %p230, %p231
      %p233 = scmp.ne.s32.totalorder %s219, %s220
      %p234 = scmp.eq.s32.totalorder %s35, 2
      %p235 = por %p233, %p234
      %p237 = scmp.ne.s32.totalorder %s220, %s236
      %p238 = scmp.eq.s32.totalorder %s35, 0
      %p239 = por %p237, %p238
      %p240 = scmp.le.s32.totalorder 1, %s29
      %p241 = scmp.lt.s32.totalorder %s29, 4
      %p242 = pnand %p240, %p241
      %p243 = pneg %p242
      // Predicated region
      $region9: #{tpu_custom_call.1} parent=5 // pred_check
        _
      $region10: #{tpu_custom_call.1} parent=5 // pred_check_branch
        %245 = sbr.rel (%p242) target = $region12
      $region11: #{tpu_custom_call.1} parent=5 // pred_region
        %s246 = ssub.s32 %s29, 1
        // Predicated region
        $region13: #{tpu_custom_call.1} parent=11 // pred_check
          %p247 = pneg %p180
        $region14: #{tpu_custom_call.1} parent=11 // pred_check_branch
          %249 = sbr.rel (%p247) target = $region16
        $region15: #{tpu_custom_call.1} parent=11 // pred_region
          _
        $region16: #{tpu_custom_call.1} parent=11 // pred_fallthru
          _
      $region12: #{tpu_custom_call.1} parent=5 // pred_fallthru
        _
      %p250 = scmp.lt.s32.totalorder %s29, 3
      // Predicated region
      $region17: #{tpu_custom_call.1} parent=5 // pred_check
        %p251 = pneg %p250
      $region18: #{tpu_custom_call.1} parent=5 // pred_check_branch
        %253 = sbr.rel (%p251) target = $region20
      $region19: #{tpu_custom_call.1} parent=5 // pred_region
        // Predicated region
        $region21: #{tpu_custom_call.1} parent=19 // pred_check
          %p254 = pneg %p49
        $region22: #{tpu_custom_call.1} parent=19 // pred_check_branch
          %256 = sbr.rel (%p254) target = $region24
        $region23: #{tpu_custom_call.1} parent=19 // pred_region
          %s257 = sand.u32 %s39, 1
          %s258 = scalar_lea.sflag [#allocation3], %s257
          %s259 = sand.u32 %s39, 1
          %s260 = smul.addr %s259, 96
          %s261 = scalar_lea.vmem [#allocation2], %s260
          %s263 = ssub.s32 1536, 1536
          %264 = vsyncadd %s258, %s263
          %s265 = smul.addr %s29, 12
          %s266 = smul.addr %s265, 128
          %s267 = scalar_lea.hbm %s0, %s266
          %s268 = sshll.u32 %s261, 4
          %s269 = int_to_ptr.vmem [resolvable:$true] %s268
          %274 = dma.hbm_to_vmem [thread:$0]  %s267, 1536, %s269, %s258, 512, 512, 32
        $region24: #{tpu_custom_call.1} parent=19 // pred_fallthru
          _
        // Predicated region
        $region25: #{tpu_custom_call.1} parent=19 // pred_check
          %p275 = pneg %p75
        $region26: #{tpu_custom_call.1} parent=19 // pred_check_branch
          %277 = sbr.rel (%p275) target = $region28
        $region27: #{tpu_custom_call.1} parent=19 // pred_region
          %s278 = sand.u32 %s29, 1
          %s279 = scalar_lea.sflag [#allocation6], %s278
          %s280 = sand.u32 %s65, 1
          %s281 = smul.addr %s280, 4096
          %s282 = scalar_lea.vmem [#allocation5], %s281
          %s284 = ssub.s32 65536, 65536
          %285 = vsyncadd %s279, %s284
          %s286 = smul.addr %s29, 1024
          %s287 = smul.addr %s286, 64
          %s288 = scalar_lea.hbm %s1, %s287
          %s289 = sshll.u32 %s282, 4
          %s290 = int_to_ptr.vmem [resolvable:$true] %s289
          %295 = dma.hbm_to_vmem [thread:$0]  %s288, 65536, %s290, %s279, 256, 256, 16
        $region28: #{tpu_custom_call.1} parent=19 // pred_fallthru
          _
        // Predicated region
        $region29: #{tpu_custom_call.1} parent=19 // pred_check
          %p296 = pneg %p101
        $region30: #{tpu_custom_call.1} parent=19 // pred_check_branch
          %298 = sbr.rel (%p296) target = $region32
        $region31: #{tpu_custom_call.1} parent=19 // pred_region
          %s299 = sand.u32 %s29, 1
          %s300 = scalar_lea.sflag [#allocation6], %s299
          %s301 = sand.u32 %s91, 1
          %s302 = smul.addr %s301, 16
          %s303 = scalar_lea.vmem [#allocation7], %s302
          %s305 = ssub.s32 256, 256
          %306 = vsyncadd %s300, %s305
          %s307 = smul.addr %s29, 4
          %s308 = smul.addr %s307, 64
          %s309 = scalar_lea.hbm %s2, %s308
          %s311 = sshll.u32 %s303, 4
          %s312 = int_to_ptr.vmem [resolvable:$true] %s311
          %314 = dma.hbm_to_vmem [thread:$0]  %s309, 256, %s312, %s300
        $region32: #{tpu_custom_call.1} parent=19 // pred_fallthru
          _
        // Predicated region
        $region33: #{tpu_custom_call.1} parent=19 // pred_check
          %p315 = pneg %p127
        $region34: #{tpu_custom_call.1} parent=19 // pred_check_branch
          %317 = sbr.rel (%p315) target = $region36
        $region35: #{tpu_custom_call.1} parent=19 // pred_region
          %s318 = sand.u32 %s29, 1
          %s319 = scalar_lea.sflag [#allocation9], %s318
          %s320 = sand.u32 %s117, 1
          %s321 = smul.addr %s320, 4096
          %s322 = scalar_lea.vmem [#allocation8], %s321
          %s324 = ssub.s32 65536, 65536
          %325 = vsyncadd %s319, %s324
          %s326 = smul.addr %s29, 1024
          %s327 = smul.addr %s326, 64
          %s328 = scalar_lea.hbm %s3, %s327
          %s329 = sshll.u32 %s322, 4
          %s330 = int_to_ptr.vmem [resolvable:$true] %s329
          %335 = dma.hbm_to_vmem [thread:$0]  %s328, 65536, %s330, %s319, 256, 256, 16
        $region36: #{tpu_custom_call.1} parent=19 // pred_fallthru
          _
        // Predicated region
        $region37: #{tpu_custom_call.1} parent=19 // pred_check
          %p336 = pneg %p153
        $region38: #{tpu_custom_call.1} parent=19 // pred_check_branch
          %338 = sbr.rel (%p336) target = $region40
        $region39: #{tpu_custom_call.1} parent=19 // pred_region
          %s339 = sand.u32 %s29, 1
          %s340 = scalar_lea.sflag [#allocation9], %s339
          %s341 = sand.u32 %s143, 1
          %s342 = smul.addr %s341, 16
          %s343 = scalar_lea.vmem [#allocation10], %s342
          %s345 = ssub.s32 256, 256
          %346 = vsyncadd %s340, %s345
          %s347 = smul.addr %s29, 4
          %s348 = smul.addr %s347, 64
          %s349 = scalar_lea.hbm %s4, %s348
          %s351 = sshll.u32 %s343, 4
          %s352 = int_to_ptr.vmem [resolvable:$true] %s351
          %354 = dma.hbm_to_vmem [thread:$0]  %s349, 256, %s352, %s340
        $region40: #{tpu_custom_call.1} parent=19 // pred_fallthru
          _
      $region20: #{tpu_custom_call.1} parent=5 // pred_fallthru
        _
      %p355 = scmp.le.s32.totalorder 1, %s29
      %p356 = scmp.lt.s32.totalorder %s29, 4
      %p357 = pnand %p355, %p356
      %p358 = pneg %p357
      // Predicated region
      $region41: #{tpu_custom_call.1} parent=5 // pred_check
        _
      $region42: #{tpu_custom_call.1} parent=5 // pred_check_branch
        %360 = sbr.rel (%p357) target = $region44
      $region43: #{tpu_custom_call.1} parent=5 // pred_region
        %s361 = ssub.s32 %s29, 1
        %s362 = sand.u32 %s42, 1
        %s363 = scalar_lea.sflag [#allocation3], %s362
        %s364 = sand.u32 %s42, 1
        %s365 = smul.addr %s364, 96
        %s366 = scalar_lea.vmem [#allocation2], %s365
        // Predicated region
        $region45: #{tpu_custom_call.1} parent=43 // pred_check
          %p367 = pneg %p55
        $region46: #{tpu_custom_call.1} parent=43 // pred_check_branch
          %369 = sbr.rel (%p367) target = $region48
        $region47: #{tpu_custom_call.1} parent=43 // pred_region
          %370 = dma.done %s363, 1536
        $region48: #{tpu_custom_call.1} parent=43 // pred_fallthru
          _
        %s371 = sand.u32 %s34, 1
        %s372 = scalar_lea.sflag [#allocation6], %s371
        %s373 = sand.u32 %s68, 1
        %s374 = smul.addr %s373, 4096
        %s375 = scalar_lea.vmem [#allocation5], %s374
        // Predicated region
        $region49: #{tpu_custom_call.1} parent=43 // pred_check
          %p376 = pneg %p81
        $region50: #{tpu_custom_call.1} parent=43 // pred_check_branch
          %378 = sbr.rel (%p376) target = $region52
        $region51: #{tpu_custom_call.1} parent=43 // pred_region
          %379 = dma.done %s372, 65536
        $region52: #{tpu_custom_call.1} parent=43 // pred_fallthru
          _
        %s380 = sand.u32 %s34, 1
        %s381 = scalar_lea.sflag [#allocation6], %s380
        %s382 = sand.u32 %s94, 1
        %s383 = smul.addr %s382, 16
        %s384 = scalar_lea.vmem [#allocation7], %s383
        // Predicated region
        $region53: #{tpu_custom_call.1} parent=43 // pred_check
          %p385 = pneg %p107
        $region54: #{tpu_custom_call.1} parent=43 // pred_check_branch
          %387 = sbr.rel (%p385) target = $region56
        $region55: #{tpu_custom_call.1} parent=43 // pred_region
          %388 = dma.done %s381, 256
        $region56: #{tpu_custom_call.1} parent=43 // pred_fallthru
          _
        %s389 = sand.u32 %s34, 1
        %s390 = scalar_lea.sflag [#allocation9], %s389
        %s391 = sand.u32 %s120, 1
        %s392 = smul.addr %s391, 4096
        %s393 = scalar_lea.vmem [#allocation8], %s392
        // Predicated region
        $region57: #{tpu_custom_call.1} parent=43 // pred_check
          %p394 = pneg %p133
        $region58: #{tpu_custom_call.1} parent=43 // pred_check_branch
          %396 = sbr.rel (%p394) target = $region60
        $region59: #{tpu_custom_call.1} parent=43 // pred_region
          %397 = dma.done %s390, 65536
        $region60: #{tpu_custom_call.1} parent=43 // pred_fallthru
          _
        %s398 = sand.u32 %s34, 1
        %s399 = scalar_lea.sflag [#allocation9], %s398
        %s400 = sand.u32 %s146, 1
        %s401 = smul.addr %s400, 16
        %s402 = scalar_lea.vmem [#allocation10], %s401
        // Predicated region
        $region61: #{tpu_custom_call.1} parent=43 // pred_check
          %p403 = pneg %p159
        $region62: #{tpu_custom_call.1} parent=43 // pred_check_branch
          %405 = sbr.rel (%p403) target = $region64
        $region63: #{tpu_custom_call.1} parent=43 // pred_region
          %406 = dma.done %s399, 256
        $region64: #{tpu_custom_call.1} parent=43 // pred_fallthru
          _
        %s407 = sand.u32 %s42, 1
        %s408 = scalar_lea.sflag [#allocation3], %s407
        %s409 = sand.u32 %s42, 1
        %s410 = smul.addr %s409, 96
        %s411 = scalar_lea.vmem [#allocation2], %s410
        %p412 = pneg %p55
        %p413 = pneg %p52
        %s414 = sand.u32 %s34, 1
        %s415 = scalar_lea.sflag [#allocation6], %s414
        %s416 = sand.u32 %s68, 1
        %s417 = smul.addr %s416, 4096
        %s418 = scalar_lea.vmem [#allocation5], %s417
        %p419 = pneg %p81
        %p420 = pneg %p78
        %s421 = sand.u32 %s34, 1
        %s422 = scalar_lea.sflag [#allocation6], %s421
        %s423 = sand.u32 %s94, 1
        %s424 = smul.addr %s423, 16
        %s425 = scalar_lea.vmem [#allocation7], %s424
        %p426 = pneg %p107
        %p427 = pneg %p104
        %s428 = sand.u32 %s34, 1
        %s429 = scalar_lea.sflag [#allocation9], %s428
        %s430 = sand.u32 %s120, 1
        %s431 = smul.addr %s430, 4096
        %s432 = scalar_lea.vmem [#allocation8], %s431
        %p433 = pneg %p133
        %p434 = pneg %p130
        %s435 = sand.u32 %s34, 1
        %s436 = scalar_lea.sflag [#allocation9], %s435
        %s437 = sand.u32 %s146, 1
        %s438 = smul.addr %s437, 16
        %s439 = scalar_lea.vmem [#allocation10], %s438
        %p440 = pneg %p159
        %p441 = pneg %p156
        %p442 = pneg %p180
        %p443 = pneg %p177
        %p444 = pneg %p206
        %p445 = pneg %p203
        %s446 = sand.u32 %s193, 1
        %s447 = scalar_lea.sflag [#allocation4], %s446
        %s448 = sand.u32 %s193, 1
        %s449 = smul.addr %s448, 96
        %s450 = scalar_lea.vmem [#allocation11], %s449
        %p451 = pneg %p232
        %p452 = pneg %p229
        %s453 = sand.u32 %s219, 1
        %s454 = scalar_lea.sflag [#allocation13], %s453
        %s455 = sand.u32 %s219, 1
        %s456 = smul.addr %s455, 96
        %s457 = scalar_lea.vmem [#allocation12], %s456
        %v458 = vld [vmem:[%s366] sm:$0xff]
        %v459 = vld [vmem:[%s366 + $0x8] sm:$0xff]
        %v460 = vld [vmem:[%s366 + $0x10] sm:$0xff]
        %v461 = vld [vmem:[%s366 + $0x18] sm:$0xff]
        %v462 = vld [vmem:[%s366 + $0x20] sm:$0xff]
        %v463 = vld [vmem:[%s366 + $0x28] sm:$0xff]
        %v464 = vld [vmem:[%s366 + $0x30] sm:$0xff]
        %v465 = vld [vmem:[%s366 + $0x38] sm:$0xff]
        %v466 = vld [vmem:[%s366 + $0x40] sm:$0xf]
        %v467 = vld [vmem:[%s366 + $0x48] sm:$0xf]
        %v468 = vld [vmem:[%s366 + $0x50] sm:$0xf]
        %v469 = vld [vmem:[%s366 + $0x58] sm:$0xf]
        %v470 = vld [vmem:[%s5] sm:$0xff]
        %v471 = vld [vmem:[%s5 + $0x8] sm:$0xff]
        %v472 = vld [vmem:[%s5 + $0x10] sm:$0xf]
        %v473 = vld [vmem:[%s384] sm:$0xff]
        %v474 = vld [vmem:[%s384 + $0x8] sm:$0xff]
        %v475 = vpack.c.bf16 %v462, %v458
        %v476 = vpack.c.bf16 %v463, %v459
        %v477 = vpack.c.bf16 %v464, %v460
        %v478 = vpack.c.bf16 %v465, %v461
        %v479 = vpack.c.bf16 %v466, %v466
        %v480 = vpack.c.bf16 %v467, %v467
        %v481 = vpack.c.bf16 %v468, %v468
        %v482 = vpack.c.bf16 %v469, %v469
        %v483 = vld [vmem:[%s375] sm:$0xff]
        %v484 = vld [vmem:[%s375 + $0x8] sm:$0xff]
        %v485 = vld [vmem:[%s375 + $0x10] sm:$0xff]
        %v486 = vld [vmem:[%s375 + $0x18] sm:$0xff]
        %v487 = vld [vmem:[%s375 + $0x20] sm:$0xff]
        %v488 = vld [vmem:[%s375 + $0x28] sm:$0xff]
        %v489 = vld [vmem:[%s375 + $0x30] sm:$0xff]
        %v490 = vld [vmem:[%s375 + $0x38] sm:$0xff]
        %v491 = vld [vmem:[%s375 + $0x40] sm:$0xff]
        %v492 = vld [vmem:[%s375 + $0x48] sm:$0xff]
        %v493 = vld [vmem:[%s375 + $0x50] sm:$0xff]
        %v494 = vld [vmem:[%s375 + $0x58] sm:$0xff]
        %v495 = vld [vmem:[%s375 + $0x60] sm:$0xff]
        %v496 = vld [vmem:[%s375 + $0x68] sm:$0xff]
        %v497 = vld [vmem:[%s375 + $0x70] sm:$0xff]
        %v498 = vld [vmem:[%s375 + $0x78] sm:$0xff]
        %v499 = vld [vmem:[%s375 + $0x80] sm:$0xff]
        %v500 = vld [vmem:[%s375 + $0x88] sm:$0xff]
        %v501 = vld [vmem:[%s375 + $0x90] sm:$0xff]
        %v502 = vld [vmem:[%s375 + $0x98] sm:$0xff]
        %v503 = vld [vmem:[%s375 + $0xa0] sm:$0xff]
        %v504 = vld [vmem:[%s375 + $0xa8] sm:$0xff]
        %v505 = vld [vmem:[%s375 + $0xb0] sm:$0xff]
        %v506 = vld [vmem:[%s375 + $0xb8] sm:$0xff]
        %v507 = vld [vmem:[%s375 + $0xc0] sm:$0xff]
        %v508 = vld [vmem:[%s375 + $0xc8] sm:$0xff]
        %v509 = vld [vmem:[%s375 + $0xd0] sm:$0xff]
        %v510 = vld [vmem:[%s375 + $0xd8] sm:$0xff]
        %v511 = vld [vmem:[%s375 + $0xe0] sm:$0xff]
        %v512 = vld [vmem:[%s375 + $0xe8] sm:$0xff]
        %v513 = vld [vmem:[%s375 + $0xf0] sm:$0xff]
        %v514 = vld [vmem:[%s375 + $0xf8] sm:$0xff]
        %v515 = vld [vmem:[%s375 + $0x100] sm:$0xff]
        %v516 = vld [vmem:[%s375 + $0x108] sm:$0xff]
        %v517 = vld [vmem:[%s375 + $0x110] sm:$0xff]
        %v518 = vld [vmem:[%s375 + $0x118] sm:$0xff]
        %v519 = vld [vmem:[%s375 + $0x120] sm:$0xff]
        %v520 = vld [vmem:[%s375 + $0x128] sm:$0xff]
        %v521 = vld [vmem:[%s375 + $0x130] sm:$0xff]
        %v522 = vld [vmem:[%s375 + $0x138] sm:$0xff]
        %v523 = vld [vmem:[%s375 + $0x140] sm:$0xff]
        %v524 = vld [vmem:[%s375 + $0x148] sm:$0xff]
        %v525 = vld [vmem:[%s375 + $0x150] sm:$0xff]
        %v526 = vld [vmem:[%s375 + $0x158] sm:$0xff]
        %v527 = vld [vmem:[%s375 + $0x160] sm:$0xff]
        %v528 = vld [vmem:[%s375 + $0x168] sm:$0xff]
        %v529 = vld [vmem:[%s375 + $0x170] sm:$0xff]
        %v530 = vld [vmem:[%s375 + $0x178] sm:$0xff]
        %v531 = vld [vmem:[%s375 + $0x180] sm:$0xff]
        %v532 = vld [vmem:[%s375 + $0x188] sm:$0xff]
        %v533 = vld [vmem:[%s375 + $0x190] sm:$0xff]
        %v534 = vld [vmem:[%s375 + $0x198] sm:$0xff]
        %v535 = vld [vmem:[%s375 + $0x1a0] sm:$0xff]
        %v536 = vld [vmem:[%s375 + $0x1a8] sm:$0xff]
        %v537 = vld [vmem:[%s375 + $0x1b0] sm:$0xff]
        %v538 = vld [vmem:[%s375 + $0x1b8] sm:$0xff]
        %v539 = vld [vmem:[%s375 + $0x1c0] sm:$0xff]
        %v540 = vld [vmem:[%s375 + $0x1c8] sm:$0xff]
        %v541 = vld [vmem:[%s375 + $0x1d0] sm:$0xff]
        %v542 = vld [vmem:[%s375 + $0x1d8] sm:$0xff]
        %v543 = vld [vmem:[%s375 + $0x1e0] sm:$0xff]
        %v544 = vld [vmem:[%s375 + $0x1e8] sm:$0xff]
        %v545 = vld [vmem:[%s375 + $0x1f0] sm:$0xff]
        %v546 = vld [vmem:[%s375 + $0x1f8] sm:$0xff]
        %v547 = vld [vmem:[%s375 + $0x200] sm:$0xff]
        %v548 = vld [vmem:[%s375 + $0x208] sm:$0xff]
        %v549 = vld [vmem:[%s375 + $0x210] sm:$0xff]
        %v550 = vld [vmem:[%s375 + $0x218] sm:$0xff]
        %v551 = vld [vmem:[%s375 + $0x220] sm:$0xff]
        %v552 = vld [vmem:[%s375 + $0x228] sm:$0xff]
        %v553 = vld [vmem:[%s375 + $0x230] sm:$0xff]
        %v554 = vld [vmem:[%s375 + $0x238] sm:$0xff]
        %v555 = vld [vmem:[%s375 + $0x240] sm:$0xff]
        %v556 = vld [vmem:[%s375 + $0x248] sm:$0xff]
        %v557 = vld [vmem:[%s375 + $0x250] sm:$0xff]
        %v558 = vld [vmem:[%s375 + $0x258] sm:$0xff]
        %v559 = vld [vmem:[%s375 + $0x260] sm:$0xff]
        %v560 = vld [vmem:[%s375 + $0x268] sm:$0xff]
        %v561 = vld [vmem:[%s375 + $0x270] sm:$0xff]
        %v562 = vld [vmem:[%s375 + $0x278] sm:$0xff]
        %v563 = vld [vmem:[%s375 + $0x280] sm:$0xff]
        %v564 = vld [vmem:[%s375 + $0x288] sm:$0xff]
        %v565 = vld [vmem:[%s375 + $0x290] sm:$0xff]
        %v566 = vld [vmem:[%s375 + $0x298] sm:$0xff]
        %v567 = vld [vmem:[%s375 + $0x2a0] sm:$0xff]
        %v568 = vld [vmem:[%s375 + $0x2a8] sm:$0xff]
        %v569 = vld [vmem:[%s375 + $0x2b0] sm:$0xff]
        %v570 = vld [vmem:[%s375 + $0x2b8] sm:$0xff]
        %v571 = vld [vmem:[%s375 + $0x2c0] sm:$0xff]
        %v572 = vld [vmem:[%s375 + $0x2c8] sm:$0xff]
        %v573 = vld [vmem:[%s375 + $0x2d0] sm:$0xff]
        %v574 = vld [vmem:[%s375 + $0x2d8] sm:$0xff]
        %v575 = vld [vmem:[%s375 + $0x2e0] sm:$0xff]
        %v576 = vld [vmem:[%s375 + $0x2e8] sm:$0xff]
        %v577 = vld [vmem:[%s375 + $0x2f0] sm:$0xff]
        %v578 = vld [vmem:[%s375 + $0x2f8] sm:$0xff]
        %v579 = vld [vmem:[%s375 + $0x300] sm:$0xff]
        %v580 = vld [vmem:[%s375 + $0x308] sm:$0xff]
        %v581 = vld [vmem:[%s375 + $0x310] sm:$0xff]
        %v582 = vld [vmem:[%s375 + $0x318] sm:$0xff]
        %v583 = vld [vmem:[%s375 + $0x320] sm:$0xff]
        %v584 = vld [vmem:[%s375 + $0x328] sm:$0xff]
        %v585 = vld [vmem:[%s375 + $0x330] sm:$0xff]
        %v586 = vld [vmem:[%s375 + $0x338] sm:$0xff]
        %v587 = vld [vmem:[%s375 + $0x340] sm:$0xff]
        %v588 = vld [vmem:[%s375 + $0x348] sm:$0xff]
        %v589 = vld [vmem:[%s375 + $0x350] sm:$0xff]
        %v590 = vld [vmem:[%s375 + $0x358] sm:$0xff]
        %v591 = vld [vmem:[%s375 + $0x360] sm:$0xff]
        %v592 = vld [vmem:[%s375 + $0x368] sm:$0xff]
        %v593 = vld [vmem:[%s375 + $0x370] sm:$0xff]
        %v594 = vld [vmem:[%s375 + $0x378] sm:$0xff]
        %v595 = vld [vmem:[%s375 + $0x380] sm:$0xff]
        %v596 = vld [vmem:[%s375 + $0x388] sm:$0xff]
        %v597 = vld [vmem:[%s375 + $0x390] sm:$0xff]
        %v598 = vld [vmem:[%s375 + $0x398] sm:$0xff]
        %v599 = vld [vmem:[%s375 + $0x3a0] sm:$0xff]
        %v600 = vld [vmem:[%s375 + $0x3a8] sm:$0xff]
        %v601 = vld [vmem:[%s375 + $0x3b0] sm:$0xff]
        %v602 = vld [vmem:[%s375 + $0x3b8] sm:$0xff]
        %v603 = vld [vmem:[%s375 + $0x3c0] sm:$0xff]
        %v604 = vld [vmem:[%s375 + $0x3c8] sm:$0xff]
        %v605 = vld [vmem:[%s375 + $0x3d0] sm:$0xff]
        %v606 = vld [vmem:[%s375 + $0x3d8] sm:$0xff]
        %v607 = vld [vmem:[%s375 + $0x3e0] sm:$0xff]
        %v608 = vld [vmem:[%s375 + $0x3e8] sm:$0xff]
        %v609 = vld [vmem:[%s375 + $0x3f0] sm:$0xff]
        %v610 = vld [vmem:[%s375 + $0x3f8] sm:$0xff]
        %v613 = vlaneseq
        %v614 = vshrl.u32 %v613, 7
        %v615 = vsub.s32 0, %v614
        %v616 = vrot.slane %v473, %v615
        %v617 = vlaneseq
        %v618 = vshrl.u32 %v617, 7
        %v619 = vsub.s32 4, %v618
        %v620 = vrot.slane %v473, %v619
        %v621 = vlaneseq
        %v622 = vshrl.u32 %v621, 7
        %v623 = vsub.s32 0, %v622
        %v624 = vrot.slane %v474, %v623
        %v625 = vlaneseq
        %v626 = vshrl.u32 %v625, 7
        %v627 = vsub.s32 4, %v626
        %v628 = vrot.slane %v474, %v627
        %v633 = vlaneseq
        %v634 = vshrl.u32 %v633, 7
        %v635 = vsub.s32 0, %v634
        %v636 = vrot.slane %v616, %v635
        %v637 = vlaneseq
        %v638 = vshrl.u32 %v637, 7
        %v639 = vsub.s32 0, %v638
        %v640 = vrot.slane %v620, %v639
        %v641 = vlaneseq
        %v642 = vshrl.u32 %v641, 7
        %v643 = vsub.s32 0, %v642
        %v644 = vrot.slane %v624, %v643
        %v645 = vlaneseq
        %v646 = vshrl.u32 %v645, 7
        %v647 = vsub.s32 0, %v646
        %v648 = vrot.slane %v628, %v647
        %v777 = vunpack.c.l.b16 %v483
        %v778 = vunpack.c.h.b16 %v483
        %v779 = vunpack.c.l.b16 %v484
        %v780 = vunpack.c.h.b16 %v484
        %v781 = vunpack.c.l.b16 %v485
        %v782 = vunpack.c.h.b16 %v485
        %v783 = vunpack.c.l.b16 %v486
        %v784 = vunpack.c.h.b16 %v486
        %v785 = vunpack.c.l.b16 %v487
        %v786 = vunpack.c.h.b16 %v487
        %v787 = vunpack.c.l.b16 %v488
        %v788 = vunpack.c.h.b16 %v488
        %v789 = vunpack.c.l.b16 %v489
        %v790 = vunpack.c.h.b16 %v489
        %v791 = vunpack.c.l.b16 %v490
        %v792 = vunpack.c.h.b16 %v490
        %v793 = vunpack.c.l.b16 %v491
        %v794 = vunpack.c.h.b16 %v491
        %v795 = vunpack.c.l.b16 %v492
        %v796 = vunpack.c.h.b16 %v492
        %v797 = vunpack.c.l.b16 %v493
        %v798 = vunpack.c.h.b16 %v493
        %v799 = vunpack.c.l.b16 %v494
        %v800 = vunpack.c.h.b16 %v494
        %v801 = vunpack.c.l.b16 %v495
        %v802 = vunpack.c.h.b16 %v495
        %v803 = vunpack.c.l.b16 %v496
        %v804 = vunpack.c.h.b16 %v496
        %v805 = vunpack.c.l.b16 %v497
        %v806 = vunpack.c.h.b16 %v497
        %v807 = vunpack.c.l.b16 %v498
        %v808 = vunpack.c.h.b16 %v498
        %v809 = vunpack.c.l.b16 %v499
        %v810 = vunpack.c.h.b16 %v499
        %v811 = vunpack.c.l.b16 %v500
        %v812 = vunpack.c.h.b16 %v500
        %v813 = vunpack.c.l.b16 %v501
        %v814 = vunpack.c.h.b16 %v501
        %v815 = vunpack.c.l.b16 %v502
        %v816 = vunpack.c.h.b16 %v502
        %v817 = vunpack.c.l.b16 %v503
        %v818 = vunpack.c.h.b16 %v503
        %v819 = vunpack.c.l.b16 %v504
        %v820 = vunpack.c.h.b16 %v504
        %v821 = vunpack.c.l.b16 %v505
        %v822 = vunpack.c.h.b16 %v505
        %v823 = vunpack.c.l.b16 %v506
        %v824 = vunpack.c.h.b16 %v506
        %v825 = vunpack.c.l.b16 %v507
        %v826 = vunpack.c.h.b16 %v507
        %v827 = vunpack.c.l.b16 %v508
        %v828 = vunpack.c.h.b16 %v508
        %v829 = vunpack.c.l.b16 %v509
        %v830 = vunpack.c.h.b16 %v509
        %v831 = vunpack.c.l.b16 %v510
        %v832 = vunpack.c.h.b16 %v510
        %v833 = vunpack.c.l.b16 %v511
        %v834 = vunpack.c.h.b16 %v511
        %v835 = vunpack.c.l.b16 %v512
        %v836 = vunpack.c.h.b16 %v512
        %v837 = vunpack.c.l.b16 %v513
        %v838 = vunpack.c.h.b16 %v513
        %v839 = vunpack.c.l.b16 %v514
        %v840 = vunpack.c.h.b16 %v514
        %v841 = vunpack.c.l.b16 %v515
        %v842 = vunpack.c.h.b16 %v515
        %v843 = vunpack.c.l.b16 %v516
        %v844 = vunpack.c.h.b16 %v516
        %v845 = vunpack.c.l.b16 %v517
        %v846 = vunpack.c.h.b16 %v517
        %v847 = vunpack.c.l.b16 %v518
        %v848 = vunpack.c.h.b16 %v518
        %v849 = vunpack.c.l.b16 %v519
        %v850 = vunpack.c.h.b16 %v519
        %v851 = vunpack.c.l.b16 %v520
        %v852 = vunpack.c.h.b16 %v520
        %v853 = vunpack.c.l.b16 %v521
        %v854 = vunpack.c.h.b16 %v521
        %v855 = vunpack.c.l.b16 %v522
        %v856 = vunpack.c.h.b16 %v522
        %v857 = vunpack.c.l.b16 %v523
        %v858 = vunpack.c.h.b16 %v523
        %v859 = vunpack.c.l.b16 %v524
        %v860 = vunpack.c.h.b16 %v524
        %v861 = vunpack.c.l.b16 %v525
        %v862 = vunpack.c.h.b16 %v525
        %v863 = vunpack.c.l.b16 %v526
        %v864 = vunpack.c.h.b16 %v526
        %v865 = vunpack.c.l.b16 %v527
        %v866 = vunpack.c.h.b16 %v527
        %v867 = vunpack.c.l.b16 %v528
        %v868 = vunpack.c.h.b16 %v528
        %v869 = vunpack.c.l.b16 %v529
        %v870 = vunpack.c.h.b16 %v529
        %v871 = vunpack.c.l.b16 %v530
        %v872 = vunpack.c.h.b16 %v530
        %v873 = vunpack.c.l.b16 %v531
        %v874 = vunpack.c.h.b16 %v531
        %v875 = vunpack.c.l.b16 %v532
        %v876 = vunpack.c.h.b16 %v532
        %v877 = vunpack.c.l.b16 %v533
        %v878 = vunpack.c.h.b16 %v533
        %v879 = vunpack.c.l.b16 %v534
        %v880 = vunpack.c.h.b16 %v534
        %v881 = vunpack.c.l.b16 %v535
        %v882 = vunpack.c.h.b16 %v535
        %v883 = vunpack.c.l.b16 %v536
        %v884 = vunpack.c.h.b16 %v536
        %v885 = vunpack.c.l.b16 %v537
        %v886 = vunpack.c.h.b16 %v537
        %v887 = vunpack.c.l.b16 %v538
        %v888 = vunpack.c.h.b16 %v538
        %v889 = vunpack.c.l.b16 %v539
        %v890 = vunpack.c.h.b16 %v539
        %v891 = vunpack.c.l.b16 %v540
        %v892 = vunpack.c.h.b16 %v540
        %v893 = vunpack.c.l.b16 %v541
        %v894 = vunpack.c.h.b16 %v541
        %v895 = vunpack.c.l.b16 %v542
        %v896 = vunpack.c.h.b16 %v542
        %v897 = vunpack.c.l.b16 %v543
        %v898 = vunpack.c.h.b16 %v543
        %v899 = vunpack.c.l.b16 %v544
        %v900 = vunpack.c.h.b16 %v544
        %v901 = vunpack.c.l.b16 %v545
        %v902 = vunpack.c.h.b16 %v545
        %v903 = vunpack.c.l.b16 %v546
        %v904 = vunpack.c.h.b16 %v546
        %v905 = vunpack.c.l.b16 %v547
        %v906 = vunpack.c.h.b16 %v547
        %v907 = vunpack.c.l.b16 %v548
        %v908 = vunpack.c.h.b16 %v548
        %v909 = vunpack.c.l.b16 %v549
        %v910 = vunpack.c.h.b16 %v549
        %v911 = vunpack.c.l.b16 %v550
        %v912 = vunpack.c.h.b16 %v550
        %v913 = vunpack.c.l.b16 %v551
        %v914 = vunpack.c.h.b16 %v551
        %v915 = vunpack.c.l.b16 %v552
        %v916 = vunpack.c.h.b16 %v552
        %v917 = vunpack.c.l.b16 %v553
        %v918 = vunpack.c.h.b16 %v553
        %v919 = vunpack.c.l.b16 %v554
        %v920 = vunpack.c.h.b16 %v554
        %v921 = vunpack.c.l.b16 %v555
        %v922 = vunpack.c.h.b16 %v555
        %v923 = vunpack.c.l.b16 %v556
        %v924 = vunpack.c.h.b16 %v556
        %v925 = vunpack.c.l.b16 %v557
        %v926 = vunpack.c.h.b16 %v557
        %v927 = vunpack.c.l.b16 %v558
        %v928 = vunpack.c.h.b16 %v558
        %v929 = vunpack.c.l.b16 %v559
        %v930 = vunpack.c.h.b16 %v559
        %v931 = vunpack.c.l.b16 %v560
        %v932 = vunpack.c.h.b16 %v560
        %v933 = vunpack.c.l.b16 %v561
        %v934 = vunpack.c.h.b16 %v561
        %v935 = vunpack.c.l.b16 %v562
        %v936 = vunpack.c.h.b16 %v562
        %v937 = vunpack.c.l.b16 %v563
        %v938 = vunpack.c.h.b16 %v563
        %v939 = vunpack.c.l.b16 %v564
        %v940 = vunpack.c.h.b16 %v564
        %v941 = vunpack.c.l.b16 %v565
        %v942 = vunpack.c.h.b16 %v565
        %v943 = vunpack.c.l.b16 %v566
        %v944 = vunpack.c.h.b16 %v566
        %v945 = vunpack.c.l.b16 %v567
        %v946 = vunpack.c.h.b16 %v567
        %v947 = vunpack.c.l.b16 %v568
        %v948 = vunpack.c.h.b16 %v568
        %v949 = vunpack.c.l.b16 %v569
        %v950 = vunpack.c.h.b16 %v569
        %v951 = vunpack.c.l.b16 %v570
        %v952 = vunpack.c.h.b16 %v570
        %v953 = vunpack.c.l.b16 %v571
        %v954 = vunpack.c.h.b16 %v571
        %v955 = vunpack.c.l.b16 %v572
        %v956 = vunpack.c.h.b16 %v572
        %v957 = vunpack.c.l.b16 %v573
        %v958 = vunpack.c.h.b16 %v573
        %v959 = vunpack.c.l.b16 %v574
        %v960 = vunpack.c.h.b16 %v574
        %v961 = vunpack.c.l.b16 %v575
        %v962 = vunpack.c.h.b16 %v575
        %v963 = vunpack.c.l.b16 %v576
        %v964 = vunpack.c.h.b16 %v576
        %v965 = vunpack.c.l.b16 %v577
        %v966 = vunpack.c.h.b16 %v577
        %v967 = vunpack.c.l.b16 %v578
        %v968 = vunpack.c.h.b16 %v578
        %v969 = vunpack.c.l.b16 %v579
        %v970 = vunpack.c.h.b16 %v579
        %v971 = vunpack.c.l.b16 %v580
        %v972 = vunpack.c.h.b16 %v580
        %v973 = vunpack.c.l.b16 %v581
        %v974 = vunpack.c.h.b16 %v581
        %v975 = vunpack.c.l.b16 %v582
        %v976 = vunpack.c.h.b16 %v582
        %v977 = vunpack.c.l.b16 %v583
        %v978 = vunpack.c.h.b16 %v583
        %v979 = vunpack.c.l.b16 %v584
        %v980 = vunpack.c.h.b16 %v584
        %v981 = vunpack.c.l.b16 %v585
        %v982 = vunpack.c.h.b16 %v585
        %v983 = vunpack.c.l.b16 %v586
        %v984 = vunpack.c.h.b16 %v586
        %v985 = vunpack.c.l.b16 %v587
        %v986 = vunpack.c.h.b16 %v587
        %v987 = vunpack.c.l.b16 %v588
        %v988 = vunpack.c.h.b16 %v588
        %v989 = vunpack.c.l.b16 %v589
        %v990 = vunpack.c.h.b16 %v589
        %v991 = vunpack.c.l.b16 %v590
        %v992 = vunpack.c.h.b16 %v590
        %v993 = vunpack.c.l.b16 %v591
        %v994 = vunpack.c.h.b16 %v591
        %v995 = vunpack.c.l.b16 %v592
        %v996 = vunpack.c.h.b16 %v592
        %v997 = vunpack.c.l.b16 %v593
        %v998 = vunpack.c.h.b16 %v593
        %v999 = vunpack.c.l.b16 %v594
        %v1000 = vunpack.c.h.b16 %v594
        %v1001 = vunpack.c.l.b16 %v595
        %v1002 = vunpack.c.h.b16 %v595
        %v1003 = vunpack.c.l.b16 %v596
        %v1004 = vunpack.c.h.b16 %v596
        %v1005 = vunpack.c.l.b16 %v597
        %v1006 = vunpack.c.h.b16 %v597
        %v1007 = vunpack.c.l.b16 %v598
        %v1008 = vunpack.c.h.b16 %v598
        %v1009 = vunpack.c.l.b16 %v599
        %v1010 = vunpack.c.h.b16 %v599
        %v1011 = vunpack.c.l.b16 %v600
        %v1012 = vunpack.c.h.b16 %v600
        %v1013 = vunpack.c.l.b16 %v601
        %v1014 = vunpack.c.h.b16 %v601
        %v1015 = vunpack.c.l.b16 %v602
        %v1016 = vunpack.c.h.b16 %v602
        %v1017 = vunpack.c.l.b16 %v603
        %v1018 = vunpack.c.h.b16 %v603
        %v1019 = vunpack.c.l.b16 %v604
        %v1020 = vunpack.c.h.b16 %v604
        %v1021 = vunpack.c.l.b16 %v605
        %v1022 = vunpack.c.h.b16 %v605
        %v1023 = vunpack.c.l.b16 %v606
        %v1024 = vunpack.c.h.b16 %v606
        %v1025 = vunpack.c.l.b16 %v607
        %v1026 = vunpack.c.h.b16 %v607
        %v1027 = vunpack.c.l.b16 %v608
        %v1028 = vunpack.c.h.b16 %v608
        %v1029 = vunpack.c.l.b16 %v609
        %v1030 = vunpack.c.h.b16 %v609
        %v1031 = vunpack.c.l.b16 %v610
        %v1032 = vunpack.c.h.b16 %v610
        %v1033 = vpack.c.b16 %v781, %v777
        %v1034 = vpack.c.b16 %v782, %v778
        %v1035 = vpack.c.b16 %v783, %v779
        %v1036 = vpack.c.b16 %v784, %v780
        %v1037 = vpack.c.b16 %v789, %v785
        %v1038 = vpack.c.b16 %v790, %v786
        %v1039 = vpack.c.b16 %v791, %v787
        %v1040 = vpack.c.b16 %v792, %v788
        %v1041 = vpack.c.b16 %v797, %v793
        %v1042 = vpack.c.b16 %v798, %v794
        %v1043 = vpack.c.b16 %v799, %v795
        %v1044 = vpack.c.b16 %v800, %v796
        %v1045 = vpack.c.b16 %v805, %v801
        %v1046 = vpack.c.b16 %v806, %v802
        %v1047 = vpack.c.b16 %v807, %v803
        %v1048 = vpack.c.b16 %v808, %v804
        %v1049 = vpack.c.b16 %v813, %v809
        %v1050 = vpack.c.b16 %v814, %v810
        %v1051 = vpack.c.b16 %v815, %v811
        %v1052 = vpack.c.b16 %v816, %v812
        %v1053 = vpack.c.b16 %v821, %v817
        %v1054 = vpack.c.b16 %v822, %v818
        %v1055 = vpack.c.b16 %v823, %v819
        %v1056 = vpack.c.b16 %v824, %v820
        %v1057 = vpack.c.b16 %v829, %v825
        %v1058 = vpack.c.b16 %v830, %v826
        %v1059 = vpack.c.b16 %v831, %v827
        %v1060 = vpack.c.b16 %v832, %v828
        %v1061 = vpack.c.b16 %v837, %v833
        %v1062 = vpack.c.b16 %v838, %v834
        %v1063 = vpack.c.b16 %v839, %v835
        %v1064 = vpack.c.b16 %v840, %v836
        %v1065 = vpack.c.b16 %v845, %v841
        %v1066 = vpack.c.b16 %v846, %v842
        %v1067 = vpack.c.b16 %v847, %v843
        %v1068 = vpack.c.b16 %v848, %v844
        %v1069 = vpack.c.b16 %v853, %v849
        %v1070 = vpack.c.b16 %v854, %v850
        %v1071 = vpack.c.b16 %v855, %v851
        %v1072 = vpack.c.b16 %v856, %v852
        %v1073 = vpack.c.b16 %v861, %v857
        %v1074 = vpack.c.b16 %v862, %v858
        %v1075 = vpack.c.b16 %v863, %v859
        %v1076 = vpack.c.b16 %v864, %v860
        %v1077 = vpack.c.b16 %v869, %v865
        %v1078 = vpack.c.b16 %v870, %v866
        %v1079 = vpack.c.b16 %v871, %v867
        %v1080 = vpack.c.b16 %v872, %v868
        %v1081 = vpack.c.b16 %v877, %v873
        %v1082 = vpack.c.b16 %v878, %v874
        %v1083 = vpack.c.b16 %v879, %v875
        %v1084 = vpack.c.b16 %v880, %v876
        %v1085 = vpack.c.b16 %v885, %v881
        %v1086 = vpack.c.b16 %v886, %v882
        %v1087 = vpack.c.b16 %v887, %v883
        %v1088 = vpack.c.b16 %v888, %v884
        %v1089 = vpack.c.b16 %v893, %v889
        %v1090 = vpack.c.b16 %v894, %v890
        %v1091 = vpack.c.b16 %v895, %v891
        %v1092 = vpack.c.b16 %v896, %v892
        %v1093 = vpack.c.b16 %v901, %v897
        %v1094 = vpack.c.b16 %v902, %v898
        %v1095 = vpack.c.b16 %v903, %v899
        %v1096 = vpack.c.b16 %v904, %v900
        %v1097 = vpack.c.b16 %v909, %v905
        %v1098 = vpack.c.b16 %v910, %v906
        %v1099 = vpack.c.b16 %v911, %v907
        %v1100 = vpack.c.b16 %v912, %v908
        %v1101 = vpack.c.b16 %v917, %v913
        %v1102 = vpack.c.b16 %v918, %v914
        %v1103 = vpack.c.b16 %v919, %v915
        %v1104 = vpack.c.b16 %v920, %v916
        %v1105 = vpack.c.b16 %v925, %v921
        %v1106 = vpack.c.b16 %v926, %v922
        %v1107 = vpack.c.b16 %v927, %v923
        %v1108 = vpack.c.b16 %v928, %v924
        %v1109 = vpack.c.b16 %v933, %v929
        %v1110 = vpack.c.b16 %v934, %v930
        %v1111 = vpack.c.b16 %v935, %v931
        %v1112 = vpack.c.b16 %v936, %v932
        %v1113 = vpack.c.b16 %v941, %v937
        %v1114 = vpack.c.b16 %v942, %v938
        %v1115 = vpack.c.b16 %v943, %v939
        %v1116 = vpack.c.b16 %v944, %v940
        %v1117 = vpack.c.b16 %v949, %v945
        %v1118 = vpack.c.b16 %v950, %v946
        %v1119 = vpack.c.b16 %v951, %v947
        %v1120 = vpack.c.b16 %v952, %v948
        %v1121 = vpack.c.b16 %v957, %v953
        %v1122 = vpack.c.b16 %v958, %v954
        %v1123 = vpack.c.b16 %v959, %v955
        %v1124 = vpack.c.b16 %v960, %v956
        %v1125 = vpack.c.b16 %v965, %v961
        %v1126 = vpack.c.b16 %v966, %v962
        %v1127 = vpack.c.b16 %v967, %v963
        %v1128 = vpack.c.b16 %v968, %v964
        %v1129 = vpack.c.b16 %v973, %v969
        %v1130 = vpack.c.b16 %v974, %v970
        %v1131 = vpack.c.b16 %v975, %v971
        %v1132 = vpack.c.b16 %v976, %v972
        %v1133 = vpack.c.b16 %v981, %v977
        %v1134 = vpack.c.b16 %v982, %v978
        %v1135 = vpack.c.b16 %v983, %v979
        %v1136 = vpack.c.b16 %v984, %v980
        %v1137 = vpack.c.b16 %v989, %v985
        %v1138 = vpack.c.b16 %v990, %v986
        %v1139 = vpack.c.b16 %v991, %v987
        %v1140 = vpack.c.b16 %v992, %v988
        %v1141 = vpack.c.b16 %v997, %v993
        %v1142 = vpack.c.b16 %v998, %v994
        %v1143 = vpack.c.b16 %v999, %v995
        %v1144 = vpack.c.b16 %v1000, %v996
        %v1145 = vpack.c.b16 %v1005, %v1001
        %v1146 = vpack.c.b16 %v1006, %v1002
        %v1147 = vpack.c.b16 %v1007, %v1003
        %v1148 = vpack.c.b16 %v1008, %v1004
        %v1149 = vpack.c.b16 %v1013, %v1009
        %v1150 = vpack.c.b16 %v1014, %v1010
        %v1151 = vpack.c.b16 %v1015, %v1011
        %v1152 = vpack.c.b16 %v1016, %v1012
        %v1153 = vpack.c.b16 %v1021, %v1017
        %v1154 = vpack.c.b16 %v1022, %v1018
        %v1155 = vpack.c.b16 %v1023, %v1019
        %v1156 = vpack.c.b16 %v1024, %v1020
        %v1157 = vpack.c.b16 %v1029, %v1025
        %v1158 = vpack.c.b16 %v1030, %v1026
        %v1159 = vpack.c.b16 %v1031, %v1027
        %v1160 = vpack.c.b16 %v1032, %v1028
        %1289 = vmatprep.subr.bf16.mxu0 %v1034
        %1290 = vmatpush1.bf16.msra.mxu0 %v1033
        %1291 = vmatprep.subr.bf16.mxu0 %v1038
        %1292 = vmatpush1.bf16.msra.mxu0 %v1037
        %1293 = vmatprep.subr.bf16.mxu0 %v1042
        %1294 = vmatpush1.bf16.msra.mxu0 %v1041
        %1295 = vmatprep.subr.bf16.mxu0 %v1046
        %1296 = vmatpush1.bf16.msra.mxu0 %v1045
        %1297 = vmatprep.subr.bf16.mxu0 %v1050
        %1298 = vmatpush1.bf16.msra.mxu0 %v1049
        %1299 = vmatprep.subr.bf16.mxu0 %v1054
        %1300 = vmatpush1.bf16.msra.mxu0 %v1053
        %1301 = vmatprep.subr.bf16.mxu0 %v1058
        %1302 = vmatpush1.bf16.msra.mxu0 %v1057
        %1303 = vmatprep.subr.bf16.mxu0 %v1062
        %1304 = vmatpush1.bf16.msra.mxu0 %v1061
        %1305 = vmatprep.subr.bf16.mxu0 %v1066
        %1306 = vmatpush1.bf16.msra.mxu0 %v1065
        %1307 = vmatprep.subr.bf16.mxu0 %v1070
        %1308 = vmatpush1.bf16.msra.mxu0 %v1069
        %1309 = vmatprep.subr.bf16.mxu0 %v1074
        %1310 = vmatpush1.bf16.msra.mxu0 %v1073
        %1311 = vmatprep.subr.bf16.mxu0 %v1078
        %1312 = vmatpush1.bf16.msra.mxu0 %v1077
        %1313 = vmatprep.subr.bf16.mxu0 %v1082
        %1314 = vmatpush1.bf16.msra.mxu0 %v1081
        %1315 = vmatprep.subr.bf16.mxu0 %v1086
        %1316 = vmatpush1.bf16.msra.mxu0 %v1085
        %1317 = vmatprep.subr.bf16.mxu0 %v1090
        %1318 = vmatpush1.bf16.msra.mxu0 %v1089
        %1319 = vmatprep.subr.bf16.mxu0 %v1094
        %1320 = vmatpush1.bf16.msra.mxu0 %v1093
        %1321 = vmatprep.mubr.bf16.mxu0 %v476
        %1322 = vmatmul.mubr.bf16.gmra.mrb[0].mxu0 %v475
        %v1323 = vpop.f32.mrb[0].mxu0
        %v1324 = vadd.f32 %v636, %v1323
        %v1325 = vpop.f32.mrb[0].mxu0
        %v1326 = vadd.f32 %v640, %v1325
        %v1327 = vpop.f32.mrb[0].mxu0
        %v1328 = vadd.f32 %v636, %v1327
        %v1329 = vpop.f32.mrb[0].mxu0
        %v1330 = vadd.f32 %v640, %v1329
        %1331 = vmatprep.mubr.bf16.mxu0 %v480
        %1332 = vmatmul.mubr.bf16.gmra.mrb[0].mxu0 %v479
        %v1333 = vpop.f32.mrb[0].mxu0
        %v1334 = vadd.f32 %v636, %v1333
        %v1335 = vpop.f32.mrb[0].mxu0
        %v1336 = vadd.f32 %v640, %v1335
        %v1337 = vpop.f32.mrb[0].mxu0
        %v1338 = vpop.f32.mrb[0].mxu0
        %1339 = vdwg.mxu0
        %1340 = vmatprep.subr.bf16.mxu0 %v1098
        %1341 = vmatpush1.bf16.msra.mxu0 %v1097
        %1342 = vmatprep.subr.bf16.mxu0 %v1102
        %1343 = vmatpush1.bf16.msra.mxu0 %v1101
        %1344 = vmatprep.subr.bf16.mxu0 %v1106
        %1345 = vmatpush1.bf16.msra.mxu0 %v1105
        %1346 = vmatprep.subr.bf16.mxu0 %v1110
        %1347 = vmatpush1.bf16.msra.mxu0 %v1109
        %1348 = vmatprep.subr.bf16.mxu0 %v1114
        %1349 = vmatpush1.bf16.msra.mxu0 %v1113
        %1350 = vmatprep.subr.bf16.mxu0 %v1118
        %1351 = vmatpush1.bf16.msra.mxu0 %v1117
        %1352 = vmatprep.subr.bf16.mxu0 %v1122
        %1353 = vmatpush1.bf16.msra.mxu0 %v1121
        %1354 = vmatprep.subr.bf16.mxu0 %v1126
        %1355 = vmatpush1.bf16.msra.mxu0 %v1125
        %1356 = vmatprep.subr.bf16.mxu0 %v1130
        %1357 = vmatpush1.bf16.msra.mxu0 %v1129
        %1358 = vmatprep.subr.bf16.mxu0 %v1134
        %1359 = vmatpush1.bf16.msra.mxu0 %v1133
        %1360 = vmatprep.subr.bf16.mxu0 %v1138
        %1361 = vmatpush1.bf16.msra.mxu0 %v1137
        %1362 = vmatprep.subr.bf16.mxu0 %v1142
        %1363 = vmatpush1.bf16.msra.mxu0 %v1141
        %1364 = vmatprep.subr.bf16.mxu0 %v1146
        %1365 = vmatpush1.bf16.msra.mxu0 %v1145
        %1366 = vmatprep.subr.bf16.mxu0 %v1150
        %1367 = vmatpush1.bf16.msra.mxu0 %v1149
        %1368 = vmatprep.subr.bf16.mxu0 %v1154
        %1369 = vmatpush1.bf16.msra.mxu0 %v1153
        %1370 = vmatprep.subr.bf16.mxu0 %v1158
        %1371 = vmatpush1.bf16.msra.mxu0 %v1157
        %1372 = vmatprep.mubr.bf16.mxu0 %v478
        %1373 = vmatmul.mubr.bf16.gmra.mrb[0].mxu0 %v477
        %v1374 = vpop.f32.mrb[0].mxu0
        %v1375 = vadd.f32 %v1324, %v1374
        %v1376 = vpop.f32.mrb[0].mxu0
        %v1377 = vadd.f32 %v1326, %v1376
        %v1378 = vpop.f32.mrb[0].mxu0
        %v1379 = vadd.f32 %v1328, %v1378
        %v1380 = vpop.f32.mrb[0].mxu0
        %v1381 = vadd.f32 %v1330, %v1380
        %1382 = vmatprep.mubr.bf16.mxu0 %v482
        %1383 = vmatmul.mubr.bf16.gmra.mrb[0].mxu0 %v481
        %v1384 = vpop.f32.mrb[0].mxu0
        %v1385 = vadd.f32 %v1334, %v1384
        %v1386 = vpop.f32.mrb[0].mxu0
        %v1387 = vadd.f32 %v1336, %v1386
        %v1388 = vpop.f32.mrb[0].mxu0
        %v1389 = vpop.f32.mrb[0].mxu0
        %1390 = vdwg.mxu0
        %1391 = vmatprep.subr.bf16.mxu0 %v1036
        %1392 = vmatpush1.bf16.msra.mxu0 %v1035
        %1393 = vmatprep.subr.bf16.mxu0 %v1040
        %1394 = vmatpush1.bf16.msra.mxu0 %v1039
        %1395 = vmatprep.subr.bf16.mxu0 %v1044
        %1396 = vmatpush1.bf16.msra.mxu0 %v1043
        %1397 = vmatprep.subr.bf16.mxu0 %v1048
        %1398 = vmatpush1.bf16.msra.mxu0 %v1047
        %1399 = vmatprep.subr.bf16.mxu0 %v1052
        %1400 = vmatpush1.bf16.msra.mxu0 %v1051
        %1401 = vmatprep.subr.bf16.mxu0 %v1056
        %1402 = vmatpush1.bf16.msra.mxu0 %v1055
        %1403 = vmatprep.subr.bf16.mxu0 %v1060
        %1404 = vmatpush1.bf16.msra.mxu0 %v1059
        %1405 = vmatprep.subr.bf16.mxu0 %v1064
        %1406 = vmatpush1.bf16.msra.mxu0 %v1063
        %1407 = vmatprep.subr.bf16.mxu0 %v1068
        %1408 = vmatpush1.bf16.msra.mxu0 %v1067
        %1409 = vmatprep.subr.bf16.mxu0 %v1072
        %1410 = vmatpush1.bf16.msra.mxu0 %v1071
        %1411 = vmatprep.subr.bf16.mxu0 %v1076
        %1412 = vmatpush1.bf16.msra.mxu0 %v1075
        %1413 = vmatprep.subr.bf16.mxu0 %v1080
        %1414 = vmatpush1.bf16.msra.mxu0 %v1079
        %1415 = vmatprep.subr.bf16.mxu0 %v1084
        %1416 = vmatpush1.bf16.msra.mxu0 %v1083
        %1417 = vmatprep.subr.bf16.mxu0 %v1088
        %1418 = vmatpush1.bf16.msra.mxu0 %v1087
        %1419 = vmatprep.subr.bf16.mxu0 %v1092
        %1420 = vmatpush1.bf16.msra.mxu0 %v1091
        %1421 = vmatprep.subr.bf16.mxu0 %v1096
        %1422 = vmatpush1.bf16.msra.mxu0 %v1095
        %1423 = vmatprep.mubr.bf16.mxu0 %v476
        %1424 = vmatmul.mubr.bf16.gmra.mrb[0].mxu0 %v475
        %v1425 = vpop.f32.mrb[0].mxu0
        %v1426 = vadd.f32 %v644, %v1425
        %v1427 = vpop.f32.mrb[0].mxu0
        %v1428 = vadd.f32 %v648, %v1427
        %v1429 = vpop.f32.mrb[0].mxu0
        %v1430 = vadd.f32 %v644, %v1429
        %v1431 = vpop.f32.mrb[0].mxu0
        %v1432 = vadd.f32 %v648, %v1431
        %1433 = vmatprep.mubr.bf16.mxu0 %v480
        %1434 = vmatmul.mubr.bf16.gmra.mrb[0].mxu0 %v479
        %v1435 = vpop.f32.mrb[0].mxu0
        %v1436 = vadd.f32 %v644, %v1435
        %v1437 = vpop.f32.mrb[0].mxu0
        %v1438 = vadd.f32 %v648, %v1437
        %v1439 = vpop.f32.mrb[0].mxu0
        %v1440 = vpop.f32.mrb[0].mxu0
        %1441 = vdwg.mxu0
        %1442 = vmatprep.subr.bf16.mxu0 %v1100
        %1443 = vmatpush1.bf16.msra.mxu0 %v1099
        %1444 = vmatprep.subr.bf16.mxu0 %v1104
        %1445 = vmatpush1.bf16.msra.mxu0 %v1103
        %1446 = vmatprep.subr.bf16.mxu0 %v1108
        %1447 = vmatpush1.bf16.msra.mxu0 %v1107
        %1448 = vmatprep.subr.bf16.mxu0 %v1112
        %1449 = vmatpush1.bf16.msra.mxu0 %v1111
        %1450 = vmatprep.subr.bf16.mxu0 %v1116
        %1451 = vmatpush1.bf16.msra.mxu0 %v1115
        %1452 = vmatprep.subr.bf16.mxu0 %v1120
        %1453 = vmatpush1.bf16.msra.mxu0 %v1119
        %1454 = vmatprep.subr.bf16.mxu0 %v1124
        %1455 = vmatpush1.bf16.msra.mxu0 %v1123
        %1456 = vmatprep.subr.bf16.mxu0 %v1128
        %1457 = vmatpush1.bf16.msra.mxu0 %v1127
        %1458 = vmatprep.subr.bf16.mxu0 %v1132
        %1459 = vmatpush1.bf16.msra.mxu0 %v1131
        %1460 = vmatprep.subr.bf16.mxu0 %v1136
        %1461 = vmatpush1.bf16.msra.mxu0 %v1135
        %1462 = vmatprep.subr.bf16.mxu0 %v1140
        %1463 = vmatpush1.bf16.msra.mxu0 %v1139
        %1464 = vmatprep.subr.bf16.mxu0 %v1144
        %1465 = vmatpush1.bf16.msra.mxu0 %v1143
        %1466 = vmatprep.subr.bf16.mxu0 %v1148
        %1467 = vmatpush1.bf16.msra.mxu0 %v1147
        %1468 = vmatprep.subr.bf16.mxu0 %v1152
        %1469 = vmatpush1.bf16.msra.mxu0 %v1151
        %1470 = vmatprep.subr.bf16.mxu0 %v1156
        %1471 = vmatpush1.bf16.msra.mxu0 %v1155
        %1472 = vmatprep.subr.bf16.mxu0 %v1160
        %1473 = vmatpush1.bf16.msra.mxu0 %v1159
        %1474 = vmatprep.mubr.bf16.mxu0 %v478
        %1475 = vmatmul.mubr.bf16.gmra.mrb[0].mxu0 %v477
        %v1476 = vpop.f32.mrb[0].mxu0
        %v1477 = vadd.f32 %v1426, %v1476
        %v1478 = vpop.f32.mrb[0].mxu0
        %v1479 = vadd.f32 %v1428, %v1478
        %v1480 = vpop.f32.mrb[0].mxu0
        %v1481 = vadd.f32 %v1430, %v1480
        %v1482 = vpop.f32.mrb[0].mxu0
        %v1483 = vadd.f32 %v1432, %v1482
        %1484 = vmatprep.mubr.bf16.mxu0 %v482
        %1485 = vmatmul.mubr.bf16.gmra.mrb[0].mxu0 %v481
        %v1486 = vpop.f32.mrb[0].mxu0
        %v1487 = vadd.f32 %v1436, %v1486
        %v1488 = vpop.f32.mrb[0].mxu0
        %v1489 = vadd.f32 %v1438, %v1488
        %v1490 = vpop.f32.mrb[0].mxu0
        %v1491 = vpop.f32.mrb[0].mxu0
        %1492 = vdwg.mxu0
        %vm1493 = vcmp.gt.f32.partialorder %v1375, 0.0
        %vm1494 = vcmp.gt.f32.partialorder %v1377, 0.0
        %vm1495 = vcmp.gt.f32.partialorder %v1477, 0.0
        %vm1496 = vcmp.gt.f32.partialorder %v1479, 0.0
        %vm1497 = vcmp.gt.f32.partialorder %v1379, 0.0
        %vm1498 = vcmp.gt.f32.partialorder %v1381, 0.0
        %vm1499 = vcmp.gt.f32.partialorder %v1481, 0.0
        %vm1500 = vcmp.gt.f32.partialorder %v1483, 0.0
        %vm1501 = vcmp.gt.f32.partialorder %v1385, 0.0
        %vm1502 = vcmp.gt.f32.partialorder %v1387, 0.0
        %vm1503 = vcmp.gt.f32.partialorder %v1487, 0.0
        %vm1504 = vcmp.gt.f32.partialorder %v1489, 0.0
        %v1505 = vmul.f32 %v1375, 0.2
        %v1506 = vmul.f32 %v1377, 0.2
        %v1507 = vmul.f32 %v1477, 0.2
        %v1508 = vmul.f32 %v1479, 0.2
        %v1509 = vmul.f32 %v1379, 0.2
        %v1510 = vmul.f32 %v1381, 0.2
        %v1511 = vmul.f32 %v1481, 0.2
        %v1512 = vmul.f32 %v1483, 0.2
        %v1513 = vmul.f32 %v1385, 0.2
        %v1514 = vmul.f32 %v1387, 0.2
        %v1515 = vmul.f32 %v1487, 0.2
        %v1516 = vmul.f32 %v1489, 0.2
        %v1517 = vsel %vm1493, %v1375, %v1505
        %v1518 = vsel %vm1494, %v1377, %v1506
        %v1519 = vsel %vm1495, %v1477, %v1507
        %v1520 = vsel %vm1496, %v1479, %v1508
        %v1521 = vsel %vm1497, %v1379, %v1509
        %v1522 = vsel %vm1498, %v1381, %v1510
        %v1523 = vsel %vm1499, %v1481, %v1511
        %v1524 = vsel %vm1500, %v1483, %v1512
        %v1525 = vsel %vm1501, %v1385, %v1513
        %v1526 = vsel %vm1502, %v1387, %v1514
        %v1527 = vsel %vm1503, %v1487, %v1515
        %v1528 = vsel %vm1504, %v1489, %v1516
        %v1529 = vmul.f32 %v1517, 1.4142135
        %v1530 = vmul.f32 %v1518, 1.4142135
        %v1531 = vmul.f32 %v1519, 1.4142135
        %v1532 = vmul.f32 %v1520, 1.4142135
        %v1533 = vmul.f32 %v1521, 1.4142135
        %v1534 = vmul.f32 %v1522, 1.4142135
        %v1535 = vmul.f32 %v1523, 1.4142135
        %v1536 = vmul.f32 %v1524, 1.4142135
        %v1537 = vmul.f32 %v1525, 1.4142135
        %v1538 = vmul.f32 %v1526, 1.4142135
        %v1539 = vmul.f32 %v1527, 1.4142135
        %v1540 = vmul.f32 %v1528, 1.4142135
        %v1541 = vpack.c.bf16 %v1533, %v1529
        %v1542 = vpack.c.bf16 %v1534, %v1530
        %v1543 = vpack.c.bf16 %v1535, %v1531
        %v1544 = vpack.c.bf16 %v1536, %v1532
        %v1545 = vpack.c.bf16 %v1537, %v1537
        %v1546 = vpack.c.bf16 %v1538, %v1538
        %v1547 = vpack.c.bf16 %v1539, %v1539
        %v1548 = vpack.c.bf16 %v1540, %v1540
        %s1549 = scalar_lea.vmem %s375, 1024 [#allocation5]
        %v1550 = vld [vmem:[%s1549] sm:$0xff]
        %v1551 = vld [vmem:[%s1549 + $0x8] sm:$0xff]
        %v1552 = vld [vmem:[%s1549 + $0x10] sm:$0xff]
        %v1553 = vld [vmem:[%s1549 + $0x18] sm:$0xff]
        %v1554 = vld [vmem:[%s1549 + $0x20] sm:$0xff]
        %v1555 = vld [vmem:[%s1549 + $0x28] sm:$0xff]
        %v1556 = vld [vmem:[%s1549 + $0x30] sm:$0xff]
        %v1557 = vld [vmem:[%s1549 + $0x38] sm:$0xff]
        %v1558 = vld [vmem:[%s1549 + $0x40] sm:$0xff]
        %v1559 = vld [vmem:[%s1549 + $0x48] sm:$0xff]
        %v1560 = vld [vmem:[%s1549 + $0x50] sm:$0xff]
        %v1561 = vld [vmem:[%s1549 + $0x58] sm:$0xff]
        %v1562 = vld [vmem:[%s1549 + $0x60] sm:$0xff]
        %v1563 = vld [vmem:[%s1549 + $0x68] sm:$0xff]
        %v1564 = vld [vmem:[%s1549 + $0x70] sm:$0xff]
        %v1565 = vld [vmem:[%s1549 + $0x78] sm:$0xff]
        %v1566 = vld [vmem:[%s1549 + $0x80] sm:$0xff]
        %v1567 = vld [vmem:[%s1549 + $0x88] sm:$0xff]
        %v1568 = vld [vmem:[%s1549 + $0x90] sm:$0xff]
        %v1569 = vld [vmem:[%s1549 + $0x98] sm:$0xff]
        %v1570 = vld [vmem:[%s1549 + $0xa0] sm:$0xff]
        %v1571 = vld [vmem:[%s1549 + $0xa8] sm:$0xff]
        %v1572 = vld [vmem:[%s1549 + $0xb0] sm:$0xff]
        %v1573 = vld [vmem:[%s1549 + $0xb8] sm:$0xff]
        %v1574 = vld [vmem:[%s1549 + $0xc0] sm:$0xff]
        %v1575 = vld [vmem:[%s1549 + $0xc8] sm:$0xff]
        %v1576 = vld [vmem:[%s1549 + $0xd0] sm:$0xff]
        %v1577 = vld [vmem:[%s1549 + $0xd8] sm:$0xff]
        %v1578 = vld [vmem:[%s1549 + $0xe0] sm:$0xff]
        %v1579 = vld [vmem:[%s1549 + $0xe8] sm:$0xff]
        %v1580 = vld [vmem:[%s1549 + $0xf0] sm:$0xff]
        %v1581 = vld [vmem:[%s1549 + $0xf8] sm:$0xff]
        %v1582 = vld [vmem:[%s1549 + $0x100] sm:$0xff]
        %v1583 = vld [vmem:[%s1549 + $0x108] sm:$0xff]
        %v1584 = vld [vmem:[%s1549 + $0x110] sm:$0xff]
        %v1585 = vld [vmem:[%s1549 + $0x118] sm:$0xff]
        %v1586 = vld [vmem:[%s1549 + $0x120] sm:$0xff]
        %v1587 = vld [vmem:[%s1549 + $0x128] sm:$0xff]
        %v1588 = vld [vmem:[%s1549 + $0x130] sm:$0xff]
        %v1589 = vld [vmem:[%s1549 + $0x138] sm:$0xff]
        %v1590 = vld [vmem:[%s1549 + $0x140] sm:$0xff]
        %v1591 = vld [vmem:[%s1549 + $0x148] sm:$0xff]
        %v1592 = vld [vmem:[%s1549 + $0x150] sm:$0xff]
        %v1593 = vld [vmem:[%s1549 + $0x158] sm:$0xff]
        %v1594 = vld [vmem:[%s1549 + $0x160] sm:$0xff]
        %v1595 = vld [vmem:[%s1549 + $0x168] sm:$0xff]
        %v1596 = vld [vmem:[%s1549 + $0x170] sm:$0xff]
        %v1597 = vld [vmem:[%s1549 + $0x178] sm:$0xff]
        %v1598 = vld [vmem:[%s1549 + $0x180] sm:$0xff]
        %v1599 = vld [vmem:[%s1549 + $0x188] sm:$0xff]
        %v1600 = vld [vmem:[%s1549 + $0x190] sm:$0xff]
        %v1601 = vld [vmem:[%s1549 + $0x198] sm:$0xff]
        %v1602 = vld [vmem:[%s1549 + $0x1a0] sm:$0xff]
        %v1603 = vld [vmem:[%s1549 + $0x1a8] sm:$0xff]
        %v1604 = vld [vmem:[%s1549 + $0x1b0] sm:$0xff]
        %v1605 = vld [vmem:[%s1549 + $0x1b8] sm:$0xff]
        %v1606 = vld [vmem:[%s1549 + $0x1c0] sm:$0xff]
        %v1607 = vld [vmem:[%s1549 + $0x1c8] sm:$0xff]
        %v1608 = vld [vmem:[%s1549 + $0x1d0] sm:$0xff]
        %v1609 = vld [vmem:[%s1549 + $0x1d8] sm:$0xff]
        %v1610 = vld [vmem:[%s1549 + $0x1e0] sm:$0xff]
        %v1611 = vld [vmem:[%s1549 + $0x1e8] sm:$0xff]
        %v1612 = vld [vmem:[%s1549 + $0x1f0] sm:$0xff]
        %v1613 = vld [vmem:[%s1549 + $0x1f8] sm:$0xff]
        %v1614 = vld [vmem:[%s1549 + $0x200] sm:$0xff]
        %v1615 = vld [vmem:[%s1549 + $0x208] sm:$0xff]
        %v1616 = vld [vmem:[%s1549 + $0x210] sm:$0xff]
        %v1617 = vld [vmem:[%s1549 + $0x218] sm:$0xff]
        %v1618 = vld [vmem:[%s1549 + $0x220] sm:$0xff]
        %v1619 = vld [vmem:[%s1549 + $0x228] sm:$0xff]
        %v1620 = vld [vmem:[%s1549 + $0x230] sm:$0xff]
        %v1621 = vld [vmem:[%s1549 + $0x238] sm:$0xff]
        %v1622 = vld [vmem:[%s1549 + $0x240] sm:$0xff]
        %v1623 = vld [vmem:[%s1549 + $0x248] sm:$0xff]
        %v1624 = vld [vmem:[%s1549 + $0x250] sm:$0xff]
        %v1625 = vld [vmem:[%s1549 + $0x258] sm:$0xff]
        %v1626 = vld [vmem:[%s1549 + $0x260] sm:$0xff]
        %v1627 = vld [vmem:[%s1549 + $0x268] sm:$0xff]
        %v1628 = vld [vmem:[%s1549 + $0x270] sm:$0xff]
        %v1629 = vld [vmem:[%s1549 + $0x278] sm:$0xff]
        %v1630 = vld [vmem:[%s1549 + $0x280] sm:$0xff]
        %v1631 = vld [vmem:[%s1549 + $0x288] sm:$0xff]
        %v1632 = vld [vmem:[%s1549 + $0x290] sm:$0xff]
        %v1633 = vld [vmem:[%s1549 + $0x298] sm:$0xff]
        %v1634 = vld [vmem:[%s1549 + $0x2a0] sm:$0xff]
        %v1635 = vld [vmem:[%s1549 + $0x2a8] sm:$0xff]
        %v1636 = vld [vmem:[%s1549 + $0x2b0] sm:$0xff]
        %v1637 = vld [vmem:[%s1549 + $0x2b8] sm:$0xff]
        %v1638 = vld [vmem:[%s1549 + $0x2c0] sm:$0xff]
        %v1639 = vld [vmem:[%s1549 + $0x2c8] sm:$0xff]
        %v1640 = vld [vmem:[%s1549 + $0x2d0] sm:$0xff]
        %v1641 = vld [vmem:[%s1549 + $0x2d8] sm:$0xff]
        %v1642 = vld [vmem:[%s1549 + $0x2e0] sm:$0xff]
        %v1643 = vld [vmem:[%s1549 + $0x2e8] sm:$0xff]
        %v1644 = vld [vmem:[%s1549 + $0x2f0] sm:$0xff]
        %v1645 = vld [vmem:[%s1549 + $0x2f8] sm:$0xff]
        %v1646 = vld [vmem:[%s1549 + $0x300] sm:$0xff]
        %v1647 = vld [vmem:[%s1549 + $0x308] sm:$0xff]
        %v1648 = vld [vmem:[%s1549 + $0x310] sm:$0xff]
        %v1649 = vld [vmem:[%s1549 + $0x318] sm:$0xff]
        %v1650 = vld [vmem:[%s1549 + $0x320] sm:$0xff]
        %v1651 = vld [vmem:[%s1549 + $0x328] sm:$0xff]
        %v1652 = vld [vmem:[%s1549 + $0x330] sm:$0xff]
        %v1653 = vld [vmem:[%s1549 + $0x338] sm:$0xff]
        %v1654 = vld [vmem:[%s1549 + $0x340] sm:$0xff]
        %v1655 = vld [vmem:[%s1549 + $0x348] sm:$0xff]
        %v1656 = vld [vmem:[%s1549 + $0x350] sm:$0xff]
        %v1657 = vld [vmem:[%s1549 + $0x358] sm:$0xff]
        %v1658 = vld [vmem:[%s1549 + $0x360] sm:$0xff]
        %v1659 = vld [vmem:[%s1549 + $0x368] sm:$0xff]
        %v1660 = vld [vmem:[%s1549 + $0x370] sm:$0xff]
        %v1661 = vld [vmem:[%s1549 + $0x378] sm:$0xff]
        %v1662 = vld [vmem:[%s1549 + $0x380] sm:$0xff]
        %v1663 = vld [vmem:[%s1549 + $0x388] sm:$0xff]
        %v1664 = vld [vmem:[%s1549 + $0x390] sm:$0xff]
        %v1665 = vld [vmem:[%s1549 + $0x398] sm:$0xff]
        %v1666 = vld [vmem:[%s1549 + $0x3a0] sm:$0xff]
        %v1667 = vld [vmem:[%s1549 + $0x3a8] sm:$0xff]
        %v1668 = vld [vmem:[%s1549 + $0x3b0] sm:$0xff]
        %v1669 = vld [vmem:[%s1549 + $0x3b8] sm:$0xff]
        %v1670 = vld [vmem:[%s1549 + $0x3c0] sm:$0xff]
        %v1671 = vld [vmem:[%s1549 + $0x3c8] sm:$0xff]
        %v1672 = vld [vmem:[%s1549 + $0x3d0] sm:$0xff]
        %v1673 = vld [vmem:[%s1549 + $0x3d8] sm:$0xff]
        %v1674 = vld [vmem:[%s1549 + $0x3e0] sm:$0xff]
        %v1675 = vld [vmem:[%s1549 + $0x3e8] sm:$0xff]
        %v1676 = vld [vmem:[%s1549 + $0x3f0] sm:$0xff]
        %v1677 = vld [vmem:[%s1549 + $0x3f8] sm:$0xff]
        %v1678 = vlaneseq
        %v1679 = vshrl.u32 %v1678, 7
        %v1680 = vsub.s32 1, %v1679
        %v1681 = vrot.slane %v473, %v1680
        %v1682 = vlaneseq
        %v1683 = vshrl.u32 %v1682, 7
        %v1684 = vsub.s32 5, %v1683
        %v1685 = vrot.slane %v473, %v1684
        %v1686 = vlaneseq
        %v1687 = vshrl.u32 %v1686, 7
        %v1688 = vsub.s32 1, %v1687
        %v1689 = vrot.slane %v474, %v1688
        %v1690 = vlaneseq
        %v1691 = vshrl.u32 %v1690, 7
        %v1692 = vsub.s32 5, %v1691
        %v1693 = vrot.slane %v474, %v1692
        %v1698 = vlaneseq
        %v1699 = vshrl.u32 %v1698, 7
        %v1700 = vsub.s32 1, %v1699
        %v1701 = vrot.slane %v1681, %v1700
        %v1702 = vlaneseq
        %v1703 = vshrl.u32 %v1702, 7
        %v1704 = vsub.s32 1, %v1703
        %v1705 = vrot.slane %v1685, %v1704
        %v1706 = vlaneseq
        %v1707 = vshrl.u32 %v1706, 7
        %v1708 = vsub.s32 1, %v1707
        %v1709 = vrot.slane %v1689, %v1708
        %v1710 = vlaneseq
        %v1711 = vshrl.u32 %v1710, 7
        %v1712 = vsub.s32 1, %v1711
        %v1713 = vrot.slane %v1693, %v1712
        %v1842 = vunpack.c.l.b16 %v1550
        %v1843 = vunpack.c.h.b16 %v1550
        %v1844 = vunpack.c.l.b16 %v1551
        %v1845 = vunpack.c.h.b16 %v1551
        %v1846 = vunpack.c.l.b16 %v1552
        %v1847 = vunpack.c.h.b16 %v1552
        %v1848 = vunpack.c.l.b16 %v1553
        %v1849 = vunpack.c.h.b16 %v1553
        %v1850 = vunpack.c.l.b16 %v1554
        %v1851 = vunpack.c.h.b16 %v1554
        %v1852 = vunpack.c.l.b16 %v1555
        %v1853 = vunpack.c.h.b16 %v1555
        %v1854 = vunpack.c.l.b16 %v1556
        %v1855 = vunpack.c.h.b16 %v1556
        %v1856 = vunpack.c.l.b16 %v1557
        %v1857 = vunpack.c.h.b16 %v1557
        %v1858 = vunpack.c.l.b16 %v1558
        %v1859 = vunpack.c.h.b16 %v1558
        %v1860 = vunpack.c.l.b16 %v1559
        %v1861 = vunpack.c.h.b16 %v1559
        %v1862 = vunpack.c.l.b16 %v1560
        %v1863 = vunpack.c.h.b16 %v1560
        %v1864 = vunpack.c.l.b16 %v1561
        %v1865 = vunpack.c.h.b16 %v1561
        %v1866 = vunpack.c.l.b16 %v1562
        %v1867 = vunpack.c.h.b16 %v1562
        %v1868 = vunpack.c.l.b16 %v1563
        %v1869 = vunpack.c.h.b16 %v1563
        %v1870 = vunpack.c.l.b16 %v1564
        %v1871 = vunpack.c.h.b16 %v1564
        %v1872 = vunpack.c.l.b16 %v1565
        %v1873 = vunpack.c.h.b16 %v1565
        %v1874 = vunpack.c.l.b16 %v1566
        %v1875 = vunpack.c.h.b16 %v1566
        %v1876 = vunpack.c.l.b16 %v1567
        %v1877 = vunpack.c.h.b16 %v1567
        %v1878 = vunpack.c.l.b16 %v1568
        %v1879 = vunpack.c.h.b16 %v1568
        %v1880 = vunpack.c.l.b16 %v1569
        %v1881 = vunpack.c.h.b16 %v1569
        %v1882 = vunpack.c.l.b16 %v1570
        %v1883 = vunpack.c.h.b16 %v1570
        %v1884 = vunpack.c.l.b16 %v1571
        %v1885 = vunpack.c.h.b16 %v1571
        %v1886 = vunpack.c.l.b16 %v1572
        %v1887 = vunpack.c.h.b16 %v1572
        %v1888 = vunpack.c.l.b16 %v1573
        %v1889 = vunpack.c.h.b16 %v1573
        %v1890 = vunpack.c.l.b16 %v1574
        %v1891 = vunpack.c.h.b16 %v1574
        %v1892 = vunpack.c.l.b16 %v1575
        %v1893 = vunpack.c.h.b16 %v1575
        %v1894 = vunpack.c.l.b16 %v1576
        %v1895 = vunpack.c.h.b16 %v1576
        %v1896 = vunpack.c.l.b16 %v1577
        %v1897 = vunpack.c.h.b16 %v1577
        %v1898 = vunpack.c.l.b16 %v1578
        %v1899 = vunpack.c.h.b16 %v1578
        %v1900 = vunpack.c.l.b16 %v1579
        %v1901 = vunpack.c.h.b16 %v1579
        %v1902 = vunpack.c.l.b16 %v1580
        %v1903 = vunpack.c.h.b16 %v1580
        %v1904 = vunpack.c.l.b16 %v1581
        %v1905 = vunpack.c.h.b16 %v1581
        %v1906 = vunpack.c.l.b16 %v1582
        %v1907 = vunpack.c.h.b16 %v1582
        %v1908 = vunpack.c.l.b16 %v1583
        %v1909 = vunpack.c.h.b16 %v1583
        %v1910 = vunpack.c.l.b16 %v1584
        %v1911 = vunpack.c.h.b16 %v1584
        %v1912 = vunpack.c.l.b16 %v1585
        %v1913 = vunpack.c.h.b16 %v1585
        %v1914 = vunpack.c.l.b16 %v1586
        %v1915 = vunpack.c.h.b16 %v1586
        %v1916 = vunpack.c.l.b16 %v1587
        %v1917 = vunpack.c.h.b16 %v1587
        %v1918 = vunpack.c.l.b16 %v1588
        %v1919 = vunpack.c.h.b16 %v1588
        %v1920 = vunpack.c.l.b16 %v1589
        %v1921 = vunpack.c.h.b16 %v1589
        %v1922 = vunpack.c.l.b16 %v1590
        %v1923 = vunpack.c.h.b16 %v1590
        %v1924 = vunpack.c.l.b16 %v1591
        %v1925 = vunpack.c.h.b16 %v1591
        %v1926 = vunpack.c.l.b16 %v1592
        %v1927 = vunpack.c.h.b16 %v1592
        %v1928 = vunpack.c.l.b16 %v1593
        %v1929 = vunpack.c.h.b16 %v1593
        %v1930 = vunpack.c.l.b16 %v1594
        %v1931 = vunpack.c.h.b16 %v1594
        %v1932 = vunpack.c.l.b16 %v1595
        %v1933 = vunpack.c.h.b16 %v1595
        %v1934 = vunpack.c.l.b16 %v1596
        %v1935 = vunpack.c.h.b16 %v1596
        %v1936 = vunpack.c.l.b16 %v1597
        %v1937 = vunpack.c.h.b16 %v1597
        %v1938 = vunpack.c.l.b16 %v1598
        %v1939 = vunpack.c.h.b16 %v1598
        %v1940 = vunpack.c.l.b16 %v1599
        %v1941 = vunpack.c.h.b16 %v1599
        %v1942 = vunpack.c.l.b16 %v1600
        %v1943 = vunpack.c.h.b16 %v1600
        %v1944 = vunpack.c.l.b16 %v1601
        %v1945 = vunpack.c.h.b16 %v1601
        %v1946 = vunpack.c.l.b16 %v1602
        %v1947 = vunpack.c.h.b16 %v1602
        %v1948 = vunpack.c.l.b16 %v1603
        %v1949 = vunpack.c.h.b16 %v1603
        %v1950 = vunpack.c.l.b16 %v1604
        %v1951 = vunpack.c.h.b16 %v1604
        %v1952 = vunpack.c.l.b16 %v1605
        %v1953 = vunpack.c.h.b16 %v1605
        %v1954 = vunpack.c.l.b16 %v1606
        %v1955 = vunpack.c.h.b16 %v1606
        %v1956 = vunpack.c.l.b16 %v1607
        %v1957 = vunpack.c.h.b16 %v1607
        %v1958 = vunpack.c.l.b16 %v1608
        %v1959 = vunpack.c.h.b16 %v1608
        %v1960 = vunpack.c.l.b16 %v1609
        %v1961 = vunpack.c.h.b16 %v1609
        %v1962 = vunpack.c.l.b16 %v1610
        %v1963 = vunpack.c.h.b16 %v1610
        %v1964 = vunpack.c.l.b16 %v1611
        %v1965 = vunpack.c.h.b16 %v1611
        %v1966 = vunpack.c.l.b16 %v1612
        %v1967 = vunpack.c.h.b16 %v1612
        %v1968 = vunpack.c.l.b16 %v1613
        %v1969 = vunpack.c.h.b16 %v1613
        %v1970 = vunpack.c.l.b16 %v1614
        %v1971 = vunpack.c.h.b16 %v1614
        %v1972 = vunpack.c.l.b16 %v1615
        %v1973 = vunpack.c.h.b16 %v1615
        %v1974 = vunpack.c.l.b16 %v1616
        %v1975 = vunpack.c.h.b16 %v1616
        %v1976 = vunpack.c.l.b16 %v1617
        %v1977 = vunpack.c.h.b16 %v1617
        %v1978 = vunpack.c.l.b16 %v1618
        %v1979 = vunpack.c.h.b16 %v1618
        %v1980 = vunpack.c.l.b16 %v1619
        %v1981 = vunpack.c.h.b16 %v1619
        %v1982 = vunpack.c.l.b16 %v1620
        %v1983 = vunpack.c.h.b16 %v1620
        %v1984 = vunpack.c.l.b16 %v1621
        %v1985 = vunpack.c.h.b16 %v1621
        %v1986 = vunpack.c.l.b16 %v1622
        %v1987 = vunpack.c.h.b16 %v1622
        %v1988 = vunpack.c.l.b16 %v1623
        %v1989 = vunpack.c.h.b16 %v1623
        %v1990 = vunpack.c.l.b16 %v1624
        %v1991 = vunpack.c.h.b16 %v1624
        %v1992 = vunpack.c.l.b16 %v1625
        %v1993 = vunpack.c.h.b16 %v1625
        %v1994 = vunpack.c.l.b16 %v1626
        %v1995 = vunpack.c.h.b16 %v1626
        %v1996 = vunpack.c.l.b16 %v1627
        %v1997 = vunpack.c.h.b16 %v1627
        %v1998 = vunpack.c.l.b16 %v1628
        %v1999 = vunpack.c.h.b16 %v1628
        %v2000 = vunpack.c.l.b16 %v1629
        %v2001 = vunpack.c.h.b16 %v1629
        %v2002 = vunpack.c.l.b16 %v1630
        %v2003 = vunpack.c.h.b16 %v1630
        %v2004 = vunpack.c.l.b16 %v1631
        %v2005 = vunpack.c.h.b16 %v1631
        %v2006 = vunpack.c.l.b16 %v1632
        %v2007 = vunpack.c.h.b16 %v1632
        %v2008 = vunpack.c.l.b16 %v1633
        %v2009 = vunpack.c.h.b16 %v1633
        %v2010 = vunpack.c.l.b16 %v1634
        %v2011 = vunpack.c.h.b16 %v1634
        %v2012 = vunpack.c.l.b16 %v1635
        %v2013 = vunpack.c.h.b16 %v1635
        %v2014 = vunpack.c.l.b16 %v1636
        %v2015 = vunpack.c.h.b16 %v1636
        %v2016 = vunpack.c.l.b16 %v1637
        %v2017 = vunpack.c.h.b16 %v1637
        %v2018 = vunpack.c.l.b16 %v1638
        %v2019 = vunpack.c.h.b16 %v1638
        %v2020 = vunpack.c.l.b16 %v1639
        %v2021 = vunpack.c.h.b16 %v1639
        %v2022 = vunpack.c.l.b16 %v1640
        %v2023 = vunpack.c.h.b16 %v1640
        %v2024 = vunpack.c.l.b16 %v1641
        %v2025 = vunpack.c.h.b16 %v1641
        %v2026 = vunpack.c.l.b16 %v1642
        %v2027 = vunpack.c.h.b16 %v1642
        %v2028 = vunpack.c.l.b16 %v1643
        %v2029 = vunpack.c.h.b16 %v1643
        %v2030 = vunpack.c.l.b16 %v1644
        %v2031 = vunpack.c.h.b16 %v1644
        %v2032 = vunpack.c.l.b16 %v1645
        %v2033 = vunpack.c.h.b16 %v1645
        %v2034 = vunpack.c.l.b16 %v1646
        %v2035 = vunpack.c.h.b16 %v1646
        %v2036 = vunpack.c.l.b16 %v1647
        %v2037 = vunpack.c.h.b16 %v1647
        %v2038 = vunpack.c.l.b16 %v1648
        %v2039 = vunpack.c.h.b16 %v1648
        %v2040 = vunpack.c.l.b16 %v1649
        %v2041 = vunpack.c.h.b16 %v1649
        %v2042 = vunpack.c.l.b16 %v1650
        %v2043 = vunpack.c.h.b16 %v1650
        %v2044 = vunpack.c.l.b16 %v1651
        %v2045 = vunpack.c.h.b16 %v1651
        %v2046 = vunpack.c.l.b16 %v1652
        %v2047 = vunpack.c.h.b16 %v1652
        %v2048 = vunpack.c.l.b16 %v1653
        %v2049 = vunpack.c.h.b16 %v1653
        %v2050 = vunpack.c.l.b16 %v1654
        %v2051 = vunpack.c.h.b16 %v1654
        %v2052 = vunpack.c.l.b16 %v1655
        %v2053 = vunpack.c.h.b16 %v1655
        %v2054 = vunpack.c.l.b16 %v1656
        %v2055 = vunpack.c.h.b16 %v1656
        %v2056 = vunpack.c.l.b16 %v1657
        %v2057 = vunpack.c.h.b16 %v1657
        %v2058 = vunpack.c.l.b16 %v1658
        %v2059 = vunpack.c.h.b16 %v1658
        %v2060 = vunpack.c.l.b16 %v1659
        %v2061 = vunpack.c.h.b16 %v1659
        %v2062 = vunpack.c.l.b16 %v1660
        %v2063 = vunpack.c.h.b16 %v1660
        %v2064 = vunpack.c.l.b16 %v1661
        %v2065 = vunpack.c.h.b16 %v1661
        %v2066 = vunpack.c.l.b16 %v1662
        %v2067 = vunpack.c.h.b16 %v1662
        %v2068 = vunpack.c.l.b16 %v1663
        %v2069 = vunpack.c.h.b16 %v1663
        %v2070 = vunpack.c.l.b16 %v1664
        %v2071 = vunpack.c.h.b16 %v1664
        %v2072 = vunpack.c.l.b16 %v1665
        %v2073 = vunpack.c.h.b16 %v1665
        %v2074 = vunpack.c.l.b16 %v1666
        %v2075 = vunpack.c.h.b16 %v1666
        %v2076 = vunpack.c.l.b16 %v1667
        %v2077 = vunpack.c.h.b16 %v1667
        %v2078 = vunpack.c.l.b16 %v1668
        %v2079 = vunpack.c.h.b16 %v1668
        %v2080 = vunpack.c.l.b16 %v1669
        %v2081 = vunpack.c.h.b16 %v1669
        %v2082 = vunpack.c.l.b16 %v1670
        %v2083 = vunpack.c.h.b16 %v1670
        %v2084 = vunpack.c.l.b16 %v1671
        %v2085 = vunpack.c.h.b16 %v1671
        %v2086 = vunpack.c.l.b16 %v1672
        %v2087 = vunpack.c.h.b16 %v1672
        %v2088 = vunpack.c.l.b16 %v1673
        %v2089 = vunpack.c.h.b16 %v1673
        %v2090 = vunpack.c.l.b16 %v1674
        %v2091 = vunpack.c.h.b16 %v1674
        %v2092 = vunpack.c.l.b16 %v1675
        %v2093 = vunpack.c.h.b16 %v1675
        %v2094 = vunpack.c.l.b16 %v1676
        %v2095 = vunpack.c.h.b16 %v1676
        %v2096 = vunpack.c.l.b16 %v1677
        %v2097 = vunpack.c.h.b16 %v1677
        %v2098 = vpack.c.b16 %v1846, %v1842
        %v2099 = vpack.c.b16 %v1847, %v1843
        %v2100 = vpack.c.b16 %v1848, %v1844
        %v2101 = vpack.c.b16 %v1849, %v1845
        %v2102 = vpack.c.b16 %v1854, %v1850
        %v2103 = vpack.c.b16 %v1855, %v1851
        %v2104 = vpack.c.b16 %v1856, %v1852
        %v2105 = vpack.c.b16 %v1857, %v1853
        %v2106 = vpack.c.b16 %v1862, %v1858
        %v2107 = vpack.c.b16 %v1863, %v1859
        %v2108 = vpack.c.b16 %v1864, %v1860
        %v2109 = vpack.c.b16 %v1865, %v1861
        %v2110 = vpack.c.b16 %v1870, %v1866
        %v2111 = vpack.c.b16 %v1871, %v1867
        %v2112 = vpack.c.b16 %v1872, %v1868
        %v2113 = vpack.c.b16 %v1873, %v1869
        %v2114 = vpack.c.b16 %v1878, %v1874
        %v2115 = vpack.c.b16 %v1879, %v1875
        %v2116 = vpack.c.b16 %v1880, %v1876
        %v2117 = vpack.c.b16 %v1881, %v1877
        %v2118 = vpack.c.b16 %v1886, %v1882
        %v2119 = vpack.c.b16 %v1887, %v1883
        %v2120 = vpack.c.b16 %v1888, %v1884
        %v2121 = vpack.c.b16 %v1889, %v1885
        %v2122 = vpack.c.b16 %v1894, %v1890
        %v2123 = vpack.c.b16 %v1895, %v1891
        %v2124 = vpack.c.b16 %v1896, %v1892
        %v2125 = vpack.c.b16 %v1897, %v1893
        %v2126 = vpack.c.b16 %v1902, %v1898
        %v2127 = vpack.c.b16 %v1903, %v1899
        %v2128 = vpack.c.b16 %v1904, %v1900
        %v2129 = vpack.c.b16 %v1905, %v1901
        %v2130 = vpack.c.b16 %v1910, %v1906
        %v2131 = vpack.c.b16 %v1911, %v1907
        %v2132 = vpack.c.b16 %v1912, %v1908
        %v2133 = vpack.c.b16 %v1913, %v1909
        %v2134 = vpack.c.b16 %v1918, %v1914
        %v2135 = vpack.c.b16 %v1919, %v1915
        %v2136 = vpack.c.b16 %v1920, %v1916
        %v2137 = vpack.c.b16 %v1921, %v1917
        %v2138 = vpack.c.b16 %v1926, %v1922
        %v2139 = vpack.c.b16 %v1927, %v1923
        %v2140 = vpack.c.b16 %v1928, %v1924
        %v2141 = vpack.c.b16 %v1929, %v1925
        %v2142 = vpack.c.b16 %v1934, %v1930
        %v2143 = vpack.c.b16 %v1935, %v1931
        %v2144 = vpack.c.b16 %v1936, %v1932
        %v2145 = vpack.c.b16 %v1937, %v1933
        %v2146 = vpack.c.b16 %v1942, %v1938
        %v2147 = vpack.c.b16 %v1943, %v1939
        %v2148 = vpack.c.b16 %v1944, %v1940
        %v2149 = vpack.c.b16 %v1945, %v1941
        %v2150 = vpack.c.b16 %v1950, %v1946
        %v2151 = vpack.c.b16 %v1951, %v1947
        %v2152 = vpack.c.b16 %v1952, %v1948
        %v2153 = vpack.c.b16 %v1953, %v1949
        %v2154 = vpack.c.b16 %v1958, %v1954
        %v2155 = vpack.c.b16 %v1959, %v1955
        %v2156 = vpack.c.b16 %v1960, %v1956
        %v2157 = vpack.c.b16 %v1961, %v1957
        %v2158 = vpack.c.b16 %v1966, %v1962
        %v2159 = vpack.c.b16 %v1967, %v1963
        %v2160 = vpack.c.b16 %v1968, %v1964
        %v2161 = vpack.c.b16 %v1969, %v1965
        %v2162 = vpack.c.b16 %v1974, %v1970
        %v2163 = vpack.c.b16 %v1975, %v1971
        %v2164 = vpack.c.b16 %v1976, %v1972
        %v2165 = vpack.c.b16 %v1977, %v1973
        %v2166 = vpack.c.b16 %v1982, %v1978
        %v2167 = vpack.c.b16 %v1983, %v1979
        %v2168 = vpack.c.b16 %v1984, %v1980
        %v2169 = vpack.c.b16 %v1985, %v1981
        %v2170 = vpack.c.b16 %v1990, %v1986
        %v2171 = vpack.c.b16 %v1991, %v1987
        %v2172 = vpack.c.b16 %v1992, %v1988
        %v2173 = vpack.c.b16 %v1993, %v1989
        %v2174 = vpack.c.b16 %v1998, %v1994
        %v2175 = vpack.c.b16 %v1999, %v1995
        %v2176 = vpack.c.b16 %v2000, %v1996
        %v2177 = vpack.c.b16 %v2001, %v1997
        %v2178 = vpack.c.b16 %v2006, %v2002
        %v2179 = vpack.c.b16 %v2007, %v2003
        %v2180 = vpack.c.b16 %v2008, %v2004
        %v2181 = vpack.c.b16 %v2009, %v2005
        %v2182 = vpack.c.b16 %v2014, %v2010
        %v2183 = vpack.c.b16 %v2015, %v2011
        %v2184 = vpack.c.b16 %v2016, %v2012
        %v2185 = vpack.c.b16 %v2017, %v2013
        %v2186 = vpack.c.b16 %v2022, %v2018
        %v2187 = vpack.c.b16 %v2023, %v2019
        %v2188 = vpack.c.b16 %v2024, %v2020
        %v2189 = vpack.c.b16 %v2025, %v2021
        %v2190 = vpack.c.b16 %v2030, %v2026
        %v2191 = vpack.c.b16 %v2031, %v2027
        %v2192 = vpack.c.b16 %v2032, %v2028
        %v2193 = vpack.c.b16 %v2033, %v2029
        %v2194 = vpack.c.b16 %v2038, %v2034
        %v2195 = vpack.c.b16 %v2039, %v2035
        %v2196 = vpack.c.b16 %v2040, %v2036
        %v2197 = vpack.c.b16 %v2041, %v2037
        %v2198 = vpack.c.b16 %v2046, %v2042
        %v2199 = vpack.c.b16 %v2047, %v2043
        %v2200 = vpack.c.b16 %v2048, %v2044
        %v2201 = vpack.c.b16 %v2049, %v2045
        %v2202 = vpack.c.b16 %v2054, %v2050
        %v2203 = vpack.c.b16 %v2055, %v2051
        %v2204 = vpack.c.b16 %v2056, %v2052
        %v2205 = vpack.c.b16 %v2057, %v2053
        %v2206 = vpack.c.b16 %v2062, %v2058
        %v2207 = vpack.c.b16 %v2063, %v2059
        %v2208 = vpack.c.b16 %v2064, %v2060
        %v2209 = vpack.c.b16 %v2065, %v2061
        %v2210 = vpack.c.b16 %v2070, %v2066
        %v2211 = vpack.c.b16 %v2071, %v2067
        %v2212 = vpack.c.b16 %v2072, %v2068
        %v2213 = vpack.c.b16 %v2073, %v2069
        %v2214 = vpack.c.b16 %v2078, %v2074
        %v2215 = vpack.c.b16 %v2079, %v2075
        %v2216 = vpack.c.b16 %v2080, %v2076
        %v2217 = vpack.c.b16 %v2081, %v2077
        %v2218 = vpack.c.b16 %v2086, %v2082
        %v2219 = vpack.c.b16 %v2087, %v2083
        %v2220 = vpack.c.b16 %v2088, %v2084
        %v2221 = vpack.c.b16 %v2089, %v2085
        %v2222 = vpack.c.b16 %v2094, %v2090
        %v2223 = vpack.c.b16 %v2095, %v2091
        %v2224 = vpack.c.b16 %v2096, %v2092
        %v2225 = vpack.c.b16 %v2097, %v2093
        %2354 = vmatprep.subr.bf16.mxu0 %v2099
        %2355 = vmatpush1.bf16.msra.mxu0 %v2098
        %2356 = vmatprep.subr.bf16.mxu0 %v2103
        %2357 = vmatpush1.bf16.msra.mxu0 %v2102
        %2358 = vmatprep.subr.bf16.mxu0 %v2107
        %2359 = vmatpush1.bf16.msra.mxu0 %v2106
        %2360 = vmatprep.subr.bf16.mxu0 %v2111
        %2361 = vmatpush1.bf16.msra.mxu0 %v2110
        %2362 = vmatprep.subr.bf16.mxu0 %v2115
        %2363 = vmatpush1.bf16.msra.mxu0 %v2114
        %2364 = vmatprep.subr.bf16.mxu0 %v2119
        %2365 = vmatpush1.bf16.msra.mxu0 %v2118
        %2366 = vmatprep.subr.bf16.mxu0 %v2123
        %2367 = vmatpush1.bf16.msra.mxu0 %v2122
        %2368 = vmatprep.subr.bf16.mxu0 %v2127
        %2369 = vmatpush1.bf16.msra.mxu0 %v2126
        %2370 = vmatprep.subr.bf16.mxu0 %v2131
        %2371 = vmatpush1.bf16.msra.mxu0 %v2130
        %2372 = vmatprep.subr.bf16.mxu0 %v2135
        %2373 = vmatpush1.bf16.msra.mxu0 %v2134
        %2374 = vmatprep.subr.bf16.mxu0 %v2139
        %2375 = vmatpush1.bf16.msra.mxu0 %v2138
        %2376 = vmatprep.subr.bf16.mxu0 %v2143
        %2377 = vmatpush1.bf16.msra.mxu0 %v2142
        %2378 = vmatprep.subr.bf16.mxu0 %v2147
        %2379 = vmatpush1.bf16.msra.mxu0 %v2146
        %2380 = vmatprep.subr.bf16.mxu0 %v2151
        %2381 = vmatpush1.bf16.msra.mxu0 %v2150
        %2382 = vmatprep.subr.bf16.mxu0 %v2155
        %2383 = vmatpush1.bf16.msra.mxu0 %v2154
        %2384 = vmatprep.subr.bf16.mxu0 %v2159
        %2385 = vmatpush1.bf16.msra.mxu0 %v2158
        %2386 = vmatprep.mubr.bf16.mxu0 %v1542
        %2387 = vmatmul.mubr.bf16.gmra.mrb[0].mxu0 %v1541
        %v2388 = vpop.f32.mrb[0].mxu0
        %v2389 = vadd.f32 %v1701, %v2388
        %v2390 = vpop.f32.mrb[0].mxu0
        %v2391 = vadd.f32 %v1705, %v2390
        %v2392 = vpop.f32.mrb[0].mxu0
        %v2393 = vadd.f32 %v1701, %v2392
        %v2394 = vpop.f32.mrb[0].mxu0
        %v2395 = vadd.f32 %v1705, %v2394
        %2396 = vmatprep.mubr.bf16.mxu0 %v1546
        %2397 = vmatmul.mubr.bf16.gmra.mrb[0].mxu0 %v1545
        %v2398 = vpop.f32.mrb[0].mxu0
        %v2399 = vadd.f32 %v1701, %v2398
        %v2400 = vpop.f32.mrb[0].mxu0
        %v2401 = vadd.f32 %v1705, %v2400
        %v2402 = vpop.f32.mrb[0].mxu0
        %v2403 = vpop.f32.mrb[0].mxu0
        %2404 = vdwg.mxu0
        %2405 = vmatprep.subr.bf16.mxu0 %v2163
        %2406 = vmatpush1.bf16.msra.mxu0 %v2162
        %2407 = vmatprep.subr.bf16.mxu0 %v2167
        %2408 = vmatpush1.bf16.msra.mxu0 %v2166
        %2409 = vmatprep.subr.bf16.mxu0 %v2171
        %2410 = vmatpush1.bf16.msra.mxu0 %v2170
        %2411 = vmatprep.subr.bf16.mxu0 %v2175
        %2412 = vmatpush1.bf16.msra.mxu0 %v2174
        %2413 = vmatprep.subr.bf16.mxu0 %v2179
        %2414 = vmatpush1.bf16.msra.mxu0 %v2178
        %2415 = vmatprep.subr.bf16.mxu0 %v2183
        %2416 = vmatpush1.bf16.msra.mxu0 %v2182
        %2417 = vmatprep.subr.bf16.mxu0 %v2187
        %2418 = vmatpush1.bf16.msra.mxu0 %v2186
        %2419 = vmatprep.subr.bf16.mxu0 %v2191
        %2420 = vmatpush1.bf16.msra.mxu0 %v2190
        %2421 = vmatprep.subr.bf16.mxu0 %v2195
        %2422 = vmatpush1.bf16.msra.mxu0 %v2194
        %2423 = vmatprep.subr.bf16.mxu0 %v2199
        %2424 = vmatpush1.bf16.msra.mxu0 %v2198
        %2425 = vmatprep.subr.bf16.mxu0 %v2203
        %2426 = vmatpush1.bf16.msra.mxu0 %v2202
        %2427 = vmatprep.subr.bf16.mxu0 %v2207
        %2428 = vmatpush1.bf16.msra.mxu0 %v2206
        %2429 = vmatprep.subr.bf16.mxu0 %v2211
        %2430 = vmatpush1.bf16.msra.mxu0 %v2210
        %2431 = vmatprep.subr.bf16.mxu0 %v2215
        %2432 = vmatpush1.bf16.msra.mxu0 %v2214
        %2433 = vmatprep.subr.bf16.mxu0 %v2219
        %2434 = vmatpush1.bf16.msra.mxu0 %v2218
        %2435 = vmatprep.subr.bf16.mxu0 %v2223
        %2436 = vmatpush1.bf16.msra.mxu0 %v2222
        %2437 = vmatprep.mubr.bf16.mxu0 %v1544
        %2438 = vmatmul.mubr.bf16.gmra.mrb[0].mxu0 %v1543
        %v2439 = vpop.f32.mrb[0].mxu0
        %v2440 = vadd.f32 %v2389, %v2439
        %v2441 = vpop.f32.mrb[0].mxu0
        %v2442 = vadd.f32 %v2391, %v2441
        %v2443 = vpop.f32.mrb[0].mxu0
        %v2444 = vadd.f32 %v2393, %v2443
        %v2445 = vpop.f32.mrb[0].mxu0
        %v2446 = vadd.f32 %v2395, %v2445
        %2447 = vmatprep.mubr.bf16.mxu0 %v1548
        %2448 = vmatmul.mubr.bf16.gmra.mrb[0].mxu0 %v1547
        %v2449 = vpop.f32.mrb[0].mxu0
        %v2450 = vadd.f32 %v2399, %v2449
        %v2451 = vpop.f32.mrb[0].mxu0
        %v2452 = vadd.f32 %v2401, %v2451
        %v2453 = vpop.f32.mrb[0].mxu0
        %v2454 = vpop.f32.mrb[0].mxu0
        %2455 = vdwg.mxu0
        %2456 = vmatprep.subr.bf16.mxu0 %v2101
        %2457 = vmatpush1.bf16.msra.mxu0 %v2100
        %2458 = vmatprep.subr.bf16.mxu0 %v2105
        %2459 = vmatpush1.bf16.msra.mxu0 %v2104
        %2460 = vmatprep.subr.bf16.mxu0 %v2109
        %2461 = vmatpush1.bf16.msra.mxu0 %v2108
        %2462 = vmatprep.subr.bf16.mxu0 %v2113
        %2463 = vmatpush1.bf16.msra.mxu0 %v2112
        %2464 = vmatprep.subr.bf16.mxu0 %v2117
        %2465 = vmatpush1.bf16.msra.mxu0 %v2116
        %2466 = vmatprep.subr.bf16.mxu0 %v2121
        %2467 = vmatpush1.bf16.msra.mxu0 %v2120
        %2468 = vmatprep.subr.bf16.mxu0 %v2125
        %2469 = vmatpush1.bf16.msra.mxu0 %v2124
        %2470 = vmatprep.subr.bf16.mxu0 %v2129
        %2471 = vmatpush1.bf16.msra.mxu0 %v2128
        %2472 = vmatprep.subr.bf16.mxu0 %v2133
        %2473 = vmatpush1.bf16.msra.mxu0 %v2132
        %2474 = vmatprep.subr.bf16.mxu0 %v2137
        %2475 = vmatpush1.bf16.msra.mxu0 %v2136
        %2476 = vmatprep.subr.bf16.mxu0 %v2141
        %2477 = vmatpush1.bf16.msra.mxu0 %v2140
        %2478 = vmatprep.subr.bf16.mxu0 %v2145
        %2479 = vmatpush1.bf16.msra.mxu0 %v2144
        %2480 = vmatprep.subr.bf16.mxu0 %v2149
        %2481 = vmatpush1.bf16.msra.mxu0 %v2148
        %2482 = vmatprep.subr.bf16.mxu0 %v2153
        %2483 = vmatpush1.bf16.msra.mxu0 %v2152
        %2484 = vmatprep.subr.bf16.mxu0 %v2157
        %2485 = vmatpush1.bf16.msra.mxu0 %v2156
        %2486 = vmatprep.subr.bf16.mxu0 %v2161
        %2487 = vmatpush1.bf16.msra.mxu0 %v2160
        %2488 = vmatprep.mubr.bf16.mxu0 %v1542
        %2489 = vmatmul.mubr.bf16.gmra.mrb[0].mxu0 %v1541
        %v2490 = vpop.f32.mrb[0].mxu0
        %v2491 = vadd.f32 %v1709, %v2490
        %v2492 = vpop.f32.mrb[0].mxu0
        %v2493 = vadd.f32 %v1713, %v2492
        %v2494 = vpop.f32.mrb[0].mxu0
        %v2495 = vadd.f32 %v1709, %v2494
        %v2496 = vpop.f32.mrb[0].mxu0
        %v2497 = vadd.f32 %v1713, %v2496
        %2498 = vmatprep.mubr.bf16.mxu0 %v1546
        %2499 = vmatmul.mubr.bf16.gmra.mrb[0].mxu0 %v1545
        %v2500 = vpop.f32.mrb[0].mxu0
        %v2501 = vadd.f32 %v1709, %v2500
        %v2502 = vpop.f32.mrb[0].mxu0
        %v2503 = vadd.f32 %v1713, %v2502
        %v2504 = vpop.f32.mrb[0].mxu0
        %v2505 = vpop.f32.mrb[0].mxu0
        %2506 = vdwg.mxu0
        %2507 = vmatprep.subr.bf16.mxu0 %v2165
        %2508 = vmatpush1.bf16.msra.mxu0 %v2164
        %2509 = vmatprep.subr.bf16.mxu0 %v2169
        %2510 = vmatpush1.bf16.msra.mxu0 %v2168
        %2511 = vmatprep.subr.bf16.mxu0 %v2173
        %2512 = vmatpush1.bf16.msra.mxu0 %v2172
        %2513 = vmatprep.subr.bf16.mxu0 %v2177
        %2514 = vmatpush1.bf16.msra.mxu0 %v2176
        %2515 = vmatprep.subr.bf16.mxu0 %v2181
        %2516 = vmatpush1.bf16.msra.mxu0 %v2180
        %2517 = vmatprep.subr.bf16.mxu0 %v2185
        %2518 = vmatpush1.bf16.msra.mxu0 %v2184
        %2519 = vmatprep.subr.bf16.mxu0 %v2189
        %2520 = vmatpush1.bf16.msra.mxu0 %v2188
        %2521 = vmatprep.subr.bf16.mxu0 %v2193
        %2522 = vmatpush1.bf16.msra.mxu0 %v2192
        %2523 = vmatprep.subr.bf16.mxu0 %v2197
        %2524 = vmatpush1.bf16.msra.mxu0 %v2196
        %2525 = vmatprep.subr.bf16.mxu0 %v2201
        %2526 = vmatpush1.bf16.msra.mxu0 %v2200
        %2527 = vmatprep.subr.bf16.mxu0 %v2205
        %2528 = vmatpush1.bf16.msra.mxu0 %v2204
        %2529 = vmatprep.subr.bf16.mxu0 %v2209
        %2530 = vmatpush1.bf16.msra.mxu0 %v2208
        %2531 = vmatprep.subr.bf16.mxu0 %v2213
        %2532 = vmatpush1.bf16.msra.mxu0 %v2212
        %2533 = vmatprep.subr.bf16.mxu0 %v2217
        %2534 = vmatpush1.bf16.msra.mxu0 %v2216
        %2535 = vmatprep.subr.bf16.mxu0 %v2221
        %2536 = vmatpush1.bf16.msra.mxu0 %v2220
        %2537 = vmatprep.subr.bf16.mxu0 %v2225
        %2538 = vmatpush1.bf16.msra.mxu0 %v2224
        %2539 = vmatprep.mubr.bf16.mxu0 %v1544
        %2540 = vmatmul.mubr.bf16.gmra.mrb[0].mxu0 %v1543
        %v2541 = vpop.f32.mrb[0].mxu0
        %v2542 = vadd.f32 %v2491, %v2541
        %v2543 = vpop.f32.mrb[0].mxu0
        %v2544 = vadd.f32 %v2493, %v2543
        %v2545 = vpop.f32.mrb[0].mxu0
        %v2546 = vadd.f32 %v2495, %v2545
        %v2547 = vpop.f32.mrb[0].mxu0
        %v2548 = vadd.f32 %v2497, %v2547
        %2549 = vmatprep.mubr.bf16.mxu0 %v1548
        %2550 = vmatmul.mubr.bf16.gmra.mrb[0].mxu0 %v1547
        %v2551 = vpop.f32.mrb[0].mxu0
        %v2552 = vadd.f32 %v2501, %v2551
        %v2553 = vpop.f32.mrb[0].mxu0
        %v2554 = vadd.f32 %v2503, %v2553
        %v2555 = vpop.f32.mrb[0].mxu0
        %v2556 = vpop.f32.mrb[0].mxu0
        %2557 = vdwg.mxu0
        %vm2558 = vcmp.gt.f32.partialorder %v2440, 0.0
        %vm2559 = vcmp.gt.f32.partialorder %v2442, 0.0
        %vm2560 = vcmp.gt.f32.partialorder %v2542, 0.0
        %vm2561 = vcmp.gt.f32.partialorder %v2544, 0.0
        %vm2562 = vcmp.gt.f32.partialorder %v2444, 0.0
        %vm2563 = vcmp.gt.f32.partialorder %v2446, 0.0
        %vm2564 = vcmp.gt.f32.partialorder %v2546, 0.0
        %vm2565 = vcmp.gt.f32.partialorder %v2548, 0.0
        %vm2566 = vcmp.gt.f32.partialorder %v2450, 0.0
        %vm2567 = vcmp.gt.f32.partialorder %v2452, 0.0
        %vm2568 = vcmp.gt.f32.partialorder %v2552, 0.0
        %vm2569 = vcmp.gt.f32.partialorder %v2554, 0.0
        %v2570 = vmul.f32 %v2440, 0.2
        %v2571 = vmul.f32 %v2442, 0.2
        %v2572 = vmul.f32 %v2542, 0.2
        %v2573 = vmul.f32 %v2544, 0.2
        %v2574 = vmul.f32 %v2444, 0.2
        %v2575 = vmul.f32 %v2446, 0.2
        %v2576 = vmul.f32 %v2546, 0.2
        %v2577 = vmul.f32 %v2548, 0.2
        %v2578 = vmul.f32 %v2450, 0.2
        %v2579 = vmul.f32 %v2452, 0.2
        %v2580 = vmul.f32 %v2552, 0.2
        %v2581 = vmul.f32 %v2554, 0.2
        %v2582 = vsel %vm2558, %v2440, %v2570
        %v2583 = vsel %vm2559, %v2442, %v2571
        %v2584 = vsel %vm2560, %v2542, %v2572
        %v2585 = vsel %vm2561, %v2544, %v2573
        %v2586 = vsel %vm2562, %v2444, %v2574
        %v2587 = vsel %vm2563, %v2446, %v2575
        %v2588 = vsel %vm2564, %v2546, %v2576
        %v2589 = vsel %vm2565, %v2548, %v2577
        %v2590 = vsel %vm2566, %v2450, %v2578
        %v2591 = vsel %vm2567, %v2452, %v2579
        %v2592 = vsel %vm2568, %v2552, %v2580
        %v2593 = vsel %vm2569, %v2554, %v2581
        %v2594 = vmul.f32 %v2582, 1.4142135
        %v2595 = vmul.f32 %v2583, 1.4142135
        %v2596 = vmul.f32 %v2584, 1.4142135
        %v2597 = vmul.f32 %v2585, 1.4142135
        %v2598 = vmul.f32 %v2586, 1.4142135
        %v2599 = vmul.f32 %v2587, 1.4142135
        %v2600 = vmul.f32 %v2588, 1.4142135
        %v2601 = vmul.f32 %v2589, 1.4142135
        %v2602 = vmul.f32 %v2590, 1.4142135
        %v2603 = vmul.f32 %v2591, 1.4142135
        %v2604 = vmul.f32 %v2592, 1.4142135
        %v2605 = vmul.f32 %v2593, 1.4142135
        %v2606 = vpack.c.bf16 %v2598, %v2594
        %v2607 = vpack.c.bf16 %v2599, %v2595
        %v2608 = vpack.c.bf16 %v2600, %v2596
        %v2609 = vpack.c.bf16 %v2601, %v2597
        %v2610 = vpack.c.bf16 %v2602, %v2602
        %v2611 = vpack.c.bf16 %v2603, %v2603
        %v2612 = vpack.c.bf16 %v2604, %v2604
        %v2613 = vpack.c.bf16 %v2605, %v2605
        %s2614 = scalar_lea.vmem %s375, 2048 [#allocation5]
        %v2615 = vld [vmem:[%s2614] sm:$0xff]
        %v2616 = vld [vmem:[%s2614 + $0x8] sm:$0xff]
        %v2617 = vld [vmem:[%s2614 + $0x10] sm:$0xff]
        %v2618 = vld [vmem:[%s2614 + $0x18] sm:$0xff]
        %v2619 = vld [vmem:[%s2614 + $0x20] sm:$0xff]
        %v2620 = vld [vmem:[%s2614 + $0x28] sm:$0xff]
        %v2621 = vld [vmem:[%s2614 + $0x30] sm:$0xff]
        %v2622 = vld [vmem:[%s2614 + $0x38] sm:$0xff]
        %v2623 = vld [vmem:[%s2614 + $0x40] sm:$0xff]
        %v2624 = vld [vmem:[%s2614 + $0x48] sm:$0xff]
        %v2625 = vld [vmem:[%s2614 + $0x50] sm:$0xff]
        %v2626 = vld [vmem:[%s2614 + $0x58] sm:$0xff]
        %v2627 = vld [vmem:[%s2614 + $0x60] sm:$0xff]
        %v2628 = vld [vmem:[%s2614 + $0x68] sm:$0xff]
        %v2629 = vld [vmem:[%s2614 + $0x70] sm:$0xff]
        %v2630 = vld [vmem:[%s2614 + $0x78] sm:$0xff]
        %v2631 = vld [vmem:[%s2614 + $0x80] sm:$0xff]
        %v2632 = vld [vmem:[%s2614 + $0x88] sm:$0xff]
        %v2633 = vld [vmem:[%s2614 + $0x90] sm:$0xff]
        %v2634 = vld [vmem:[%s2614 + $0x98] sm:$0xff]
        %v2635 = vld [vmem:[%s2614 + $0xa0] sm:$0xff]
        %v2636 = vld [vmem:[%s2614 + $0xa8] sm:$0xff]
        %v2637 = vld [vmem:[%s2614 + $0xb0] sm:$0xff]
        %v2638 = vld [vmem:[%s2614 + $0xb8] sm:$0xff]
        %v2639 = vld [vmem:[%s2614 + $0xc0] sm:$0xff]
        %v2640 = vld [vmem:[%s2614 + $0xc8] sm:$0xff]
        %v2641 = vld [vmem:[%s2614 + $0xd0] sm:$0xff]
        %v2642 = vld [vmem:[%s2614 + $0xd8] sm:$0xff]
        %v2643 = vld [vmem:[%s2614 + $0xe0] sm:$0xff]
        %v2644 = vld [vmem:[%s2614 + $0xe8] sm:$0xff]
        %v2645 = vld [vmem:[%s2614 + $0xf0] sm:$0xff]
        %v2646 = vld [vmem:[%s2614 + $0xf8] sm:$0xff]
        %v2647 = vld [vmem:[%s2614 + $0x100] sm:$0xff]
        %v2648 = vld [vmem:[%s2614 + $0x108] sm:$0xff]
        %v2649 = vld [vmem:[%s2614 + $0x110] sm:$0xff]
        %v2650 = vld [vmem:[%s2614 + $0x118] sm:$0xff]
        %v2651 = vld [vmem:[%s2614 + $0x120] sm:$0xff]
        %v2652 = vld [vmem:[%s2614 + $0x128] sm:$0xff]
        %v2653 = vld [vmem:[%s2614 + $0x130] sm:$0xff]
        %v2654 = vld [vmem:[%s2614 + $0x138] sm:$0xff]
        %v2655 = vld [vmem:[%s2614 + $0x140] sm:$0xff]
        %v2656 = vld [vmem:[%s2614 + $0x148] sm:$0xff]
        %v2657 = vld [vmem:[%s2614 + $0x150] sm:$0xff]
        %v2658 = vld [vmem:[%s2614 + $0x158] sm:$0xff]
        %v2659 = vld [vmem:[%s2614 + $0x160] sm:$0xff]
        %v2660 = vld [vmem:[%s2614 + $0x168] sm:$0xff]
        %v2661 = vld [vmem:[%s2614 + $0x170] sm:$0xff]
        %v2662 = vld [vmem:[%s2614 + $0x178] sm:$0xff]
        %v2663 = vld [vmem:[%s2614 + $0x180] sm:$0xff]
        %v2664 = vld [vmem:[%s2614 + $0x188] sm:$0xff]
        %v2665 = vld [vmem:[%s2614 + $0x190] sm:$0xff]
        %v2666 = vld [vmem:[%s2614 + $0x198] sm:$0xff]
        %v2667 = vld [vmem:[%s2614 + $0x1a0] sm:$0xff]
        %v2668 = vld [vmem:[%s2614 + $0x1a8] sm:$0xff]
        %v2669 = vld [vmem:[%s2614 + $0x1b0] sm:$0xff]
        %v2670 = vld [vmem:[%s2614 + $0x1b8] sm:$0xff]
        %v2671 = vld [vmem:[%s2614 + $0x1c0] sm:$0xff]
        %v2672 = vld [vmem:[%s2614 + $0x1c8] sm:$0xff]
        %v2673 = vld [vmem:[%s2614 + $0x1d0] sm:$0xff]
        %v2674 = vld [vmem:[%s2614 + $0x1d8] sm:$0xff]
        %v2675 = vld [vmem:[%s2614 + $0x1e0] sm:$0xff]
        %v2676 = vld [vmem:[%s2614 + $0x1e8] sm:$0xff]
        %v2677 = vld [vmem:[%s2614 + $0x1f0] sm:$0xff]
        %v2678 = vld [vmem:[%s2614 + $0x1f8] sm:$0xff]
        %v2679 = vld [vmem:[%s2614 + $0x200] sm:$0xff]
        %v2680 = vld [vmem:[%s2614 + $0x208] sm:$0xff]
        %v2681 = vld [vmem:[%s2614 + $0x210] sm:$0xff]
        %v2682 = vld [vmem:[%s2614 + $0x218] sm:$0xff]
        %v2683 = vld [vmem:[%s2614 + $0x220] sm:$0xff]
        %v2684 = vld [vmem:[%s2614 + $0x228] sm:$0xff]
        %v2685 = vld [vmem:[%s2614 + $0x230] sm:$0xff]
        %v2686 = vld [vmem:[%s2614 + $0x238] sm:$0xff]
        %v2687 = vld [vmem:[%s2614 + $0x240] sm:$0xff]
        %v2688 = vld [vmem:[%s2614 + $0x248] sm:$0xff]
        %v2689 = vld [vmem:[%s2614 + $0x250] sm:$0xff]
        %v2690 = vld [vmem:[%s2614 + $0x258] sm:$0xff]
        %v2691 = vld [vmem:[%s2614 + $0x260] sm:$0xff]
        %v2692 = vld [vmem:[%s2614 + $0x268] sm:$0xff]
        %v2693 = vld [vmem:[%s2614 + $0x270] sm:$0xff]
        %v2694 = vld [vmem:[%s2614 + $0x278] sm:$0xff]
        %v2695 = vld [vmem:[%s2614 + $0x280] sm:$0xff]
        %v2696 = vld [vmem:[%s2614 + $0x288] sm:$0xff]
        %v2697 = vld [vmem:[%s2614 + $0x290] sm:$0xff]
        %v2698 = vld [vmem:[%s2614 + $0x298] sm:$0xff]
        %v2699 = vld [vmem:[%s2614 + $0x2a0] sm:$0xff]
        %v2700 = vld [vmem:[%s2614 + $0x2a8] sm:$0xff]
        %v2701 = vld [vmem:[%s2614 + $0x2b0] sm:$0xff]
        %v2702 = vld [vmem:[%s2614 + $0x2b8] sm:$0xff]
        %v2703 = vld [vmem:[%s2614 + $0x2c0] sm:$0xff]
        %v2704 = vld [vmem:[%s2614 + $0x2c8] sm:$0xff]
        %v2705 = vld [vmem:[%s2614 + $0x2d0] sm:$0xff]
        %v2706 = vld [vmem:[%s2614 + $0x2d8] sm:$0xff]
        %v2707 = vld [vmem:[%s2614 + $0x2e0] sm:$0xff]
        %v2708 = vld [vmem:[%s2614 + $0x2e8] sm:$0xff]
        %v2709 = vld [vmem:[%s2614 + $0x2f0] sm:$0xff]
        %v2710 = vld [vmem:[%s2614 + $0x2f8] sm:$0xff]
        %v2711 = vld [vmem:[%s2614 + $0x300] sm:$0xff]
        %v2712 = vld [vmem:[%s2614 + $0x308] sm:$0xff]
        %v2713 = vld [vmem:[%s2614 + $0x310] sm:$0xff]
        %v2714 = vld [vmem:[%s2614 + $0x318] sm:$0xff]
        %v2715 = vld [vmem:[%s2614 + $0x320] sm:$0xff]
        %v2716 = vld [vmem:[%s2614 + $0x328] sm:$0xff]
        %v2717 = vld [vmem:[%s2614 + $0x330] sm:$0xff]
        %v2718 = vld [vmem:[%s2614 + $0x338] sm:$0xff]
        %v2719 = vld [vmem:[%s2614 + $0x340] sm:$0xff]
        %v2720 = vld [vmem:[%s2614 + $0x348] sm:$0xff]
        %v2721 = vld [vmem:[%s2614 + $0x350] sm:$0xff]
        %v2722 = vld [vmem:[%s2614 + $0x358] sm:$0xff]
        %v2723 = vld [vmem:[%s2614 + $0x360] sm:$0xff]
        %v2724 = vld [vmem:[%s2614 + $0x368] sm:$0xff]
        %v2725 = vld [vmem:[%s2614 + $0x370] sm:$0xff]
        %v2726 = vld [vmem:[%s2614 + $0x378] sm:$0xff]
        %v2727 = vld [vmem:[%s2614 + $0x380] sm:$0xff]
        %v2728 = vld [vmem:[%s2614 + $0x388] sm:$0xff]
        %v2729 = vld [vmem:[%s2614 + $0x390] sm:$0xff]
        %v2730 = vld [vmem:[%s2614 + $0x398] sm:$0xff]
        %v2731 = vld [vmem:[%s2614 + $0x3a0] sm:$0xff]
        %v2732 = vld [vmem:[%s2614 + $0x3a8] sm:$0xff]
        %v2733 = vld [vmem:[%s2614 + $0x3b0] sm:$0xff]
        %v2734 = vld [vmem:[%s2614 + $0x3b8] sm:$0xff]
        %v2735 = vld [vmem:[%s2614 + $0x3c0] sm:$0xff]
        %v2736 = vld [vmem:[%s2614 + $0x3c8] sm:$0xff]
        %v2737 = vld [vmem:[%s2614 + $0x3d0] sm:$0xff]
        %v2738 = vld [vmem:[%s2614 + $0x3d8] sm:$0xff]
        %v2739 = vld [vmem:[%s2614 + $0x3e0] sm:$0xff]
        %v2740 = vld [vmem:[%s2614 + $0x3e8] sm:$0xff]
        %v2741 = vld [vmem:[%s2614 + $0x3f0] sm:$0xff]
        %v2742 = vld [vmem:[%s2614 + $0x3f8] sm:$0xff]
        %v2743 = vlaneseq
        %v2744 = vshrl.u32 %v2743, 7
        %v2745 = vsub.s32 2, %v2744
        %v2746 = vrot.slane %v473, %v2745
        %v2747 = vlaneseq
        %v2748 = vshrl.u32 %v2747, 7
        %v2749 = vsub.s32 6, %v2748
        %v2750 = vrot.slane %v473, %v2749
        %v2751 = vlaneseq
        %v2752 = vshrl.u32 %v2751, 7
        %v2753 = vsub.s32 2, %v2752
        %v2754 = vrot.slane %v474, %v2753
        %v2755 = vlaneseq
        %v2756 = vshrl.u32 %v2755, 7
        %v2757 = vsub.s32 6, %v2756
        %v2758 = vrot.slane %v474, %v2757
        %v2763 = vlaneseq
        %v2764 = vshrl.u32 %v2763, 7
        %v2765 = vsub.s32 2, %v2764
        %v2766 = vrot.slane %v2746, %v2765
        %v2767 = vlaneseq
        %v2768 = vshrl.u32 %v2767, 7
        %v2769 = vsub.s32 2, %v2768
        %v2770 = vrot.slane %v2750, %v2769
        %v2771 = vlaneseq
        %v2772 = vshrl.u32 %v2771, 7
        %v2773 = vsub.s32 2, %v2772
        %v2774 = vrot.slane %v2754, %v2773
        %v2775 = vlaneseq
        %v2776 = vshrl.u32 %v2775, 7
        %v2777 = vsub.s32 2, %v2776
        %v2778 = vrot.slane %v2758, %v2777
        %v2907 = vunpack.c.l.b16 %v2615
        %v2908 = vunpack.c.h.b16 %v2615
        %v2909 = vunpack.c.l.b16 %v2616
        %v2910 = vunpack.c.h.b16 %v2616
        %v2911 = vunpack.c.l.b16 %v2617
        %v2912 = vunpack.c.h.b16 %v2617
        %v2913 = vunpack.c.l.b16 %v2618
        %v2914 = vunpack.c.h.b16 %v2618
        %v2915 = vunpack.c.l.b16 %v2619
        %v2916 = vunpack.c.h.b16 %v2619
        %v2917 = vunpack.c.l.b16 %v2620
        %v2918 = vunpack.c.h.b16 %v2620
        %v2919 = vunpack.c.l.b16 %v2621
        %v2920 = vunpack.c.h.b16 %v2621
        %v2921 = vunpack.c.l.b16 %v2622
        %v2922 = vunpack.c.h.b16 %v2622
        %v2923 = vunpack.c.l.b16 %v2623
        %v2924 = vunpack.c.h.b16 %v2623
        %v2925 = vunpack.c.l.b16 %v2624
        %v2926 = vunpack.c.h.b16 %v2624
        %v2927 = vunpack.c.l.b16 %v2625
        %v2928 = vunpack.c.h.b16 %v2625
        %v2929 = vunpack.c.l.b16 %v2626
        %v2930 = vunpack.c.h.b16 %v2626
        %v2931 = vunpack.c.l.b16 %v2627
        %v2932 = vunpack.c.h.b16 %v2627
        %v2933 = vunpack.c.l.b16 %v2628
        %v2934 = vunpack.c.h.b16 %v2628
        %v2935 = vunpack.c.l.b16 %v2629
        %v2936 = vunpack.c.h.b16 %v2629
        %v2937 = vunpack.c.l.b16 %v2630
        %v2938 = vunpack.c.h.b16 %v2630
        %v2939 = vunpack.c.l.b16 %v2631
        %v2940 = vunpack.c.h.b16 %v2631
        %v2941 = vunpack.c.l.b16 %v2632
        %v2942 = vunpack.c.h.b16 %v2632
        %v2943 = vunpack.c.l.b16 %v2633
        %v2944 = vunpack.c.h.b16 %v2633
        %v2945 = vunpack.c.l.b16 %v2634
        %v2946 = vunpack.c.h.b16 %v2634
        %v2947 = vunpack.c.l.b16 %v2635
        %v2948 = vunpack.c.h.b16 %v2635
        %v2949 = vunpack.c.l.b16 %v2636
        %v2950 = vunpack.c.h.b16 %v2636
        %v2951 = vunpack.c.l.b16 %v2637
        %v2952 = vunpack.c.h.b16 %v2637
        %v2953 = vunpack.c.l.b16 %v2638
        %v2954 = vunpack.c.h.b16 %v2638
        %v2955 = vunpack.c.l.b16 %v2639
        %v2956 = vunpack.c.h.b16 %v2639
        %v2957 = vunpack.c.l.b16 %v2640
        %v2958 = vunpack.c.h.b16 %v2640
        %v2959 = vunpack.c.l.b16 %v2641
        %v2960 = vunpack.c.h.b16 %v2641
        %v2961 = vunpack.c.l.b16 %v2642
        %v2962 = vunpack.c.h.b16 %v2642
        %v2963 = vunpack.c.l.b16 %v2643
        %v2964 = vunpack.c.h.b16 %v2643
        %v2965 = vunpack.c.l.b16 %v2644
        %v2966 = vunpack.c.h.b16 %v2644
        %v2967 = vunpack.c.l.b16 %v2645
        %v2968 = vunpack.c.h.b16 %v2645
        %v2969 = vunpack.c.l.b16 %v2646
        %v2970 = vunpack.c.h.b16 %v2646
        %v2971 = vunpack.c.l.b16 %v2647
        %v2972 = vunpack.c.h.b16 %v2647
        %v2973 = vunpack.c.l.b16 %v2648
        %v2974 = vunpack.c.h.b16 %v2648
        %v2975 = vunpack.c.l.b16 %v2649
        %v2976 = vunpack.c.h.b16 %v2649
        %v2977 = vunpack.c.l.b16 %v2650
        %v2978 = vunpack.c.h.b16 %v2650
        %v2979 = vunpack.c.l.b16 %v2651
        %v2980 = vunpack.c.h.b16 %v2651
        %v2981 = vunpack.c.l.b16 %v2652
        %v2982 = vunpack.c.h.b16 %v2652
        %v2983 = vunpack.c.l.b16 %v2653
        %v2984 = vunpack.c.h.b16 %v2653
        %v2985 = vunpack.c.l.b16 %v2654
        %v2986 = vunpack.c.h.b16 %v2654
        %v2987 = vunpack.c.l.b16 %v2655
        %v2988 = vunpack.c.h.b16 %v2655
        %v2989 = vunpack.c.l.b16 %v2656
        %v2990 = vunpack.c.h.b16 %v2656
        %v2991 = vunpack.c.l.b16 %v2657
        %v2992 = vunpack.c.h.b16 %v2657
        %v2993 = vunpack.c.l.b16 %v2658
        %v2994 = vunpack.c.h.b16 %v2658
        %v2995 = vunpack.c.l.b16 %v2659
        %v2996 = vunpack.c.h.b16 %v2659
        %v2997 = vunpack.c.l.b16 %v2660
        %v2998 = vunpack.c.h.b16 %v2660
        %v2999 = vunpack.c.l.b16 %v2661
        %v3000 = vunpack.c.h.b16 %v2661
        %v3001 = vunpack.c.l.b16 %v2662
        %v3002 = vunpack.c.h.b16 %v2662
        %v3003 = vunpack.c.l.b16 %v2663
        %v3004 = vunpack.c.h.b16 %v2663
        %v3005 = vunpack.c.l.b16 %v2664
        %v3006 = vunpack.c.h.b16 %v2664
        %v3007 = vunpack.c.l.b16 %v2665
        %v3008 = vunpack.c.h.b16 %v2665
        %v3009 = vunpack.c.l.b16 %v2666
        %v3010 = vunpack.c.h.b16 %v2666
        %v3011 = vunpack.c.l.b16 %v2667
        %v3012 = vunpack.c.h.b16 %v2667
        %v3013 = vunpack.c.l.b16 %v2668
        %v3014 = vunpack.c.h.b16 %v2668
        %v3015 = vunpack.c.l.b16 %v2669
        %v3016 = vunpack.c.h.b16 %v2669
        %v3017 = vunpack.c.l.b16 %v2670
        %v3018 = vunpack.c.h.b16 %v2670
        %v3019 = vunpack.c.l.b16 %v2671
        %v3020 = vunpack.c.h.b16 %v2671
        %v3021 = vunpack.c.l.b16 %v2672
        %v3022 = vunpack.c.h.b16 %v2672
        %v3023 = vunpack.c.l.b16 %v2673
        %v3024 = vunpack.c.h.b16 %v2673
        %v3025 = vunpack.c.l.b16 %v2674
        %v3026 = vunpack.c.h.b16 %v2674
        %v3027 = vunpack.c.l.b16 %v2675
        %v3028 = vunpack.c.h.b16 %v2675
        %v3029 = vunpack.c.l.b16 %v2676
        %v3030 = vunpack.c.h.b16 %v2676
        %v3031 = vunpack.c.l.b16 %v2677
        %v3032 = vunpack.c.h.b16 %v2677
        %v3033 = vunpack.c.l.b16 %v2678
        %v3034 = vunpack.c.h.b16 %v2678
        %v3035 = vunpack.c.l.b16 %v2679
        %v3036 = vunpack.c.h.b16 %v2679
        %v3037 = vunpack.c.l.b16 %v2680
        %v3038 = vunpack.c.h.b16 %v2680
        %v3039 = vunpack.c.l.b16 %v2681
        %v3040 = vunpack.c.h.b16 %v2681
        %v3041 = vunpack.c.l.b16 %v2682
        %v3042 = vunpack.c.h.b16 %v2682
        %v3043 = vunpack.c.l.b16 %v2683
        %v3044 = vunpack.c.h.b16 %v2683
        %v3045 = vunpack.c.l.b16 %v2684
        %v3046 = vunpack.c.h.b16 %v2684
        %v3047 = vunpack.c.l.b16 %v2685
        %v3048 = vunpack.c.h.b16 %v2685
        %v3049 = vunpack.c.l.b16 %v2686
        %v3050 = vunpack.c.h.b16 %v2686
        %v3051 = vunpack.c.l.b16 %v2687
        %v3052 = vunpack.c.h.b16 %v2687
        %v3053 = vunpack.c.l.b16 %v2688
        %v3054 = vunpack.c.h.b16 %v2688
        %v3055 = vunpack.c.l.b16 %v2689
        %v3056 = vunpack.c.h.b16 %v2689
        %v3057 = vunpack.c.l.b16 %v2690
        %v3058 = vunpack.c.h.b16 %v2690
        %v3059 = vunpack.c.l.b16 %v2691
        %v3060 = vunpack.c.h.b16 %v2691
        %v3061 = vunpack.c.l.b16 %v2692
        %v3062 = vunpack.c.h.b16 %v2692
        %v3063 = vunpack.c.l.b16 %v2693
        %v3064 = vunpack.c.h.b16 %v2693
        %v3065 = vunpack.c.l.b16 %v2694
        %v3066 = vunpack.c.h.b16 %v2694
        %v3067 = vunpack.c.l.b16 %v2695
        %v3068 = vunpack.c.h.b16 %v2695
        %v3069 = vunpack.c.l.b16 %v2696
        %v3070 = vunpack.c.h.b16 %v2696
        %v3071 = vunpack.c.l.b16 %v2697
        %v3072 = vunpack.c.h.b16 %v2697
        %v3073 = vunpack.c.l.b16 %v2698
        %v3074 = vunpack.c.h.b16 %v2698
        %v3075 = vunpack.c.l.b16 %v2699
        %v3076 = vunpack.c.h.b16 %v2699
        %v3077 = vunpack.c.l.b16 %v2700
        %v3078 = vunpack.c.h.b16 %v2700
        %v3079 = vunpack.c.l.b16 %v2701
        %v3080 = vunpack.c.h.b16 %v2701
        %v3081 = vunpack.c.l.b16 %v2702
        %v3082 = vunpack.c.h.b16 %v2702
        %v3083 = vunpack.c.l.b16 %v2703
        %v3084 = vunpack.c.h.b16 %v2703
        %v3085 = vunpack.c.l.b16 %v2704
        %v3086 = vunpack.c.h.b16 %v2704
        %v3087 = vunpack.c.l.b16 %v2705
        %v3088 = vunpack.c.h.b16 %v2705
        %v3089 = vunpack.c.l.b16 %v2706
        %v3090 = vunpack.c.h.b16 %v2706
        %v3091 = vunpack.c.l.b16 %v2707
        %v3092 = vunpack.c.h.b16 %v2707
        %v3093 = vunpack.c.l.b16 %v2708
        %v3094 = vunpack.c.h.b16 %v2708
        %v3095 = vunpack.c.l.b16 %v2709
        %v3096 = vunpack.c.h.b16 %v2709
        %v3097 = vunpack.c.l.b16 %v2710
        %v3098 = vunpack.c.h.b16 %v2710
        %v3099 = vunpack.c.l.b16 %v2711
        %v3100 = vunpack.c.h.b16 %v2711
        %v3101 = vunpack.c.l.b16 %v2712
        %v3102 = vunpack.c.h.b16 %v2712
        %v3103 = vunpack.c.l.b16 %v2713
        %v3104 = vunpack.c.h.b16 %v2713
        %v3105 = vunpack.c.l.b16 %v2714
        %v3106 = vunpack.c.h.b16 %v2714
        %v3107 = vunpack.c.l.b16 %v2715
        %v3108 = vunpack.c.h.b16 %v2715
        %v3109 = vunpack.c.l.b16 %v2716
        %v3110 = vunpack.c.h.b16 %v2716
        %v3111 = vunpack.c.l.b16 %v2717
        %v3112 = vunpack.c.h.b16 %v2717
        %v3113 = vunpack.c.l.b16 %v2718
        %v3114 = vunpack.c.h.b16 %v2718
        %v3115 = vunpack.c.l.b16 %v2719
        %v3116 = vunpack.c.h.b16 %v2719
        %v3117 = vunpack.c.l.b16 %v2720
        %v3118 = vunpack.c.h.b16 %v2720
        %v3119 = vunpack.c.l.b16 %v2721
        %v3120 = vunpack.c.h.b16 %v2721
        %v3121 = vunpack.c.l.b16 %v2722
        %v3122 = vunpack.c.h.b16 %v2722
        %v3123 = vunpack.c.l.b16 %v2723
        %v3124 = vunpack.c.h.b16 %v2723
        %v3125 = vunpack.c.l.b16 %v2724
        %v3126 = vunpack.c.h.b16 %v2724
        %v3127 = vunpack.c.l.b16 %v2725
        %v3128 = vunpack.c.h.b16 %v2725
        %v3129 = vunpack.c.l.b16 %v2726
        %v3130 = vunpack.c.h.b16 %v2726
        %v3131 = vunpack.c.l.b16 %v2727
        %v3132 = vunpack.c.h.b16 %v2727
        %v3133 = vunpack.c.l.b16 %v2728
        %v3134 = vunpack.c.h.b16 %v2728
        %v3135 = vunpack.c.l.b16 %v2729
        %v3136 = vunpack.c.h.b16 %v2729
        %v3137 = vunpack.c.l.b16 %v2730
        %v3138 = vunpack.c.h.b16 %v2730
        %v3139 = vunpack.c.l.b16 %v2731
        %v3140 = vunpack.c.h.b16 %v2731
        %v3141 = vunpack.c.l.b16 %v2732
        %v3142 = vunpack.c.h.b16 %v2732
        %v3143 = vunpack.c.l.b16 %v2733
        %v3144 = vunpack.c.h.b16 %v2733
        %v3145 = vunpack.c.l.b16 %v2734
        %v3146 = vunpack.c.h.b16 %v2734
        %v3147 = vunpack.c.l.b16 %v2735
        %v3148 = vunpack.c.h.b16 %v2735
        %v3149 = vunpack.c.l.b16 %v2736
        %v3150 = vunpack.c.h.b16 %v2736
        %v3151 = vunpack.c.l.b16 %v2737
        %v3152 = vunpack.c.h.b16 %v2737
        %v3153 = vunpack.c.l.b16 %v2738
        %v3154 = vunpack.c.h.b16 %v2738
        %v3155 = vunpack.c.l.b16 %v2739
        %v3156 = vunpack.c.h.b16 %v2739
        %v3157 = vunpack.c.l.b16 %v2740
        %v3158 = vunpack.c.h.b16 %v2740
        %v3159 = vunpack.c.l.b16 %v2741
        %v3160 = vunpack.c.h.b16 %v2741
        %v3161 = vunpack.c.l.b16 %v2742
        %v3162 = vunpack.c.h.b16 %v2742
        %v3163 = vpack.c.b16 %v2911, %v2907
        %v3164 = vpack.c.b16 %v2912, %v2908
        %v3165 = vpack.c.b16 %v2913, %v2909
        %v3166 = vpack.c.b16 %v2914, %v2910
        %v3167 = vpack.c.b16 %v2919, %v2915
        %v3168 = vpack.c.b16 %v2920, %v2916
        %v3169 = vpack.c.b16 %v2921, %v2917
        %v3170 = vpack.c.b16 %v2922, %v2918
        %v3171 = vpack.c.b16 %v2927, %v2923
        %v3172 = vpack.c.b16 %v2928, %v2924
        %v3173 = vpack.c.b16 %v2929, %v2925
        %v3174 = vpack.c.b16 %v2930, %v2926
        %v3175 = vpack.c.b16 %v2935, %v2931
        %v3176 = vpack.c.b16 %v2936, %v2932
        %v3177 = vpack.c.b16 %v2937, %v2933
        %v3178 = vpack.c.b16 %v2938, %v2934
        %v3179 = vpack.c.b16 %v2943, %v2939
        %v3180 = vpack.c.b16 %v2944, %v2940
        %v3181 = vpack.c.b16 %v2945, %v2941
        %v3182 = vpack.c.b16 %v2946, %v2942
        %v3183 = vpack.c.b16 %v2951, %v2947
        %v3184 = vpack.c.b16 %v2952, %v2948
        %v3185 = vpack.c.b16 %v2953, %v2949
        %v3186 = vpack.c.b16 %v2954, %v2950
        %v3187 = vpack.c.b16 %v2959, %v2955
        %v3188 = vpack.c.b16 %v2960, %v2956
        %v3189 = vpack.c.b16 %v2961, %v2957
        %v3190 = vpack.c.b16 %v2962, %v2958
        %v3191 = vpack.c.b16 %v2967, %v2963
        %v3192 = vpack.c.b16 %v2968, %v2964
        %v3193 = vpack.c.b16 %v2969, %v2965
        %v3194 = vpack.c.b16 %v2970, %v2966
        %v3195 = vpack.c.b16 %v2975, %v2971
        %v3196 = vpack.c.b16 %v2976, %v2972
        %v3197 = vpack.c.b16 %v2977, %v2973
        %v3198 = vpack.c.b16 %v2978, %v2974
        %v3199 = vpack.c.b16 %v2983, %v2979
        %v3200 = vpack.c.b16 %v2984, %v2980
        %v3201 = vpack.c.b16 %v2985, %v2981
        %v3202 = vpack.c.b16 %v2986, %v2982
        %v3203 = vpack.c.b16 %v2991, %v2987
        %v3204 = vpack.c.b16 %v2992, %v2988
        %v3205 = vpack.c.b16 %v2993, %v2989
        %v3206 = vpack.c.b16 %v2994, %v2990
        %v3207 = vpack.c.b16 %v2999, %v2995
        %v3208 = vpack.c.b16 %v3000, %v2996
        %v3209 = vpack.c.b16 %v3001, %v2997
        %v3210 = vpack.c.b16 %v3002, %v2998
        %v3211 = vpack.c.b16 %v3007, %v3003
        %v3212 = vpack.c.b16 %v3008, %v3004
        %v3213 = vpack.c.b16 %v3009, %v3005
        %v3214 = vpack.c.b16 %v3010, %v3006
        %v3215 = vpack.c.b16 %v3015, %v3011
        %v3216 = vpack.c.b16 %v3016, %v3012
        %v3217 = vpack.c.b16 %v3017, %v3013
        %v3218 = vpack.c.b16 %v3018, %v3014
        %v3219 = vpack.c.b16 %v3023, %v3019
        %v3220 = vpack.c.b16 %v3024, %v3020
        %v3221 = vpack.c.b16 %v3025, %v3021
        %v3222 = vpack.c.b16 %v3026, %v3022
        %v3223 = vpack.c.b16 %v3031, %v3027
        %v3224 = vpack.c.b16 %v3032, %v3028
        %v3225 = vpack.c.b16 %v3033, %v3029
        %v3226 = vpack.c.b16 %v3034, %v3030
        %v3227 = vpack.c.b16 %v3039, %v3035
        %v3228 = vpack.c.b16 %v3040, %v3036
        %v3229 = vpack.c.b16 %v3041, %v3037
        %v3230 = vpack.c.b16 %v3042, %v3038
        %v3231 = vpack.c.b16 %v3047, %v3043
        %v3232 = vpack.c.b16 %v3048, %v3044
        %v3233 = vpack.c.b16 %v3049, %v3045
        %v3234 = vpack.c.b16 %v3050, %v3046
        %v3235 = vpack.c.b16 %v3055, %v3051
        %v3236 = vpack.c.b16 %v3056, %v3052
        %v3237 = vpack.c.b16 %v3057, %v3053
        %v3238 = vpack.c.b16 %v3058, %v3054
        %v3239 = vpack.c.b16 %v3063, %v3059
        %v3240 = vpack.c.b16 %v3064, %v3060
        %v3241 = vpack.c.b16 %v3065, %v3061
        %v3242 = vpack.c.b16 %v3066, %v3062
        %v3243 = vpack.c.b16 %v3071, %v3067
        %v3244 = vpack.c.b16 %v3072, %v3068
        %v3245 = vpack.c.b16 %v3073, %v3069
        %v3246 = vpack.c.b16 %v3074, %v3070
        %v3247 = vpack.c.b16 %v3079, %v3075
        %v3248 = vpack.c.b16 %v3080, %v3076
        %v3249 = vpack.c.b16 %v3081, %v3077
        %v3250 = vpack.c.b16 %v3082, %v3078
        %v3251 = vpack.c.b16 %v3087, %v3083
        %v3252 = vpack.c.b16 %v3088, %v3084
        %v3253 = vpack.c.b16 %v3089, %v3085
        %v3254 = vpack.c.b16 %v3090, %v3086
        %v3255 = vpack.c.b16 %v3095, %v3091
        %v3256 = vpack.c.b16 %v3096, %v3092
        %v3257 = vpack.c.b16 %v3097, %v3093
        %v3258 = vpack.c.b16 %v3098, %v3094
        %v3259 = vpack.c.b16 %v3103, %v3099
        %v3260 = vpack.c.b16 %v3104, %v3100
        %v3261 = vpack.c.b16 %v3105, %v3101
        %v3262 = vpack.c.b16 %v3106, %v3102
        %v3263 = vpack.c.b16 %v3111, %v3107
        %v3264 = vpack.c.b16 %v3112, %v3108
        %v3265 = vpack.c.b16 %v3113, %v3109
        %v3266 = vpack.c.b16 %v3114, %v3110
        %v3267 = vpack.c.b16 %v3119, %v3115
        %v3268 = vpack.c.b16 %v3120, %v3116
        %v3269 = vpack.c.b16 %v3121, %v3117
        %v3270 = vpack.c.b16 %v3122, %v3118
        %v3271 = vpack.c.b16 %v3127, %v3123
        %v3272 = vpack.c.b16 %v3128, %v3124
        %v3273 = vpack.c.b16 %v3129, %v3125
        %v3274 = vpack.c.b16 %v3130, %v3126
        %v3275 = vpack.c.b16 %v3135, %v3131
        %v3276 = vpack.c.b16 %v3136, %v3132
        %v3277 = vpack.c.b16 %v3137, %v3133
        %v3278 = vpack.c.b16 %v3138, %v3134
        %v3279 = vpack.c.b16 %v3143, %v3139
        %v3280 = vpack.c.b16 %v3144, %v3140
        %v3281 = vpack.c.b16 %v3145, %v3141
        %v3282 = vpack.c.b16 %v3146, %v3142
        %v3283 = vpack.c.b16 %v3151, %v3147
        %v3284 = vpack.c.b16 %v3152, %v3148
        %v3285 = vpack.c.b16 %v3153, %v3149
        %v3286 = vpack.c.b16 %v3154, %v3150
        %v3287 = vpack.c.b16 %v3159, %v3155
        %v3288 = vpack.c.b16 %v3160, %v3156
        %v3289 = vpack.c.b16 %v3161, %v3157
        %v3290 = vpack.c.b16 %v3162, %v3158
        %3419 = vmatprep.subr.bf16.mxu0 %v3164
        %3420 = vmatpush1.bf16.msra.mxu0 %v3163
        %3421 = vmatprep.subr.bf16.mxu0 %v3168
        %3422 = vmatpush1.bf16.msra.mxu0 %v3167
        %3423 = vmatprep.subr.bf16.mxu0 %v3172
        %3424 = vmatpush1.bf16.msra.mxu0 %v3171
        %3425 = vmatprep.subr.bf16.mxu0 %v3176
        %3426 = vmatpush1.bf16.msra.mxu0 %v3175
        %3427 = vmatprep.subr.bf16.mxu0 %v3180
        %3428 = vmatpush1.bf16.msra.mxu0 %v3179
        %3429 = vmatprep.subr.bf16.mxu0 %v3184
        %3430 = vmatpush1.bf16.msra.mxu0 %v3183
        %3431 = vmatprep.subr.bf16.mxu0 %v3188
        %3432 = vmatpush1.bf16.msra.mxu0 %v3187
        %3433 = vmatprep.subr.bf16.mxu0 %v3192
        %3434 = vmatpush1.bf16.msra.mxu0 %v3191
        %3435 = vmatprep.subr.bf16.mxu0 %v3196
        %3436 = vmatpush1.bf16.msra.mxu0 %v3195
        %3437 = vmatprep.subr.bf16.mxu0 %v3200
        %3438 = vmatpush1.bf16.msra.mxu0 %v3199
        %3439 = vmatprep.subr.bf16.mxu0 %v3204
        %3440 = vmatpush1.bf16.msra.mxu0 %v3203
        %3441 = vmatprep.subr.bf16.mxu0 %v3208
        %3442 = vmatpush1.bf16.msra.mxu0 %v3207
        %3443 = vmatprep.subr.bf16.mxu0 %v3212
        %3444 = vmatpush1.bf16.msra.mxu0 %v3211
        %3445 = vmatprep.subr.bf16.mxu0 %v3216
        %3446 = vmatpush1.bf16.msra.mxu0 %v3215
        %3447 = vmatprep.subr.bf16.mxu0 %v3220
        %3448 = vmatpush1.bf16.msra.mxu0 %v3219
        %3449 = vmatprep.subr.bf16.mxu0 %v3224
        %3450 = vmatpush1.bf16.msra.mxu0 %v3223
        %3451 = vmatprep.mubr.bf16.mxu0 %v2607
        %3452 = vmatmul.mubr.bf16.gmra.mrb[0].mxu0 %v2606
        %v3453 = vpop.f32.mrb[0].mxu0
        %v3454 = vadd.f32 %v2766, %v3453
        %v3455 = vpop.f32.mrb[0].mxu0
        %v3456 = vadd.f32 %v2770, %v3455
        %v3457 = vpop.f32.mrb[0].mxu0
        %v3458 = vadd.f32 %v2766, %v3457
        %v3459 = vpop.f32.mrb[0].mxu0
        %v3460 = vadd.f32 %v2770, %v3459
        %3461 = vmatprep.mubr.bf16.mxu0 %v2611
        %3462 = vmatmul.mubr.bf16.gmra.mrb[0].mxu0 %v2610
        %v3463 = vpop.f32.mrb[0].mxu0
        %v3464 = vadd.f32 %v2766, %v3463
        %v3465 = vpop.f32.mrb[0].mxu0
        %v3466 = vadd.f32 %v2770, %v3465
        %v3467 = vpop.f32.mrb[0].mxu0
        %v3468 = vpop.f32.mrb[0].mxu0
        %3469 = vdwg.mxu0
        %3470 = vmatprep.subr.bf16.mxu0 %v3228
        %3471 = vmatpush1.bf16.msra.mxu0 %v3227
        %3472 = vmatprep.subr.bf16.mxu0 %v3232
        %3473 = vmatpush1.bf16.msra.mxu0 %v3231
        %3474 = vmatprep.subr.bf16.mxu0 %v3236
        %3475 = vmatpush1.bf16.msra.mxu0 %v3235
        %3476 = vmatprep.subr.bf16.mxu0 %v3240
        %3477 = vmatpush1.bf16.msra.mxu0 %v3239
        %3478 = vmatprep.subr.bf16.mxu0 %v3244
        %3479 = vmatpush1.bf16.msra.mxu0 %v3243
        %3480 = vmatprep.subr.bf16.mxu0 %v3248
        %3481 = vmatpush1.bf16.msra.mxu0 %v3247
        %3482 = vmatprep.subr.bf16.mxu0 %v3252
        %3483 = vmatpush1.bf16.msra.mxu0 %v3251
        %3484 = vmatprep.subr.bf16.mxu0 %v3256
        %3485 = vmatpush1.bf16.msra.mxu0 %v3255
        %3486 = vmatprep.subr.bf16.mxu0 %v3260
        %3487 = vmatpush1.bf16.msra.mxu0 %v3259
        %3488 = vmatprep.subr.bf16.mxu0 %v3264
        %3489 = vmatpush1.bf16.msra.mxu0 %v3263
        %3490 = vmatprep.subr.bf16.mxu0 %v3268
        %3491 = vmatpush1.bf16.msra.mxu0 %v3267
        %3492 = vmatprep.subr.bf16.mxu0 %v3272
        %3493 = vmatpush1.bf16.msra.mxu0 %v3271
        %3494 = vmatprep.subr.bf16.mxu0 %v3276
        %3495 = vmatpush1.bf16.msra.mxu0 %v3275
        %3496 = vmatprep.subr.bf16.mxu0 %v3280
        %3497 = vmatpush1.bf16.msra.mxu0 %v3279
        %3498 = vmatprep.subr.bf16.mxu0 %v3284
        %3499 = vmatpush1.bf16.msra.mxu0 %v3283
        %3500 = vmatprep.subr.bf16.mxu0 %v3288
        %3501 = vmatpush1.bf16.msra.mxu0 %v3287
        %3502 = vmatprep.mubr.bf16.mxu0 %v2609
        %3503 = vmatmul.mubr.bf16.gmra.mrb[0].mxu0 %v2608
        %v3504 = vpop.f32.mrb[0].mxu0
        %v3505 = vadd.f32 %v3454, %v3504
        %v3506 = vpop.f32.mrb[0].mxu0
        %v3507 = vadd.f32 %v3456, %v3506
        %v3508 = vpop.f32.mrb[0].mxu0
        %v3509 = vadd.f32 %v3458, %v3508
        %v3510 = vpop.f32.mrb[0].mxu0
        %v3511 = vadd.f32 %v3460, %v3510
        %3512 = vmatprep.mubr.bf16.mxu0 %v2613
        %3513 = vmatmul.mubr.bf16.gmra.mrb[0].mxu0 %v2612
        %v3514 = vpop.f32.mrb[0].mxu0
        %v3515 = vadd.f32 %v3464, %v3514
        %v3516 = vpop.f32.mrb[0].mxu0
        %v3517 = vadd.f32 %v3466, %v3516
        %v3518 = vpop.f32.mrb[0].mxu0
        %v3519 = vpop.f32.mrb[0].mxu0
        %3520 = vdwg.mxu0
        %3521 = vmatprep.subr.bf16.mxu0 %v3166
        %3522 = vmatpush1.bf16.msra.mxu0 %v3165
        %3523 = vmatprep.subr.bf16.mxu0 %v3170
        %3524 = vmatpush1.bf16.msra.mxu0 %v3169
        %3525 = vmatprep.subr.bf16.mxu0 %v3174
        %3526 = vmatpush1.bf16.msra.mxu0 %v3173
        %3527 = vmatprep.subr.bf16.mxu0 %v3178
        %3528 = vmatpush1.bf16.msra.mxu0 %v3177
        %3529 = vmatprep.subr.bf16.mxu0 %v3182
        %3530 = vmatpush1.bf16.msra.mxu0 %v3181
        %3531 = vmatprep.subr.bf16.mxu0 %v3186
        %3532 = vmatpush1.bf16.msra.mxu0 %v3185
        %3533 = vmatprep.subr.bf16.mxu0 %v3190
        %3534 = vmatpush1.bf16.msra.mxu0 %v3189
        %3535 = vmatprep.subr.bf16.mxu0 %v3194
        %3536 = vmatpush1.bf16.msra.mxu0 %v3193
        %3537 = vmatprep.subr.bf16.mxu0 %v3198
        %3538 = vmatpush1.bf16.msra.mxu0 %v3197
        %3539 = vmatprep.subr.bf16.mxu0 %v3202
        %3540 = vmatpush1.bf16.msra.mxu0 %v3201
        %3541 = vmatprep.subr.bf16.mxu0 %v3206
        %3542 = vmatpush1.bf16.msra.mxu0 %v3205
        %3543 = vmatprep.subr.bf16.mxu0 %v3210
        %3544 = vmatpush1.bf16.msra.mxu0 %v3209
        %3545 = vmatprep.subr.bf16.mxu0 %v3214
        %3546 = vmatpush1.bf16.msra.mxu0 %v3213
        %3547 = vmatprep.subr.bf16.mxu0 %v3218
        %3548 = vmatpush1.bf16.msra.mxu0 %v3217
        %3549 = vmatprep.subr.bf16.mxu0 %v3222
        %3550 = vmatpush1.bf16.msra.mxu0 %v3221
        %3551 = vmatprep.subr.bf16.mxu0 %v3226
        %3552 = vmatpush1.bf16.msra.mxu0 %v3225
        %3553 = vmatprep.mubr.bf16.mxu0 %v2607
        %3554 = vmatmul.mubr.bf16.gmra.mrb[0].mxu0 %v2606
        %v3555 = vpop.f32.mrb[0].mxu0
        %v3556 = vadd.f32 %v2774, %v3555
        %v3557 = vpop.f32.mrb[0].mxu0
        %v3558 = vadd.f32 %v2778, %v3557
        %v3559 = vpop.f32.mrb[0].mxu0
        %v3560 = vadd.f32 %v2774, %v3559
        %v3561 = vpop.f32.mrb[0].mxu0
        %v3562 = vadd.f32 %v2778, %v3561
        %3563 = vmatprep.mubr.bf16.mxu0 %v2611
        %3564 = vmatmul.mubr.bf16.gmra.mrb[0].mxu0 %v2610
        %v3565 = vpop.f32.mrb[0].mxu0
        %v3566 = vadd.f32 %v2774, %v3565
        %v3567 = vpop.f32.mrb[0].mxu0
        %v3568 = vadd.f32 %v2778, %v3567
        %v3569 = vpop.f32.mrb[0].mxu0
        %v3570 = vpop.f32.mrb[0].mxu0
        %3571 = vdwg.mxu0
        %3572 = vmatprep.subr.bf16.mxu0 %v3230
        %3573 = vmatpush1.bf16.msra.mxu0 %v3229
        %3574 = vmatprep.subr.bf16.mxu0 %v3234
        %3575 = vmatpush1.bf16.msra.mxu0 %v3233
        %3576 = vmatprep.subr.bf16.mxu0 %v3238
        %3577 = vmatpush1.bf16.msra.mxu0 %v3237
        %3578 = vmatprep.subr.bf16.mxu0 %v3242
        %3579 = vmatpush1.bf16.msra.mxu0 %v3241
        %3580 = vmatprep.subr.bf16.mxu0 %v3246
        %3581 = vmatpush1.bf16.msra.mxu0 %v3245
        %3582 = vmatprep.subr.bf16.mxu0 %v3250
        %3583 = vmatpush1.bf16.msra.mxu0 %v3249
        %3584 = vmatprep.subr.bf16.mxu0 %v3254
        %3585 = vmatpush1.bf16.msra.mxu0 %v3253
        %3586 = vmatprep.subr.bf16.mxu0 %v3258
        %3587 = vmatpush1.bf16.msra.mxu0 %v3257
        %3588 = vmatprep.subr.bf16.mxu0 %v3262
        %3589 = vmatpush1.bf16.msra.mxu0 %v3261
        %3590 = vmatprep.subr.bf16.mxu0 %v3266
        %3591 = vmatpush1.bf16.msra.mxu0 %v3265
        %3592 = vmatprep.subr.bf16.mxu0 %v3270
        %3593 = vmatpush1.bf16.msra.mxu0 %v3269
        %3594 = vmatprep.subr.bf16.mxu0 %v3274
        %3595 = vmatpush1.bf16.msra.mxu0 %v3273
        %3596 = vmatprep.subr.bf16.mxu0 %v3278
        %3597 = vmatpush1.bf16.msra.mxu0 %v3277
        %3598 = vmatprep.subr.bf16.mxu0 %v3282
        %3599 = vmatpush1.bf16.msra.mxu0 %v3281
        %3600 = vmatprep.subr.bf16.mxu0 %v3286
        %3601 = vmatpush1.bf16.msra.mxu0 %v3285
        %3602 = vmatprep.subr.bf16.mxu0 %v3290
        %3603 = vmatpush1.bf16.msra.mxu0 %v3289
        %3604 = vmatprep.mubr.bf16.mxu0 %v2609
        %3605 = vmatmul.mubr.bf16.gmra.mrb[0].mxu0 %v2608
        %v3606 = vpop.f32.mrb[0].mxu0
        %v3607 = vadd.f32 %v3556, %v3606
        %v3608 = vpop.f32.mrb[0].mxu0
        %v3609 = vadd.f32 %v3558, %v3608
        %v3610 = vpop.f32.mrb[0].mxu0
        %v3611 = vadd.f32 %v3560, %v3610
        %v3612 = vpop.f32.mrb[0].mxu0
        %v3613 = vadd.f32 %v3562, %v3612
        %3614 = vmatprep.mubr.bf16.mxu0 %v2613
        %3615 = vmatmul.mubr.bf16.gmra.mrb[0].mxu0 %v2612
        %v3616 = vpop.f32.mrb[0].mxu0
        %v3617 = vadd.f32 %v3566, %v3616
        %v3618 = vpop.f32.mrb[0].mxu0
        %v3619 = vadd.f32 %v3568, %v3618
        %v3620 = vpop.f32.mrb[0].mxu0
        %v3621 = vpop.f32.mrb[0].mxu0
        %3622 = vdwg.mxu0
        %vm3623 = vcmp.gt.f32.partialorder %v3505, 0.0
        %vm3624 = vcmp.gt.f32.partialorder %v3507, 0.0
        %vm3625 = vcmp.gt.f32.partialorder %v3607, 0.0
        %vm3626 = vcmp.gt.f32.partialorder %v3609, 0.0
        %vm3627 = vcmp.gt.f32.partialorder %v3509, 0.0
        %vm3628 = vcmp.gt.f32.partialorder %v3511, 0.0
        %vm3629 = vcmp.gt.f32.partialorder %v3611, 0.0
        %vm3630 = vcmp.gt.f32.partialorder %v3613, 0.0
        %vm3631 = vcmp.gt.f32.partialorder %v3515, 0.0
        %vm3632 = vcmp.gt.f32.partialorder %v3517, 0.0
        %vm3633 = vcmp.gt.f32.partialorder %v3617, 0.0
        %vm3634 = vcmp.gt.f32.partialorder %v3619, 0.0
        %v3635 = vmul.f32 %v3505, 0.2
        %v3636 = vmul.f32 %v3507, 0.2
        %v3637 = vmul.f32 %v3607, 0.2
        %v3638 = vmul.f32 %v3609, 0.2
        %v3639 = vmul.f32 %v3509, 0.2
        %v3640 = vmul.f32 %v3511, 0.2
        %v3641 = vmul.f32 %v3611, 0.2
        %v3642 = vmul.f32 %v3613, 0.2
        %v3643 = vmul.f32 %v3515, 0.2
        %v3644 = vmul.f32 %v3517, 0.2
        %v3645 = vmul.f32 %v3617, 0.2
        %v3646 = vmul.f32 %v3619, 0.2
        %v3647 = vsel %vm3623, %v3505, %v3635
        %v3648 = vsel %vm3624, %v3507, %v3636
        %v3649 = vsel %vm3625, %v3607, %v3637
        %v3650 = vsel %vm3626, %v3609, %v3638
        %v3651 = vsel %vm3627, %v3509, %v3639
        %v3652 = vsel %vm3628, %v3511, %v3640
        %v3653 = vsel %vm3629, %v3611, %v3641
        %v3654 = vsel %vm3630, %v3613, %v3642
        %v3655 = vsel %vm3631, %v3515, %v3643
        %v3656 = vsel %vm3632, %v3517, %v3644
        %v3657 = vsel %vm3633, %v3617, %v3645
        %v3658 = vsel %vm3634, %v3619, %v3646
        %v3659 = vmul.f32 %v3647, 1.4142135
        %v3660 = vmul.f32 %v3648, 1.4142135
        %v3661 = vmul.f32 %v3649, 1.4142135
        %v3662 = vmul.f32 %v3650, 1.4142135
        %v3663 = vmul.f32 %v3651, 1.4142135
        %v3664 = vmul.f32 %v3652, 1.4142135
        %v3665 = vmul.f32 %v3653, 1.4142135
        %v3666 = vmul.f32 %v3654, 1.4142135
        %v3667 = vmul.f32 %v3655, 1.4142135
        %v3668 = vmul.f32 %v3656, 1.4142135
        %v3669 = vmul.f32 %v3657, 1.4142135
        %v3670 = vmul.f32 %v3658, 1.4142135
        %v3671 = vpack.c.bf16 %v3663, %v3659
        %v3672 = vpack.c.bf16 %v3664, %v3660
        %v3673 = vpack.c.bf16 %v3665, %v3661
        %v3674 = vpack.c.bf16 %v3666, %v3662
        %v3675 = vpack.c.bf16 %v3667, %v3667
        %v3676 = vpack.c.bf16 %v3668, %v3668
        %v3677 = vpack.c.bf16 %v3669, %v3669
        %v3678 = vpack.c.bf16 %v3670, %v3670
        %s3679 = scalar_lea.vmem %s375, 3072 [#allocation5]
        %v3680 = vld [vmem:[%s3679] sm:$0xff]
        %v3681 = vld [vmem:[%s3679 + $0x8] sm:$0xff]
        %v3682 = vld [vmem:[%s3679 + $0x10] sm:$0xff]
        %v3683 = vld [vmem:[%s3679 + $0x18] sm:$0xff]
        %v3684 = vld [vmem:[%s3679 + $0x20] sm:$0xff]
        %v3685 = vld [vmem:[%s3679 + $0x28] sm:$0xff]
        %v3686 = vld [vmem:[%s3679 + $0x30] sm:$0xff]
        %v3687 = vld [vmem:[%s3679 + $0x38] sm:$0xff]
        %v3688 = vld [vmem:[%s3679 + $0x40] sm:$0xff]
        %v3689 = vld [vmem:[%s3679 + $0x48] sm:$0xff]
        %v3690 = vld [vmem:[%s3679 + $0x50] sm:$0xff]
        %v3691 = vld [vmem:[%s3679 + $0x58] sm:$0xff]
        %v3692 = vld [vmem:[%s3679 + $0x60] sm:$0xff]
        %v3693 = vld [vmem:[%s3679 + $0x68] sm:$0xff]
        %v3694 = vld [vmem:[%s3679 + $0x70] sm:$0xff]
        %v3695 = vld [vmem:[%s3679 + $0x78] sm:$0xff]
        %v3696 = vld [vmem:[%s3679 + $0x80] sm:$0xff]
        %v3697 = vld [vmem:[%s3679 + $0x88] sm:$0xff]
        %v3698 = vld [vmem:[%s3679 + $0x90] sm:$0xff]
        %v3699 = vld [vmem:[%s3679 + $0x98] sm:$0xff]
        %v3700 = vld [vmem:[%s3679 + $0xa0] sm:$0xff]
        %v3701 = vld [vmem:[%s3679 + $0xa8] sm:$0xff]
        %v3702 = vld [vmem:[%s3679 + $0xb0] sm:$0xff]
        %v3703 = vld [vmem:[%s3679 + $0xb8] sm:$0xff]
        %v3704 = vld [vmem:[%s3679 + $0xc0] sm:$0xff]
        %v3705 = vld [vmem:[%s3679 + $0xc8] sm:$0xff]
        %v3706 = vld [vmem:[%s3679 + $0xd0] sm:$0xff]
        %v3707 = vld [vmem:[%s3679 + $0xd8] sm:$0xff]
        %v3708 = vld [vmem:[%s3679 + $0xe0] sm:$0xff]
        %v3709 = vld [vmem:[%s3679 + $0xe8] sm:$0xff]
        %v3710 = vld [vmem:[%s3679 + $0xf0] sm:$0xff]
        %v3711 = vld [vmem:[%s3679 + $0xf8] sm:$0xff]
        %v3712 = vld [vmem:[%s3679 + $0x100] sm:$0xff]
        %v3713 = vld [vmem:[%s3679 + $0x108] sm:$0xff]
        %v3714 = vld [vmem:[%s3679 + $0x110] sm:$0xff]
        %v3715 = vld [vmem:[%s3679 + $0x118] sm:$0xff]
        %v3716 = vld [vmem:[%s3679 + $0x120] sm:$0xff]
        %v3717 = vld [vmem:[%s3679 + $0x128] sm:$0xff]
        %v3718 = vld [vmem:[%s3679 + $0x130] sm:$0xff]
        %v3719 = vld [vmem:[%s3679 + $0x138] sm:$0xff]
        %v3720 = vld [vmem:[%s3679 + $0x140] sm:$0xff]
        %v3721 = vld [vmem:[%s3679 + $0x148] sm:$0xff]
        %v3722 = vld [vmem:[%s3679 + $0x150] sm:$0xff]
        %v3723 = vld [vmem:[%s3679 + $0x158] sm:$0xff]
        %v3724 = vld [vmem:[%s3679 + $0x160] sm:$0xff]
        %v3725 = vld [vmem:[%s3679 + $0x168] sm:$0xff]
        %v3726 = vld [vmem:[%s3679 + $0x170] sm:$0xff]
        %v3727 = vld [vmem:[%s3679 + $0x178] sm:$0xff]
        %v3728 = vld [vmem:[%s3679 + $0x180] sm:$0xff]
        %v3729 = vld [vmem:[%s3679 + $0x188] sm:$0xff]
        %v3730 = vld [vmem:[%s3679 + $0x190] sm:$0xff]
        %v3731 = vld [vmem:[%s3679 + $0x198] sm:$0xff]
        %v3732 = vld [vmem:[%s3679 + $0x1a0] sm:$0xff]
        %v3733 = vld [vmem:[%s3679 + $0x1a8] sm:$0xff]
        %v3734 = vld [vmem:[%s3679 + $0x1b0] sm:$0xff]
        %v3735 = vld [vmem:[%s3679 + $0x1b8] sm:$0xff]
        %v3736 = vld [vmem:[%s3679 + $0x1c0] sm:$0xff]
        %v3737 = vld [vmem:[%s3679 + $0x1c8] sm:$0xff]
        %v3738 = vld [vmem:[%s3679 + $0x1d0] sm:$0xff]
        %v3739 = vld [vmem:[%s3679 + $0x1d8] sm:$0xff]
        %v3740 = vld [vmem:[%s3679 + $0x1e0] sm:$0xff]
        %v3741 = vld [vmem:[%s3679 + $0x1e8] sm:$0xff]
        %v3742 = vld [vmem:[%s3679 + $0x1f0] sm:$0xff]
        %v3743 = vld [vmem:[%s3679 + $0x1f8] sm:$0xff]
        %v3744 = vld [vmem:[%s3679 + $0x200] sm:$0xff]
        %v3745 = vld [vmem:[%s3679 + $0x208] sm:$0xff]
        %v3746 = vld [vmem:[%s3679 + $0x210] sm:$0xff]
        %v3747 = vld [vmem:[%s3679 + $0x218] sm:$0xff]
        %v3748 = vld [vmem:[%s3679 + $0x220] sm:$0xff]
        %v3749 = vld [vmem:[%s3679 + $0x228] sm:$0xff]
        %v3750 = vld [vmem:[%s3679 + $0x230] sm:$0xff]
        %v3751 = vld [vmem:[%s3679 + $0x238] sm:$0xff]
        %v3752 = vld [vmem:[%s3679 + $0x240] sm:$0xff]
        %v3753 = vld [vmem:[%s3679 + $0x248] sm:$0xff]
        %v3754 = vld [vmem:[%s3679 + $0x250] sm:$0xff]
        %v3755 = vld [vmem:[%s3679 + $0x258] sm:$0xff]
        %v3756 = vld [vmem:[%s3679 + $0x260] sm:$0xff]
        %v3757 = vld [vmem:[%s3679 + $0x268] sm:$0xff]
        %v3758 = vld [vmem:[%s3679 + $0x270] sm:$0xff]
        %v3759 = vld [vmem:[%s3679 + $0x278] sm:$0xff]
        %v3760 = vld [vmem:[%s3679 + $0x280] sm:$0xff]
        %v3761 = vld [vmem:[%s3679 + $0x288] sm:$0xff]
        %v3762 = vld [vmem:[%s3679 + $0x290] sm:$0xff]
        %v3763 = vld [vmem:[%s3679 + $0x298] sm:$0xff]
        %v3764 = vld [vmem:[%s3679 + $0x2a0] sm:$0xff]
        %v3765 = vld [vmem:[%s3679 + $0x2a8] sm:$0xff]
        %v3766 = vld [vmem:[%s3679 + $0x2b0] sm:$0xff]
        %v3767 = vld [vmem:[%s3679 + $0x2b8] sm:$0xff]
        %v3768 = vld [vmem:[%s3679 + $0x2c0] sm:$0xff]
        %v3769 = vld [vmem:[%s3679 + $0x2c8] sm:$0xff]
        %v3770 = vld [vmem:[%s3679 + $0x2d0] sm:$0xff]
        %v3771 = vld [vmem:[%s3679 + $0x2d8] sm:$0xff]
        %v3772 = vld [vmem:[%s3679 + $0x2e0] sm:$0xff]
        %v3773 = vld [vmem:[%s3679 + $0x2e8] sm:$0xff]
        %v3774 = vld [vmem:[%s3679 + $0x2f0] sm:$0xff]
        %v3775 = vld [vmem:[%s3679 + $0x2f8] sm:$0xff]
        %v3776 = vld [vmem:[%s3679 + $0x300] sm:$0xff]
        %v3777 = vld [vmem:[%s3679 + $0x308] sm:$0xff]
        %v3778 = vld [vmem:[%s3679 + $0x310] sm:$0xff]
        %v3779 = vld [vmem:[%s3679 + $0x318] sm:$0xff]
        %v3780 = vld [vmem:[%s3679 + $0x320] sm:$0xff]
        %v3781 = vld [vmem:[%s3679 + $0x328] sm:$0xff]
        %v3782 = vld [vmem:[%s3679 + $0x330] sm:$0xff]
        %v3783 = vld [vmem:[%s3679 + $0x338] sm:$0xff]
        %v3784 = vld [vmem:[%s3679 + $0x340] sm:$0xff]
        %v3785 = vld [vmem:[%s3679 + $0x348] sm:$0xff]
        %v3786 = vld [vmem:[%s3679 + $0x350] sm:$0xff]
        %v3787 = vld [vmem:[%s3679 + $0x358] sm:$0xff]
        %v3788 = vld [vmem:[%s3679 + $0x360] sm:$0xff]
        %v3789 = vld [vmem:[%s3679 + $0x368] sm:$0xff]
        %v3790 = vld [vmem:[%s3679 + $0x370] sm:$0xff]
        %v3791 = vld [vmem:[%s3679 + $0x378] sm:$0xff]
        %v3792 = vld [vmem:[%s3679 + $0x380] sm:$0xff]
        %v3793 = vld [vmem:[%s3679 + $0x388] sm:$0xff]
        %v3794 = vld [vmem:[%s3679 + $0x390] sm:$0xff]
        %v3795 = vld [vmem:[%s3679 + $0x398] sm:$0xff]
        %v3796 = vld [vmem:[%s3679 + $0x3a0] sm:$0xff]
        %v3797 = vld [vmem:[%s3679 + $0x3a8] sm:$0xff]
        %v3798 = vld [vmem:[%s3679 + $0x3b0] sm:$0xff]
        %v3799 = vld [vmem:[%s3679 + $0x3b8] sm:$0xff]
        %v3800 = vld [vmem:[%s3679 + $0x3c0] sm:$0xff]
        %v3801 = vld [vmem:[%s3679 + $0x3c8] sm:$0xff]
        %v3802 = vld [vmem:[%s3679 + $0x3d0] sm:$0xff]
        %v3803 = vld [vmem:[%s3679 + $0x3d8] sm:$0xff]
        %v3804 = vld [vmem:[%s3679 + $0x3e0] sm:$0xff]
        %v3805 = vld [vmem:[%s3679 + $0x3e8] sm:$0xff]
        %v3806 = vld [vmem:[%s3679 + $0x3f0] sm:$0xff]
        %v3807 = vld [vmem:[%s3679 + $0x3f8] sm:$0xff]
        %v3808 = vlaneseq
        %v3809 = vshrl.u32 %v3808, 7
        %v3810 = vsub.s32 3, %v3809
        %v3811 = vrot.slane %v473, %v3810
        %v3812 = vlaneseq
        %v3813 = vshrl.u32 %v3812, 7
        %v3814 = vsub.s32 7, %v3813
        %v3815 = vrot.slane %v473, %v3814
        %v3816 = vlaneseq
        %v3817 = vshrl.u32 %v3816, 7
        %v3818 = vsub.s32 3, %v3817
        %v3819 = vrot.slane %v474, %v3818
        %v3820 = vlaneseq
        %v3821 = vshrl.u32 %v3820, 7
        %v3822 = vsub.s32 7, %v3821
        %v3823 = vrot.slane %v474, %v3822
        %v3828 = vlaneseq
        %v3829 = vshrl.u32 %v3828, 7
        %v3830 = vsub.s32 3, %v3829
        %v3831 = vrot.slane %v3811, %v3830
        %v3832 = vlaneseq
        %v3833 = vshrl.u32 %v3832, 7
        %v3834 = vsub.s32 3, %v3833
        %v3835 = vrot.slane %v3815, %v3834
        %v3836 = vlaneseq
        %v3837 = vshrl.u32 %v3836, 7
        %v3838 = vsub.s32 3, %v3837
        %v3839 = vrot.slane %v3819, %v3838
        %v3840 = vlaneseq
        %v3841 = vshrl.u32 %v3840, 7
        %v3842 = vsub.s32 3, %v3841
        %v3843 = vrot.slane %v3823, %v3842
        %v3972 = vunpack.c.l.b16 %v3680
        %v3973 = vunpack.c.h.b16 %v3680
        %v3974 = vunpack.c.l.b16 %v3681
        %v3975 = vunpack.c.h.b16 %v3681
        %v3976 = vunpack.c.l.b16 %v3682
        %v3977 = vunpack.c.h.b16 %v3682
        %v3978 = vunpack.c.l.b16 %v3683
        %v3979 = vunpack.c.h.b16 %v3683
        %v3980 = vunpack.c.l.b16 %v3684
        %v3981 = vunpack.c.h.b16 %v3684
        %v3982 = vunpack.c.l.b16 %v3685
        %v3983 = vunpack.c.h.b16 %v3685
        %v3984 = vunpack.c.l.b16 %v3686
        %v3985 = vunpack.c.h.b16 %v3686
        %v3986 = vunpack.c.l.b16 %v3687
        %v3987 = vunpack.c.h.b16 %v3687
        %v3988 = vunpack.c.l.b16 %v3688
        %v3989 = vunpack.c.h.b16 %v3688
        %v3990 = vunpack.c.l.b16 %v3689
        %v3991 = vunpack.c.h.b16 %v3689
        %v3992 = vunpack.c.l.b16 %v3690
        %v3993 = vunpack.c.h.b16 %v3690
        %v3994 = vunpack.c.l.b16 %v3691
        %v3995 = vunpack.c.h.b16 %v3691
        %v3996 = vunpack.c.l.b16 %v3692
        %v3997 = vunpack.c.h.b16 %v3692
        %v3998 = vunpack.c.l.b16 %v3693
        %v3999 = vunpack.c.h.b16 %v3693
        %v4000 = vunpack.c.l.b16 %v3694
        %v4001 = vunpack.c.h.b16 %v3694
        %v4002 = vunpack.c.l.b16 %v3695
        %v4003 = vunpack.c.h.b16 %v3695
        %v4004 = vunpack.c.l.b16 %v3696
        %v4005 = vunpack.c.h.b16 %v3696
        %v4006 = vunpack.c.l.b16 %v3697
        %v4007 = vunpack.c.h.b16 %v3697
        %v4008 = vunpack.c.l.b16 %v3698
        %v4009 = vunpack.c.h.b16 %v3698
        %v4010 = vunpack.c.l.b16 %v3699
        %v4011 = vunpack.c.h.b16 %v3699
        %v4012 = vunpack.c.l.b16 %v3700
        %v4013 = vunpack.c.h.b16 %v3700
        %v4014 = vunpack.c.l.b16 %v3701
        %v4015 = vunpack.c.h.b16 %v3701
        %v4016 = vunpack.c.l.b16 %v3702
        %v4017 = vunpack.c.h.b16 %v3702
        %v4018 = vunpack.c.l.b16 %v3703
        %v4019 = vunpack.c.h.b16 %v3703
        %v4020 = vunpack.c.l.b16 %v3704
        %v4021 = vunpack.c.h.b16 %v3704
        %v4022 = vunpack.c.l.b16 %v3705
        %v4023 = vunpack.c.h.b16 %v3705
        %v4024 = vunpack.c.l.b16 %v3706
        %v4025 = vunpack.c.h.b16 %v3706
        %v4026 = vunpack.c.l.b16 %v3707
        %v4027 = vunpack.c.h.b16 %v3707
        %v4028 = vunpack.c.l.b16 %v3708
        %v4029 = vunpack.c.h.b16 %v3708
        %v4030 = vunpack.c.l.b16 %v3709
        %v4031 = vunpack.c.h.b16 %v3709
        %v4032 = vunpack.c.l.b16 %v3710
        %v4033 = vunpack.c.h.b16 %v3710
        %v4034 = vunpack.c.l.b16 %v3711
        %v4035 = vunpack.c.h.b16 %v3711
        %v4036 = vunpack.c.l.b16 %v3712
        %v4037 = vunpack.c.h.b16 %v3712
        %v4038 = vunpack.c.l.b16 %v3713
        %v4039 = vunpack.c.h.b16 %v3713
        %v4040 = vunpack.c.l.b16 %v3714
        %v4041 = vunpack.c.h.b16 %v3714
        %v4042 = vunpack.c.l.b16 %v3715
        %v4043 = vunpack.c.h.b16 %v3715
        %v4044 = vunpack.c.l.b16 %v3716
        %v4045 = vunpack.c.h.b16 %v3716
        %v4046 = vunpack.c.l.b16 %v3717
        %v4047 = vunpack.c.h.b16 %v3717
        %v4048 = vunpack.c.l.b16 %v3718
        %v4049 = vunpack.c.h.b16 %v3718
        %v4050 = vunpack.c.l.b16 %v3719
        %v4051 = vunpack.c.h.b16 %v3719
        %v4052 = vunpack.c.l.b16 %v3720
        %v4053 = vunpack.c.h.b16 %v3720
        %v4054 = vunpack.c.l.b16 %v3721
        %v4055 = vunpack.c.h.b16 %v3721
        %v4056 = vunpack.c.l.b16 %v3722
        %v4057 = vunpack.c.h.b16 %v3722
        %v4058 = vunpack.c.l.b16 %v3723
        %v4059 = vunpack.c.h.b16 %v3723
        %v4060 = vunpack.c.l.b16 %v3724
        %v4061 = vunpack.c.h.b16 %v3724
        %v4062 = vunpack.c.l.b16 %v3725
        %v4063 = vunpack.c.h.b16 %v3725
        %v4064 = vunpack.c.l.b16 %v3726
        %v4065 = vunpack.c.h.b16 %v3726
        %v4066 = vunpack.c.l.b16 %v3727
        %v4067 = vunpack.c.h.b16 %v3727
        %v4068 = vunpack.c.l.b16 %v3728
        %v4069 = vunpack.c.h.b16 %v3728
        %v4070 = vunpack.c.l.b16 %v3729
        %v4071 = vunpack.c.h.b16 %v3729
        %v4072 = vunpack.c.l.b16 %v3730
        %v4073 = vunpack.c.h.b16 %v3730
        %v4074 = vunpack.c.l.b16 %v3731
        %v4075 = vunpack.c.h.b16 %v3731
        %v4076 = vunpack.c.l.b16 %v3732
        %v4077 = vunpack.c.h.b16 %v3732
        %v4078 = vunpack.c.l.b16 %v3733
        %v4079 = vunpack.c.h.b16 %v3733
        %v4080 = vunpack.c.l.b16 %v3734
        %v4081 = vunpack.c.h.b16 %v3734
        %v4082 = vunpack.c.l.b16 %v3735
        %v4083 = vunpack.c.h.b16 %v3735
        %v4084 = vunpack.c.l.b16 %v3736
        %v4085 = vunpack.c.h.b16 %v3736
        %v4086 = vunpack.c.l.b16 %v3737
        %v4087 = vunpack.c.h.b16 %v3737
        %v4088 = vunpack.c.l.b16 %v3738
        %v4089 = vunpack.c.h.b16 %v3738
        %v4090 = vunpack.c.l.b16 %v3739
        %v4091 = vunpack.c.h.b16 %v3739
        %v4092 = vunpack.c.l.b16 %v3740
        %v4093 = vunpack.c.h.b16 %v3740
        %v4094 = vunpack.c.l.b16 %v3741
        %v4095 = vunpack.c.h.b16 %v3741
        %v4096 = vunpack.c.l.b16 %v3742
        %v4097 = vunpack.c.h.b16 %v3742
        %v4098 = vunpack.c.l.b16 %v3743
        %v4099 = vunpack.c.h.b16 %v3743
        %v4100 = vunpack.c.l.b16 %v3744
        %v4101 = vunpack.c.h.b16 %v3744
        %v4102 = vunpack.c.l.b16 %v3745
        %v4103 = vunpack.c.h.b16 %v3745
        %v4104 = vunpack.c.l.b16 %v3746
        %v4105 = vunpack.c.h.b16 %v3746
        %v4106 = vunpack.c.l.b16 %v3747
        %v4107 = vunpack.c.h.b16 %v3747
        %v4108 = vunpack.c.l.b16 %v3748
        %v4109 = vunpack.c.h.b16 %v3748
        %v4110 = vunpack.c.l.b16 %v3749
        %v4111 = vunpack.c.h.b16 %v3749
        %v4112 = vunpack.c.l.b16 %v3750
        %v4113 = vunpack.c.h.b16 %v3750
        %v4114 = vunpack.c.l.b16 %v3751
        %v4115 = vunpack.c.h.b16 %v3751
        %v4116 = vunpack.c.l.b16 %v3752
        %v4117 = vunpack.c.h.b16 %v3752
        %v4118 = vunpack.c.l.b16 %v3753
        %v4119 = vunpack.c.h.b16 %v3753
        %v4120 = vunpack.c.l.b16 %v3754
        %v4121 = vunpack.c.h.b16 %v3754
        %v4122 = vunpack.c.l.b16 %v3755
        %v4123 = vunpack.c.h.b16 %v3755
        %v4124 = vunpack.c.l.b16 %v3756
        %v4125 = vunpack.c.h.b16 %v3756
        %v4126 = vunpack.c.l.b16 %v3757
        %v4127 = vunpack.c.h.b16 %v3757
        %v4128 = vunpack.c.l.b16 %v3758
        %v4129 = vunpack.c.h.b16 %v3758
        %v4130 = vunpack.c.l.b16 %v3759
        %v4131 = vunpack.c.h.b16 %v3759
        %v4132 = vunpack.c.l.b16 %v3760
        %v4133 = vunpack.c.h.b16 %v3760
        %v4134 = vunpack.c.l.b16 %v3761
        %v4135 = vunpack.c.h.b16 %v3761
        %v4136 = vunpack.c.l.b16 %v3762
        %v4137 = vunpack.c.h.b16 %v3762
        %v4138 = vunpack.c.l.b16 %v3763
        %v4139 = vunpack.c.h.b16 %v3763
        %v4140 = vunpack.c.l.b16 %v3764
        %v4141 = vunpack.c.h.b16 %v3764
        %v4142 = vunpack.c.l.b16 %v3765
        %v4143 = vunpack.c.h.b16 %v3765
        %v4144 = vunpack.c.l.b16 %v3766
        %v4145 = vunpack.c.h.b16 %v3766
        %v4146 = vunpack.c.l.b16 %v3767
        %v4147 = vunpack.c.h.b16 %v3767
        %v4148 = vunpack.c.l.b16 %v3768
        %v4149 = vunpack.c.h.b16 %v3768
        %v4150 = vunpack.c.l.b16 %v3769
        %v4151 = vunpack.c.h.b16 %v3769
        %v4152 = vunpack.c.l.b16 %v3770
        %v4153 = vunpack.c.h.b16 %v3770
        %v4154 = vunpack.c.l.b16 %v3771
        %v4155 = vunpack.c.h.b16 %v3771
        %v4156 = vunpack.c.l.b16 %v3772
        %v4157 = vunpack.c.h.b16 %v3772
        %v4158 = vunpack.c.l.b16 %v3773
        %v4159 = vunpack.c.h.b16 %v3773
        %v4160 = vunpack.c.l.b16 %v3774
        %v4161 = vunpack.c.h.b16 %v3774
        %v4162 = vunpack.c.l.b16 %v3775
        %v4163 = vunpack.c.h.b16 %v3775
        %v4164 = vunpack.c.l.b16 %v3776
        %v4165 = vunpack.c.h.b16 %v3776
        %v4166 = vunpack.c.l.b16 %v3777
        %v4167 = vunpack.c.h.b16 %v3777
        %v4168 = vunpack.c.l.b16 %v3778
        %v4169 = vunpack.c.h.b16 %v3778
        %v4170 = vunpack.c.l.b16 %v3779
        %v4171 = vunpack.c.h.b16 %v3779
        %v4172 = vunpack.c.l.b16 %v3780
        %v4173 = vunpack.c.h.b16 %v3780
        %v4174 = vunpack.c.l.b16 %v3781
        %v4175 = vunpack.c.h.b16 %v3781
        %v4176 = vunpack.c.l.b16 %v3782
        %v4177 = vunpack.c.h.b16 %v3782
        %v4178 = vunpack.c.l.b16 %v3783
        %v4179 = vunpack.c.h.b16 %v3783
        %v4180 = vunpack.c.l.b16 %v3784
        %v4181 = vunpack.c.h.b16 %v3784
        %v4182 = vunpack.c.l.b16 %v3785
        %v4183 = vunpack.c.h.b16 %v3785
        %v4184 = vunpack.c.l.b16 %v3786
        %v4185 = vunpack.c.h.b16 %v3786
        %v4186 = vunpack.c.l.b16 %v3787
        %v4187 = vunpack.c.h.b16 %v3787
        %v4188 = vunpack.c.l.b16 %v3788
        %v4189 = vunpack.c.h.b16 %v3788
        %v4190 = vunpack.c.l.b16 %v3789
        %v4191 = vunpack.c.h.b16 %v3789
        %v4192 = vunpack.c.l.b16 %v3790
        %v4193 = vunpack.c.h.b16 %v3790
        %v4194 = vunpack.c.l.b16 %v3791
        %v4195 = vunpack.c.h.b16 %v3791
        %v4196 = vunpack.c.l.b16 %v3792
        %v4197 = vunpack.c.h.b16 %v3792
        %v4198 = vunpack.c.l.b16 %v3793
        %v4199 = vunpack.c.h.b16 %v3793
        %v4200 = vunpack.c.l.b16 %v3794
        %v4201 = vunpack.c.h.b16 %v3794
        %v4202 = vunpack.c.l.b16 %v3795
        %v4203 = vunpack.c.h.b16 %v3795
        %v4204 = vunpack.c.l.b16 %v3796
        %v4205 = vunpack.c.h.b16 %v3796
        %v4206 = vunpack.c.l.b16 %v3797
        %v4207 = vunpack.c.h.b16 %v3797
        %v4208 = vunpack.c.l.b16 %v3798
        %v4209 = vunpack.c.h.b16 %v3798
        %v4210 = vunpack.c.l.b16 %v3799
        %v4211 = vunpack.c.h.b16 %v3799
        %v4212 = vunpack.c.l.b16 %v3800
        %v4213 = vunpack.c.h.b16 %v3800
        %v4214 = vunpack.c.l.b16 %v3801
        %v4215 = vunpack.c.h.b16 %v3801
        %v4216 = vunpack.c.l.b16 %v3802
        %v4217 = vunpack.c.h.b16 %v3802
        %v4218 = vunpack.c.l.b16 %v3803
        %v4219 = vunpack.c.h.b16 %v3803
        %v4220 = vunpack.c.l.b16 %v3804
        %v4221 = vunpack.c.h.b16 %v3804
        %v4222 = vunpack.c.l.b16 %v3805
        %v4223 = vunpack.c.h.b16 %v3805
        %v4224 = vunpack.c.l.b16 %v3806
        %v4225 = vunpack.c.h.b16 %v3806
        %v4226 = vunpack.c.l.b16 %v3807
        %v4227 = vunpack.c.h.b16 %v3807
        %v4228 = vpack.c.b16 %v3976, %v3972
        %v4229 = vpack.c.b16 %v3977, %v3973
        %v4230 = vpack.c.b16 %v3978, %v3974
        %v4231 = vpack.c.b16 %v3979, %v3975
        %v4232 = vpack.c.b16 %v3984, %v3980
        %v4233 = vpack.c.b16 %v3985, %v3981
        %v4234 = vpack.c.b16 %v3986, %v3982
        %v4235 = vpack.c.b16 %v3987, %v3983
        %v4236 = vpack.c.b16 %v3992, %v3988
        %v4237 = vpack.c.b16 %v3993, %v3989
        %v4238 = vpack.c.b16 %v3994, %v3990
        %v4239 = vpack.c.b16 %v3995, %v3991
        %v4240 = vpack.c.b16 %v4000, %v3996
        %v4241 = vpack.c.b16 %v4001, %v3997
        %v4242 = vpack.c.b16 %v4002, %v3998
        %v4243 = vpack.c.b16 %v4003, %v3999
        %v4244 = vpack.c.b16 %v4008, %v4004
        %v4245 = vpack.c.b16 %v4009, %v4005
        %v4246 = vpack.c.b16 %v4010, %v4006
        %v4247 = vpack.c.b16 %v4011, %v4007
        %v4248 = vpack.c.b16 %v4016, %v4012
        %v4249 = vpack.c.b16 %v4017, %v4013
        %v4250 = vpack.c.b16 %v4018, %v4014
        %v4251 = vpack.c.b16 %v4019, %v4015
        %v4252 = vpack.c.b16 %v4024, %v4020
        %v4253 = vpack.c.b16 %v4025, %v4021
        %v4254 = vpack.c.b16 %v4026, %v4022
        %v4255 = vpack.c.b16 %v4027, %v4023
        %v4256 = vpack.c.b16 %v4032, %v4028
        %v4257 = vpack.c.b16 %v4033, %v4029
        %v4258 = vpack.c.b16 %v4034, %v4030
        %v4259 = vpack.c.b16 %v4035, %v4031
        %v4260 = vpack.c.b16 %v4040, %v4036
        %v4261 = vpack.c.b16 %v4041, %v4037
        %v4262 = vpack.c.b16 %v4042, %v4038
        %v4263 = vpack.c.b16 %v4043, %v4039
        %v4264 = vpack.c.b16 %v4048, %v4044
        %v4265 = vpack.c.b16 %v4049, %v4045
        %v4266 = vpack.c.b16 %v4050, %v4046
        %v4267 = vpack.c.b16 %v4051, %v4047
        %v4268 = vpack.c.b16 %v4056, %v4052
        %v4269 = vpack.c.b16 %v4057, %v4053
        %v4270 = vpack.c.b16 %v4058, %v4054
        %v4271 = vpack.c.b16 %v4059, %v4055
        %v4272 = vpack.c.b16 %v4064, %v4060
        %v4273 = vpack.c.b16 %v4065, %v4061
        %v4274 = vpack.c.b16 %v4066, %v4062
        %v4275 = vpack.c.b16 %v4067, %v4063
        %v4276 = vpack.c.b16 %v4072, %v4068
        %v4277 = vpack.c.b16 %v4073, %v4069
        %v4278 = vpack.c.b16 %v4074, %v4070
        %v4279 = vpack.c.b16 %v4075, %v4071
        %v4280 = vpack.c.b16 %v4080, %v4076
        %v4281 = vpack.c.b16 %v4081, %v4077
        %v4282 = vpack.c.b16 %v4082, %v4078
        %v4283 = vpack.c.b16 %v4083, %v4079
        %v4284 = vpack.c.b16 %v4088, %v4084
        %v4285 = vpack.c.b16 %v4089, %v4085
        %v4286 = vpack.c.b16 %v4090, %v4086
        %v4287 = vpack.c.b16 %v4091, %v4087
        %v4288 = vpack.c.b16 %v4096, %v4092
        %v4289 = vpack.c.b16 %v4097, %v4093
        %v4290 = vpack.c.b16 %v4098, %v4094
        %v4291 = vpack.c.b16 %v4099, %v4095
        %v4292 = vpack.c.b16 %v4104, %v4100
        %v4293 = vpack.c.b16 %v4105, %v4101
        %v4294 = vpack.c.b16 %v4106, %v4102
        %v4295 = vpack.c.b16 %v4107, %v4103
        %v4296 = vpack.c.b16 %v4112, %v4108
        %v4297 = vpack.c.b16 %v4113, %v4109
        %v4298 = vpack.c.b16 %v4114, %v4110
        %v4299 = vpack.c.b16 %v4115, %v4111
        %v4300 = vpack.c.b16 %v4120, %v4116
        %v4301 = vpack.c.b16 %v4121, %v4117
        %v4302 = vpack.c.b16 %v4122, %v4118
        %v4303 = vpack.c.b16 %v4123, %v4119
        %v4304 = vpack.c.b16 %v4128, %v4124
        %v4305 = vpack.c.b16 %v4129, %v4125
        %v4306 = vpack.c.b16 %v4130, %v4126
        %v4307 = vpack.c.b16 %v4131, %v4127
        %v4308 = vpack.c.b16 %v4136, %v4132
        %v4309 = vpack.c.b16 %v4137, %v4133
        %v4310 = vpack.c.b16 %v4138, %v4134
        %v4311 = vpack.c.b16 %v4139, %v4135
        %v4312 = vpack.c.b16 %v4144, %v4140
        %v4313 = vpack.c.b16 %v4145, %v4141
        %v4314 = vpack.c.b16 %v4146, %v4142
        %v4315 = vpack.c.b16 %v4147, %v4143
        %v4316 = vpack.c.b16 %v4152, %v4148
        %v4317 = vpack.c.b16 %v4153, %v4149
        %v4318 = vpack.c.b16 %v4154, %v4150
        %v4319 = vpack.c.b16 %v4155, %v4151
        %v4320 = vpack.c.b16 %v4160, %v4156
        %v4321 = vpack.c.b16 %v4161, %v4157
        %v4322 = vpack.c.b16 %v4162, %v4158
        %v4323 = vpack.c.b16 %v4163, %v4159
        %v4324 = vpack.c.b16 %v4168, %v4164
        %v4325 = vpack.c.b16 %v4169, %v4165
        %v4326 = vpack.c.b16 %v4170, %v4166
        %v4327 = vpack.c.b16 %v4171, %v4167
        %v4328 = vpack.c.b16 %v4176, %v4172
        %v4329 = vpack.c.b16 %v4177, %v4173
        %v4330 = vpack.c.b16 %v4178, %v4174
        %v4331 = vpack.c.b16 %v4179, %v4175
        %v4332 = vpack.c.b16 %v4184, %v4180
        %v4333 = vpack.c.b16 %v4185, %v4181
        %v4334 = vpack.c.b16 %v4186, %v4182
        %v4335 = vpack.c.b16 %v4187, %v4183
        %v4336 = vpack.c.b16 %v4192, %v4188
        %v4337 = vpack.c.b16 %v4193, %v4189
        %v4338 = vpack.c.b16 %v4194, %v4190
        %v4339 = vpack.c.b16 %v4195, %v4191
        %v4340 = vpack.c.b16 %v4200, %v4196
        %v4341 = vpack.c.b16 %v4201, %v4197
        %v4342 = vpack.c.b16 %v4202, %v4198
        %v4343 = vpack.c.b16 %v4203, %v4199
        %v4344 = vpack.c.b16 %v4208, %v4204
        %v4345 = vpack.c.b16 %v4209, %v4205
        %v4346 = vpack.c.b16 %v4210, %v4206
        %v4347 = vpack.c.b16 %v4211, %v4207
        %v4348 = vpack.c.b16 %v4216, %v4212
        %v4349 = vpack.c.b16 %v4217, %v4213
        %v4350 = vpack.c.b16 %v4218, %v4214
        %v4351 = vpack.c.b16 %v4219, %v4215
        %v4352 = vpack.c.b16 %v4224, %v4220
        %v4353 = vpack.c.b16 %v4225, %v4221
        %v4354 = vpack.c.b16 %v4226, %v4222
        %v4355 = vpack.c.b16 %v4227, %v4223
        %4484 = vmatprep.subr.bf16.mxu0 %v4229
        %4485 = vmatpush1.bf16.msra.mxu0 %v4228
        %4486 = vmatprep.subr.bf16.mxu0 %v4233
        %4487 = vmatpush1.bf16.msra.mxu0 %v4232
        %4488 = vmatprep.subr.bf16.mxu0 %v4237
        %4489 = vmatpush1.bf16.msra.mxu0 %v4236
        %4490 = vmatprep.subr.bf16.mxu0 %v4241
        %4491 = vmatpush1.bf16.msra.mxu0 %v4240
        %4492 = vmatprep.subr.bf16.mxu0 %v4245
        %4493 = vmatpush1.bf16.msra.mxu0 %v4244
        %4494 = vmatprep.subr.bf16.mxu0 %v4249
        %4495 = vmatpush1.bf16.msra.mxu0 %v4248
        %4496 = vmatprep.subr.bf16.mxu0 %v4253
        %4497 = vmatpush1.bf16.msra.mxu0 %v4252
        %4498 = vmatprep.subr.bf16.mxu0 %v4257
        %4499 = vmatpush1.bf16.msra.mxu0 %v4256
        %4500 = vmatprep.subr.bf16.mxu0 %v4261
        %4501 = vmatpush1.bf16.msra.mxu0 %v4260
        %4502 = vmatprep.subr.bf16.mxu0 %v4265
        %4503 = vmatpush1.bf16.msra.mxu0 %v4264
        %4504 = vmatprep.subr.bf16.mxu0 %v4269
        %4505 = vmatpush1.bf16.msra.mxu0 %v4268
        %4506 = vmatprep.subr.bf16.mxu0 %v4273
        %4507 = vmatpush1.bf16.msra.mxu0 %v4272
        %4508 = vmatprep.subr.bf16.mxu0 %v4277
        %4509 = vmatpush1.bf16.msra.mxu0 %v4276
        %4510 = vmatprep.subr.bf16.mxu0 %v4281
        %4511 = vmatpush1.bf16.msra.mxu0 %v4280
        %4512 = vmatprep.subr.bf16.mxu0 %v4285
        %4513 = vmatpush1.bf16.msra.mxu0 %v4284
        %4514 = vmatprep.subr.bf16.mxu0 %v4289
        %4515 = vmatpush1.bf16.msra.mxu0 %v4288
        %4516 = vmatprep.mubr.bf16.mxu0 %v3672
        %4517 = vmatmul.mubr.bf16.gmra.mrb[0].mxu0 %v3671
        %v4518 = vpop.f32.mrb[0].mxu0
        %v4519 = vadd.f32 %v3831, %v4518
        %v4520 = vpop.f32.mrb[0].mxu0
        %v4521 = vadd.f32 %v3835, %v4520
        %v4522 = vpop.f32.mrb[0].mxu0
        %v4523 = vadd.f32 %v3831, %v4522
        %v4524 = vpop.f32.mrb[0].mxu0
        %v4525 = vadd.f32 %v3835, %v4524
        %4526 = vmatprep.mubr.bf16.mxu0 %v3676
        %4527 = vmatmul.mubr.bf16.gmra.mrb[0].mxu0 %v3675
        %v4528 = vpop.f32.mrb[0].mxu0
        %v4529 = vadd.f32 %v3831, %v4528
        %v4530 = vpop.f32.mrb[0].mxu0
        %v4531 = vadd.f32 %v3835, %v4530
        %v4532 = vpop.f32.mrb[0].mxu0
        %v4533 = vpop.f32.mrb[0].mxu0
        %4534 = vdwg.mxu0
        %4535 = vmatprep.subr.bf16.mxu0 %v4293
        %4536 = vmatpush1.bf16.msra.mxu0 %v4292
        %4537 = vmatprep.subr.bf16.mxu0 %v4297
        %4538 = vmatpush1.bf16.msra.mxu0 %v4296
        %4539 = vmatprep.subr.bf16.mxu0 %v4301
        %4540 = vmatpush1.bf16.msra.mxu0 %v4300
        %4541 = vmatprep.subr.bf16.mxu0 %v4305
        %4542 = vmatpush1.bf16.msra.mxu0 %v4304
        %4543 = vmatprep.subr.bf16.mxu0 %v4309
        %4544 = vmatpush1.bf16.msra.mxu0 %v4308
        %4545 = vmatprep.subr.bf16.mxu0 %v4313
        %4546 = vmatpush1.bf16.msra.mxu0 %v4312
        %4547 = vmatprep.subr.bf16.mxu0 %v4317
        %4548 = vmatpush1.bf16.msra.mxu0 %v4316
        %4549 = vmatprep.subr.bf16.mxu0 %v4321
        %4550 = vmatpush1.bf16.msra.mxu0 %v4320
        %4551 = vmatprep.subr.bf16.mxu0 %v4325
        %4552 = vmatpush1.bf16.msra.mxu0 %v4324
        %4553 = vmatprep.subr.bf16.mxu0 %v4329
        %4554 = vmatpush1.bf16.msra.mxu0 %v4328
        %4555 = vmatprep.subr.bf16.mxu0 %v4333
        %4556 = vmatpush1.bf16.msra.mxu0 %v4332
        %4557 = vmatprep.subr.bf16.mxu0 %v4337
        %4558 = vmatpush1.bf16.msra.mxu0 %v4336
        %4559 = vmatprep.subr.bf16.mxu0 %v4341
        %4560 = vmatpush1.bf16.msra.mxu0 %v4340
        %4561 = vmatprep.subr.bf16.mxu0 %v4345
        %4562 = vmatpush1.bf16.msra.mxu0 %v4344
        %4563 = vmatprep.subr.bf16.mxu0 %v4349
        %4564 = vmatpush1.bf16.msra.mxu0 %v4348
        %4565 = vmatprep.subr.bf16.mxu0 %v4353
        %4566 = vmatpush1.bf16.msra.mxu0 %v4352
        %4567 = vmatprep.mubr.bf16.mxu0 %v3674
        %4568 = vmatmul.mubr.bf16.gmra.mrb[0].mxu0 %v3673
        %v4569 = vpop.f32.mrb[0].mxu0
        %v4570 = vadd.f32 %v4519, %v4569
        %v4571 = vpop.f32.mrb[0].mxu0
        %v4572 = vadd.f32 %v4521, %v4571
        %v4573 = vpop.f32.mrb[0].mxu0
        %v4574 = vadd.f32 %v4523, %v4573
        %v4575 = vpop.f32.mrb[0].mxu0
        %v4576 = vadd.f32 %v4525, %v4575
        %4577 = vmatprep.mubr.bf16.mxu0 %v3678
        %4578 = vmatmul.mubr.bf16.gmra.mrb[0].mxu0 %v3677
        %v4579 = vpop.f32.mrb[0].mxu0
        %v4580 = vadd.f32 %v4529, %v4579
        %v4581 = vpop.f32.mrb[0].mxu0
        %v4582 = vadd.f32 %v4531, %v4581
        %v4583 = vpop.f32.mrb[0].mxu0
        %v4584 = vpop.f32.mrb[0].mxu0
        %4585 = vdwg.mxu0
        %4586 = vmatprep.subr.bf16.mxu0 %v4231
        %4587 = vmatpush1.bf16.msra.mxu0 %v4230
        %4588 = vmatprep.subr.bf16.mxu0 %v4235
        %4589 = vmatpush1.bf16.msra.mxu0 %v4234
        %4590 = vmatprep.subr.bf16.mxu0 %v4239
        %4591 = vmatpush1.bf16.msra.mxu0 %v4238
        %4592 = vmatprep.subr.bf16.mxu0 %v4243
        %4593 = vmatpush1.bf16.msra.mxu0 %v4242
        %4594 = vmatprep.subr.bf16.mxu0 %v4247
        %4595 = vmatpush1.bf16.msra.mxu0 %v4246
        %4596 = vmatprep.subr.bf16.mxu0 %v4251
        %4597 = vmatpush1.bf16.msra.mxu0 %v4250
        %4598 = vmatprep.subr.bf16.mxu0 %v4255
        %4599 = vmatpush1.bf16.msra.mxu0 %v4254
        %4600 = vmatprep.subr.bf16.mxu0 %v4259
        %4601 = vmatpush1.bf16.msra.mxu0 %v4258
        %4602 = vmatprep.subr.bf16.mxu0 %v4263
        %4603 = vmatpush1.bf16.msra.mxu0 %v4262
        %4604 = vmatprep.subr.bf16.mxu0 %v4267
        %4605 = vmatpush1.bf16.msra.mxu0 %v4266
        %4606 = vmatprep.subr.bf16.mxu0 %v4271
        %4607 = vmatpush1.bf16.msra.mxu0 %v4270
        %4608 = vmatprep.subr.bf16.mxu0 %v4275
        %4609 = vmatpush1.bf16.msra.mxu0 %v4274
        %4610 = vmatprep.subr.bf16.mxu0 %v4279
        %4611 = vmatpush1.bf16.msra.mxu0 %v4278
        %4612 = vmatprep.subr.bf16.mxu0 %v4283
        %4613 = vmatpush1.bf16.msra.mxu0 %v4282
        %4614 = vmatprep.subr.bf16.mxu0 %v4287
        %4615 = vmatpush1.bf16.msra.mxu0 %v4286
        %4616 = vmatprep.subr.bf16.mxu0 %v4291
        %4617 = vmatpush1.bf16.msra.mxu0 %v4290
        %4618 = vmatprep.mubr.bf16.mxu0 %v3672
        %4619 = vmatmul.mubr.bf16.gmra.mrb[0].mxu0 %v3671
        %v4620 = vpop.f32.mrb[0].mxu0
        %v4621 = vadd.f32 %v3839, %v4620
        %v4622 = vpop.f32.mrb[0].mxu0
        %v4623 = vadd.f32 %v3843, %v4622
        %v4624 = vpop.f32.mrb[0].mxu0
        %v4625 = vadd.f32 %v3839, %v4624
        %v4626 = vpop.f32.mrb[0].mxu0
        %v4627 = vadd.f32 %v3843, %v4626
        %4628 = vmatprep.mubr.bf16.mxu0 %v3676
        %4629 = vmatmul.mubr.bf16.gmra.mrb[0].mxu0 %v3675
        %v4630 = vpop.f32.mrb[0].mxu0
        %v4631 = vadd.f32 %v3839, %v4630
        %v4632 = vpop.f32.mrb[0].mxu0
        %v4633 = vadd.f32 %v3843, %v4632
        %v4634 = vpop.f32.mrb[0].mxu0
        %v4635 = vpop.f32.mrb[0].mxu0
        %4636 = vdwg.mxu0
        %4637 = vmatprep.subr.bf16.mxu0 %v4295
        %4638 = vmatpush1.bf16.msra.mxu0 %v4294
        %4639 = vmatprep.subr.bf16.mxu0 %v4299
        %4640 = vmatpush1.bf16.msra.mxu0 %v4298
        %4641 = vmatprep.subr.bf16.mxu0 %v4303
        %4642 = vmatpush1.bf16.msra.mxu0 %v4302
        %4643 = vmatprep.subr.bf16.mxu0 %v4307
        %4644 = vmatpush1.bf16.msra.mxu0 %v4306
        %4645 = vmatprep.subr.bf16.mxu0 %v4311
        %4646 = vmatpush1.bf16.msra.mxu0 %v4310
        %4647 = vmatprep.subr.bf16.mxu0 %v4315
        %4648 = vmatpush1.bf16.msra.mxu0 %v4314
        %4649 = vmatprep.subr.bf16.mxu0 %v4319
        %4650 = vmatpush1.bf16.msra.mxu0 %v4318
        %4651 = vmatprep.subr.bf16.mxu0 %v4323
        %4652 = vmatpush1.bf16.msra.mxu0 %v4322
        %4653 = vmatprep.subr.bf16.mxu0 %v4327
        %4654 = vmatpush1.bf16.msra.mxu0 %v4326
        %4655 = vmatprep.subr.bf16.mxu0 %v4331
        %4656 = vmatpush1.bf16.msra.mxu0 %v4330
        %4657 = vmatprep.subr.bf16.mxu0 %v4335
        %4658 = vmatpush1.bf16.msra.mxu0 %v4334
        %4659 = vmatprep.subr.bf16.mxu0 %v4339
        %4660 = vmatpush1.bf16.msra.mxu0 %v4338
        %4661 = vmatprep.subr.bf16.mxu0 %v4343
        %4662 = vmatpush1.bf16.msra.mxu0 %v4342
        %4663 = vmatprep.subr.bf16.mxu0 %v4347
        %4664 = vmatpush1.bf16.msra.mxu0 %v4346
        %4665 = vmatprep.subr.bf16.mxu0 %v4351
        %4666 = vmatpush1.bf16.msra.mxu0 %v4350
        %4667 = vmatprep.subr.bf16.mxu0 %v4355
        %4668 = vmatpush1.bf16.msra.mxu0 %v4354
        %4669 = vmatprep.mubr.bf16.mxu0 %v3674
        %4670 = vmatmul.mubr.bf16.gmra.mrb[0].mxu0 %v3673
        %v4671 = vpop.f32.mrb[0].mxu0
        %v4672 = vadd.f32 %v4621, %v4671
        %v4673 = vpop.f32.mrb[0].mxu0
        %v4674 = vadd.f32 %v4623, %v4673
        %v4675 = vpop.f32.mrb[0].mxu0
        %v4676 = vadd.f32 %v4625, %v4675
        %v4677 = vpop.f32.mrb[0].mxu0
        %v4678 = vadd.f32 %v4627, %v4677
        %4679 = vmatprep.mubr.bf16.mxu0 %v3678
        %4680 = vmatmul.mubr.bf16.gmra.mrb[0].mxu0 %v3677
        %v4681 = vpop.f32.mrb[0].mxu0
        %v4682 = vadd.f32 %v4631, %v4681
        %v4683 = vpop.f32.mrb[0].mxu0
        %v4684 = vadd.f32 %v4633, %v4683
        %v4685 = vpop.f32.mrb[0].mxu0
        %v4686 = vpop.f32.mrb[0].mxu0
        %4687 = vdwg.mxu0
        %4689 = vset.pattern.permute.xlu0 0
        %4690 = vperm.xlu0 %4689, %v470
        %v4691 = vpop.permute.xlu0 %4690
        %4694 = vset.pattern.permute.xlu0 0
        %4695 = vperm.xlu0 %4694, %v471
        %v4696 = vpop.permute.xlu0 %4695
        %4699 = vset.pattern.permute.xlu0 0
        %4700 = vperm.xlu0 %4699, %v472
        %v4701 = vpop.permute.xlu0 %4700
        %v4703 = vmul.f32 %v4570, %v4691
        %v4704 = vmul.f32 %v4572, %v4691
        %v4705 = vmul.f32 %v4672, %v4691
        %v4706 = vmul.f32 %v4674, %v4691
        %v4707 = vmul.f32 %v4574, %v4696
        %v4708 = vmul.f32 %v4576, %v4696
        %v4709 = vmul.f32 %v4676, %v4696
        %v4710 = vmul.f32 %v4678, %v4696
        %v4711 = vmul.f32 %v4580, %v4701
        %v4712 = vmul.f32 %v4582, %v4701
        %v4713 = vmul.f32 %v4682, %v4701
        %v4714 = vmul.f32 %v4684, %v4701
        %v4715 = vadd.f32 %v458, %v4703
        %v4716 = vadd.f32 %v459, %v4704
        %v4717 = vadd.f32 %v460, %v4705
        %v4718 = vadd.f32 %v461, %v4706
        %v4719 = vadd.f32 %v462, %v4707
        %v4720 = vadd.f32 %v463, %v4708
        %v4721 = vadd.f32 %v464, %v4709
        %v4722 = vadd.f32 %v465, %v4710
        %v4723 = vadd.f32 %v466, %v4711
        %v4724 = vadd.f32 %v467, %v4712
        %v4725 = vadd.f32 %v468, %v4713
        %v4726 = vadd.f32 %v469, %v4714
        %4727 = vst [vmem:[%s450] sm:$0xff] %v4715
        %4728 = vst [vmem:[%s450 + $0x8] sm:$0xff] %v4716
        %4729 = vst [vmem:[%s450 + $0x10] sm:$0xff] %v4717
        %4730 = vst [vmem:[%s450 + $0x18] sm:$0xff] %v4718
        %4731 = vst [vmem:[%s450 + $0x20] sm:$0xff] %v4719
        %4732 = vst [vmem:[%s450 + $0x28] sm:$0xff] %v4720
        %4733 = vst [vmem:[%s450 + $0x30] sm:$0xff] %v4721
        %4734 = vst [vmem:[%s450 + $0x38] sm:$0xff] %v4722
        %4735 = vst [vmem:[%s450 + $0x40] sm:$0xf] %v4723
        %4736 = vst [vmem:[%s450 + $0x48] sm:$0xf] %v4724
        %4737 = vst [vmem:[%s450 + $0x50] sm:$0xf] %v4725
        %4738 = vst [vmem:[%s450 + $0x58] sm:$0xf] %v4726
        %v4739 = vld [vmem:[%s402] sm:$0xff]
        %v4740 = vld [vmem:[%s402 + $0x8] sm:$0xff]
        %v4741 = vpack.c.bf16 %v4719, %v4715
        %v4742 = vpack.c.bf16 %v4720, %v4716
        %v4743 = vpack.c.bf16 %v4721, %v4717
        %v4744 = vpack.c.bf16 %v4722, %v4718
        %v4745 = vpack.c.bf16 %v4723, %v4723
        %v4746 = vpack.c.bf16 %v4724, %v4724
        %v4747 = vpack.c.bf16 %v4725, %v4725
        %v4748 = vpack.c.bf16 %v4726, %v4726
        %v4749 = vld [vmem:[%s393] sm:$0xff]
        %v4750 = vld [vmem:[%s393 + $0x8] sm:$0xff]
        %v4751 = vld [vmem:[%s393 + $0x10] sm:$0xff]
        %v4752 = vld [vmem:[%s393 + $0x18] sm:$0xff]
        %v4753 = vld [vmem:[%s393 + $0x20] sm:$0xff]
        %v4754 = vld [vmem:[%s393 + $0x28] sm:$0xff]
        %v4755 = vld [vmem:[%s393 + $0x30] sm:$0xff]
        %v4756 = vld [vmem:[%s393 + $0x38] sm:$0xff]
        %v4757 = vld [vmem:[%s393 + $0x40] sm:$0xff]
        %v4758 = vld [vmem:[%s393 + $0x48] sm:$0xff]
        %v4759 = vld [vmem:[%s393 + $0x50] sm:$0xff]
        %v4760 = vld [vmem:[%s393 + $0x58] sm:$0xff]
        %v4761 = vld [vmem:[%s393 + $0x60] sm:$0xff]
        %v4762 = vld [vmem:[%s393 + $0x68] sm:$0xff]
        %v4763 = vld [vmem:[%s393 + $0x70] sm:$0xff]
        %v4764 = vld [vmem:[%s393 + $0x78] sm:$0xff]
        %v4765 = vld [vmem:[%s393 + $0x80] sm:$0xff]
        %v4766 = vld [vmem:[%s393 + $0x88] sm:$0xff]
        %v4767 = vld [vmem:[%s393 + $0x90] sm:$0xff]
        %v4768 = vld [vmem:[%s393 + $0x98] sm:$0xff]
        %v4769 = vld [vmem:[%s393 + $0xa0] sm:$0xff]
        %v4770 = vld [vmem:[%s393 + $0xa8] sm:$0xff]
        %v4771 = vld [vmem:[%s393 + $0xb0] sm:$0xff]
        %v4772 = vld [vmem:[%s393 + $0xb8] sm:$0xff]
        %v4773 = vld [vmem:[%s393 + $0xc0] sm:$0xff]
        %v4774 = vld [vmem:[%s393 + $0xc8] sm:$0xff]
        %v4775 = vld [vmem:[%s393 + $0xd0] sm:$0xff]
        %v4776 = vld [vmem:[%s393 + $0xd8] sm:$0xff]
        %v4777 = vld [vmem:[%s393 + $0xe0] sm:$0xff]
        %v4778 = vld [vmem:[%s393 + $0xe8] sm:$0xff]
        %v4779 = vld [vmem:[%s393 + $0xf0] sm:$0xff]
        %v4780 = vld [vmem:[%s393 + $0xf8] sm:$0xff]
        %v4781 = vld [vmem:[%s393 + $0x100] sm:$0xff]
        %v4782 = vld [vmem:[%s393 + $0x108] sm:$0xff]
        %v4783 = vld [vmem:[%s393 + $0x110] sm:$0xff]
        %v4784 = vld [vmem:[%s393 + $0x118] sm:$0xff]
        %v4785 = vld [vmem:[%s393 + $0x120] sm:$0xff]
        %v4786 = vld [vmem:[%s393 + $0x128] sm:$0xff]
        %v4787 = vld [vmem:[%s393 + $0x130] sm:$0xff]
        %v4788 = vld [vmem:[%s393 + $0x138] sm:$0xff]
        %v4789 = vld [vmem:[%s393 + $0x140] sm:$0xff]
        %v4790 = vld [vmem:[%s393 + $0x148] sm:$0xff]
        %v4791 = vld [vmem:[%s393 + $0x150] sm:$0xff]
        %v4792 = vld [vmem:[%s393 + $0x158] sm:$0xff]
        %v4793 = vld [vmem:[%s393 + $0x160] sm:$0xff]
        %v4794 = vld [vmem:[%s393 + $0x168] sm:$0xff]
        %v4795 = vld [vmem:[%s393 + $0x170] sm:$0xff]
        %v4796 = vld [vmem:[%s393 + $0x178] sm:$0xff]
        %v4797 = vld [vmem:[%s393 + $0x180] sm:$0xff]
        %v4798 = vld [vmem:[%s393 + $0x188] sm:$0xff]
        %v4799 = vld [vmem:[%s393 + $0x190] sm:$0xff]
        %v4800 = vld [vmem:[%s393 + $0x198] sm:$0xff]
        %v4801 = vld [vmem:[%s393 + $0x1a0] sm:$0xff]
        %v4802 = vld [vmem:[%s393 + $0x1a8] sm:$0xff]
        %v4803 = vld [vmem:[%s393 + $0x1b0] sm:$0xff]
        %v4804 = vld [vmem:[%s393 + $0x1b8] sm:$0xff]
        %v4805 = vld [vmem:[%s393 + $0x1c0] sm:$0xff]
        %v4806 = vld [vmem:[%s393 + $0x1c8] sm:$0xff]
        %v4807 = vld [vmem:[%s393 + $0x1d0] sm:$0xff]
        %v4808 = vld [vmem:[%s393 + $0x1d8] sm:$0xff]
        %v4809 = vld [vmem:[%s393 + $0x1e0] sm:$0xff]
        %v4810 = vld [vmem:[%s393 + $0x1e8] sm:$0xff]
        %v4811 = vld [vmem:[%s393 + $0x1f0] sm:$0xff]
        %v4812 = vld [vmem:[%s393 + $0x1f8] sm:$0xff]
        %v4813 = vld [vmem:[%s393 + $0x200] sm:$0xff]
        %v4814 = vld [vmem:[%s393 + $0x208] sm:$0xff]
        %v4815 = vld [vmem:[%s393 + $0x210] sm:$0xff]
        %v4816 = vld [vmem:[%s393 + $0x218] sm:$0xff]
        %v4817 = vld [vmem:[%s393 + $0x220] sm:$0xff]
        %v4818 = vld [vmem:[%s393 + $0x228] sm:$0xff]
        %v4819 = vld [vmem:[%s393 + $0x230] sm:$0xff]
        %v4820 = vld [vmem:[%s393 + $0x238] sm:$0xff]
        %v4821 = vld [vmem:[%s393 + $0x240] sm:$0xff]
        %v4822 = vld [vmem:[%s393 + $0x248] sm:$0xff]
        %v4823 = vld [vmem:[%s393 + $0x250] sm:$0xff]
        %v4824 = vld [vmem:[%s393 + $0x258] sm:$0xff]
        %v4825 = vld [vmem:[%s393 + $0x260] sm:$0xff]
        %v4826 = vld [vmem:[%s393 + $0x268] sm:$0xff]
        %v4827 = vld [vmem:[%s393 + $0x270] sm:$0xff]
        %v4828 = vld [vmem:[%s393 + $0x278] sm:$0xff]
        %v4829 = vld [vmem:[%s393 + $0x280] sm:$0xff]
        %v4830 = vld [vmem:[%s393 + $0x288] sm:$0xff]
        %v4831 = vld [vmem:[%s393 + $0x290] sm:$0xff]
        %v4832 = vld [vmem:[%s393 + $0x298] sm:$0xff]
        %v4833 = vld [vmem:[%s393 + $0x2a0] sm:$0xff]
        %v4834 = vld [vmem:[%s393 + $0x2a8] sm:$0xff]
        %v4835 = vld [vmem:[%s393 + $0x2b0] sm:$0xff]
        %v4836 = vld [vmem:[%s393 + $0x2b8] sm:$0xff]
        %v4837 = vld [vmem:[%s393 + $0x2c0] sm:$0xff]
        %v4838 = vld [vmem:[%s393 + $0x2c8] sm:$0xff]
        %v4839 = vld [vmem:[%s393 + $0x2d0] sm:$0xff]
        %v4840 = vld [vmem:[%s393 + $0x2d8] sm:$0xff]
        %v4841 = vld [vmem:[%s393 + $0x2e0] sm:$0xff]
        %v4842 = vld [vmem:[%s393 + $0x2e8] sm:$0xff]
        %v4843 = vld [vmem:[%s393 + $0x2f0] sm:$0xff]
        %v4844 = vld [vmem:[%s393 + $0x2f8] sm:$0xff]
        %v4845 = vld [vmem:[%s393 + $0x300] sm:$0xff]
        %v4846 = vld [vmem:[%s393 + $0x308] sm:$0xff]
        %v4847 = vld [vmem:[%s393 + $0x310] sm:$0xff]
        %v4848 = vld [vmem:[%s393 + $0x318] sm:$0xff]
        %v4849 = vld [vmem:[%s393 + $0x320] sm:$0xff]
        %v4850 = vld [vmem:[%s393 + $0x328] sm:$0xff]
        %v4851 = vld [vmem:[%s393 + $0x330] sm:$0xff]
        %v4852 = vld [vmem:[%s393 + $0x338] sm:$0xff]
        %v4853 = vld [vmem:[%s393 + $0x340] sm:$0xff]
        %v4854 = vld [vmem:[%s393 + $0x348] sm:$0xff]
        %v4855 = vld [vmem:[%s393 + $0x350] sm:$0xff]
        %v4856 = vld [vmem:[%s393 + $0x358] sm:$0xff]
        %v4857 = vld [vmem:[%s393 + $0x360] sm:$0xff]
        %v4858 = vld [vmem:[%s393 + $0x368] sm:$0xff]
        %v4859 = vld [vmem:[%s393 + $0x370] sm:$0xff]
        %v4860 = vld [vmem:[%s393 + $0x378] sm:$0xff]
        %v4861 = vld [vmem:[%s393 + $0x380] sm:$0xff]
        %v4862 = vld [vmem:[%s393 + $0x388] sm:$0xff]
        %v4863 = vld [vmem:[%s393 + $0x390] sm:$0xff]
        %v4864 = vld [vmem:[%s393 + $0x398] sm:$0xff]
        %v4865 = vld [vmem:[%s393 + $0x3a0] sm:$0xff]
        %v4866 = vld [vmem:[%s393 + $0x3a8] sm:$0xff]
        %v4867 = vld [vmem:[%s393 + $0x3b0] sm:$0xff]
        %v4868 = vld [vmem:[%s393 + $0x3b8] sm:$0xff]
        %v4869 = vld [vmem:[%s393 + $0x3c0] sm:$0xff]
        %v4870 = vld [vmem:[%s393 + $0x3c8] sm:$0xff]
        %v4871 = vld [vmem:[%s393 + $0x3d0] sm:$0xff]
        %v4872 = vld [vmem:[%s393 + $0x3d8] sm:$0xff]
        %v4873 = vld [vmem:[%s393 + $0x3e0] sm:$0xff]
        %v4874 = vld [vmem:[%s393 + $0x3e8] sm:$0xff]
        %v4875 = vld [vmem:[%s393 + $0x3f0] sm:$0xff]
        %v4876 = vld [vmem:[%s393 + $0x3f8] sm:$0xff]
        %v4879 = vlaneseq
        %v4880 = vshrl.u32 %v4879, 7
        %v4881 = vsub.s32 0, %v4880
        %v4882 = vrot.slane %v4739, %v4881
        %v4883 = vlaneseq
        %v4884 = vshrl.u32 %v4883, 7
        %v4885 = vsub.s32 4, %v4884
        %v4886 = vrot.slane %v4739, %v4885
        %v4887 = vlaneseq
        %v4888 = vshrl.u32 %v4887, 7
        %v4889 = vsub.s32 0, %v4888
        %v4890 = vrot.slane %v4740, %v4889
        %v4891 = vlaneseq
        %v4892 = vshrl.u32 %v4891, 7
        %v4893 = vsub.s32 4, %v4892
        %v4894 = vrot.slane %v4740, %v4893
        %v4899 = vlaneseq
        %v4900 = vshrl.u32 %v4899, 7
        %v4901 = vsub.s32 0, %v4900
        %v4902 = vrot.slane %v4882, %v4901
        %v4903 = vlaneseq
        %v4904 = vshrl.u32 %v4903, 7
        %v4905 = vsub.s32 0, %v4904
        %v4906 = vrot.slane %v4886, %v4905
        %v4907 = vlaneseq
        %v4908 = vshrl.u32 %v4907, 7
        %v4909 = vsub.s32 0, %v4908
        %v4910 = vrot.slane %v4890, %v4909
        %v4911 = vlaneseq
        %v4912 = vshrl.u32 %v4911, 7
        %v4913 = vsub.s32 0, %v4912
        %v4914 = vrot.slane %v4894, %v4913
        %v5043 = vunpack.c.l.b16 %v4749
        %v5044 = vunpack.c.h.b16 %v4749
        %v5045 = vunpack.c.l.b16 %v4750
        %v5046 = vunpack.c.h.b16 %v4750
        %v5047 = vunpack.c.l.b16 %v4751
        %v5048 = vunpack.c.h.b16 %v4751
        %v5049 = vunpack.c.l.b16 %v4752
        %v5050 = vunpack.c.h.b16 %v4752
        %v5051 = vunpack.c.l.b16 %v4753
        %v5052 = vunpack.c.h.b16 %v4753
        %v5053 = vunpack.c.l.b16 %v4754
        %v5054 = vunpack.c.h.b16 %v4754
        %v5055 = vunpack.c.l.b16 %v4755
        %v5056 = vunpack.c.h.b16 %v4755
        %v5057 = vunpack.c.l.b16 %v4756
        %v5058 = vunpack.c.h.b16 %v4756
        %v5059 = vunpack.c.l.b16 %v4757
        %v5060 = vunpack.c.h.b16 %v4757
        %v5061 = vunpack.c.l.b16 %v4758
        %v5062 = vunpack.c.h.b16 %v4758
        %v5063 = vunpack.c.l.b16 %v4759
        %v5064 = vunpack.c.h.b16 %v4759
        %v5065 = vunpack.c.l.b16 %v4760
        %v5066 = vunpack.c.h.b16 %v4760
        %v5067 = vunpack.c.l.b16 %v4761
        %v5068 = vunpack.c.h.b16 %v4761
        %v5069 = vunpack.c.l.b16 %v4762
        %v5070 = vunpack.c.h.b16 %v4762
        %v5071 = vunpack.c.l.b16 %v4763
        %v5072 = vunpack.c.h.b16 %v4763
        %v5073 = vunpack.c.l.b16 %v4764
        %v5074 = vunpack.c.h.b16 %v4764
        %v5075 = vunpack.c.l.b16 %v4765
        %v5076 = vunpack.c.h.b16 %v4765
        %v5077 = vunpack.c.l.b16 %v4766
        %v5078 = vunpack.c.h.b16 %v4766
        %v5079 = vunpack.c.l.b16 %v4767
        %v5080 = vunpack.c.h.b16 %v4767
        %v5081 = vunpack.c.l.b16 %v4768
        %v5082 = vunpack.c.h.b16 %v4768
        %v5083 = vunpack.c.l.b16 %v4769
        %v5084 = vunpack.c.h.b16 %v4769
        %v5085 = vunpack.c.l.b16 %v4770
        %v5086 = vunpack.c.h.b16 %v4770
        %v5087 = vunpack.c.l.b16 %v4771
        %v5088 = vunpack.c.h.b16 %v4771
        %v5089 = vunpack.c.l.b16 %v4772
        %v5090 = vunpack.c.h.b16 %v4772
        %v5091 = vunpack.c.l.b16 %v4773
        %v5092 = vunpack.c.h.b16 %v4773
        %v5093 = vunpack.c.l.b16 %v4774
        %v5094 = vunpack.c.h.b16 %v4774
        %v5095 = vunpack.c.l.b16 %v4775
        %v5096 = vunpack.c.h.b16 %v4775
        %v5097 = vunpack.c.l.b16 %v4776
        %v5098 = vunpack.c.h.b16 %v4776
        %v5099 = vunpack.c.l.b16 %v4777
        %v5100 = vunpack.c.h.b16 %v4777
        %v5101 = vunpack.c.l.b16 %v4778
        %v5102 = vunpack.c.h.b16 %v4778
        %v5103 = vunpack.c.l.b16 %v4779
        %v5104 = vunpack.c.h.b16 %v4779
        %v5105 = vunpack.c.l.b16 %v4780
        %v5106 = vunpack.c.h.b16 %v4780
        %v5107 = vunpack.c.l.b16 %v4781
        %v5108 = vunpack.c.h.b16 %v4781
        %v5109 = vunpack.c.l.b16 %v4782
        %v5110 = vunpack.c.h.b16 %v4782
        %v5111 = vunpack.c.l.b16 %v4783
        %v5112 = vunpack.c.h.b16 %v4783
        %v5113 = vunpack.c.l.b16 %v4784
        %v5114 = vunpack.c.h.b16 %v4784
        %v5115 = vunpack.c.l.b16 %v4785
        %v5116 = vunpack.c.h.b16 %v4785
        %v5117 = vunpack.c.l.b16 %v4786
        %v5118 = vunpack.c.h.b16 %v4786
        %v5119 = vunpack.c.l.b16 %v4787
        %v5120 = vunpack.c.h.b16 %v4787
        %v5121 = vunpack.c.l.b16 %v4788
        %v5122 = vunpack.c.h.b16 %v4788
        %v5123 = vunpack.c.l.b16 %v4789
        %v5124 = vunpack.c.h.b16 %v4789
        %v5125 = vunpack.c.l.b16 %v4790
        %v5126 = vunpack.c.h.b16 %v4790
        %v5127 = vunpack.c.l.b16 %v4791
        %v5128 = vunpack.c.h.b16 %v4791
        %v5129 = vunpack.c.l.b16 %v4792
        %v5130 = vunpack.c.h.b16 %v4792
        %v5131 = vunpack.c.l.b16 %v4793
        %v5132 = vunpack.c.h.b16 %v4793
        %v5133 = vunpack.c.l.b16 %v4794
        %v5134 = vunpack.c.h.b16 %v4794
        %v5135 = vunpack.c.l.b16 %v4795
        %v5136 = vunpack.c.h.b16 %v4795
        %v5137 = vunpack.c.l.b16 %v4796
        %v5138 = vunpack.c.h.b16 %v4796
        %v5139 = vunpack.c.l.b16 %v4797
        %v5140 = vunpack.c.h.b16 %v4797
        %v5141 = vunpack.c.l.b16 %v4798
        %v5142 = vunpack.c.h.b16 %v4798
        %v5143 = vunpack.c.l.b16 %v4799
        %v5144 = vunpack.c.h.b16 %v4799
        %v5145 = vunpack.c.l.b16 %v4800
        %v5146 = vunpack.c.h.b16 %v4800
        %v5147 = vunpack.c.l.b16 %v4801
        %v5148 = vunpack.c.h.b16 %v4801
        %v5149 = vunpack.c.l.b16 %v4802
        %v5150 = vunpack.c.h.b16 %v4802
        %v5151 = vunpack.c.l.b16 %v4803
        %v5152 = vunpack.c.h.b16 %v4803
        %v5153 = vunpack.c.l.b16 %v4804
        %v5154 = vunpack.c.h.b16 %v4804
        %v5155 = vunpack.c.l.b16 %v4805
        %v5156 = vunpack.c.h.b16 %v4805
        %v5157 = vunpack.c.l.b16 %v4806
        %v5158 = vunpack.c.h.b16 %v4806
        %v5159 = vunpack.c.l.b16 %v4807
        %v5160 = vunpack.c.h.b16 %v4807
        %v5161 = vunpack.c.l.b16 %v4808
        %v5162 = vunpack.c.h.b16 %v4808
        %v5163 = vunpack.c.l.b16 %v4809
        %v5164 = vunpack.c.h.b16 %v4809
        %v5165 = vunpack.c.l.b16 %v4810
        %v5166 = vunpack.c.h.b16 %v4810
        %v5167 = vunpack.c.l.b16 %v4811
        %v5168 = vunpack.c.h.b16 %v4811
        %v5169 = vunpack.c.l.b16 %v4812
        %v5170 = vunpack.c.h.b16 %v4812
        %v5171 = vunpack.c.l.b16 %v4813
        %v5172 = vunpack.c.h.b16 %v4813
        %v5173 = vunpack.c.l.b16 %v4814
        %v5174 = vunpack.c.h.b16 %v4814
        %v5175 = vunpack.c.l.b16 %v4815
        %v5176 = vunpack.c.h.b16 %v4815
        %v5177 = vunpack.c.l.b16 %v4816
        %v5178 = vunpack.c.h.b16 %v4816
        %v5179 = vunpack.c.l.b16 %v4817
        %v5180 = vunpack.c.h.b16 %v4817
        %v5181 = vunpack.c.l.b16 %v4818
        %v5182 = vunpack.c.h.b16 %v4818
        %v5183 = vunpack.c.l.b16 %v4819
        %v5184 = vunpack.c.h.b16 %v4819
        %v5185 = vunpack.c.l.b16 %v4820
        %v5186 = vunpack.c.h.b16 %v4820
        %v5187 = vunpack.c.l.b16 %v4821
        %v5188 = vunpack.c.h.b16 %v4821
        %v5189 = vunpack.c.l.b16 %v4822
        %v5190 = vunpack.c.h.b16 %v4822
        %v5191 = vunpack.c.l.b16 %v4823
        %v5192 = vunpack.c.h.b16 %v4823
        %v5193 = vunpack.c.l.b16 %v4824
        %v5194 = vunpack.c.h.b16 %v4824
        %v5195 = vunpack.c.l.b16 %v4825
        %v5196 = vunpack.c.h.b16 %v4825
        %v5197 = vunpack.c.l.b16 %v4826
        %v5198 = vunpack.c.h.b16 %v4826
        %v5199 = vunpack.c.l.b16 %v4827
        %v5200 = vunpack.c.h.b16 %v4827
        %v5201 = vunpack.c.l.b16 %v4828
        %v5202 = vunpack.c.h.b16 %v4828
        %v5203 = vunpack.c.l.b16 %v4829
        %v5204 = vunpack.c.h.b16 %v4829
        %v5205 = vunpack.c.l.b16 %v4830
        %v5206 = vunpack.c.h.b16 %v4830
        %v5207 = vunpack.c.l.b16 %v4831
        %v5208 = vunpack.c.h.b16 %v4831
        %v5209 = vunpack.c.l.b16 %v4832
        %v5210 = vunpack.c.h.b16 %v4832
        %v5211 = vunpack.c.l.b16 %v4833
        %v5212 = vunpack.c.h.b16 %v4833
        %v5213 = vunpack.c.l.b16 %v4834
        %v5214 = vunpack.c.h.b16 %v4834
        %v5215 = vunpack.c.l.b16 %v4835
        %v5216 = vunpack.c.h.b16 %v4835
        %v5217 = vunpack.c.l.b16 %v4836
        %v5218 = vunpack.c.h.b16 %v4836
        %v5219 = vunpack.c.l.b16 %v4837
        %v5220 = vunpack.c.h.b16 %v4837
        %v5221 = vunpack.c.l.b16 %v4838
        %v5222 = vunpack.c.h.b16 %v4838
        %v5223 = vunpack.c.l.b16 %v4839
        %v5224 = vunpack.c.h.b16 %v4839
        %v5225 = vunpack.c.l.b16 %v4840
        %v5226 = vunpack.c.h.b16 %v4840
        %v5227 = vunpack.c.l.b16 %v4841
        %v5228 = vunpack.c.h.b16 %v4841
        %v5229 = vunpack.c.l.b16 %v4842
        %v5230 = vunpack.c.h.b16 %v4842
        %v5231 = vunpack.c.l.b16 %v4843
        %v5232 = vunpack.c.h.b16 %v4843
        %v5233 = vunpack.c.l.b16 %v4844
        %v5234 = vunpack.c.h.b16 %v4844
        %v5235 = vunpack.c.l.b16 %v4845
        %v5236 = vunpack.c.h.b16 %v4845
        %v5237 = vunpack.c.l.b16 %v4846
        %v5238 = vunpack.c.h.b16 %v4846
        %v5239 = vunpack.c.l.b16 %v4847
        %v5240 = vunpack.c.h.b16 %v4847
        %v5241 = vunpack.c.l.b16 %v4848
        %v5242 = vunpack.c.h.b16 %v4848
        %v5243 = vunpack.c.l.b16 %v4849
        %v5244 = vunpack.c.h.b16 %v4849
        %v5245 = vunpack.c.l.b16 %v4850
        %v5246 = vunpack.c.h.b16 %v4850
        %v5247 = vunpack.c.l.b16 %v4851
        %v5248 = vunpack.c.h.b16 %v4851
        %v5249 = vunpack.c.l.b16 %v4852
        %v5250 = vunpack.c.h.b16 %v4852
        %v5251 = vunpack.c.l.b16 %v4853
        %v5252 = vunpack.c.h.b16 %v4853
        %v5253 = vunpack.c.l.b16 %v4854
        %v5254 = vunpack.c.h.b16 %v4854
        %v5255 = vunpack.c.l.b16 %v4855
        %v5256 = vunpack.c.h.b16 %v4855
        %v5257 = vunpack.c.l.b16 %v4856
        %v5258 = vunpack.c.h.b16 %v4856
        %v5259 = vunpack.c.l.b16 %v4857
        %v5260 = vunpack.c.h.b16 %v4857
        %v5261 = vunpack.c.l.b16 %v4858
        %v5262 = vunpack.c.h.b16 %v4858
        %v5263 = vunpack.c.l.b16 %v4859
        %v5264 = vunpack.c.h.b16 %v4859
        %v5265 = vunpack.c.l.b16 %v4860
        %v5266 = vunpack.c.h.b16 %v4860
        %v5267 = vunpack.c.l.b16 %v4861
        %v5268 = vunpack.c.h.b16 %v4861
        %v5269 = vunpack.c.l.b16 %v4862
        %v5270 = vunpack.c.h.b16 %v4862
        %v5271 = vunpack.c.l.b16 %v4863
        %v5272 = vunpack.c.h.b16 %v4863
        %v5273 = vunpack.c.l.b16 %v4864
        %v5274 = vunpack.c.h.b16 %v4864
        %v5275 = vunpack.c.l.b16 %v4865
        %v5276 = vunpack.c.h.b16 %v4865
        %v5277 = vunpack.c.l.b16 %v4866
        %v5278 = vunpack.c.h.b16 %v4866
        %v5279 = vunpack.c.l.b16 %v4867
        %v5280 = vunpack.c.h.b16 %v4867
        %v5281 = vunpack.c.l.b16 %v4868
        %v5282 = vunpack.c.h.b16 %v4868
        %v5283 = vunpack.c.l.b16 %v4869
        %v5284 = vunpack.c.h.b16 %v4869
        %v5285 = vunpack.c.l.b16 %v4870
        %v5286 = vunpack.c.h.b16 %v4870
        %v5287 = vunpack.c.l.b16 %v4871
        %v5288 = vunpack.c.h.b16 %v4871
        %v5289 = vunpack.c.l.b16 %v4872
        %v5290 = vunpack.c.h.b16 %v4872
        %v5291 = vunpack.c.l.b16 %v4873
        %v5292 = vunpack.c.h.b16 %v4873
        %v5293 = vunpack.c.l.b16 %v4874
        %v5294 = vunpack.c.h.b16 %v4874
        %v5295 = vunpack.c.l.b16 %v4875
        %v5296 = vunpack.c.h.b16 %v4875
        %v5297 = vunpack.c.l.b16 %v4876
        %v5298 = vunpack.c.h.b16 %v4876
        %v5299 = vpack.c.b16 %v5047, %v5043
        %v5300 = vpack.c.b16 %v5048, %v5044
        %v5301 = vpack.c.b16 %v5049, %v5045
        %v5302 = vpack.c.b16 %v5050, %v5046
        %v5303 = vpack.c.b16 %v5055, %v5051
        %v5304 = vpack.c.b16 %v5056, %v5052
        %v5305 = vpack.c.b16 %v5057, %v5053
        %v5306 = vpack.c.b16 %v5058, %v5054
        %v5307 = vpack.c.b16 %v5063, %v5059
        %v5308 = vpack.c.b16 %v5064, %v5060
        %v5309 = vpack.c.b16 %v5065, %v5061
        %v5310 = vpack.c.b16 %v5066, %v5062
        %v5311 = vpack.c.b16 %v5071, %v5067
        %v5312 = vpack.c.b16 %v5072, %v5068
        %v5313 = vpack.c.b16 %v5073, %v5069
        %v5314 = vpack.c.b16 %v5074, %v5070
        %v5315 = vpack.c.b16 %v5079, %v5075
        %v5316 = vpack.c.b16 %v5080, %v5076
        %v5317 = vpack.c.b16 %v5081, %v5077
        %v5318 = vpack.c.b16 %v5082, %v5078
        %v5319 = vpack.c.b16 %v5087, %v5083
        %v5320 = vpack.c.b16 %v5088, %v5084
        %v5321 = vpack.c.b16 %v5089, %v5085
        %v5322 = vpack.c.b16 %v5090, %v5086
        %v5323 = vpack.c.b16 %v5095, %v5091
        %v5324 = vpack.c.b16 %v5096, %v5092
        %v5325 = vpack.c.b16 %v5097, %v5093
        %v5326 = vpack.c.b16 %v5098, %v5094
        %v5327 = vpack.c.b16 %v5103, %v5099
        %v5328 = vpack.c.b16 %v5104, %v5100
        %v5329 = vpack.c.b16 %v5105, %v5101
        %v5330 = vpack.c.b16 %v5106, %v5102
        %v5331 = vpack.c.b16 %v5111, %v5107
        %v5332 = vpack.c.b16 %v5112, %v5108
        %v5333 = vpack.c.b16 %v5113, %v5109
        %v5334 = vpack.c.b16 %v5114, %v5110
        %v5335 = vpack.c.b16 %v5119, %v5115
        %v5336 = vpack.c.b16 %v5120, %v5116
        %v5337 = vpack.c.b16 %v5121, %v5117
        %v5338 = vpack.c.b16 %v5122, %v5118
        %v5339 = vpack.c.b16 %v5127, %v5123
        %v5340 = vpack.c.b16 %v5128, %v5124
        %v5341 = vpack.c.b16 %v5129, %v5125
        %v5342 = vpack.c.b16 %v5130, %v5126
        %v5343 = vpack.c.b16 %v5135, %v5131
        %v5344 = vpack.c.b16 %v5136, %v5132
        %v5345 = vpack.c.b16 %v5137, %v5133
        %v5346 = vpack.c.b16 %v5138, %v5134
        %v5347 = vpack.c.b16 %v5143, %v5139
        %v5348 = vpack.c.b16 %v5144, %v5140
        %v5349 = vpack.c.b16 %v5145, %v5141
        %v5350 = vpack.c.b16 %v5146, %v5142
        %v5351 = vpack.c.b16 %v5151, %v5147
        %v5352 = vpack.c.b16 %v5152, %v5148
        %v5353 = vpack.c.b16 %v5153, %v5149
        %v5354 = vpack.c.b16 %v5154, %v5150
        %v5355 = vpack.c.b16 %v5159, %v5155
        %v5356 = vpack.c.b16 %v5160, %v5156
        %v5357 = vpack.c.b16 %v5161, %v5157
        %v5358 = vpack.c.b16 %v5162, %v5158
        %v5359 = vpack.c.b16 %v5167, %v5163
        %v5360 = vpack.c.b16 %v5168, %v5164
        %v5361 = vpack.c.b16 %v5169, %v5165
        %v5362 = vpack.c.b16 %v5170, %v5166
        %v5363 = vpack.c.b16 %v5175, %v5171
        %v5364 = vpack.c.b16 %v5176, %v5172
        %v5365 = vpack.c.b16 %v5177, %v5173
        %v5366 = vpack.c.b16 %v5178, %v5174
        %v5367 = vpack.c.b16 %v5183, %v5179
        %v5368 = vpack.c.b16 %v5184, %v5180
        %v5369 = vpack.c.b16 %v5185, %v5181
        %v5370 = vpack.c.b16 %v5186, %v5182
        %v5371 = vpack.c.b16 %v5191, %v5187
        %v5372 = vpack.c.b16 %v5192, %v5188
        %v5373 = vpack.c.b16 %v5193, %v5189
        %v5374 = vpack.c.b16 %v5194, %v5190
        %v5375 = vpack.c.b16 %v5199, %v5195
        %v5376 = vpack.c.b16 %v5200, %v5196
        %v5377 = vpack.c.b16 %v5201, %v5197
        %v5378 = vpack.c.b16 %v5202, %v5198
        %v5379 = vpack.c.b16 %v5207, %v5203
        %v5380 = vpack.c.b16 %v5208, %v5204
        %v5381 = vpack.c.b16 %v5209, %v5205
        %v5382 = vpack.c.b16 %v5210, %v5206
        %v5383 = vpack.c.b16 %v5215, %v5211
        %v5384 = vpack.c.b16 %v5216, %v5212
        %v5385 = vpack.c.b16 %v5217, %v5213
        %v5386 = vpack.c.b16 %v5218, %v5214
        %v5387 = vpack.c.b16 %v5223, %v5219
        %v5388 = vpack.c.b16 %v5224, %v5220
        %v5389 = vpack.c.b16 %v5225, %v5221
        %v5390 = vpack.c.b16 %v5226, %v5222
        %v5391 = vpack.c.b16 %v5231, %v5227
        %v5392 = vpack.c.b16 %v5232, %v5228
        %v5393 = vpack.c.b16 %v5233, %v5229
        %v5394 = vpack.c.b16 %v5234, %v5230
        %v5395 = vpack.c.b16 %v5239, %v5235
        %v5396 = vpack.c.b16 %v5240, %v5236
        %v5397 = vpack.c.b16 %v5241, %v5237
        %v5398 = vpack.c.b16 %v5242, %v5238
        %v5399 = vpack.c.b16 %v5247, %v5243
        %v5400 = vpack.c.b16 %v5248, %v5244
        %v5401 = vpack.c.b16 %v5249, %v5245
        %v5402 = vpack.c.b16 %v5250, %v5246
        %v5403 = vpack.c.b16 %v5255, %v5251
        %v5404 = vpack.c.b16 %v5256, %v5252
        %v5405 = vpack.c.b16 %v5257, %v5253
        %v5406 = vpack.c.b16 %v5258, %v5254
        %v5407 = vpack.c.b16 %v5263, %v5259
        %v5408 = vpack.c.b16 %v5264, %v5260
        %v5409 = vpack.c.b16 %v5265, %v5261
        %v5410 = vpack.c.b16 %v5266, %v5262
        %v5411 = vpack.c.b16 %v5271, %v5267
        %v5412 = vpack.c.b16 %v5272, %v5268
        %v5413 = vpack.c.b16 %v5273, %v5269
        %v5414 = vpack.c.b16 %v5274, %v5270
        %v5415 = vpack.c.b16 %v5279, %v5275
        %v5416 = vpack.c.b16 %v5280, %v5276
        %v5417 = vpack.c.b16 %v5281, %v5277
        %v5418 = vpack.c.b16 %v5282, %v5278
        %v5419 = vpack.c.b16 %v5287, %v5283
        %v5420 = vpack.c.b16 %v5288, %v5284
        %v5421 = vpack.c.b16 %v5289, %v5285
        %v5422 = vpack.c.b16 %v5290, %v5286
        %v5423 = vpack.c.b16 %v5295, %v5291
        %v5424 = vpack.c.b16 %v5296, %v5292
        %v5425 = vpack.c.b16 %v5297, %v5293
        %v5426 = vpack.c.b16 %v5298, %v5294
        %5555 = vmatprep.subr.bf16.mxu0 %v5300
        %5556 = vmatpush1.bf16.msra.mxu0 %v5299
        %5557 = vmatprep.subr.bf16.mxu0 %v5304
        %5558 = vmatpush1.bf16.msra.mxu0 %v5303
        %5559 = vmatprep.subr.bf16.mxu0 %v5308
        %5560 = vmatpush1.bf16.msra.mxu0 %v5307
        %5561 = vmatprep.subr.bf16.mxu0 %v5312
        %5562 = vmatpush1.bf16.msra.mxu0 %v5311
        %5563 = vmatprep.subr.bf16.mxu0 %v5316
        %5564 = vmatpush1.bf16.msra.mxu0 %v5315
        %5565 = vmatprep.subr.bf16.mxu0 %v5320
        %5566 = vmatpush1.bf16.msra.mxu0 %v5319
        %5567 = vmatprep.subr.bf16.mxu0 %v5324
        %5568 = vmatpush1.bf16.msra.mxu0 %v5323
        %5569 = vmatprep.subr.bf16.mxu0 %v5328
        %5570 = vmatpush1.bf16.msra.mxu0 %v5327
        %5571 = vmatprep.subr.bf16.mxu0 %v5332
        %5572 = vmatpush1.bf16.msra.mxu0 %v5331
        %5573 = vmatprep.subr.bf16.mxu0 %v5336
        %5574 = vmatpush1.bf16.msra.mxu0 %v5335
        %5575 = vmatprep.subr.bf16.mxu0 %v5340
        %5576 = vmatpush1.bf16.msra.mxu0 %v5339
        %5577 = vmatprep.subr.bf16.mxu0 %v5344
        %5578 = vmatpush1.bf16.msra.mxu0 %v5343
        %5579 = vmatprep.subr.bf16.mxu0 %v5348
        %5580 = vmatpush1.bf16.msra.mxu0 %v5347
        %5581 = vmatprep.subr.bf16.mxu0 %v5352
        %5582 = vmatpush1.bf16.msra.mxu0 %v5351
        %5583 = vmatprep.subr.bf16.mxu0 %v5356
        %5584 = vmatpush1.bf16.msra.mxu0 %v5355
        %5585 = vmatprep.subr.bf16.mxu0 %v5360
        %5586 = vmatpush1.bf16.msra.mxu0 %v5359
        %5587 = vmatprep.mubr.bf16.mxu0 %v4742
        %5588 = vmatmul.mubr.bf16.gmra.mrb[0].mxu0 %v4741
        %v5589 = vpop.f32.mrb[0].mxu0
        %v5590 = vadd.f32 %v4902, %v5589
        %v5591 = vpop.f32.mrb[0].mxu0
        %v5592 = vadd.f32 %v4906, %v5591
        %v5593 = vpop.f32.mrb[0].mxu0
        %v5594 = vadd.f32 %v4902, %v5593
        %v5595 = vpop.f32.mrb[0].mxu0
        %v5596 = vadd.f32 %v4906, %v5595
        %5597 = vmatprep.mubr.bf16.mxu0 %v4746
        %5598 = vmatmul.mubr.bf16.gmra.mrb[0].mxu0 %v4745
        %v5599 = vpop.f32.mrb[0].mxu0
        %v5600 = vadd.f32 %v4902, %v5599
        %v5601 = vpop.f32.mrb[0].mxu0
        %v5602 = vadd.f32 %v4906, %v5601
        %v5603 = vpop.f32.mrb[0].mxu0
        %v5604 = vpop.f32.mrb[0].mxu0
        %5605 = vdwg.mxu0
        %5606 = vmatprep.subr.bf16.mxu0 %v5364
        %5607 = vmatpush1.bf16.msra.mxu0 %v5363
        %5608 = vmatprep.subr.bf16.mxu0 %v5368
        %5609 = vmatpush1.bf16.msra.mxu0 %v5367
        %5610 = vmatprep.subr.bf16.mxu0 %v5372
        %5611 = vmatpush1.bf16.msra.mxu0 %v5371
        %5612 = vmatprep.subr.bf16.mxu0 %v5376
        %5613 = vmatpush1.bf16.msra.mxu0 %v5375
        %5614 = vmatprep.subr.bf16.mxu0 %v5380
        %5615 = vmatpush1.bf16.msra.mxu0 %v5379
        %5616 = vmatprep.subr.bf16.mxu0 %v5384
        %5617 = vmatpush1.bf16.msra.mxu0 %v5383
        %5618 = vmatprep.subr.bf16.mxu0 %v5388
        %5619 = vmatpush1.bf16.msra.mxu0 %v5387
        %5620 = vmatprep.subr.bf16.mxu0 %v5392
        %5621 = vmatpush1.bf16.msra.mxu0 %v5391
        %5622 = vmatprep.subr.bf16.mxu0 %v5396
        %5623 = vmatpush1.bf16.msra.mxu0 %v5395
        %5624 = vmatprep.subr.bf16.mxu0 %v5400
        %5625 = vmatpush1.bf16.msra.mxu0 %v5399
        %5626 = vmatprep.subr.bf16.mxu0 %v5404
        %5627 = vmatpush1.bf16.msra.mxu0 %v5403
        %5628 = vmatprep.subr.bf16.mxu0 %v5408
        %5629 = vmatpush1.bf16.msra.mxu0 %v5407
        %5630 = vmatprep.subr.bf16.mxu0 %v5412
        %5631 = vmatpush1.bf16.msra.mxu0 %v5411
        %5632 = vmatprep.subr.bf16.mxu0 %v5416
        %5633 = vmatpush1.bf16.msra.mxu0 %v5415
        %5634 = vmatprep.subr.bf16.mxu0 %v5420
        %5635 = vmatpush1.bf16.msra.mxu0 %v5419
        %5636 = vmatprep.subr.bf16.mxu0 %v5424
        %5637 = vmatpush1.bf16.msra.mxu0 %v5423
        %5638 = vmatprep.mubr.bf16.mxu0 %v4744
        %5639 = vmatmul.mubr.bf16.gmra.mrb[0].mxu0 %v4743
        %v5640 = vpop.f32.mrb[0].mxu0
        %v5641 = vadd.f32 %v5590, %v5640
        %v5642 = vpop.f32.mrb[0].mxu0
        %v5643 = vadd.f32 %v5592, %v5642
        %v5644 = vpop.f32.mrb[0].mxu0
        %v5645 = vadd.f32 %v5594, %v5644
        %v5646 = vpop.f32.mrb[0].mxu0
        %v5647 = vadd.f32 %v5596, %v5646
        %5648 = vmatprep.mubr.bf16.mxu0 %v4748
        %5649 = vmatmul.mubr.bf16.gmra.mrb[0].mxu0 %v4747
        %v5650 = vpop.f32.mrb[0].mxu0
        %v5651 = vadd.f32 %v5600, %v5650
        %v5652 = vpop.f32.mrb[0].mxu0
        %v5653 = vadd.f32 %v5602, %v5652
        %v5654 = vpop.f32.mrb[0].mxu0
        %v5655 = vpop.f32.mrb[0].mxu0
        %5656 = vdwg.mxu0
        %5657 = vmatprep.subr.bf16.mxu0 %v5302
        %5658 = vmatpush1.bf16.msra.mxu0 %v5301
        %5659 = vmatprep.subr.bf16.mxu0 %v5306
        %5660 = vmatpush1.bf16.msra.mxu0 %v5305
        %5661 = vmatprep.subr.bf16.mxu0 %v5310
        %5662 = vmatpush1.bf16.msra.mxu0 %v5309
        %5663 = vmatprep.subr.bf16.mxu0 %v5314
        %5664 = vmatpush1.bf16.msra.mxu0 %v5313
        %5665 = vmatprep.subr.bf16.mxu0 %v5318
        %5666 = vmatpush1.bf16.msra.mxu0 %v5317
        %5667 = vmatprep.subr.bf16.mxu0 %v5322
        %5668 = vmatpush1.bf16.msra.mxu0 %v5321
        %5669 = vmatprep.subr.bf16.mxu0 %v5326
        %5670 = vmatpush1.bf16.msra.mxu0 %v5325
        %5671 = vmatprep.subr.bf16.mxu0 %v5330
        %5672 = vmatpush1.bf16.msra.mxu0 %v5329
        %5673 = vmatprep.subr.bf16.mxu0 %v5334
        %5674 = vmatpush1.bf16.msra.mxu0 %v5333
        %5675 = vmatprep.subr.bf16.mxu0 %v5338
        %5676 = vmatpush1.bf16.msra.mxu0 %v5337
        %5677 = vmatprep.subr.bf16.mxu0 %v5342
        %5678 = vmatpush1.bf16.msra.mxu0 %v5341
        %5679 = vmatprep.subr.bf16.mxu0 %v5346
        %5680 = vmatpush1.bf16.msra.mxu0 %v5345
        %5681 = vmatprep.subr.bf16.mxu0 %v5350
        %5682 = vmatpush1.bf16.msra.mxu0 %v5349
        %5683 = vmatprep.subr.bf16.mxu0 %v5354
        %5684 = vmatpush1.bf16.msra.mxu0 %v5353
        %5685 = vmatprep.subr.bf16.mxu0 %v5358
        %5686 = vmatpush1.bf16.msra.mxu0 %v5357
        %5687 = vmatprep.subr.bf16.mxu0 %v5362
        %5688 = vmatpush1.bf16.msra.mxu0 %v5361
        %5689 = vmatprep.mubr.bf16.mxu0 %v4742
        %5690 = vmatmul.mubr.bf16.gmra.mrb[0].mxu0 %v4741
        %v5691 = vpop.f32.mrb[0].mxu0
        %v5692 = vadd.f32 %v4910, %v5691
        %v5693 = vpop.f32.mrb[0].mxu0
        %v5694 = vadd.f32 %v4914, %v5693
        %v5695 = vpop.f32.mrb[0].mxu0
        %v5696 = vadd.f32 %v4910, %v5695
        %v5697 = vpop.f32.mrb[0].mxu0
        %v5698 = vadd.f32 %v4914, %v5697
        %5699 = vmatprep.mubr.bf16.mxu0 %v4746
        %5700 = vmatmul.mubr.bf16.gmra.mrb[0].mxu0 %v4745
        %v5701 = vpop.f32.mrb[0].mxu0
        %v5702 = vadd.f32 %v4910, %v5701
        %v5703 = vpop.f32.mrb[0].mxu0
        %v5704 = vadd.f32 %v4914, %v5703
        %v5705 = vpop.f32.mrb[0].mxu0
        %v5706 = vpop.f32.mrb[0].mxu0
        %5707 = vdwg.mxu0
        %5708 = vmatprep.subr.bf16.mxu0 %v5366
        %5709 = vmatpush1.bf16.msra.mxu0 %v5365
        %5710 = vmatprep.subr.bf16.mxu0 %v5370
        %5711 = vmatpush1.bf16.msra.mxu0 %v5369
        %5712 = vmatprep.subr.bf16.mxu0 %v5374
        %5713 = vmatpush1.bf16.msra.mxu0 %v5373
        %5714 = vmatprep.subr.bf16.mxu0 %v5378
        %5715 = vmatpush1.bf16.msra.mxu0 %v5377
        %5716 = vmatprep.subr.bf16.mxu0 %v5382
        %5717 = vmatpush1.bf16.msra.mxu0 %v5381
        %5718 = vmatprep.subr.bf16.mxu0 %v5386
        %5719 = vmatpush1.bf16.msra.mxu0 %v5385
        %5720 = vmatprep.subr.bf16.mxu0 %v5390
        %5721 = vmatpush1.bf16.msra.mxu0 %v5389
        %5722 = vmatprep.subr.bf16.mxu0 %v5394
        %5723 = vmatpush1.bf16.msra.mxu0 %v5393
        %5724 = vmatprep.subr.bf16.mxu0 %v5398
        %5725 = vmatpush1.bf16.msra.mxu0 %v5397
        %5726 = vmatprep.subr.bf16.mxu0 %v5402
        %5727 = vmatpush1.bf16.msra.mxu0 %v5401
        %5728 = vmatprep.subr.bf16.mxu0 %v5406
        %5729 = vmatpush1.bf16.msra.mxu0 %v5405
        %5730 = vmatprep.subr.bf16.mxu0 %v5410
        %5731 = vmatpush1.bf16.msra.mxu0 %v5409
        %5732 = vmatprep.subr.bf16.mxu0 %v5414
        %5733 = vmatpush1.bf16.msra.mxu0 %v5413
        %5734 = vmatprep.subr.bf16.mxu0 %v5418
        %5735 = vmatpush1.bf16.msra.mxu0 %v5417
        %5736 = vmatprep.subr.bf16.mxu0 %v5422
        %5737 = vmatpush1.bf16.msra.mxu0 %v5421
        %5738 = vmatprep.subr.bf16.mxu0 %v5426
        %5739 = vmatpush1.bf16.msra.mxu0 %v5425
        %5740 = vmatprep.mubr.bf16.mxu0 %v4744
        %5741 = vmatmul.mubr.bf16.gmra.mrb[0].mxu0 %v4743
        %v5742 = vpop.f32.mrb[0].mxu0
        %v5743 = vadd.f32 %v5692, %v5742
        %v5744 = vpop.f32.mrb[0].mxu0
        %v5745 = vadd.f32 %v5694, %v5744
        %v5746 = vpop.f32.mrb[0].mxu0
        %v5747 = vadd.f32 %v5696, %v5746
        %v5748 = vpop.f32.mrb[0].mxu0
        %v5749 = vadd.f32 %v5698, %v5748
        %5750 = vmatprep.mubr.bf16.mxu0 %v4748
        %5751 = vmatmul.mubr.bf16.gmra.mrb[0].mxu0 %v4747
        %v5752 = vpop.f32.mrb[0].mxu0
        %v5753 = vadd.f32 %v5702, %v5752
        %v5754 = vpop.f32.mrb[0].mxu0
        %v5755 = vadd.f32 %v5704, %v5754
        %v5756 = vpop.f32.mrb[0].mxu0
        %v5757 = vpop.f32.mrb[0].mxu0
        %5758 = vdwg.mxu0
        %vm5759 = vcmp.gt.f32.partialorder %v5641, 0.0
        %vm5760 = vcmp.gt.f32.partialorder %v5643, 0.0
        %vm5761 = vcmp.gt.f32.partialorder %v5743, 0.0
        %vm5762 = vcmp.gt.f32.partialorder %v5745, 0.0
        %vm5763 = vcmp.gt.f32.partialorder %v5645, 0.0
        %vm5764 = vcmp.gt.f32.partialorder %v5647, 0.0
        %vm5765 = vcmp.gt.f32.partialorder %v5747, 0.0
        %vm5766 = vcmp.gt.f32.partialorder %v5749, 0.0
        %vm5767 = vcmp.gt.f32.partialorder %v5651, 0.0
        %vm5768 = vcmp.gt.f32.partialorder %v5653, 0.0
        %vm5769 = vcmp.gt.f32.partialorder %v5753, 0.0
        %vm5770 = vcmp.gt.f32.partialorder %v5755, 0.0
        %v5771 = vmul.f32 %v5641, 0.2
        %v5772 = vmul.f32 %v5643, 0.2
        %v5773 = vmul.f32 %v5743, 0.2
        %v5774 = vmul.f32 %v5745, 0.2
        %v5775 = vmul.f32 %v5645, 0.2
        %v5776 = vmul.f32 %v5647, 0.2
        %v5777 = vmul.f32 %v5747, 0.2
        %v5778 = vmul.f32 %v5749, 0.2
        %v5779 = vmul.f32 %v5651, 0.2
        %v5780 = vmul.f32 %v5653, 0.2
        %v5781 = vmul.f32 %v5753, 0.2
        %v5782 = vmul.f32 %v5755, 0.2
        %v5783 = vsel %vm5759, %v5641, %v5771
        %v5784 = vsel %vm5760, %v5643, %v5772
        %v5785 = vsel %vm5761, %v5743, %v5773
        %v5786 = vsel %vm5762, %v5745, %v5774
        %v5787 = vsel %vm5763, %v5645, %v5775
        %v5788 = vsel %vm5764, %v5647, %v5776
        %v5789 = vsel %vm5765, %v5747, %v5777
        %v5790 = vsel %vm5766, %v5749, %v5778
        %v5791 = vsel %vm5767, %v5651, %v5779
        %v5792 = vsel %vm5768, %v5653, %v5780
        %v5793 = vsel %vm5769, %v5753, %v5781
        %v5794 = vsel %vm5770, %v5755, %v5782
        %v5795 = vmul.f32 %v5783, 1.4142135
        %v5796 = vmul.f32 %v5784, 1.4142135
        %v5797 = vmul.f32 %v5785, 1.4142135
        %v5798 = vmul.f32 %v5786, 1.4142135
        %v5799 = vmul.f32 %v5787, 1.4142135
        %v5800 = vmul.f32 %v5788, 1.4142135
        %v5801 = vmul.f32 %v5789, 1.4142135
        %v5802 = vmul.f32 %v5790, 1.4142135
        %v5803 = vmul.f32 %v5791, 1.4142135
        %v5804 = vmul.f32 %v5792, 1.4142135
        %v5805 = vmul.f32 %v5793, 1.4142135
        %v5806 = vmul.f32 %v5794, 1.4142135
        %v5807 = vpack.c.bf16 %v5799, %v5795
        %v5808 = vpack.c.bf16 %v5800, %v5796
        %v5809 = vpack.c.bf16 %v5801, %v5797
        %v5810 = vpack.c.bf16 %v5802, %v5798
        %v5811 = vpack.c.bf16 %v5803, %v5803
        %v5812 = vpack.c.bf16 %v5804, %v5804
        %v5813 = vpack.c.bf16 %v5805, %v5805
        %v5814 = vpack.c.bf16 %v5806, %v5806
        %s5815 = scalar_lea.vmem %s393, 1024 [#allocation8]
        %v5816 = vld [vmem:[%s5815] sm:$0xff]
        %v5817 = vld [vmem:[%s5815 + $0x8] sm:$0xff]
        %v5818 = vld [vmem:[%s5815 + $0x10] sm:$0xff]
        %v5819 = vld [vmem:[%s5815 + $0x18] sm:$0xff]
        %v5820 = vld [vmem:[%s5815 + $0x20] sm:$0xff]
        %v5821 = vld [vmem:[%s5815 + $0x28] sm:$0xff]
        %v5822 = vld [vmem:[%s5815 + $0x30] sm:$0xff]
        %v5823 = vld [vmem:[%s5815 + $0x38] sm:$0xff]
        %v5824 = vld [vmem:[%s5815 + $0x40] sm:$0xff]
        %v5825 = vld [vmem:[%s5815 + $0x48] sm:$0xff]
        %v5826 = vld [vmem:[%s5815 + $0x50] sm:$0xff]
        %v5827 = vld [vmem:[%s5815 + $0x58] sm:$0xff]
        %v5828 = vld [vmem:[%s5815 + $0x60] sm:$0xff]
        %v5829 = vld [vmem:[%s5815 + $0x68] sm:$0xff]
        %v5830 = vld [vmem:[%s5815 + $0x70] sm:$0xff]
        %v5831 = vld [vmem:[%s5815 + $0x78] sm:$0xff]
        %v5832 = vld [vmem:[%s5815 + $0x80] sm:$0xff]
        %v5833 = vld [vmem:[%s5815 + $0x88] sm:$0xff]
        %v5834 = vld [vmem:[%s5815 + $0x90] sm:$0xff]
        %v5835 = vld [vmem:[%s5815 + $0x98] sm:$0xff]
        %v5836 = vld [vmem:[%s5815 + $0xa0] sm:$0xff]
        %v5837 = vld [vmem:[%s5815 + $0xa8] sm:$0xff]
        %v5838 = vld [vmem:[%s5815 + $0xb0] sm:$0xff]
        %v5839 = vld [vmem:[%s5815 + $0xb8] sm:$0xff]
        %v5840 = vld [vmem:[%s5815 + $0xc0] sm:$0xff]
        %v5841 = vld [vmem:[%s5815 + $0xc8] sm:$0xff]
        %v5842 = vld [vmem:[%s5815 + $0xd0] sm:$0xff]
        %v5843 = vld [vmem:[%s5815 + $0xd8] sm:$0xff]
        %v5844 = vld [vmem:[%s5815 + $0xe0] sm:$0xff]
        %v5845 = vld [vmem:[%s5815 + $0xe8] sm:$0xff]
        %v5846 = vld [vmem:[%s5815 + $0xf0] sm:$0xff]
        %v5847 = vld [vmem:[%s5815 + $0xf8] sm:$0xff]
        %v5848 = vld [vmem:[%s5815 + $0x100] sm:$0xff]
        %v5849 = vld [vmem:[%s5815 + $0x108] sm:$0xff]
        %v5850 = vld [vmem:[%s5815 + $0x110] sm:$0xff]
        %v5851 = vld [vmem:[%s5815 + $0x118] sm:$0xff]
        %v5852 = vld [vmem:[%s5815 + $0x120] sm:$0xff]
        %v5853 = vld [vmem:[%s5815 + $0x128] sm:$0xff]
        %v5854 = vld [vmem:[%s5815 + $0x130] sm:$0xff]
        %v5855 = vld [vmem:[%s5815 + $0x138] sm:$0xff]
        %v5856 = vld [vmem:[%s5815 + $0x140] sm:$0xff]
        %v5857 = vld [vmem:[%s5815 + $0x148] sm:$0xff]
        %v5858 = vld [vmem:[%s5815 + $0x150] sm:$0xff]
        %v5859 = vld [vmem:[%s5815 + $0x158] sm:$0xff]
        %v5860 = vld [vmem:[%s5815 + $0x160] sm:$0xff]
        %v5861 = vld [vmem:[%s5815 + $0x168] sm:$0xff]
        %v5862 = vld [vmem:[%s5815 + $0x170] sm:$0xff]
        %v5863 = vld [vmem:[%s5815 + $0x178] sm:$0xff]
        %v5864 = vld [vmem:[%s5815 + $0x180] sm:$0xff]
        %v5865 = vld [vmem:[%s5815 + $0x188] sm:$0xff]
        %v5866 = vld [vmem:[%s5815 + $0x190] sm:$0xff]
        %v5867 = vld [vmem:[%s5815 + $0x198] sm:$0xff]
        %v5868 = vld [vmem:[%s5815 + $0x1a0] sm:$0xff]
        %v5869 = vld [vmem:[%s5815 + $0x1a8] sm:$0xff]
        %v5870 = vld [vmem:[%s5815 + $0x1b0] sm:$0xff]
        %v5871 = vld [vmem:[%s5815 + $0x1b8] sm:$0xff]
        %v5872 = vld [vmem:[%s5815 + $0x1c0] sm:$0xff]
        %v5873 = vld [vmem:[%s5815 + $0x1c8] sm:$0xff]
        %v5874 = vld [vmem:[%s5815 + $0x1d0] sm:$0xff]
        %v5875 = vld [vmem:[%s5815 + $0x1d8] sm:$0xff]
        %v5876 = vld [vmem:[%s5815 + $0x1e0] sm:$0xff]
        %v5877 = vld [vmem:[%s5815 + $0x1e8] sm:$0xff]
        %v5878 = vld [vmem:[%s5815 + $0x1f0] sm:$0xff]
        %v5879 = vld [vmem:[%s5815 + $0x1f8] sm:$0xff]
        %v5880 = vld [vmem:[%s5815 + $0x200] sm:$0xff]
        %v5881 = vld [vmem:[%s5815 + $0x208] sm:$0xff]
        %v5882 = vld [vmem:[%s5815 + $0x210] sm:$0xff]
        %v5883 = vld [vmem:[%s5815 + $0x218] sm:$0xff]
        %v5884 = vld [vmem:[%s5815 + $0x220] sm:$0xff]
        %v5885 = vld [vmem:[%s5815 + $0x228] sm:$0xff]
        %v5886 = vld [vmem:[%s5815 + $0x230] sm:$0xff]
        %v5887 = vld [vmem:[%s5815 + $0x238] sm:$0xff]
        %v5888 = vld [vmem:[%s5815 + $0x240] sm:$0xff]
        %v5889 = vld [vmem:[%s5815 + $0x248] sm:$0xff]
        %v5890 = vld [vmem:[%s5815 + $0x250] sm:$0xff]
        %v5891 = vld [vmem:[%s5815 + $0x258] sm:$0xff]
        %v5892 = vld [vmem:[%s5815 + $0x260] sm:$0xff]
        %v5893 = vld [vmem:[%s5815 + $0x268] sm:$0xff]
        %v5894 = vld [vmem:[%s5815 + $0x270] sm:$0xff]
        %v5895 = vld [vmem:[%s5815 + $0x278] sm:$0xff]
        %v5896 = vld [vmem:[%s5815 + $0x280] sm:$0xff]
        %v5897 = vld [vmem:[%s5815 + $0x288] sm:$0xff]
        %v5898 = vld [vmem:[%s5815 + $0x290] sm:$0xff]
        %v5899 = vld [vmem:[%s5815 + $0x298] sm:$0xff]
        %v5900 = vld [vmem:[%s5815 + $0x2a0] sm:$0xff]
        %v5901 = vld [vmem:[%s5815 + $0x2a8] sm:$0xff]
        %v5902 = vld [vmem:[%s5815 + $0x2b0] sm:$0xff]
        %v5903 = vld [vmem:[%s5815 + $0x2b8] sm:$0xff]
        %v5904 = vld [vmem:[%s5815 + $0x2c0] sm:$0xff]
        %v5905 = vld [vmem:[%s5815 + $0x2c8] sm:$0xff]
        %v5906 = vld [vmem:[%s5815 + $0x2d0] sm:$0xff]
        %v5907 = vld [vmem:[%s5815 + $0x2d8] sm:$0xff]
        %v5908 = vld [vmem:[%s5815 + $0x2e0] sm:$0xff]
        %v5909 = vld [vmem:[%s5815 + $0x2e8] sm:$0xff]
        %v5910 = vld [vmem:[%s5815 + $0x2f0] sm:$0xff]
        %v5911 = vld [vmem:[%s5815 + $0x2f8] sm:$0xff]
        %v5912 = vld [vmem:[%s5815 + $0x300] sm:$0xff]
        %v5913 = vld [vmem:[%s5815 + $0x308] sm:$0xff]
        %v5914 = vld [vmem:[%s5815 + $0x310] sm:$0xff]
        %v5915 = vld [vmem:[%s5815 + $0x318] sm:$0xff]
        %v5916 = vld [vmem:[%s5815 + $0x320] sm:$0xff]
        %v5917 = vld [vmem:[%s5815 + $0x328] sm:$0xff]
        %v5918 = vld [vmem:[%s5815 + $0x330] sm:$0xff]
        %v5919 = vld [vmem:[%s5815 + $0x338] sm:$0xff]
        %v5920 = vld [vmem:[%s5815 + $0x340] sm:$0xff]
        %v5921 = vld [vmem:[%s5815 + $0x348] sm:$0xff]
        %v5922 = vld [vmem:[%s5815 + $0x350] sm:$0xff]
        %v5923 = vld [vmem:[%s5815 + $0x358] sm:$0xff]
        %v5924 = vld [vmem:[%s5815 + $0x360] sm:$0xff]
        %v5925 = vld [vmem:[%s5815 + $0x368] sm:$0xff]
        %v5926 = vld [vmem:[%s5815 + $0x370] sm:$0xff]
        %v5927 = vld [vmem:[%s5815 + $0x378] sm:$0xff]
        %v5928 = vld [vmem:[%s5815 + $0x380] sm:$0xff]
        %v5929 = vld [vmem:[%s5815 + $0x388] sm:$0xff]
        %v5930 = vld [vmem:[%s5815 + $0x390] sm:$0xff]
        %v5931 = vld [vmem:[%s5815 + $0x398] sm:$0xff]
        %v5932 = vld [vmem:[%s5815 + $0x3a0] sm:$0xff]
        %v5933 = vld [vmem:[%s5815 + $0x3a8] sm:$0xff]
        %v5934 = vld [vmem:[%s5815 + $0x3b0] sm:$0xff]
        %v5935 = vld [vmem:[%s5815 + $0x3b8] sm:$0xff]
        %v5936 = vld [vmem:[%s5815 + $0x3c0] sm:$0xff]
        %v5937 = vld [vmem:[%s5815 + $0x3c8] sm:$0xff]
        %v5938 = vld [vmem:[%s5815 + $0x3d0] sm:$0xff]
        %v5939 = vld [vmem:[%s5815 + $0x3d8] sm:$0xff]
        %v5940 = vld [vmem:[%s5815 + $0x3e0] sm:$0xff]
        %v5941 = vld [vmem:[%s5815 + $0x3e8] sm:$0xff]
        %v5942 = vld [vmem:[%s5815 + $0x3f0] sm:$0xff]
        %v5943 = vld [vmem:[%s5815 + $0x3f8] sm:$0xff]
        %v5944 = vlaneseq
        %v5945 = vshrl.u32 %v5944, 7
        %v5946 = vsub.s32 1, %v5945
        %v5947 = vrot.slane %v4739, %v5946
        %v5948 = vlaneseq
        %v5949 = vshrl.u32 %v5948, 7
        %v5950 = vsub.s32 5, %v5949
        %v5951 = vrot.slane %v4739, %v5950
        %v5952 = vlaneseq
        %v5953 = vshrl.u32 %v5952, 7
        %v5954 = vsub.s32 1, %v5953
        %v5955 = vrot.slane %v4740, %v5954
        %v5956 = vlaneseq
        %v5957 = vshrl.u32 %v5956, 7
        %v5958 = vsub.s32 5, %v5957
        %v5959 = vrot.slane %v4740, %v5958
        %v5964 = vlaneseq
        %v5965 = vshrl.u32 %v5964, 7
        %v5966 = vsub.s32 1, %v5965
        %v5967 = vrot.slane %v5947, %v5966
        %v5968 = vlaneseq
        %v5969 = vshrl.u32 %v5968, 7
        %v5970 = vsub.s32 1, %v5969
        %v5971 = vrot.slane %v5951, %v5970
        %v5972 = vlaneseq
        %v5973 = vshrl.u32 %v5972, 7
        %v5974 = vsub.s32 1, %v5973
        %v5975 = vrot.slane %v5955, %v5974
        %v5976 = vlaneseq
        %v5977 = vshrl.u32 %v5976, 7
        %v5978 = vsub.s32 1, %v5977
        %v5979 = vrot.slane %v5959, %v5978
        %v6108 = vunpack.c.l.b16 %v5816
        %v6109 = vunpack.c.h.b16 %v5816
        %v6110 = vunpack.c.l.b16 %v5817
        %v6111 = vunpack.c.h.b16 %v5817
        %v6112 = vunpack.c.l.b16 %v5818
        %v6113 = vunpack.c.h.b16 %v5818
        %v6114 = vunpack.c.l.b16 %v5819
        %v6115 = vunpack.c.h.b16 %v5819
        %v6116 = vunpack.c.l.b16 %v5820
        %v6117 = vunpack.c.h.b16 %v5820
        %v6118 = vunpack.c.l.b16 %v5821
        %v6119 = vunpack.c.h.b16 %v5821
        %v6120 = vunpack.c.l.b16 %v5822
        %v6121 = vunpack.c.h.b16 %v5822
        %v6122 = vunpack.c.l.b16 %v5823
        %v6123 = vunpack.c.h.b16 %v5823
        %v6124 = vunpack.c.l.b16 %v5824
        %v6125 = vunpack.c.h.b16 %v5824
        %v6126 = vunpack.c.l.b16 %v5825
        %v6127 = vunpack.c.h.b16 %v5825
        %v6128 = vunpack.c.l.b16 %v5826
        %v6129 = vunpack.c.h.b16 %v5826
        %v6130 = vunpack.c.l.b16 %v5827
        %v6131 = vunpack.c.h.b16 %v5827
        %v6132 = vunpack.c.l.b16 %v5828
        %v6133 = vunpack.c.h.b16 %v5828
        %v6134 = vunpack.c.l.b16 %v5829
        %v6135 = vunpack.c.h.b16 %v5829
        %v6136 = vunpack.c.l.b16 %v5830
        %v6137 = vunpack.c.h.b16 %v5830
        %v6138 = vunpack.c.l.b16 %v5831
        %v6139 = vunpack.c.h.b16 %v5831
        %v6140 = vunpack.c.l.b16 %v5832
        %v6141 = vunpack.c.h.b16 %v5832
        %v6142 = vunpack.c.l.b16 %v5833
        %v6143 = vunpack.c.h.b16 %v5833
        %v6144 = vunpack.c.l.b16 %v5834
        %v6145 = vunpack.c.h.b16 %v5834
        %v6146 = vunpack.c.l.b16 %v5835
        %v6147 = vunpack.c.h.b16 %v5835
        %v6148 = vunpack.c.l.b16 %v5836
        %v6149 = vunpack.c.h.b16 %v5836
        %v6150 = vunpack.c.l.b16 %v5837
        %v6151 = vunpack.c.h.b16 %v5837
        %v6152 = vunpack.c.l.b16 %v5838
        %v6153 = vunpack.c.h.b16 %v5838
        %v6154 = vunpack.c.l.b16 %v5839
        %v6155 = vunpack.c.h.b16 %v5839
        %v6156 = vunpack.c.l.b16 %v5840
        %v6157 = vunpack.c.h.b16 %v5840
        %v6158 = vunpack.c.l.b16 %v5841
        %v6159 = vunpack.c.h.b16 %v5841
        %v6160 = vunpack.c.l.b16 %v5842
        %v6161 = vunpack.c.h.b16 %v5842
        %v6162 = vunpack.c.l.b16 %v5843
        %v6163 = vunpack.c.h.b16 %v5843
        %v6164 = vunpack.c.l.b16 %v5844
        %v6165 = vunpack.c.h.b16 %v5844
        %v6166 = vunpack.c.l.b16 %v5845
        %v6167 = vunpack.c.h.b16 %v5845
        %v6168 = vunpack.c.l.b16 %v5846
        %v6169 = vunpack.c.h.b16 %v5846
        %v6170 = vunpack.c.l.b16 %v5847
        %v6171 = vunpack.c.h.b16 %v5847
        %v6172 = vunpack.c.l.b16 %v5848
        %v6173 = vunpack.c.h.b16 %v5848
        %v6174 = vunpack.c.l.b16 %v5849
        %v6175 = vunpack.c.h.b16 %v5849
        %v6176 = vunpack.c.l.b16 %v5850
        %v6177 = vunpack.c.h.b16 %v5850
        %v6178 = vunpack.c.l.b16 %v5851
        %v6179 = vunpack.c.h.b16 %v5851
        %v6180 = vunpack.c.l.b16 %v5852
        %v6181 = vunpack.c.h.b16 %v5852
        %v6182 = vunpack.c.l.b16 %v5853
        %v6183 = vunpack.c.h.b16 %v5853
        %v6184 = vunpack.c.l.b16 %v5854
        %v6185 = vunpack.c.h.b16 %v5854
        %v6186 = vunpack.c.l.b16 %v5855
        %v6187 = vunpack.c.h.b16 %v5855
        %v6188 = vunpack.c.l.b16 %v5856
        %v6189 = vunpack.c.h.b16 %v5856
        %v6190 = vunpack.c.l.b16 %v5857
        %v6191 = vunpack.c.h.b16 %v5857
        %v6192 = vunpack.c.l.b16 %v5858
        %v6193 = vunpack.c.h.b16 %v5858
        %v6194 = vunpack.c.l.b16 %v5859
        %v6195 = vunpack.c.h.b16 %v5859
        %v6196 = vunpack.c.l.b16 %v5860
        %v6197 = vunpack.c.h.b16 %v5860
        %v6198 = vunpack.c.l.b16 %v5861
        %v6199 = vunpack.c.h.b16 %v5861
        %v6200 = vunpack.c.l.b16 %v5862
        %v6201 = vunpack.c.h.b16 %v5862
        %v6202 = vunpack.c.l.b16 %v5863
        %v6203 = vunpack.c.h.b16 %v5863
        %v6204 = vunpack.c.l.b16 %v5864
        %v6205 = vunpack.c.h.b16 %v5864
        %v6206 = vunpack.c.l.b16 %v5865
        %v6207 = vunpack.c.h.b16 %v5865
        %v6208 = vunpack.c.l.b16 %v5866
        %v6209 = vunpack.c.h.b16 %v5866
        %v6210 = vunpack.c.l.b16 %v5867
        %v6211 = vunpack.c.h.b16 %v5867
        %v6212 = vunpack.c.l.b16 %v5868
        %v6213 = vunpack.c.h.b16 %v5868
        %v6214 = vunpack.c.l.b16 %v5869
        %v6215 = vunpack.c.h.b16 %v5869
        %v6216 = vunpack.c.l.b16 %v5870
        %v6217 = vunpack.c.h.b16 %v5870
        %v6218 = vunpack.c.l.b16 %v5871
        %v6219 = vunpack.c.h.b16 %v5871
        %v6220 = vunpack.c.l.b16 %v5872
        %v6221 = vunpack.c.h.b16 %v5872
        %v6222 = vunpack.c.l.b16 %v5873
        %v6223 = vunpack.c.h.b16 %v5873
        %v6224 = vunpack.c.l.b16 %v5874
        %v6225 = vunpack.c.h.b16 %v5874
        %v6226 = vunpack.c.l.b16 %v5875
        %v6227 = vunpack.c.h.b16 %v5875
        %v6228 = vunpack.c.l.b16 %v5876
        %v6229 = vunpack.c.h.b16 %v5876
        %v6230 = vunpack.c.l.b16 %v5877
        %v6231 = vunpack.c.h.b16 %v5877
        %v6232 = vunpack.c.l.b16 %v5878
        %v6233 = vunpack.c.h.b16 %v5878
        %v6234 = vunpack.c.l.b16 %v5879
        %v6235 = vunpack.c.h.b16 %v5879
        %v6236 = vunpack.c.l.b16 %v5880
        %v6237 = vunpack.c.h.b16 %v5880
        %v6238 = vunpack.c.l.b16 %v5881
        %v6239 = vunpack.c.h.b16 %v5881
        %v6240 = vunpack.c.l.b16 %v5882
        %v6241 = vunpack.c.h.b16 %v5882
        %v6242 = vunpack.c.l.b16 %v5883
        %v6243 = vunpack.c.h.b16 %v5883
        %v6244 = vunpack.c.l.b16 %v5884
        %v6245 = vunpack.c.h.b16 %v5884
        %v6246 = vunpack.c.l.b16 %v5885
        %v6247 = vunpack.c.h.b16 %v5885
        %v6248 = vunpack.c.l.b16 %v5886
        %v6249 = vunpack.c.h.b16 %v5886
        %v6250 = vunpack.c.l.b16 %v5887
        %v6251 = vunpack.c.h.b16 %v5887
        %v6252 = vunpack.c.l.b16 %v5888
        %v6253 = vunpack.c.h.b16 %v5888
        %v6254 = vunpack.c.l.b16 %v5889
        %v6255 = vunpack.c.h.b16 %v5889
        %v6256 = vunpack.c.l.b16 %v5890
        %v6257 = vunpack.c.h.b16 %v5890
        %v6258 = vunpack.c.l.b16 %v5891
        %v6259 = vunpack.c.h.b16 %v5891
        %v6260 = vunpack.c.l.b16 %v5892
        %v6261 = vunpack.c.h.b16 %v5892
        %v6262 = vunpack.c.l.b16 %v5893
        %v6263 = vunpack.c.h.b16 %v5893
        %v6264 = vunpack.c.l.b16 %v5894
        %v6265 = vunpack.c.h.b16 %v5894
        %v6266 = vunpack.c.l.b16 %v5895
        %v6267 = vunpack.c.h.b16 %v5895
        %v6268 = vunpack.c.l.b16 %v5896
        %v6269 = vunpack.c.h.b16 %v5896
        %v6270 = vunpack.c.l.b16 %v5897
        %v6271 = vunpack.c.h.b16 %v5897
        %v6272 = vunpack.c.l.b16 %v5898
        %v6273 = vunpack.c.h.b16 %v5898
        %v6274 = vunpack.c.l.b16 %v5899
        %v6275 = vunpack.c.h.b16 %v5899
        %v6276 = vunpack.c.l.b16 %v5900
        %v6277 = vunpack.c.h.b16 %v5900
        %v6278 = vunpack.c.l.b16 %v5901
        %v6279 = vunpack.c.h.b16 %v5901
        %v6280 = vunpack.c.l.b16 %v5902
        %v6281 = vunpack.c.h.b16 %v5902
        %v6282 = vunpack.c.l.b16 %v5903
        %v6283 = vunpack.c.h.b16 %v5903
        %v6284 = vunpack.c.l.b16 %v5904
        %v6285 = vunpack.c.h.b16 %v5904
        %v6286 = vunpack.c.l.b16 %v5905
        %v6287 = vunpack.c.h.b16 %v5905
        %v6288 = vunpack.c.l.b16 %v5906
        %v6289 = vunpack.c.h.b16 %v5906
        %v6290 = vunpack.c.l.b16 %v5907
        %v6291 = vunpack.c.h.b16 %v5907
        %v6292 = vunpack.c.l.b16 %v5908
        %v6293 = vunpack.c.h.b16 %v5908
        %v6294 = vunpack.c.l.b16 %v5909
        %v6295 = vunpack.c.h.b16 %v5909
        %v6296 = vunpack.c.l.b16 %v5910
        %v6297 = vunpack.c.h.b16 %v5910
        %v6298 = vunpack.c.l.b16 %v5911
        %v6299 = vunpack.c.h.b16 %v5911
        %v6300 = vunpack.c.l.b16 %v5912
        %v6301 = vunpack.c.h.b16 %v5912
        %v6302 = vunpack.c.l.b16 %v5913
        %v6303 = vunpack.c.h.b16 %v5913
        %v6304 = vunpack.c.l.b16 %v5914
        %v6305 = vunpack.c.h.b16 %v5914
        %v6306 = vunpack.c.l.b16 %v5915
        %v6307 = vunpack.c.h.b16 %v5915
        %v6308 = vunpack.c.l.b16 %v5916
        %v6309 = vunpack.c.h.b16 %v5916
        %v6310 = vunpack.c.l.b16 %v5917
        %v6311 = vunpack.c.h.b16 %v5917
        %v6312 = vunpack.c.l.b16 %v5918
        %v6313 = vunpack.c.h.b16 %v5918
        %v6314 = vunpack.c.l.b16 %v5919
        %v6315 = vunpack.c.h.b16 %v5919
        %v6316 = vunpack.c.l.b16 %v5920
        %v6317 = vunpack.c.h.b16 %v5920
        %v6318 = vunpack.c.l.b16 %v5921
        %v6319 = vunpack.c.h.b16 %v5921
        %v6320 = vunpack.c.l.b16 %v5922
        %v6321 = vunpack.c.h.b16 %v5922
        %v6322 = vunpack.c.l.b16 %v5923
        %v6323 = vunpack.c.h.b16 %v5923
        %v6324 = vunpack.c.l.b16 %v5924
        %v6325 = vunpack.c.h.b16 %v5924
        %v6326 = vunpack.c.l.b16 %v5925
        %v6327 = vunpack.c.h.b16 %v5925
        %v6328 = vunpack.c.l.b16 %v5926
        %v6329 = vunpack.c.h.b16 %v5926
        %v6330 = vunpack.c.l.b16 %v5927
        %v6331 = vunpack.c.h.b16 %v5927
        %v6332 = vunpack.c.l.b16 %v5928
        %v6333 = vunpack.c.h.b16 %v5928
        %v6334 = vunpack.c.l.b16 %v5929
        %v6335 = vunpack.c.h.b16 %v5929
        %v6336 = vunpack.c.l.b16 %v5930
        %v6337 = vunpack.c.h.b16 %v5930
        %v6338 = vunpack.c.l.b16 %v5931
        %v6339 = vunpack.c.h.b16 %v5931
        %v6340 = vunpack.c.l.b16 %v5932
        %v6341 = vunpack.c.h.b16 %v5932
        %v6342 = vunpack.c.l.b16 %v5933
        %v6343 = vunpack.c.h.b16 %v5933
        %v6344 = vunpack.c.l.b16 %v5934
        %v6345 = vunpack.c.h.b16 %v5934
        %v6346 = vunpack.c.l.b16 %v5935
        %v6347 = vunpack.c.h.b16 %v5935
        %v6348 = vunpack.c.l.b16 %v5936
        %v6349 = vunpack.c.h.b16 %v5936
        %v6350 = vunpack.c.l.b16 %v5937
        %v6351 = vunpack.c.h.b16 %v5937
        %v6352 = vunpack.c.l.b16 %v5938
        %v6353 = vunpack.c.h.b16 %v5938
        %v6354 = vunpack.c.l.b16 %v5939
        %v6355 = vunpack.c.h.b16 %v5939
        %v6356 = vunpack.c.l.b16 %v5940
        %v6357 = vunpack.c.h.b16 %v5940
        %v6358 = vunpack.c.l.b16 %v5941
        %v6359 = vunpack.c.h.b16 %v5941
        %v6360 = vunpack.c.l.b16 %v5942
        %v6361 = vunpack.c.h.b16 %v5942
        %v6362 = vunpack.c.l.b16 %v5943
        %v6363 = vunpack.c.h.b16 %v5943
        %v6364 = vpack.c.b16 %v6112, %v6108
        %v6365 = vpack.c.b16 %v6113, %v6109
        %v6366 = vpack.c.b16 %v6114, %v6110
        %v6367 = vpack.c.b16 %v6115, %v6111
        %v6368 = vpack.c.b16 %v6120, %v6116
        %v6369 = vpack.c.b16 %v6121, %v6117
        %v6370 = vpack.c.b16 %v6122, %v6118
        %v6371 = vpack.c.b16 %v6123, %v6119
        %v6372 = vpack.c.b16 %v6128, %v6124
        %v6373 = vpack.c.b16 %v6129, %v6125
        %v6374 = vpack.c.b16 %v6130, %v6126
        %v6375 = vpack.c.b16 %v6131, %v6127
        %v6376 = vpack.c.b16 %v6136, %v6132
        %v6377 = vpack.c.b16 %v6137, %v6133
        %v6378 = vpack.c.b16 %v6138, %v6134
        %v6379 = vpack.c.b16 %v6139, %v6135
        %v6380 = vpack.c.b16 %v6144, %v6140
        %v6381 = vpack.c.b16 %v6145, %v6141
        %v6382 = vpack.c.b16 %v6146, %v6142
        %v6383 = vpack.c.b16 %v6147, %v6143
        %v6384 = vpack.c.b16 %v6152, %v6148
        %v6385 = vpack.c.b16 %v6153, %v6149
        %v6386 = vpack.c.b16 %v6154, %v6150
        %v6387 = vpack.c.b16 %v6155, %v6151
        %v6388 = vpack.c.b16 %v6160, %v6156
        %v6389 = vpack.c.b16 %v6161, %v6157
        %v6390 = vpack.c.b16 %v6162, %v6158
        %v6391 = vpack.c.b16 %v6163, %v6159
        %v6392 = vpack.c.b16 %v6168, %v6164
        %v6393 = vpack.c.b16 %v6169, %v6165
        %v6394 = vpack.c.b16 %v6170, %v6166
        %v6395 = vpack.c.b16 %v6171, %v6167
        %v6396 = vpack.c.b16 %v6176, %v6172
        %v6397 = vpack.c.b16 %v6177, %v6173
        %v6398 = vpack.c.b16 %v6178, %v6174
        %v6399 = vpack.c.b16 %v6179, %v6175
        %v6400 = vpack.c.b16 %v6184, %v6180
        %v6401 = vpack.c.b16 %v6185, %v6181
        %v6402 = vpack.c.b16 %v6186, %v6182
        %v6403 = vpack.c.b16 %v6187, %v6183
        %v6404 = vpack.c.b16 %v6192, %v6188
        %v6405 = vpack.c.b16 %v6193, %v6189
        %v6406 = vpack.c.b16 %v6194, %v6190
        %v6407 = vpack.c.b16 %v6195, %v6191
        %v6408 = vpack.c.b16 %v6200, %v6196
        %v6409 = vpack.c.b16 %v6201, %v6197
        %v6410 = vpack.c.b16 %v6202, %v6198
        %v6411 = vpack.c.b16 %v6203, %v6199
        %v6412 = vpack.c.b16 %v6208, %v6204
        %v6413 = vpack.c.b16 %v6209, %v6205
        %v6414 = vpack.c.b16 %v6210, %v6206
        %v6415 = vpack.c.b16 %v6211, %v6207
        %v6416 = vpack.c.b16 %v6216, %v6212
        %v6417 = vpack.c.b16 %v6217, %v6213
        %v6418 = vpack.c.b16 %v6218, %v6214
        %v6419 = vpack.c.b16 %v6219, %v6215
        %v6420 = vpack.c.b16 %v6224, %v6220
        %v6421 = vpack.c.b16 %v6225, %v6221
        %v6422 = vpack.c.b16 %v6226, %v6222
        %v6423 = vpack.c.b16 %v6227, %v6223
        %v6424 = vpack.c.b16 %v6232, %v6228
        %v6425 = vpack.c.b16 %v6233, %v6229
        %v6426 = vpack.c.b16 %v6234, %v6230
        %v6427 = vpack.c.b16 %v6235, %v6231
        %v6428 = vpack.c.b16 %v6240, %v6236
        %v6429 = vpack.c.b16 %v6241, %v6237
        %v6430 = vpack.c.b16 %v6242, %v6238
        %v6431 = vpack.c.b16 %v6243, %v6239
        %v6432 = vpack.c.b16 %v6248, %v6244
        %v6433 = vpack.c.b16 %v6249, %v6245
        %v6434 = vpack.c.b16 %v6250, %v6246
        %v6435 = vpack.c.b16 %v6251, %v6247
        %v6436 = vpack.c.b16 %v6256, %v6252
        %v6437 = vpack.c.b16 %v6257, %v6253
        %v6438 = vpack.c.b16 %v6258, %v6254
        %v6439 = vpack.c.b16 %v6259, %v6255
        %v6440 = vpack.c.b16 %v6264, %v6260
        %v6441 = vpack.c.b16 %v6265, %v6261
        %v6442 = vpack.c.b16 %v6266, %v6262
        %v6443 = vpack.c.b16 %v6267, %v6263
        %v6444 = vpack.c.b16 %v6272, %v6268
        %v6445 = vpack.c.b16 %v6273, %v6269
        %v6446 = vpack.c.b16 %v6274, %v6270
        %v6447 = vpack.c.b16 %v6275, %v6271
        %v6448 = vpack.c.b16 %v6280, %v6276
        %v6449 = vpack.c.b16 %v6281, %v6277
        %v6450 = vpack.c.b16 %v6282, %v6278
        %v6451 = vpack.c.b16 %v6283, %v6279
        %v6452 = vpack.c.b16 %v6288, %v6284
        %v6453 = vpack.c.b16 %v6289, %v6285
        %v6454 = vpack.c.b16 %v6290, %v6286
        %v6455 = vpack.c.b16 %v6291, %v6287
        %v6456 = vpack.c.b16 %v6296, %v6292
        %v6457 = vpack.c.b16 %v6297, %v6293
        %v6458 = vpack.c.b16 %v6298, %v6294
        %v6459 = vpack.c.b16 %v6299, %v6295
        %v6460 = vpack.c.b16 %v6304, %v6300
        %v6461 = vpack.c.b16 %v6305, %v6301
        %v6462 = vpack.c.b16 %v6306, %v6302
        %v6463 = vpack.c.b16 %v6307, %v6303
        %v6464 = vpack.c.b16 %v6312, %v6308
        %v6465 = vpack.c.b16 %v6313, %v6309
        %v6466 = vpack.c.b16 %v6314, %v6310
        %v6467 = vpack.c.b16 %v6315, %v6311
        %v6468 = vpack.c.b16 %v6320, %v6316
        %v6469 = vpack.c.b16 %v6321, %v6317
        %v6470 = vpack.c.b16 %v6322, %v6318
        %v6471 = vpack.c.b16 %v6323, %v6319
        %v6472 = vpack.c.b16 %v6328, %v6324
        %v6473 = vpack.c.b16 %v6329, %v6325
        %v6474 = vpack.c.b16 %v6330, %v6326
        %v6475 = vpack.c.b16 %v6331, %v6327
        %v6476 = vpack.c.b16 %v6336, %v6332
        %v6477 = vpack.c.b16 %v6337, %v6333
        %v6478 = vpack.c.b16 %v6338, %v6334
        %v6479 = vpack.c.b16 %v6339, %v6335
        %v6480 = vpack.c.b16 %v6344, %v6340
        %v6481 = vpack.c.b16 %v6345, %v6341
        %v6482 = vpack.c.b16 %v6346, %v6342
        %v6483 = vpack.c.b16 %v6347, %v6343
        %v6484 = vpack.c.b16 %v6352, %v6348
        %v6485 = vpack.c.b16 %v6353, %v6349
        %v6486 = vpack.c.b16 %v6354, %v6350
        %v6487 = vpack.c.b16 %v6355, %v6351
        %v6488 = vpack.c.b16 %v6360, %v6356
        %v6489 = vpack.c.b16 %v6361, %v6357
        %v6490 = vpack.c.b16 %v6362, %v6358
        %v6491 = vpack.c.b16 %v6363, %v6359
        %6620 = vmatprep.subr.bf16.mxu0 %v6365
        %6621 = vmatpush1.bf16.msra.mxu0 %v6364
        %6622 = vmatprep.subr.bf16.mxu0 %v6369
        %6623 = vmatpush1.bf16.msra.mxu0 %v6368
        %6624 = vmatprep.subr.bf16.mxu0 %v6373
        %6625 = vmatpush1.bf16.msra.mxu0 %v6372
        %6626 = vmatprep.subr.bf16.mxu0 %v6377
        %6627 = vmatpush1.bf16.msra.mxu0 %v6376
        %6628 = vmatprep.subr.bf16.mxu0 %v6381
        %6629 = vmatpush1.bf16.msra.mxu0 %v6380
        %6630 = vmatprep.subr.bf16.mxu0 %v6385
        %6631 = vmatpush1.bf16.msra.mxu0 %v6384
        %6632 = vmatprep.subr.bf16.mxu0 %v6389
        %6633 = vmatpush1.bf16.msra.mxu0 %v6388
        %6634 = vmatprep.subr.bf16.mxu0 %v6393
        %6635 = vmatpush1.bf16.msra.mxu0 %v6392
        %6636 = vmatprep.subr.bf16.mxu0 %v6397
        %6637 = vmatpush1.bf16.msra.mxu0 %v6396
        %6638 = vmatprep.subr.bf16.mxu0 %v6401
        %6639 = vmatpush1.bf16.msra.mxu0 %v6400
        %6640 = vmatprep.subr.bf16.mxu0 %v6405
        %6641 = vmatpush1.bf16.msra.mxu0 %v6404
        %6642 = vmatprep.subr.bf16.mxu0 %v6409
        %6643 = vmatpush1.bf16.msra.mxu0 %v6408
        %6644 = vmatprep.subr.bf16.mxu0 %v6413
        %6645 = vmatpush1.bf16.msra.mxu0 %v6412
        %6646 = vmatprep.subr.bf16.mxu0 %v6417
        %6647 = vmatpush1.bf16.msra.mxu0 %v6416
        %6648 = vmatprep.subr.bf16.mxu0 %v6421
        %6649 = vmatpush1.bf16.msra.mxu0 %v6420
        %6650 = vmatprep.subr.bf16.mxu0 %v6425
        %6651 = vmatpush1.bf16.msra.mxu0 %v6424
        %6652 = vmatprep.mubr.bf16.mxu0 %v5808
        %6653 = vmatmul.mubr.bf16.gmra.mrb[0].mxu0 %v5807
        %v6654 = vpop.f32.mrb[0].mxu0
        %v6655 = vadd.f32 %v5967, %v6654
        %v6656 = vpop.f32.mrb[0].mxu0
        %v6657 = vadd.f32 %v5971, %v6656
        %v6658 = vpop.f32.mrb[0].mxu0
        %v6659 = vadd.f32 %v5967, %v6658
        %v6660 = vpop.f32.mrb[0].mxu0
        %v6661 = vadd.f32 %v5971, %v6660
        %6662 = vmatprep.mubr.bf16.mxu0 %v5812
        %6663 = vmatmul.mubr.bf16.gmra.mrb[0].mxu0 %v5811
        %v6664 = vpop.f32.mrb[0].mxu0
        %v6665 = vadd.f32 %v5967, %v6664
        %v6666 = vpop.f32.mrb[0].mxu0
        %v6667 = vadd.f32 %v5971, %v6666
        %v6668 = vpop.f32.mrb[0].mxu0
        %v6669 = vpop.f32.mrb[0].mxu0
        %6670 = vdwg.mxu0
        %6671 = vmatprep.subr.bf16.mxu0 %v6429
        %6672 = vmatpush1.bf16.msra.mxu0 %v6428
        %6673 = vmatprep.subr.bf16.mxu0 %v6433
        %6674 = vmatpush1.bf16.msra.mxu0 %v6432
        %6675 = vmatprep.subr.bf16.mxu0 %v6437
        %6676 = vmatpush1.bf16.msra.mxu0 %v6436
        %6677 = vmatprep.subr.bf16.mxu0 %v6441
        %6678 = vmatpush1.bf16.msra.mxu0 %v6440
        %6679 = vmatprep.subr.bf16.mxu0 %v6445
        %6680 = vmatpush1.bf16.msra.mxu0 %v6444
        %6681 = vmatprep.subr.bf16.mxu0 %v6449
        %6682 = vmatpush1.bf16.msra.mxu0 %v6448
        %6683 = vmatprep.subr.bf16.mxu0 %v6453
        %6684 = vmatpush1.bf16.msra.mxu0 %v6452
        %6685 = vmatprep.subr.bf16.mxu0 %v6457
        %6686 = vmatpush1.bf16.msra.mxu0 %v6456
        %6687 = vmatprep.subr.bf16.mxu0 %v6461
        %6688 = vmatpush1.bf16.msra.mxu0 %v6460
        %6689 = vmatprep.subr.bf16.mxu0 %v6465
        %6690 = vmatpush1.bf16.msra.mxu0 %v6464
        %6691 = vmatprep.subr.bf16.mxu0 %v6469
        %6692 = vmatpush1.bf16.msra.mxu0 %v6468
        %6693 = vmatprep.subr.bf16.mxu0 %v6473
        %6694 = vmatpush1.bf16.msra.mxu0 %v6472
        %6695 = vmatprep.subr.bf16.mxu0 %v6477
        %6696 = vmatpush1.bf16.msra.mxu0 %v6476
        %6697 = vmatprep.subr.bf16.mxu0 %v6481
        %6698 = vmatpush1.bf16.msra.mxu0 %v6480
        %6699 = vmatprep.subr.bf16.mxu0 %v6485
        %6700 = vmatpush1.bf16.msra.mxu0 %v6484
        %6701 = vmatprep.subr.bf16.mxu0 %v6489
        %6702 = vmatpush1.bf16.msra.mxu0 %v6488
        %6703 = vmatprep.mubr.bf16.mxu0 %v5810
        %6704 = vmatmul.mubr.bf16.gmra.mrb[0].mxu0 %v5809
        %v6705 = vpop.f32.mrb[0].mxu0
        %v6706 = vadd.f32 %v6655, %v6705
        %v6707 = vpop.f32.mrb[0].mxu0
        %v6708 = vadd.f32 %v6657, %v6707
        %v6709 = vpop.f32.mrb[0].mxu0
        %v6710 = vadd.f32 %v6659, %v6709
        %v6711 = vpop.f32.mrb[0].mxu0
        %v6712 = vadd.f32 %v6661, %v6711
        %6713 = vmatprep.mubr.bf16.mxu0 %v5814
        %6714 = vmatmul.mubr.bf16.gmra.mrb[0].mxu0 %v5813
        %v6715 = vpop.f32.mrb[0].mxu0
        %v6716 = vadd.f32 %v6665, %v6715
        %v6717 = vpop.f32.mrb[0].mxu0
        %v6718 = vadd.f32 %v6667, %v6717
        %v6719 = vpop.f32.mrb[0].mxu0
        %v6720 = vpop.f32.mrb[0].mxu0
        %6721 = vdwg.mxu0
        %6722 = vmatprep.subr.bf16.mxu0 %v6367
        %6723 = vmatpush1.bf16.msra.mxu0 %v6366
        %6724 = vmatprep.subr.bf16.mxu0 %v6371
        %6725 = vmatpush1.bf16.msra.mxu0 %v6370
        %6726 = vmatprep.subr.bf16.mxu0 %v6375
        %6727 = vmatpush1.bf16.msra.mxu0 %v6374
        %6728 = vmatprep.subr.bf16.mxu0 %v6379
        %6729 = vmatpush1.bf16.msra.mxu0 %v6378
        %6730 = vmatprep.subr.bf16.mxu0 %v6383
        %6731 = vmatpush1.bf16.msra.mxu0 %v6382
        %6732 = vmatprep.subr.bf16.mxu0 %v6387
        %6733 = vmatpush1.bf16.msra.mxu0 %v6386
        %6734 = vmatprep.subr.bf16.mxu0 %v6391
        %6735 = vmatpush1.bf16.msra.mxu0 %v6390
        %6736 = vmatprep.subr.bf16.mxu0 %v6395
        %6737 = vmatpush1.bf16.msra.mxu0 %v6394
        %6738 = vmatprep.subr.bf16.mxu0 %v6399
        %6739 = vmatpush1.bf16.msra.mxu0 %v6398
        %6740 = vmatprep.subr.bf16.mxu0 %v6403
        %6741 = vmatpush1.bf16.msra.mxu0 %v6402
        %6742 = vmatprep.subr.bf16.mxu0 %v6407
        %6743 = vmatpush1.bf16.msra.mxu0 %v6406
        %6744 = vmatprep.subr.bf16.mxu0 %v6411
        %6745 = vmatpush1.bf16.msra.mxu0 %v6410
        %6746 = vmatprep.subr.bf16.mxu0 %v6415
        %6747 = vmatpush1.bf16.msra.mxu0 %v6414
        %6748 = vmatprep.subr.bf16.mxu0 %v6419
        %6749 = vmatpush1.bf16.msra.mxu0 %v6418
        %6750 = vmatprep.subr.bf16.mxu0 %v6423
        %6751 = vmatpush1.bf16.msra.mxu0 %v6422
        %6752 = vmatprep.subr.bf16.mxu0 %v6427
        %6753 = vmatpush1.bf16.msra.mxu0 %v6426
        %6754 = vmatprep.mubr.bf16.mxu0 %v5808
        %6755 = vmatmul.mubr.bf16.gmra.mrb[0].mxu0 %v5807
        %v6756 = vpop.f32.mrb[0].mxu0
        %v6757 = vadd.f32 %v5975, %v6756
        %v6758 = vpop.f32.mrb[0].mxu0
        %v6759 = vadd.f32 %v5979, %v6758
        %v6760 = vpop.f32.mrb[0].mxu0
        %v6761 = vadd.f32 %v5975, %v6760
        %v6762 = vpop.f32.mrb[0].mxu0
        %v6763 = vadd.f32 %v5979, %v6762
        %6764 = vmatprep.mubr.bf16.mxu0 %v5812
        %6765 = vmatmul.mubr.bf16.gmra.mrb[0].mxu0 %v5811
        %v6766 = vpop.f32.mrb[0].mxu0
        %v6767 = vadd.f32 %v5975, %v6766
        %v6768 = vpop.f32.mrb[0].mxu0
        %v6769 = vadd.f32 %v5979, %v6768
        %v6770 = vpop.f32.mrb[0].mxu0
        %v6771 = vpop.f32.mrb[0].mxu0
        %6772 = vdwg.mxu0
        %6773 = vmatprep.subr.bf16.mxu0 %v6431
        %6774 = vmatpush1.bf16.msra.mxu0 %v6430
        %6775 = vmatprep.subr.bf16.mxu0 %v6435
        %6776 = vmatpush1.bf16.msra.mxu0 %v6434
        %6777 = vmatprep.subr.bf16.mxu0 %v6439
        %6778 = vmatpush1.bf16.msra.mxu0 %v6438
        %6779 = vmatprep.subr.bf16.mxu0 %v6443
        %6780 = vmatpush1.bf16.msra.mxu0 %v6442
        %6781 = vmatprep.subr.bf16.mxu0 %v6447
        %6782 = vmatpush1.bf16.msra.mxu0 %v6446
        %6783 = vmatprep.subr.bf16.mxu0 %v6451
        %6784 = vmatpush1.bf16.msra.mxu0 %v6450
        %6785 = vmatprep.subr.bf16.mxu0 %v6455
        %6786 = vmatpush1.bf16.msra.mxu0 %v6454
        %6787 = vmatprep.subr.bf16.mxu0 %v6459
        %6788 = vmatpush1.bf16.msra.mxu0 %v6458
        %6789 = vmatprep.subr.bf16.mxu0 %v6463
        %6790 = vmatpush1.bf16.msra.mxu0 %v6462
        %6791 = vmatprep.subr.bf16.mxu0 %v6467
        %6792 = vmatpush1.bf16.msra.mxu0 %v6466
        %6793 = vmatprep.subr.bf16.mxu0 %v6471
        %6794 = vmatpush1.bf16.msra.mxu0 %v6470
        %6795 = vmatprep.subr.bf16.mxu0 %v6475
        %6796 = vmatpush1.bf16.msra.mxu0 %v6474
        %6797 = vmatprep.subr.bf16.mxu0 %v6479
        %6798 = vmatpush1.bf16.msra.mxu0 %v6478
        %6799 = vmatprep.subr.bf16.mxu0 %v6483
        %6800 = vmatpush1.bf16.msra.mxu0 %v6482
        %6801 = vmatprep.subr.bf16.mxu0 %v6487
        %6802 = vmatpush1.bf16.msra.mxu0 %v6486
        %6803 = vmatprep.subr.bf16.mxu0 %v6491
        %6804 = vmatpush1.bf16.msra.mxu0 %v6490
        %6805 = vmatprep.mubr.bf16.mxu0 %v5810
        %6806 = vmatmul.mubr.bf16.gmra.mrb[0].mxu0 %v5809
        %v6807 = vpop.f32.mrb[0].mxu0
        %v6808 = vadd.f32 %v6757, %v6807
        %v6809 = vpop.f32.mrb[0].mxu0
        %v6810 = vadd.f32 %v6759, %v6809
        %v6811 = vpop.f32.mrb[0].mxu0
        %v6812 = vadd.f32 %v6761, %v6811
        %v6813 = vpop.f32.mrb[0].mxu0
        %v6814 = vadd.f32 %v6763, %v6813
        %6815 = vmatprep.mubr.bf16.mxu0 %v5814
        %6816 = vmatmul.mubr.bf16.gmra.mrb[0].mxu0 %v5813
        %v6817 = vpop.f32.mrb[0].mxu0
        %v6818 = vadd.f32 %v6767, %v6817
        %v6819 = vpop.f32.mrb[0].mxu0
        %v6820 = vadd.f32 %v6769, %v6819
        %v6821 = vpop.f32.mrb[0].mxu0
        %v6822 = vpop.f32.mrb[0].mxu0
        %6823 = vdwg.mxu0
        %vm6824 = vcmp.gt.f32.partialorder %v6706, 0.0
        %vm6825 = vcmp.gt.f32.partialorder %v6708, 0.0
        %vm6826 = vcmp.gt.f32.partialorder %v6808, 0.0
        %vm6827 = vcmp.gt.f32.partialorder %v6810, 0.0
        %vm6828 = vcmp.gt.f32.partialorder %v6710, 0.0
        %vm6829 = vcmp.gt.f32.partialorder %v6712, 0.0
        %vm6830 = vcmp.gt.f32.partialorder %v6812, 0.0
        %vm6831 = vcmp.gt.f32.partialorder %v6814, 0.0
        %vm6832 = vcmp.gt.f32.partialorder %v6716, 0.0
        %vm6833 = vcmp.gt.f32.partialorder %v6718, 0.0
        %vm6834 = vcmp.gt.f32.partialorder %v6818, 0.0
        %vm6835 = vcmp.gt.f32.partialorder %v6820, 0.0
        %v6836 = vmul.f32 %v6706, 0.2
        %v6837 = vmul.f32 %v6708, 0.2
        %v6838 = vmul.f32 %v6808, 0.2
        %v6839 = vmul.f32 %v6810, 0.2
        %v6840 = vmul.f32 %v6710, 0.2
        %v6841 = vmul.f32 %v6712, 0.2
        %v6842 = vmul.f32 %v6812, 0.2
        %v6843 = vmul.f32 %v6814, 0.2
        %v6844 = vmul.f32 %v6716, 0.2
        %v6845 = vmul.f32 %v6718, 0.2
        %v6846 = vmul.f32 %v6818, 0.2
        %v6847 = vmul.f32 %v6820, 0.2
        %v6848 = vsel %vm6824, %v6706, %v6836
        %v6849 = vsel %vm6825, %v6708, %v6837
        %v6850 = vsel %vm6826, %v6808, %v6838
        %v6851 = vsel %vm6827, %v6810, %v6839
        %v6852 = vsel %vm6828, %v6710, %v6840
        %v6853 = vsel %vm6829, %v6712, %v6841
        %v6854 = vsel %vm6830, %v6812, %v6842
        %v6855 = vsel %vm6831, %v6814, %v6843
        %v6856 = vsel %vm6832, %v6716, %v6844
        %v6857 = vsel %vm6833, %v6718, %v6845
        %v6858 = vsel %vm6834, %v6818, %v6846
        %v6859 = vsel %vm6835, %v6820, %v6847
        %v6860 = vmul.f32 %v6848, 1.4142135
        %v6861 = vmul.f32 %v6849, 1.4142135
        %v6862 = vmul.f32 %v6850, 1.4142135
        %v6863 = vmul.f32 %v6851, 1.4142135
        %v6864 = vmul.f32 %v6852, 1.4142135
        %v6865 = vmul.f32 %v6853, 1.4142135
        %v6866 = vmul.f32 %v6854, 1.4142135
        %v6867 = vmul.f32 %v6855, 1.4142135
        %v6868 = vmul.f32 %v6856, 1.4142135
        %v6869 = vmul.f32 %v6857, 1.4142135
        %v6870 = vmul.f32 %v6858, 1.4142135
        %v6871 = vmul.f32 %v6859, 1.4142135
        %v6872 = vpack.c.bf16 %v6864, %v6860
        %v6873 = vpack.c.bf16 %v6865, %v6861
        %v6874 = vpack.c.bf16 %v6866, %v6862
        %v6875 = vpack.c.bf16 %v6867, %v6863
        %v6876 = vpack.c.bf16 %v6868, %v6868
        %v6877 = vpack.c.bf16 %v6869, %v6869
        %v6878 = vpack.c.bf16 %v6870, %v6870
        %v6879 = vpack.c.bf16 %v6871, %v6871
        %s6880 = scalar_lea.vmem %s393, 2048 [#allocation8]
        %v6881 = vld [vmem:[%s6880] sm:$0xff]
        %v6882 = vld [vmem:[%s6880 + $0x8] sm:$0xff]
        %v6883 = vld [vmem:[%s6880 + $0x10] sm:$0xff]
        %v6884 = vld [vmem:[%s6880 + $0x18] sm:$0xff]
        %v6885 = vld [vmem:[%s6880 + $0x20] sm:$0xff]
        %v6886 = vld [vmem:[%s6880 + $0x28] sm:$0xff]
        %v6887 = vld [vmem:[%s6880 + $0x30] sm:$0xff]
        %v6888 = vld [vmem:[%s6880 + $0x38] sm:$0xff]
        %v6889 = vld [vmem:[%s6880 + $0x40] sm:$0xff]
        %v6890 = vld [vmem:[%s6880 + $0x48] sm:$0xff]
        %v6891 = vld [vmem:[%s6880 + $0x50] sm:$0xff]
        %v6892 = vld [vmem:[%s6880 + $0x58] sm:$0xff]
        %v6893 = vld [vmem:[%s6880 + $0x60] sm:$0xff]
        %v6894 = vld [vmem:[%s6880 + $0x68] sm:$0xff]
        %v6895 = vld [vmem:[%s6880 + $0x70] sm:$0xff]
        %v6896 = vld [vmem:[%s6880 + $0x78] sm:$0xff]
        %v6897 = vld [vmem:[%s6880 + $0x80] sm:$0xff]
        %v6898 = vld [vmem:[%s6880 + $0x88] sm:$0xff]
        %v6899 = vld [vmem:[%s6880 + $0x90] sm:$0xff]
        %v6900 = vld [vmem:[%s6880 + $0x98] sm:$0xff]
        %v6901 = vld [vmem:[%s6880 + $0xa0] sm:$0xff]
        %v6902 = vld [vmem:[%s6880 + $0xa8] sm:$0xff]
        %v6903 = vld [vmem:[%s6880 + $0xb0] sm:$0xff]
        %v6904 = vld [vmem:[%s6880 + $0xb8] sm:$0xff]
        %v6905 = vld [vmem:[%s6880 + $0xc0] sm:$0xff]
        %v6906 = vld [vmem:[%s6880 + $0xc8] sm:$0xff]
        %v6907 = vld [vmem:[%s6880 + $0xd0] sm:$0xff]
        %v6908 = vld [vmem:[%s6880 + $0xd8] sm:$0xff]
        %v6909 = vld [vmem:[%s6880 + $0xe0] sm:$0xff]
        %v6910 = vld [vmem:[%s6880 + $0xe8] sm:$0xff]
        %v6911 = vld [vmem:[%s6880 + $0xf0] sm:$0xff]
        %v6912 = vld [vmem:[%s6880 + $0xf8] sm:$0xff]
        %v6913 = vld [vmem:[%s6880 + $0x100] sm:$0xff]
        %v6914 = vld [vmem:[%s6880 + $0x108] sm:$0xff]
        %v6915 = vld [vmem:[%s6880 + $0x110] sm:$0xff]
        %v6916 = vld [vmem:[%s6880 + $0x118] sm:$0xff]
        %v6917 = vld [vmem:[%s6880 + $0x120] sm:$0xff]
        %v6918 = vld [vmem:[%s6880 + $0x128] sm:$0xff]
        %v6919 = vld [vmem:[%s6880 + $0x130] sm:$0xff]
        %v6920 = vld [vmem:[%s6880 + $0x138] sm:$0xff]
        %v6921 = vld [vmem:[%s6880 + $0x140] sm:$0xff]
        %v6922 = vld [vmem:[%s6880 + $0x148] sm:$0xff]
        %v6923 = vld [vmem:[%s6880 + $0x150] sm:$0xff]
        %v6924 = vld [vmem:[%s6880 + $0x158] sm:$0xff]
        %v6925 = vld [vmem:[%s6880 + $0x160] sm:$0xff]
        %v6926 = vld [vmem:[%s6880 + $0x168] sm:$0xff]
        %v6927 = vld [vmem:[%s6880 + $0x170] sm:$0xff]
        %v6928 = vld [vmem:[%s6880 + $0x178] sm:$0xff]
        %v6929 = vld [vmem:[%s6880 + $0x180] sm:$0xff]
        %v6930 = vld [vmem:[%s6880 + $0x188] sm:$0xff]
        %v6931 = vld [vmem:[%s6880 + $0x190] sm:$0xff]
        %v6932 = vld [vmem:[%s6880 + $0x198] sm:$0xff]
        %v6933 = vld [vmem:[%s6880 + $0x1a0] sm:$0xff]
        %v6934 = vld [vmem:[%s6880 + $0x1a8] sm:$0xff]
        %v6935 = vld [vmem:[%s6880 + $0x1b0] sm:$0xff]
        %v6936 = vld [vmem:[%s6880 + $0x1b8] sm:$0xff]
        %v6937 = vld [vmem:[%s6880 + $0x1c0] sm:$0xff]
        %v6938 = vld [vmem:[%s6880 + $0x1c8] sm:$0xff]
        %v6939 = vld [vmem:[%s6880 + $0x1d0] sm:$0xff]
        %v6940 = vld [vmem:[%s6880 + $0x1d8] sm:$0xff]
        %v6941 = vld [vmem:[%s6880 + $0x1e0] sm:$0xff]
        %v6942 = vld [vmem:[%s6880 + $0x1e8] sm:$0xff]
        %v6943 = vld [vmem:[%s6880 + $0x1f0] sm:$0xff]
        %v6944 = vld [vmem:[%s6880 + $0x1f8] sm:$0xff]
        %v6945 = vld [vmem:[%s6880 + $0x200] sm:$0xff]
        %v6946 = vld [vmem:[%s6880 + $0x208] sm:$0xff]
        %v6947 = vld [vmem:[%s6880 + $0x210] sm:$0xff]
        %v6948 = vld [vmem:[%s6880 + $0x218] sm:$0xff]
        %v6949 = vld [vmem:[%s6880 + $0x220] sm:$0xff]
        %v6950 = vld [vmem:[%s6880 + $0x228] sm:$0xff]
        %v6951 = vld [vmem:[%s6880 + $0x230] sm:$0xff]
        %v6952 = vld [vmem:[%s6880 + $0x238] sm:$0xff]
        %v6953 = vld [vmem:[%s6880 + $0x240] sm:$0xff]
        %v6954 = vld [vmem:[%s6880 + $0x248] sm:$0xff]
        %v6955 = vld [vmem:[%s6880 + $0x250] sm:$0xff]
        %v6956 = vld [vmem:[%s6880 + $0x258] sm:$0xff]
        %v6957 = vld [vmem:[%s6880 + $0x260] sm:$0xff]
        %v6958 = vld [vmem:[%s6880 + $0x268] sm:$0xff]
        %v6959 = vld [vmem:[%s6880 + $0x270] sm:$0xff]
        %v6960 = vld [vmem:[%s6880 + $0x278] sm:$0xff]
        %v6961 = vld [vmem:[%s6880 + $0x280] sm:$0xff]
        %v6962 = vld [vmem:[%s6880 + $0x288] sm:$0xff]
        %v6963 = vld [vmem:[%s6880 + $0x290] sm:$0xff]
        %v6964 = vld [vmem:[%s6880 + $0x298] sm:$0xff]
        %v6965 = vld [vmem:[%s6880 + $0x2a0] sm:$0xff]
        %v6966 = vld [vmem:[%s6880 + $0x2a8] sm:$0xff]
        %v6967 = vld [vmem:[%s6880 + $0x2b0] sm:$0xff]
        %v6968 = vld [vmem:[%s6880 + $0x2b8] sm:$0xff]
        %v6969 = vld [vmem:[%s6880 + $0x2c0] sm:$0xff]
        %v6970 = vld [vmem:[%s6880 + $0x2c8] sm:$0xff]
        %v6971 = vld [vmem:[%s6880 + $0x2d0] sm:$0xff]
        %v6972 = vld [vmem:[%s6880 + $0x2d8] sm:$0xff]
        %v6973 = vld [vmem:[%s6880 + $0x2e0] sm:$0xff]
        %v6974 = vld [vmem:[%s6880 + $0x2e8] sm:$0xff]
        %v6975 = vld [vmem:[%s6880 + $0x2f0] sm:$0xff]
        %v6976 = vld [vmem:[%s6880 + $0x2f8] sm:$0xff]
        %v6977 = vld [vmem:[%s6880 + $0x300] sm:$0xff]
        %v6978 = vld [vmem:[%s6880 + $0x308] sm:$0xff]
        %v6979 = vld [vmem:[%s6880 + $0x310] sm:$0xff]
        %v6980 = vld [vmem:[%s6880 + $0x318] sm:$0xff]
        %v6981 = vld [vmem:[%s6880 + $0x320] sm:$0xff]
        %v6982 = vld [vmem:[%s6880 + $0x328] sm:$0xff]
        %v6983 = vld [vmem:[%s6880 + $0x330] sm:$0xff]
        %v6984 = vld [vmem:[%s6880 + $0x338] sm:$0xff]
        %v6985 = vld [vmem:[%s6880 + $0x340] sm:$0xff]
        %v6986 = vld [vmem:[%s6880 + $0x348] sm:$0xff]
        %v6987 = vld [vmem:[%s6880 + $0x350] sm:$0xff]
        %v6988 = vld [vmem:[%s6880 + $0x358] sm:$0xff]
        %v6989 = vld [vmem:[%s6880 + $0x360] sm:$0xff]
        %v6990 = vld [vmem:[%s6880 + $0x368] sm:$0xff]
        %v6991 = vld [vmem:[%s6880 + $0x370] sm:$0xff]
        %v6992 = vld [vmem:[%s6880 + $0x378] sm:$0xff]
        %v6993 = vld [vmem:[%s6880 + $0x380] sm:$0xff]
        %v6994 = vld [vmem:[%s6880 + $0x388] sm:$0xff]
        %v6995 = vld [vmem:[%s6880 + $0x390] sm:$0xff]
        %v6996 = vld [vmem:[%s6880 + $0x398] sm:$0xff]
        %v6997 = vld [vmem:[%s6880 + $0x3a0] sm:$0xff]
        %v6998 = vld [vmem:[%s6880 + $0x3a8] sm:$0xff]
        %v6999 = vld [vmem:[%s6880 + $0x3b0] sm:$0xff]
        %v7000 = vld [vmem:[%s6880 + $0x3b8] sm:$0xff]
        %v7001 = vld [vmem:[%s6880 + $0x3c0] sm:$0xff]
        %v7002 = vld [vmem:[%s6880 + $0x3c8] sm:$0xff]
        %v7003 = vld [vmem:[%s6880 + $0x3d0] sm:$0xff]
        %v7004 = vld [vmem:[%s6880 + $0x3d8] sm:$0xff]
        %v7005 = vld [vmem:[%s6880 + $0x3e0] sm:$0xff]
        %v7006 = vld [vmem:[%s6880 + $0x3e8] sm:$0xff]
        %v7007 = vld [vmem:[%s6880 + $0x3f0] sm:$0xff]
        %v7008 = vld [vmem:[%s6880 + $0x3f8] sm:$0xff]
        %v7009 = vlaneseq
        %v7010 = vshrl.u32 %v7009, 7
        %v7011 = vsub.s32 2, %v7010
        %v7012 = vrot.slane %v4739, %v7011
        %v7013 = vlaneseq
        %v7014 = vshrl.u32 %v7013, 7
        %v7015 = vsub.s32 6, %v7014
        %v7016 = vrot.slane %v4739, %v7015
        %v7017 = vlaneseq
        %v7018 = vshrl.u32 %v7017, 7
        %v7019 = vsub.s32 2, %v7018
        %v7020 = vrot.slane %v4740, %v7019
        %v7021 = vlaneseq
        %v7022 = vshrl.u32 %v7021, 7
        %v7023 = vsub.s32 6, %v7022
        %v7024 = vrot.slane %v4740, %v7023
        %v7029 = vlaneseq
        %v7030 = vshrl.u32 %v7029, 7
        %v7031 = vsub.s32 2, %v7030
        %v7032 = vrot.slane %v7012, %v7031
        %v7033 = vlaneseq
        %v7034 = vshrl.u32 %v7033, 7
        %v7035 = vsub.s32 2, %v7034
        %v7036 = vrot.slane %v7016, %v7035
        %v7037 = vlaneseq
        %v7038 = vshrl.u32 %v7037, 7
        %v7039 = vsub.s32 2, %v7038
        %v7040 = vrot.slane %v7020, %v7039
        %v7041 = vlaneseq
        %v7042 = vshrl.u32 %v7041, 7
        %v7043 = vsub.s32 2, %v7042
        %v7044 = vrot.slane %v7024, %v7043
        %v7173 = vunpack.c.l.b16 %v6881
        %v7174 = vunpack.c.h.b16 %v6881
        %v7175 = vunpack.c.l.b16 %v6882
        %v7176 = vunpack.c.h.b16 %v6882
        %v7177 = vunpack.c.l.b16 %v6883
        %v7178 = vunpack.c.h.b16 %v6883
        %v7179 = vunpack.c.l.b16 %v6884
        %v7180 = vunpack.c.h.b16 %v6884
        %v7181 = vunpack.c.l.b16 %v6885
        %v7182 = vunpack.c.h.b16 %v6885
        %v7183 = vunpack.c.l.b16 %v6886
        %v7184 = vunpack.c.h.b16 %v6886
        %v7185 = vunpack.c.l.b16 %v6887
        %v7186 = vunpack.c.h.b16 %v6887
        %v7187 = vunpack.c.l.b16 %v6888
        %v7188 = vunpack.c.h.b16 %v6888
        %v7189 = vunpack.c.l.b16 %v6889
        %v7190 = vunpack.c.h.b16 %v6889
        %v7191 = vunpack.c.l.b16 %v6890
        %v7192 = vunpack.c.h.b16 %v6890
        %v7193 = vunpack.c.l.b16 %v6891
        %v7194 = vunpack.c.h.b16 %v6891
        %v7195 = vunpack.c.l.b16 %v6892
        %v7196 = vunpack.c.h.b16 %v6892
        %v7197 = vunpack.c.l.b16 %v6893
        %v7198 = vunpack.c.h.b16 %v6893
        %v7199 = vunpack.c.l.b16 %v6894
        %v7200 = vunpack.c.h.b16 %v6894
        %v7201 = vunpack.c.l.b16 %v6895
        %v7202 = vunpack.c.h.b16 %v6895
        %v7203 = vunpack.c.l.b16 %v6896
        %v7204 = vunpack.c.h.b16 %v6896
        %v7205 = vunpack.c.l.b16 %v6897
        %v7206 = vunpack.c.h.b16 %v6897
        %v7207 = vunpack.c.l.b16 %v6898
        %v7208 = vunpack.c.h.b16 %v6898
        %v7209 = vunpack.c.l.b16 %v6899
        %v7210 = vunpack.c.h.b16 %v6899
        %v7211 = vunpack.c.l.b16 %v6900
        %v7212 = vunpack.c.h.b16 %v6900
        %v7213 = vunpack.c.l.b16 %v6901
        %v7214 = vunpack.c.h.b16 %v6901
        %v7215 = vunpack.c.l.b16 %v6902
        %v7216 = vunpack.c.h.b16 %v6902
        %v7217 = vunpack.c.l.b16 %v6903
        %v7218 = vunpack.c.h.b16 %v6903
        %v7219 = vunpack.c.l.b16 %v6904
        %v7220 = vunpack.c.h.b16 %v6904
        %v7221 = vunpack.c.l.b16 %v6905
        %v7222 = vunpack.c.h.b16 %v6905
        %v7223 = vunpack.c.l.b16 %v6906
        %v7224 = vunpack.c.h.b16 %v6906
        %v7225 = vunpack.c.l.b16 %v6907
        %v7226 = vunpack.c.h.b16 %v6907
        %v7227 = vunpack.c.l.b16 %v6908
        %v7228 = vunpack.c.h.b16 %v6908
        %v7229 = vunpack.c.l.b16 %v6909
        %v7230 = vunpack.c.h.b16 %v6909
        %v7231 = vunpack.c.l.b16 %v6910
        %v7232 = vunpack.c.h.b16 %v6910
        %v7233 = vunpack.c.l.b16 %v6911
        %v7234 = vunpack.c.h.b16 %v6911
        %v7235 = vunpack.c.l.b16 %v6912
        %v7236 = vunpack.c.h.b16 %v6912
        %v7237 = vunpack.c.l.b16 %v6913
        %v7238 = vunpack.c.h.b16 %v6913
        %v7239 = vunpack.c.l.b16 %v6914
        %v7240 = vunpack.c.h.b16 %v6914
        %v7241 = vunpack.c.l.b16 %v6915
        %v7242 = vunpack.c.h.b16 %v6915
        %v7243 = vunpack.c.l.b16 %v6916
        %v7244 = vunpack.c.h.b16 %v6916
        %v7245 = vunpack.c.l.b16 %v6917
        %v7246 = vunpack.c.h.b16 %v6917
        %v7247 = vunpack.c.l.b16 %v6918
        %v7248 = vunpack.c.h.b16 %v6918
        %v7249 = vunpack.c.l.b16 %v6919
        %v7250 = vunpack.c.h.b16 %v6919
        %v7251 = vunpack.c.l.b16 %v6920
        %v7252 = vunpack.c.h.b16 %v6920
        %v7253 = vunpack.c.l.b16 %v6921
        %v7254 = vunpack.c.h.b16 %v6921
        %v7255 = vunpack.c.l.b16 %v6922
        %v7256 = vunpack.c.h.b16 %v6922
        %v7257 = vunpack.c.l.b16 %v6923
        %v7258 = vunpack.c.h.b16 %v6923
        %v7259 = vunpack.c.l.b16 %v6924
        %v7260 = vunpack.c.h.b16 %v6924
        %v7261 = vunpack.c.l.b16 %v6925
        %v7262 = vunpack.c.h.b16 %v6925
        %v7263 = vunpack.c.l.b16 %v6926
        %v7264 = vunpack.c.h.b16 %v6926
        %v7265 = vunpack.c.l.b16 %v6927
        %v7266 = vunpack.c.h.b16 %v6927
        %v7267 = vunpack.c.l.b16 %v6928
        %v7268 = vunpack.c.h.b16 %v6928
        %v7269 = vunpack.c.l.b16 %v6929
        %v7270 = vunpack.c.h.b16 %v6929
        %v7271 = vunpack.c.l.b16 %v6930
        %v7272 = vunpack.c.h.b16 %v6930
        %v7273 = vunpack.c.l.b16 %v6931
        %v7274 = vunpack.c.h.b16 %v6931
        %v7275 = vunpack.c.l.b16 %v6932
        %v7276 = vunpack.c.h.b16 %v6932
        %v7277 = vunpack.c.l.b16 %v6933
        %v7278 = vunpack.c.h.b16 %v6933
        %v7279 = vunpack.c.l.b16 %v6934
        %v7280 = vunpack.c.h.b16 %v6934
        %v7281 = vunpack.c.l.b16 %v6935
        %v7282 = vunpack.c.h.b16 %v6935
        %v7283 = vunpack.c.l.b16 %v6936
        %v7284 = vunpack.c.h.b16 %v6936
        %v7285 = vunpack.c.l.b16 %v6937
        %v7286 = vunpack.c.h.b16 %v6937
        %v7287 = vunpack.c.l.b16 %v6938
        %v7288 = vunpack.c.h.b16 %v6938
        %v7289 = vunpack.c.l.b16 %v6939
        %v7290 = vunpack.c.h.b16 %v6939
        %v7291 = vunpack.c.l.b16 %v6940
        %v7292 = vunpack.c.h.b16 %v6940
        %v7293 = vunpack.c.l.b16 %v6941
        %v7294 = vunpack.c.h.b16 %v6941
        %v7295 = vunpack.c.l.b16 %v6942
        %v7296 = vunpack.c.h.b16 %v6942
        %v7297 = vunpack.c.l.b16 %v6943
        %v7298 = vunpack.c.h.b16 %v6943
        %v7299 = vunpack.c.l.b16 %v6944
        %v7300 = vunpack.c.h.b16 %v6944
        %v7301 = vunpack.c.l.b16 %v6945
        %v7302 = vunpack.c.h.b16 %v6945
        %v7303 = vunpack.c.l.b16 %v6946
        %v7304 = vunpack.c.h.b16 %v6946
        %v7305 = vunpack.c.l.b16 %v6947
        %v7306 = vunpack.c.h.b16 %v6947
        %v7307 = vunpack.c.l.b16 %v6948
        %v7308 = vunpack.c.h.b16 %v6948
        %v7309 = vunpack.c.l.b16 %v6949
        %v7310 = vunpack.c.h.b16 %v6949
        %v7311 = vunpack.c.l.b16 %v6950
        %v7312 = vunpack.c.h.b16 %v6950
        %v7313 = vunpack.c.l.b16 %v6951
        %v7314 = vunpack.c.h.b16 %v6951
        %v7315 = vunpack.c.l.b16 %v6952
        %v7316 = vunpack.c.h.b16 %v6952
        %v7317 = vunpack.c.l.b16 %v6953
        %v7318 = vunpack.c.h.b16 %v6953
        %v7319 = vunpack.c.l.b16 %v6954
        %v7320 = vunpack.c.h.b16 %v6954
        %v7321 = vunpack.c.l.b16 %v6955
        %v7322 = vunpack.c.h.b16 %v6955
        %v7323 = vunpack.c.l.b16 %v6956
        %v7324 = vunpack.c.h.b16 %v6956
        %v7325 = vunpack.c.l.b16 %v6957
        %v7326 = vunpack.c.h.b16 %v6957
        %v7327 = vunpack.c.l.b16 %v6958
        %v7328 = vunpack.c.h.b16 %v6958
        %v7329 = vunpack.c.l.b16 %v6959
        %v7330 = vunpack.c.h.b16 %v6959
        %v7331 = vunpack.c.l.b16 %v6960
        %v7332 = vunpack.c.h.b16 %v6960
        %v7333 = vunpack.c.l.b16 %v6961
        %v7334 = vunpack.c.h.b16 %v6961
        %v7335 = vunpack.c.l.b16 %v6962
        %v7336 = vunpack.c.h.b16 %v6962
        %v7337 = vunpack.c.l.b16 %v6963
        %v7338 = vunpack.c.h.b16 %v6963
        %v7339 = vunpack.c.l.b16 %v6964
        %v7340 = vunpack.c.h.b16 %v6964
        %v7341 = vunpack.c.l.b16 %v6965
        %v7342 = vunpack.c.h.b16 %v6965
        %v7343 = vunpack.c.l.b16 %v6966
        %v7344 = vunpack.c.h.b16 %v6966
        %v7345 = vunpack.c.l.b16 %v6967
        %v7346 = vunpack.c.h.b16 %v6967
        %v7347 = vunpack.c.l.b16 %v6968
        %v7348 = vunpack.c.h.b16 %v6968
        %v7349 = vunpack.c.l.b16 %v6969
        %v7350 = vunpack.c.h.b16 %v6969
        %v7351 = vunpack.c.l.b16 %v6970
        %v7352 = vunpack.c.h.b16 %v6970
        %v7353 = vunpack.c.l.b16 %v6971
        %v7354 = vunpack.c.h.b16 %v6971
        %v7355 = vunpack.c.l.b16 %v6972
        %v7356 = vunpack.c.h.b16 %v6972
        %v7357 = vunpack.c.l.b16 %v6973
        %v7358 = vunpack.c.h.b16 %v6973
        %v7359 = vunpack.c.l.b16 %v6974
        %v7360 = vunpack.c.h.b16 %v6974
        %v7361 = vunpack.c.l.b16 %v6975
        %v7362 = vunpack.c.h.b16 %v6975
        %v7363 = vunpack.c.l.b16 %v6976
        %v7364 = vunpack.c.h.b16 %v6976
        %v7365 = vunpack.c.l.b16 %v6977
        %v7366 = vunpack.c.h.b16 %v6977
        %v7367 = vunpack.c.l.b16 %v6978
        %v7368 = vunpack.c.h.b16 %v6978
        %v7369 = vunpack.c.l.b16 %v6979
        %v7370 = vunpack.c.h.b16 %v6979
        %v7371 = vunpack.c.l.b16 %v6980
        %v7372 = vunpack.c.h.b16 %v6980
        %v7373 = vunpack.c.l.b16 %v6981
        %v7374 = vunpack.c.h.b16 %v6981
        %v7375 = vunpack.c.l.b16 %v6982
        %v7376 = vunpack.c.h.b16 %v6982
        %v7377 = vunpack.c.l.b16 %v6983
        %v7378 = vunpack.c.h.b16 %v6983
        %v7379 = vunpack.c.l.b16 %v6984
        %v7380 = vunpack.c.h.b16 %v6984
        %v7381 = vunpack.c.l.b16 %v6985
        %v7382 = vunpack.c.h.b16 %v6985
        %v7383 = vunpack.c.l.b16 %v6986
        %v7384 = vunpack.c.h.b16 %v6986
        %v7385 = vunpack.c.l.b16 %v6987
        %v7386 = vunpack.c.h.b16 %v6987
        %v7387 = vunpack.c.l.b16 %v6988
        %v7388 = vunpack.c.h.b16 %v6988
        %v7389 = vunpack.c.l.b16 %v6989
        %v7390 = vunpack.c.h.b16 %v6989
        %v7391 = vunpack.c.l.b16 %v6990
        %v7392 = vunpack.c.h.b16 %v6990
        %v7393 = vunpack.c.l.b16 %v6991
        %v7394 = vunpack.c.h.b16 %v6991
        %v7395 = vunpack.c.l.b16 %v6992
        %v7396 = vunpack.c.h.b16 %v6992
        %v7397 = vunpack.c.l.b16 %v6993
        %v7398 = vunpack.c.h.b16 %v6993
        %v7399 = vunpack.c.l.b16 %v6994
        %v7400 = vunpack.c.h.b16 %v6994
        %v7401 = vunpack.c.l.b16 %v6995
        %v7402 = vunpack.c.h.b16 %v6995
        %v7403 = vunpack.c.l.b16 %v6996
        %v7404 = vunpack.c.h.b16 %v6996
        %v7405 = vunpack.c.l.b16 %v6997
        %v7406 = vunpack.c.h.b16 %v6997
        %v7407 = vunpack.c.l.b16 %v6998
        %v7408 = vunpack.c.h.b16 %v6998
        %v7409 = vunpack.c.l.b16 %v6999
        %v7410 = vunpack.c.h.b16 %v6999
        %v7411 = vunpack.c.l.b16 %v7000
        %v7412 = vunpack.c.h.b16 %v7000
        %v7413 = vunpack.c.l.b16 %v7001
        %v7414 = vunpack.c.h.b16 %v7001
        %v7415 = vunpack.c.l.b16 %v7002
        %v7416 = vunpack.c.h.b16 %v7002
        %v7417 = vunpack.c.l.b16 %v7003
        %v7418 = vunpack.c.h.b16 %v7003
        %v7419 = vunpack.c.l.b16 %v7004
        %v7420 = vunpack.c.h.b16 %v7004
        %v7421 = vunpack.c.l.b16 %v7005
        %v7422 = vunpack.c.h.b16 %v7005
        %v7423 = vunpack.c.l.b16 %v7006
        %v7424 = vunpack.c.h.b16 %v7006
        %v7425 = vunpack.c.l.b16 %v7007
        %v7426 = vunpack.c.h.b16 %v7007
        %v7427 = vunpack.c.l.b16 %v7008
        %v7428 = vunpack.c.h.b16 %v7008
        %v7429 = vpack.c.b16 %v7177, %v7173
        %v7430 = vpack.c.b16 %v7178, %v7174
        %v7431 = vpack.c.b16 %v7179, %v7175
        %v7432 = vpack.c.b16 %v7180, %v7176
        %v7433 = vpack.c.b16 %v7185, %v7181
        %v7434 = vpack.c.b16 %v7186, %v7182
        %v7435 = vpack.c.b16 %v7187, %v7183
        %v7436 = vpack.c.b16 %v7188, %v7184
        %v7437 = vpack.c.b16 %v7193, %v7189
        %v7438 = vpack.c.b16 %v7194, %v7190
        %v7439 = vpack.c.b16 %v7195, %v7191
        %v7440 = vpack.c.b16 %v7196, %v7192
        %v7441 = vpack.c.b16 %v7201, %v7197
        %v7442 = vpack.c.b16 %v7202, %v7198
        %v7443 = vpack.c.b16 %v7203, %v7199
        %v7444 = vpack.c.b16 %v7204, %v7200
        %v7445 = vpack.c.b16 %v7209, %v7205
        %v7446 = vpack.c.b16 %v7210, %v7206
        %v7447 = vpack.c.b16 %v7211, %v7207
        %v7448 = vpack.c.b16 %v7212, %v7208
        %v7449 = vpack.c.b16 %v7217, %v7213
        %v7450 = vpack.c.b16 %v7218, %v7214
        %v7451 = vpack.c.b16 %v7219, %v7215
        %v7452 = vpack.c.b16 %v7220, %v7216
        %v7453 = vpack.c.b16 %v7225, %v7221
        %v7454 = vpack.c.b16 %v7226, %v7222
        %v7455 = vpack.c.b16 %v7227, %v7223
        %v7456 = vpack.c.b16 %v7228, %v7224
        %v7457 = vpack.c.b16 %v7233, %v7229
        %v7458 = vpack.c.b16 %v7234, %v7230
        %v7459 = vpack.c.b16 %v7235, %v7231
        %v7460 = vpack.c.b16 %v7236, %v7232
        %v7461 = vpack.c.b16 %v7241, %v7237
        %v7462 = vpack.c.b16 %v7242, %v7238
        %v7463 = vpack.c.b16 %v7243, %v7239
        %v7464 = vpack.c.b16 %v7244, %v7240
        %v7465 = vpack.c.b16 %v7249, %v7245
        %v7466 = vpack.c.b16 %v7250, %v7246
        %v7467 = vpack.c.b16 %v7251, %v7247
        %v7468 = vpack.c.b16 %v7252, %v7248
        %v7469 = vpack.c.b16 %v7257, %v7253
        %v7470 = vpack.c.b16 %v7258, %v7254
        %v7471 = vpack.c.b16 %v7259, %v7255
        %v7472 = vpack.c.b16 %v7260, %v7256
        %v7473 = vpack.c.b16 %v7265, %v7261
        %v7474 = vpack.c.b16 %v7266, %v7262
        %v7475 = vpack.c.b16 %v7267, %v7263
        %v7476 = vpack.c.b16 %v7268, %v7264
        %v7477 = vpack.c.b16 %v7273, %v7269
        %v7478 = vpack.c.b16 %v7274, %v7270
        %v7479 = vpack.c.b16 %v7275, %v7271
        %v7480 = vpack.c.b16 %v7276, %v7272
        %v7481 = vpack.c.b16 %v7281, %v7277
        %v7482 = vpack.c.b16 %v7282, %v7278
        %v7483 = vpack.c.b16 %v7283, %v7279
        %v7484 = vpack.c.b16 %v7284, %v7280
        %v7485 = vpack.c.b16 %v7289, %v7285
        %v7486 = vpack.c.b16 %v7290, %v7286
        %v7487 = vpack.c.b16 %v7291, %v7287
        %v7488 = vpack.c.b16 %v7292, %v7288
        %v7489 = vpack.c.b16 %v7297, %v7293
        %v7490 = vpack.c.b16 %v7298, %v7294
        %v7491 = vpack.c.b16 %v7299, %v7295
        %v7492 = vpack.c.b16 %v7300, %v7296
        %v7493 = vpack.c.b16 %v7305, %v7301
        %v7494 = vpack.c.b16 %v7306, %v7302
        %v7495 = vpack.c.b16 %v7307, %v7303
        %v7496 = vpack.c.b16 %v7308, %v7304
        %v7497 = vpack.c.b16 %v7313, %v7309
        %v7498 = vpack.c.b16 %v7314, %v7310
        %v7499 = vpack.c.b16 %v7315, %v7311
        %v7500 = vpack.c.b16 %v7316, %v7312
        %v7501 = vpack.c.b16 %v7321, %v7317
        %v7502 = vpack.c.b16 %v7322, %v7318
        %v7503 = vpack.c.b16 %v7323, %v7319
        %v7504 = vpack.c.b16 %v7324, %v7320
        %v7505 = vpack.c.b16 %v7329, %v7325
        %v7506 = vpack.c.b16 %v7330, %v7326
        %v7507 = vpack.c.b16 %v7331, %v7327
        %v7508 = vpack.c.b16 %v7332, %v7328
        %v7509 = vpack.c.b16 %v7337, %v7333
        %v7510 = vpack.c.b16 %v7338, %v7334
        %v7511 = vpack.c.b16 %v7339, %v7335
        %v7512 = vpack.c.b16 %v7340, %v7336
        %v7513 = vpack.c.b16 %v7345, %v7341
        %v7514 = vpack.c.b16 %v7346, %v7342
        %v7515 = vpack.c.b16 %v7347, %v7343
        %v7516 = vpack.c.b16 %v7348, %v7344
        %v7517 = vpack.c.b16 %v7353, %v7349
        %v7518 = vpack.c.b16 %v7354, %v7350
        %v7519 = vpack.c.b16 %v7355, %v7351
        %v7520 = vpack.c.b16 %v7356, %v7352
        %v7521 = vpack.c.b16 %v7361, %v7357
        %v7522 = vpack.c.b16 %v7362, %v7358
        %v7523 = vpack.c.b16 %v7363, %v7359
        %v7524 = vpack.c.b16 %v7364, %v7360
        %v7525 = vpack.c.b16 %v7369, %v7365
        %v7526 = vpack.c.b16 %v7370, %v7366
        %v7527 = vpack.c.b16 %v7371, %v7367
        %v7528 = vpack.c.b16 %v7372, %v7368
        %v7529 = vpack.c.b16 %v7377, %v7373
        %v7530 = vpack.c.b16 %v7378, %v7374
        %v7531 = vpack.c.b16 %v7379, %v7375
        %v7532 = vpack.c.b16 %v7380, %v7376
        %v7533 = vpack.c.b16 %v7385, %v7381
        %v7534 = vpack.c.b16 %v7386, %v7382
        %v7535 = vpack.c.b16 %v7387, %v7383
        %v7536 = vpack.c.b16 %v7388, %v7384
        %v7537 = vpack.c.b16 %v7393, %v7389
        %v7538 = vpack.c.b16 %v7394, %v7390
        %v7539 = vpack.c.b16 %v7395, %v7391
        %v7540 = vpack.c.b16 %v7396, %v7392
        %v7541 = vpack.c.b16 %v7401, %v7397
        %v7542 = vpack.c.b16 %v7402, %v7398
        %v7543 = vpack.c.b16 %v7403, %v7399
        %v7544 = vpack.c.b16 %v7404, %v7400
        %v7545 = vpack.c.b16 %v7409, %v7405
        %v7546 = vpack.c.b16 %v7410, %v7406
        %v7547 = vpack.c.b16 %v7411, %v7407
        %v7548 = vpack.c.b16 %v7412, %v7408
        %v7549 = vpack.c.b16 %v7417, %v7413
        %v7550 = vpack.c.b16 %v7418, %v7414
        %v7551 = vpack.c.b16 %v7419, %v7415
        %v7552 = vpack.c.b16 %v7420, %v7416
        %v7553 = vpack.c.b16 %v7425, %v7421
        %v7554 = vpack.c.b16 %v7426, %v7422
        %v7555 = vpack.c.b16 %v7427, %v7423
        %v7556 = vpack.c.b16 %v7428, %v7424
        %7685 = vmatprep.subr.bf16.mxu0 %v7430
        %7686 = vmatpush1.bf16.msra.mxu0 %v7429
        %7687 = vmatprep.subr.bf16.mxu0 %v7434
        %7688 = vmatpush1.bf16.msra.mxu0 %v7433
        %7689 = vmatprep.subr.bf16.mxu0 %v7438
        %7690 = vmatpush1.bf16.msra.mxu0 %v7437
        %7691 = vmatprep.subr.bf16.mxu0 %v7442
        %7692 = vmatpush1.bf16.msra.mxu0 %v7441
        %7693 = vmatprep.subr.bf16.mxu0 %v7446
        %7694 = vmatpush1.bf16.msra.mxu0 %v7445
        %7695 = vmatprep.subr.bf16.mxu0 %v7450
        %7696 = vmatpush1.bf16.msra.mxu0 %v7449
        %7697 = vmatprep.subr.bf16.mxu0 %v7454
        %7698 = vmatpush1.bf16.msra.mxu0 %v7453
        %7699 = vmatprep.subr.bf16.mxu0 %v7458
        %7700 = vmatpush1.bf16.msra.mxu0 %v7457
        %7701 = vmatprep.subr.bf16.mxu0 %v7462
        %7702 = vmatpush1.bf16.msra.mxu0 %v7461
        %7703 = vmatprep.subr.bf16.mxu0 %v7466
        %7704 = vmatpush1.bf16.msra.mxu0 %v7465
        %7705 = vmatprep.subr.bf16.mxu0 %v7470
        %7706 = vmatpush1.bf16.msra.mxu0 %v7469
        %7707 = vmatprep.subr.bf16.mxu0 %v7474
        %7708 = vmatpush1.bf16.msra.mxu0 %v7473
        %7709 = vmatprep.subr.bf16.mxu0 %v7478
        %7710 = vmatpush1.bf16.msra.mxu0 %v7477
        %7711 = vmatprep.subr.bf16.mxu0 %v7482
        %7712 = vmatpush1.bf16.msra.mxu0 %v7481
        %7713 = vmatprep.subr.bf16.mxu0 %v7486
        %7714 = vmatpush1.bf16.msra.mxu0 %v7485
        %7715 = vmatprep.subr.bf16.mxu0 %v7490
        %7716 = vmatpush1.bf16.msra.mxu0 %v7489
        %7717 = vmatprep.mubr.bf16.mxu0 %v6873
        %7718 = vmatmul.mubr.bf16.gmra.mrb[0].mxu0 %v6872
        %v7719 = vpop.f32.mrb[0].mxu0
        %v7720 = vadd.f32 %v7032, %v7719
        %v7721 = vpop.f32.mrb[0].mxu0
        %v7722 = vadd.f32 %v7036, %v7721
        %v7723 = vpop.f32.mrb[0].mxu0
        %v7724 = vadd.f32 %v7032, %v7723
        %v7725 = vpop.f32.mrb[0].mxu0
        %v7726 = vadd.f32 %v7036, %v7725
        %7727 = vmatprep.mubr.bf16.mxu0 %v6877
        %7728 = vmatmul.mubr.bf16.gmra.mrb[0].mxu0 %v6876
        %v7729 = vpop.f32.mrb[0].mxu0
        %v7730 = vadd.f32 %v7032, %v7729
        %v7731 = vpop.f32.mrb[0].mxu0
        %v7732 = vadd.f32 %v7036, %v7731
        %v7733 = vpop.f32.mrb[0].mxu0
        %v7734 = vpop.f32.mrb[0].mxu0
        %7735 = vdwg.mxu0
        %7736 = vmatprep.subr.bf16.mxu0 %v7494
        %7737 = vmatpush1.bf16.msra.mxu0 %v7493
        %7738 = vmatprep.subr.bf16.mxu0 %v7498
        %7739 = vmatpush1.bf16.msra.mxu0 %v7497
        %7740 = vmatprep.subr.bf16.mxu0 %v7502
        %7741 = vmatpush1.bf16.msra.mxu0 %v7501
        %7742 = vmatprep.subr.bf16.mxu0 %v7506
        %7743 = vmatpush1.bf16.msra.mxu0 %v7505
        %7744 = vmatprep.subr.bf16.mxu0 %v7510
        %7745 = vmatpush1.bf16.msra.mxu0 %v7509
        %7746 = vmatprep.subr.bf16.mxu0 %v7514
        %7747 = vmatpush1.bf16.msra.mxu0 %v7513
        %7748 = vmatprep.subr.bf16.mxu0 %v7518
        %7749 = vmatpush1.bf16.msra.mxu0 %v7517
        %7750 = vmatprep.subr.bf16.mxu0 %v7522
        %7751 = vmatpush1.bf16.msra.mxu0 %v7521
        %7752 = vmatprep.subr.bf16.mxu0 %v7526
        %7753 = vmatpush1.bf16.msra.mxu0 %v7525
        %7754 = vmatprep.subr.bf16.mxu0 %v7530
        %7755 = vmatpush1.bf16.msra.mxu0 %v7529
        %7756 = vmatprep.subr.bf16.mxu0 %v7534
        %7757 = vmatpush1.bf16.msra.mxu0 %v7533
        %7758 = vmatprep.subr.bf16.mxu0 %v7538
        %7759 = vmatpush1.bf16.msra.mxu0 %v7537
        %7760 = vmatprep.subr.bf16.mxu0 %v7542
        %7761 = vmatpush1.bf16.msra.mxu0 %v7541
        %7762 = vmatprep.subr.bf16.mxu0 %v7546
        %7763 = vmatpush1.bf16.msra.mxu0 %v7545
        %7764 = vmatprep.subr.bf16.mxu0 %v7550
        %7765 = vmatpush1.bf16.msra.mxu0 %v7549
        %7766 = vmatprep.subr.bf16.mxu0 %v7554
        %7767 = vmatpush1.bf16.msra.mxu0 %v7553
        %7768 = vmatprep.mubr.bf16.mxu0 %v6875
        %7769 = vmatmul.mubr.bf16.gmra.mrb[0].mxu0 %v6874
        %v7770 = vpop.f32.mrb[0].mxu0
        %v7771 = vadd.f32 %v7720, %v7770
        %v7772 = vpop.f32.mrb[0].mxu0
        %v7773 = vadd.f32 %v7722, %v7772
        %v7774 = vpop.f32.mrb[0].mxu0
        %v7775 = vadd.f32 %v7724, %v7774
        %v7776 = vpop.f32.mrb[0].mxu0
        %v7777 = vadd.f32 %v7726, %v7776
        %7778 = vmatprep.mubr.bf16.mxu0 %v6879
        %7779 = vmatmul.mubr.bf16.gmra.mrb[0].mxu0 %v6878
        %v7780 = vpop.f32.mrb[0].mxu0
        %v7781 = vadd.f32 %v7730, %v7780
        %v7782 = vpop.f32.mrb[0].mxu0
        %v7783 = vadd.f32 %v7732, %v7782
        %v7784 = vpop.f32.mrb[0].mxu0
        %v7785 = vpop.f32.mrb[0].mxu0
        %7786 = vdwg.mxu0
        %7787 = vmatprep.subr.bf16.mxu0 %v7432
        %7788 = vmatpush1.bf16.msra.mxu0 %v7431
        %7789 = vmatprep.subr.bf16.mxu0 %v7436
        %7790 = vmatpush1.bf16.msra.mxu0 %v7435
        %7791 = vmatprep.subr.bf16.mxu0 %v7440
        %7792 = vmatpush1.bf16.msra.mxu0 %v7439
        %7793 = vmatprep.subr.bf16.mxu0 %v7444
        %7794 = vmatpush1.bf16.msra.mxu0 %v7443
        %7795 = vmatprep.subr.bf16.mxu0 %v7448
        %7796 = vmatpush1.bf16.msra.mxu0 %v7447
        %7797 = vmatprep.subr.bf16.mxu0 %v7452
        %7798 = vmatpush1.bf16.msra.mxu0 %v7451
        %7799 = vmatprep.subr.bf16.mxu0 %v7456
        %7800 = vmatpush1.bf16.msra.mxu0 %v7455
        %7801 = vmatprep.subr.bf16.mxu0 %v7460
        %7802 = vmatpush1.bf16.msra.mxu0 %v7459
        %7803 = vmatprep.subr.bf16.mxu0 %v7464
        %7804 = vmatpush1.bf16.msra.mxu0 %v7463
        %7805 = vmatprep.subr.bf16.mxu0 %v7468
        %7806 = vmatpush1.bf16.msra.mxu0 %v7467
        %7807 = vmatprep.subr.bf16.mxu0 %v7472
        %7808 = vmatpush1.bf16.msra.mxu0 %v7471
        %7809 = vmatprep.subr.bf16.mxu0 %v7476
        %7810 = vmatpush1.bf16.msra.mxu0 %v7475
        %7811 = vmatprep.subr.bf16.mxu0 %v7480
        %7812 = vmatpush1.bf16.msra.mxu0 %v7479
        %7813 = vmatprep.subr.bf16.mxu0 %v7484
        %7814 = vmatpush1.bf16.msra.mxu0 %v7483
        %7815 = vmatprep.subr.bf16.mxu0 %v7488
        %7816 = vmatpush1.bf16.msra.mxu0 %v7487
        %7817 = vmatprep.subr.bf16.mxu0 %v7492
        %7818 = vmatpush1.bf16.msra.mxu0 %v7491
        %7819 = vmatprep.mubr.bf16.mxu0 %v6873
        %7820 = vmatmul.mubr.bf16.gmra.mrb[0].mxu0 %v6872
        %v7821 = vpop.f32.mrb[0].mxu0
        %v7822 = vadd.f32 %v7040, %v7821
        %v7823 = vpop.f32.mrb[0].mxu0
        %v7824 = vadd.f32 %v7044, %v7823
        %v7825 = vpop.f32.mrb[0].mxu0
        %v7826 = vadd.f32 %v7040, %v7825
        %v7827 = vpop.f32.mrb[0].mxu0
        %v7828 = vadd.f32 %v7044, %v7827
        %7829 = vmatprep.mubr.bf16.mxu0 %v6877
        %7830 = vmatmul.mubr.bf16.gmra.mrb[0].mxu0 %v6876
        %v7831 = vpop.f32.mrb[0].mxu0
        %v7832 = vadd.f32 %v7040, %v7831
        %v7833 = vpop.f32.mrb[0].mxu0
        %v7834 = vadd.f32 %v7044, %v7833
        %v7835 = vpop.f32.mrb[0].mxu0
        %v7836 = vpop.f32.mrb[0].mxu0
        %7837 = vdwg.mxu0
        %7838 = vmatprep.subr.bf16.mxu0 %v7496
        %7839 = vmatpush1.bf16.msra.mxu0 %v7495
        %7840 = vmatprep.subr.bf16.mxu0 %v7500
        %7841 = vmatpush1.bf16.msra.mxu0 %v7499
        %7842 = vmatprep.subr.bf16.mxu0 %v7504
        %7843 = vmatpush1.bf16.msra.mxu0 %v7503
        %7844 = vmatprep.subr.bf16.mxu0 %v7508
        %7845 = vmatpush1.bf16.msra.mxu0 %v7507
        %7846 = vmatprep.subr.bf16.mxu0 %v7512
        %7847 = vmatpush1.bf16.msra.mxu0 %v7511
        %7848 = vmatprep.subr.bf16.mxu0 %v7516
        %7849 = vmatpush1.bf16.msra.mxu0 %v7515
        %7850 = vmatprep.subr.bf16.mxu0 %v7520
        %7851 = vmatpush1.bf16.msra.mxu0 %v7519
        %7852 = vmatprep.subr.bf16.mxu0 %v7524
        %7853 = vmatpush1.bf16.msra.mxu0 %v7523
        %7854 = vmatprep.subr.bf16.mxu0 %v7528
        %7855 = vmatpush1.bf16.msra.mxu0 %v7527
        %7856 = vmatprep.subr.bf16.mxu0 %v7532
        %7857 = vmatpush1.bf16.msra.mxu0 %v7531
        %7858 = vmatprep.subr.bf16.mxu0 %v7536
        %7859 = vmatpush1.bf16.msra.mxu0 %v7535
        %7860 = vmatprep.subr.bf16.mxu0 %v7540
        %7861 = vmatpush1.bf16.msra.mxu0 %v7539
        %7862 = vmatprep.subr.bf16.mxu0 %v7544
        %7863 = vmatpush1.bf16.msra.mxu0 %v7543
        %7864 = vmatprep.subr.bf16.mxu0 %v7548
        %7865 = vmatpush1.bf16.msra.mxu0 %v7547
        %7866 = vmatprep.subr.bf16.mxu0 %v7552
        %7867 = vmatpush1.bf16.msra.mxu0 %v7551
        %7868 = vmatprep.subr.bf16.mxu0 %v7556
        %7869 = vmatpush1.bf16.msra.mxu0 %v7555
        %7870 = vmatprep.mubr.bf16.mxu0 %v6875
        %7871 = vmatmul.mubr.bf16.gmra.mrb[0].mxu0 %v6874
        %v7872 = vpop.f32.mrb[0].mxu0
        %v7873 = vadd.f32 %v7822, %v7872
        %v7874 = vpop.f32.mrb[0].mxu0
        %v7875 = vadd.f32 %v7824, %v7874
        %v7876 = vpop.f32.mrb[0].mxu0
        %v7877 = vadd.f32 %v7826, %v7876
        %v7878 = vpop.f32.mrb[0].mxu0
        %v7879 = vadd.f32 %v7828, %v7878
        %7880 = vmatprep.mubr.bf16.mxu0 %v6879
        %7881 = vmatmul.mubr.bf16.gmra.mrb[0].mxu0 %v6878
        %v7882 = vpop.f32.mrb[0].mxu0
        %v7883 = vadd.f32 %v7832, %v7882
        %v7884 = vpop.f32.mrb[0].mxu0
        %v7885 = vadd.f32 %v7834, %v7884
        %v7886 = vpop.f32.mrb[0].mxu0
        %v7887 = vpop.f32.mrb[0].mxu0
        %7888 = vdwg.mxu0
        %vm7889 = vcmp.gt.f32.partialorder %v7771, 0.0
        %vm7890 = vcmp.gt.f32.partialorder %v7773, 0.0
        %vm7891 = vcmp.gt.f32.partialorder %v7873, 0.0
        %vm7892 = vcmp.gt.f32.partialorder %v7875, 0.0
        %vm7893 = vcmp.gt.f32.partialorder %v7775, 0.0
        %vm7894 = vcmp.gt.f32.partialorder %v7777, 0.0
        %vm7895 = vcmp.gt.f32.partialorder %v7877, 0.0
        %vm7896 = vcmp.gt.f32.partialorder %v7879, 0.0
        %vm7897 = vcmp.gt.f32.partialorder %v7781, 0.0
        %vm7898 = vcmp.gt.f32.partialorder %v7783, 0.0
        %vm7899 = vcmp.gt.f32.partialorder %v7883, 0.0
        %vm7900 = vcmp.gt.f32.partialorder %v7885, 0.0
        %v7901 = vmul.f32 %v7771, 0.2
        %v7902 = vmul.f32 %v7773, 0.2
        %v7903 = vmul.f32 %v7873, 0.2
        %v7904 = vmul.f32 %v7875, 0.2
        %v7905 = vmul.f32 %v7775, 0.2
        %v7906 = vmul.f32 %v7777, 0.2
        %v7907 = vmul.f32 %v7877, 0.2
        %v7908 = vmul.f32 %v7879, 0.2
        %v7909 = vmul.f32 %v7781, 0.2
        %v7910 = vmul.f32 %v7783, 0.2
        %v7911 = vmul.f32 %v7883, 0.2
        %v7912 = vmul.f32 %v7885, 0.2
        %v7913 = vsel %vm7889, %v7771, %v7901
        %v7914 = vsel %vm7890, %v7773, %v7902
        %v7915 = vsel %vm7891, %v7873, %v7903
        %v7916 = vsel %vm7892, %v7875, %v7904
        %v7917 = vsel %vm7893, %v7775, %v7905
        %v7918 = vsel %vm7894, %v7777, %v7906
        %v7919 = vsel %vm7895, %v7877, %v7907
        %v7920 = vsel %vm7896, %v7879, %v7908
        %v7921 = vsel %vm7897, %v7781, %v7909
        %v7922 = vsel %vm7898, %v7783, %v7910
        %v7923 = vsel %vm7899, %v7883, %v7911
        %v7924 = vsel %vm7900, %v7885, %v7912
        %v7925 = vmul.f32 %v7913, 1.4142135
        %v7926 = vmul.f32 %v7914, 1.4142135
        %v7927 = vmul.f32 %v7915, 1.4142135
        %v7928 = vmul.f32 %v7916, 1.4142135
        %v7929 = vmul.f32 %v7917, 1.4142135
        %v7930 = vmul.f32 %v7918, 1.4142135
        %v7931 = vmul.f32 %v7919, 1.4142135
        %v7932 = vmul.f32 %v7920, 1.4142135
        %v7933 = vmul.f32 %v7921, 1.4142135
        %v7934 = vmul.f32 %v7922, 1.4142135
        %v7935 = vmul.f32 %v7923, 1.4142135
        %v7936 = vmul.f32 %v7924, 1.4142135
        %v7937 = vpack.c.bf16 %v7929, %v7925
        %v7938 = vpack.c.bf16 %v7930, %v7926
        %v7939 = vpack.c.bf16 %v7931, %v7927
        %v7940 = vpack.c.bf16 %v7932, %v7928
        %v7941 = vpack.c.bf16 %v7933, %v7933
        %v7942 = vpack.c.bf16 %v7934, %v7934
        %v7943 = vpack.c.bf16 %v7935, %v7935
        %v7944 = vpack.c.bf16 %v7936, %v7936
        %s7945 = scalar_lea.vmem %s393, 3072 [#allocation8]
        %v7946 = vld [vmem:[%s7945] sm:$0xff]
        %v7947 = vld [vmem:[%s7945 + $0x8] sm:$0xff]
        %v7948 = vld [vmem:[%s7945 + $0x10] sm:$0xff]
        %v7949 = vld [vmem:[%s7945 + $0x18] sm:$0xff]
        %v7950 = vld [vmem:[%s7945 + $0x20] sm:$0xff]
        %v7951 = vld [vmem:[%s7945 + $0x28] sm:$0xff]
        %v7952 = vld [vmem:[%s7945 + $0x30] sm:$0xff]
        %v7953 = vld [vmem:[%s7945 + $0x38] sm:$0xff]
        %v7954 = vld [vmem:[%s7945 + $0x40] sm:$0xff]
        %v7955 = vld [vmem:[%s7945 + $0x48] sm:$0xff]
        %v7956 = vld [vmem:[%s7945 + $0x50] sm:$0xff]
        %v7957 = vld [vmem:[%s7945 + $0x58] sm:$0xff]
        %v7958 = vld [vmem:[%s7945 + $0x60] sm:$0xff]
        %v7959 = vld [vmem:[%s7945 + $0x68] sm:$0xff]
        %v7960 = vld [vmem:[%s7945 + $0x70] sm:$0xff]
        %v7961 = vld [vmem:[%s7945 + $0x78] sm:$0xff]
        %v7962 = vld [vmem:[%s7945 + $0x80] sm:$0xff]
        %v7963 = vld [vmem:[%s7945 + $0x88] sm:$0xff]
        %v7964 = vld [vmem:[%s7945 + $0x90] sm:$0xff]
        %v7965 = vld [vmem:[%s7945 + $0x98] sm:$0xff]
        %v7966 = vld [vmem:[%s7945 + $0xa0] sm:$0xff]
        %v7967 = vld [vmem:[%s7945 + $0xa8] sm:$0xff]
        %v7968 = vld [vmem:[%s7945 + $0xb0] sm:$0xff]
        %v7969 = vld [vmem:[%s7945 + $0xb8] sm:$0xff]
        %v7970 = vld [vmem:[%s7945 + $0xc0] sm:$0xff]
        %v7971 = vld [vmem:[%s7945 + $0xc8] sm:$0xff]
        %v7972 = vld [vmem:[%s7945 + $0xd0] sm:$0xff]
        %v7973 = vld [vmem:[%s7945 + $0xd8] sm:$0xff]
        %v7974 = vld [vmem:[%s7945 + $0xe0] sm:$0xff]
        %v7975 = vld [vmem:[%s7945 + $0xe8] sm:$0xff]
        %v7976 = vld [vmem:[%s7945 + $0xf0] sm:$0xff]
        %v7977 = vld [vmem:[%s7945 + $0xf8] sm:$0xff]
        %v7978 = vld [vmem:[%s7945 + $0x100] sm:$0xff]
        %v7979 = vld [vmem:[%s7945 + $0x108] sm:$0xff]
        %v7980 = vld [vmem:[%s7945 + $0x110] sm:$0xff]
        %v7981 = vld [vmem:[%s7945 + $0x118] sm:$0xff]
        %v7982 = vld [vmem:[%s7945 + $0x120] sm:$0xff]
        %v7983 = vld [vmem:[%s7945 + $0x128] sm:$0xff]
        %v7984 = vld [vmem:[%s7945 + $0x130] sm:$0xff]
        %v7985 = vld [vmem:[%s7945 + $0x138] sm:$0xff]
        %v7986 = vld [vmem:[%s7945 + $0x140] sm:$0xff]
        %v7987 = vld [vmem:[%s7945 + $0x148] sm:$0xff]
        %v7988 = vld [vmem:[%s7945 + $0x150] sm:$0xff]
        %v7989 = vld [vmem:[%s7945 + $0x158] sm:$0xff]
        %v7990 = vld [vmem:[%s7945 + $0x160] sm:$0xff]
        %v7991 = vld [vmem:[%s7945 + $0x168] sm:$0xff]
        %v7992 = vld [vmem:[%s7945 + $0x170] sm:$0xff]
        %v7993 = vld [vmem:[%s7945 + $0x178] sm:$0xff]
        %v7994 = vld [vmem:[%s7945 + $0x180] sm:$0xff]
        %v7995 = vld [vmem:[%s7945 + $0x188] sm:$0xff]
        %v7996 = vld [vmem:[%s7945 + $0x190] sm:$0xff]
        %v7997 = vld [vmem:[%s7945 + $0x198] sm:$0xff]
        %v7998 = vld [vmem:[%s7945 + $0x1a0] sm:$0xff]
        %v7999 = vld [vmem:[%s7945 + $0x1a8] sm:$0xff]
        %v8000 = vld [vmem:[%s7945 + $0x1b0] sm:$0xff]
        %v8001 = vld [vmem:[%s7945 + $0x1b8] sm:$0xff]
        %v8002 = vld [vmem:[%s7945 + $0x1c0] sm:$0xff]
        %v8003 = vld [vmem:[%s7945 + $0x1c8] sm:$0xff]
        %v8004 = vld [vmem:[%s7945 + $0x1d0] sm:$0xff]
        %v8005 = vld [vmem:[%s7945 + $0x1d8] sm:$0xff]
        %v8006 = vld [vmem:[%s7945 + $0x1e0] sm:$0xff]
        %v8007 = vld [vmem:[%s7945 + $0x1e8] sm:$0xff]
        %v8008 = vld [vmem:[%s7945 + $0x1f0] sm:$0xff]
        %v8009 = vld [vmem:[%s7945 + $0x1f8] sm:$0xff]
        %v8010 = vld [vmem:[%s7945 + $0x200] sm:$0xff]
        %v8011 = vld [vmem:[%s7945 + $0x208] sm:$0xff]
        %v8012 = vld [vmem:[%s7945 + $0x210] sm:$0xff]
        %v8013 = vld [vmem:[%s7945 + $0x218] sm:$0xff]
        %v8014 = vld [vmem:[%s7945 + $0x220] sm:$0xff]
        %v8015 = vld [vmem:[%s7945 + $0x228] sm:$0xff]
        %v8016 = vld [vmem:[%s7945 + $0x230] sm:$0xff]
        %v8017 = vld [vmem:[%s7945 + $0x238] sm:$0xff]
        %v8018 = vld [vmem:[%s7945 + $0x240] sm:$0xff]
        %v8019 = vld [vmem:[%s7945 + $0x248] sm:$0xff]
        %v8020 = vld [vmem:[%s7945 + $0x250] sm:$0xff]
        %v8021 = vld [vmem:[%s7945 + $0x258] sm:$0xff]
        %v8022 = vld [vmem:[%s7945 + $0x260] sm:$0xff]
        %v8023 = vld [vmem:[%s7945 + $0x268] sm:$0xff]
        %v8024 = vld [vmem:[%s7945 + $0x270] sm:$0xff]
        %v8025 = vld [vmem:[%s7945 + $0x278] sm:$0xff]
        %v8026 = vld [vmem:[%s7945 + $0x280] sm:$0xff]
        %v8027 = vld [vmem:[%s7945 + $0x288] sm:$0xff]
        %v8028 = vld [vmem:[%s7945 + $0x290] sm:$0xff]
        %v8029 = vld [vmem:[%s7945 + $0x298] sm:$0xff]
        %v8030 = vld [vmem:[%s7945 + $0x2a0] sm:$0xff]
        %v8031 = vld [vmem:[%s7945 + $0x2a8] sm:$0xff]
        %v8032 = vld [vmem:[%s7945 + $0x2b0] sm:$0xff]
        %v8033 = vld [vmem:[%s7945 + $0x2b8] sm:$0xff]
        %v8034 = vld [vmem:[%s7945 + $0x2c0] sm:$0xff]
        %v8035 = vld [vmem:[%s7945 + $0x2c8] sm:$0xff]
        %v8036 = vld [vmem:[%s7945 + $0x2d0] sm:$0xff]
        %v8037 = vld [vmem:[%s7945 + $0x2d8] sm:$0xff]
        %v8038 = vld [vmem:[%s7945 + $0x2e0] sm:$0xff]
        %v8039 = vld [vmem:[%s7945 + $0x2e8] sm:$0xff]
        %v8040 = vld [vmem:[%s7945 + $0x2f0] sm:$0xff]
        %v8041 = vld [vmem:[%s7945 + $0x2f8] sm:$0xff]
        %v8042 = vld [vmem:[%s7945 + $0x300] sm:$0xff]
        %v8043 = vld [vmem:[%s7945 + $0x308] sm:$0xff]
        %v8044 = vld [vmem:[%s7945 + $0x310] sm:$0xff]
        %v8045 = vld [vmem:[%s7945 + $0x318] sm:$0xff]
        %v8046 = vld [vmem:[%s7945 + $0x320] sm:$0xff]
        %v8047 = vld [vmem:[%s7945 + $0x328] sm:$0xff]
        %v8048 = vld [vmem:[%s7945 + $0x330] sm:$0xff]
        %v8049 = vld [vmem:[%s7945 + $0x338] sm:$0xff]
        %v8050 = vld [vmem:[%s7945 + $0x340] sm:$0xff]
        %v8051 = vld [vmem:[%s7945 + $0x348] sm:$0xff]
        %v8052 = vld [vmem:[%s7945 + $0x350] sm:$0xff]
        %v8053 = vld [vmem:[%s7945 + $0x358] sm:$0xff]
        %v8054 = vld [vmem:[%s7945 + $0x360] sm:$0xff]
        %v8055 = vld [vmem:[%s7945 + $0x368] sm:$0xff]
        %v8056 = vld [vmem:[%s7945 + $0x370] sm:$0xff]
        %v8057 = vld [vmem:[%s7945 + $0x378] sm:$0xff]
        %v8058 = vld [vmem:[%s7945 + $0x380] sm:$0xff]
        %v8059 = vld [vmem:[%s7945 + $0x388] sm:$0xff]
        %v8060 = vld [vmem:[%s7945 + $0x390] sm:$0xff]
        %v8061 = vld [vmem:[%s7945 + $0x398] sm:$0xff]
        %v8062 = vld [vmem:[%s7945 + $0x3a0] sm:$0xff]
        %v8063 = vld [vmem:[%s7945 + $0x3a8] sm:$0xff]
        %v8064 = vld [vmem:[%s7945 + $0x3b0] sm:$0xff]
        %v8065 = vld [vmem:[%s7945 + $0x3b8] sm:$0xff]
        %v8066 = vld [vmem:[%s7945 + $0x3c0] sm:$0xff]
        %v8067 = vld [vmem:[%s7945 + $0x3c8] sm:$0xff]
        %v8068 = vld [vmem:[%s7945 + $0x3d0] sm:$0xff]
        %v8069 = vld [vmem:[%s7945 + $0x3d8] sm:$0xff]
        %v8070 = vld [vmem:[%s7945 + $0x3e0] sm:$0xff]
        %v8071 = vld [vmem:[%s7945 + $0x3e8] sm:$0xff]
        %v8072 = vld [vmem:[%s7945 + $0x3f0] sm:$0xff]
        %v8073 = vld [vmem:[%s7945 + $0x3f8] sm:$0xff]
        %v8074 = vlaneseq
        %v8075 = vshrl.u32 %v8074, 7
        %v8076 = vsub.s32 3, %v8075
        %v8077 = vrot.slane %v4739, %v8076
        %v8078 = vlaneseq
        %v8079 = vshrl.u32 %v8078, 7
        %v8080 = vsub.s32 7, %v8079
        %v8081 = vrot.slane %v4739, %v8080
        %v8082 = vlaneseq
        %v8083 = vshrl.u32 %v8082, 7
        %v8084 = vsub.s32 3, %v8083
        %v8085 = vrot.slane %v4740, %v8084
        %v8086 = vlaneseq
        %v8087 = vshrl.u32 %v8086, 7
        %v8088 = vsub.s32 7, %v8087
        %v8089 = vrot.slane %v4740, %v8088
        %v8094 = vlaneseq
        %v8095 = vshrl.u32 %v8094, 7
        %v8096 = vsub.s32 3, %v8095
        %v8097 = vrot.slane %v8077, %v8096
        %v8098 = vlaneseq
        %v8099 = vshrl.u32 %v8098, 7
        %v8100 = vsub.s32 3, %v8099
        %v8101 = vrot.slane %v8081, %v8100
        %v8102 = vlaneseq
        %v8103 = vshrl.u32 %v8102, 7
        %v8104 = vsub.s32 3, %v8103
        %v8105 = vrot.slane %v8085, %v8104
        %v8106 = vlaneseq
        %v8107 = vshrl.u32 %v8106, 7
        %v8108 = vsub.s32 3, %v8107
        %v8109 = vrot.slane %v8089, %v8108
        %v8238 = vunpack.c.l.b16 %v7946
        %v8239 = vunpack.c.h.b16 %v7946
        %v8240 = vunpack.c.l.b16 %v7947
        %v8241 = vunpack.c.h.b16 %v7947
        %v8242 = vunpack.c.l.b16 %v7948
        %v8243 = vunpack.c.h.b16 %v7948
        %v8244 = vunpack.c.l.b16 %v7949
        %v8245 = vunpack.c.h.b16 %v7949
        %v8246 = vunpack.c.l.b16 %v7950
        %v8247 = vunpack.c.h.b16 %v7950
        %v8248 = vunpack.c.l.b16 %v7951
        %v8249 = vunpack.c.h.b16 %v7951
        %v8250 = vunpack.c.l.b16 %v7952
        %v8251 = vunpack.c.h.b16 %v7952
        %v8252 = vunpack.c.l.b16 %v7953
        %v8253 = vunpack.c.h.b16 %v7953
        %v8254 = vunpack.c.l.b16 %v7954
        %v8255 = vunpack.c.h.b16 %v7954
        %v8256 = vunpack.c.l.b16 %v7955
        %v8257 = vunpack.c.h.b16 %v7955
        %v8258 = vunpack.c.l.b16 %v7956
        %v8259 = vunpack.c.h.b16 %v7956
        %v8260 = vunpack.c.l.b16 %v7957
        %v8261 = vunpack.c.h.b16 %v7957
        %v8262 = vunpack.c.l.b16 %v7958
        %v8263 = vunpack.c.h.b16 %v7958
        %v8264 = vunpack.c.l.b16 %v7959
        %v8265 = vunpack.c.h.b16 %v7959
        %v8266 = vunpack.c.l.b16 %v7960
        %v8267 = vunpack.c.h.b16 %v7960
        %v8268 = vunpack.c.l.b16 %v7961
        %v8269 = vunpack.c.h.b16 %v7961
        %v8270 = vunpack.c.l.b16 %v7962
        %v8271 = vunpack.c.h.b16 %v7962
        %v8272 = vunpack.c.l.b16 %v7963
        %v8273 = vunpack.c.h.b16 %v7963
        %v8274 = vunpack.c.l.b16 %v7964
        %v8275 = vunpack.c.h.b16 %v7964
        %v8276 = vunpack.c.l.b16 %v7965
        %v8277 = vunpack.c.h.b16 %v7965
        %v8278 = vunpack.c.l.b16 %v7966
        %v8279 = vunpack.c.h.b16 %v7966
        %v8280 = vunpack.c.l.b16 %v7967
        %v8281 = vunpack.c.h.b16 %v7967
        %v8282 = vunpack.c.l.b16 %v7968
        %v8283 = vunpack.c.h.b16 %v7968
        %v8284 = vunpack.c.l.b16 %v7969
        %v8285 = vunpack.c.h.b16 %v7969
        %v8286 = vunpack.c.l.b16 %v7970
        %v8287 = vunpack.c.h.b16 %v7970
        %v8288 = vunpack.c.l.b16 %v7971
        %v8289 = vunpack.c.h.b16 %v7971
        %v8290 = vunpack.c.l.b16 %v7972
        %v8291 = vunpack.c.h.b16 %v7972
        %v8292 = vunpack.c.l.b16 %v7973
        %v8293 = vunpack.c.h.b16 %v7973
        %v8294 = vunpack.c.l.b16 %v7974
        %v8295 = vunpack.c.h.b16 %v7974
        %v8296 = vunpack.c.l.b16 %v7975
        %v8297 = vunpack.c.h.b16 %v7975
        %v8298 = vunpack.c.l.b16 %v7976
        %v8299 = vunpack.c.h.b16 %v7976
        %v8300 = vunpack.c.l.b16 %v7977
        %v8301 = vunpack.c.h.b16 %v7977
        %v8302 = vunpack.c.l.b16 %v7978
        %v8303 = vunpack.c.h.b16 %v7978
        %v8304 = vunpack.c.l.b16 %v7979
        %v8305 = vunpack.c.h.b16 %v7979
        %v8306 = vunpack.c.l.b16 %v7980
        %v8307 = vunpack.c.h.b16 %v7980
        %v8308 = vunpack.c.l.b16 %v7981
        %v8309 = vunpack.c.h.b16 %v7981
        %v8310 = vunpack.c.l.b16 %v7982
        %v8311 = vunpack.c.h.b16 %v7982
        %v8312 = vunpack.c.l.b16 %v7983
        %v8313 = vunpack.c.h.b16 %v7983
        %v8314 = vunpack.c.l.b16 %v7984
        %v8315 = vunpack.c.h.b16 %v7984
        %v8316 = vunpack.c.l.b16 %v7985
        %v8317 = vunpack.c.h.b16 %v7985
        %v8318 = vunpack.c.l.b16 %v7986
        %v8319 = vunpack.c.h.b16 %v7986
        %v8320 = vunpack.c.l.b16 %v7987
        %v8321 = vunpack.c.h.b16 %v7987
        %v8322 = vunpack.c.l.b16 %v7988
        %v8323 = vunpack.c.h.b16 %v7988
        %v8324 = vunpack.c.l.b16 %v7989
        %v8325 = vunpack.c.h.b16 %v7989
        %v8326 = vunpack.c.l.b16 %v7990
        %v8327 = vunpack.c.h.b16 %v7990
        %v8328 = vunpack.c.l.b16 %v7991
        %v8329 = vunpack.c.h.b16 %v7991
        %v8330 = vunpack.c.l.b16 %v7992
        %v8331 = vunpack.c.h.b16 %v7992
        %v8332 = vunpack.c.l.b16 %v7993
        %v8333 = vunpack.c.h.b16 %v7993
        %v8334 = vunpack.c.l.b16 %v7994
        %v8335 = vunpack.c.h.b16 %v7994
        %v8336 = vunpack.c.l.b16 %v7995
        %v8337 = vunpack.c.h.b16 %v7995
        %v8338 = vunpack.c.l.b16 %v7996
        %v8339 = vunpack.c.h.b16 %v7996
        %v8340 = vunpack.c.l.b16 %v7997
        %v8341 = vunpack.c.h.b16 %v7997
        %v8342 = vunpack.c.l.b16 %v7998
        %v8343 = vunpack.c.h.b16 %v7998
        %v8344 = vunpack.c.l.b16 %v7999
        %v8345 = vunpack.c.h.b16 %v7999
        %v8346 = vunpack.c.l.b16 %v8000
        %v8347 = vunpack.c.h.b16 %v8000
        %v8348 = vunpack.c.l.b16 %v8001
        %v8349 = vunpack.c.h.b16 %v8001
        %v8350 = vunpack.c.l.b16 %v8002
        %v8351 = vunpack.c.h.b16 %v8002
        %v8352 = vunpack.c.l.b16 %v8003
        %v8353 = vunpack.c.h.b16 %v8003
        %v8354 = vunpack.c.l.b16 %v8004
        %v8355 = vunpack.c.h.b16 %v8004
        %v8356 = vunpack.c.l.b16 %v8005
        %v8357 = vunpack.c.h.b16 %v8005
        %v8358 = vunpack.c.l.b16 %v8006
        %v8359 = vunpack.c.h.b16 %v8006
        %v8360 = vunpack.c.l.b16 %v8007
        %v8361 = vunpack.c.h.b16 %v8007
        %v8362 = vunpack.c.l.b16 %v8008
        %v8363 = vunpack.c.h.b16 %v8008
        %v8364 = vunpack.c.l.b16 %v8009
        %v8365 = vunpack.c.h.b16 %v8009
        %v8366 = vunpack.c.l.b16 %v8010
        %v8367 = vunpack.c.h.b16 %v8010
        %v8368 = vunpack.c.l.b16 %v8011
        %v8369 = vunpack.c.h.b16 %v8011
        %v8370 = vunpack.c.l.b16 %v8012
        %v8371 = vunpack.c.h.b16 %v8012
        %v8372 = vunpack.c.l.b16 %v8013
        %v8373 = vunpack.c.h.b16 %v8013
        %v8374 = vunpack.c.l.b16 %v8014
        %v8375 = vunpack.c.h.b16 %v8014
        %v8376 = vunpack.c.l.b16 %v8015
        %v8377 = vunpack.c.h.b16 %v8015
        %v8378 = vunpack.c.l.b16 %v8016
        %v8379 = vunpack.c.h.b16 %v8016
        %v8380 = vunpack.c.l.b16 %v8017
        %v8381 = vunpack.c.h.b16 %v8017
        %v8382 = vunpack.c.l.b16 %v8018
        %v8383 = vunpack.c.h.b16 %v8018
        %v8384 = vunpack.c.l.b16 %v8019
        %v8385 = vunpack.c.h.b16 %v8019
        %v8386 = vunpack.c.l.b16 %v8020
        %v8387 = vunpack.c.h.b16 %v8020
        %v8388 = vunpack.c.l.b16 %v8021
        %v8389 = vunpack.c.h.b16 %v8021
        %v8390 = vunpack.c.l.b16 %v8022
        %v8391 = vunpack.c.h.b16 %v8022
        %v8392 = vunpack.c.l.b16 %v8023
        %v8393 = vunpack.c.h.b16 %v8023
        %v8394 = vunpack.c.l.b16 %v8024
        %v8395 = vunpack.c.h.b16 %v8024
        %v8396 = vunpack.c.l.b16 %v8025
        %v8397 = vunpack.c.h.b16 %v8025
        %v8398 = vunpack.c.l.b16 %v8026
        %v8399 = vunpack.c.h.b16 %v8026
        %v8400 = vunpack.c.l.b16 %v8027
        %v8401 = vunpack.c.h.b16 %v8027
        %v8402 = vunpack.c.l.b16 %v8028
        %v8403 = vunpack.c.h.b16 %v8028
        %v8404 = vunpack.c.l.b16 %v8029
        %v8405 = vunpack.c.h.b16 %v8029
        %v8406 = vunpack.c.l.b16 %v8030
        %v8407 = vunpack.c.h.b16 %v8030
        %v8408 = vunpack.c.l.b16 %v8031
        %v8409 = vunpack.c.h.b16 %v8031
        %v8410 = vunpack.c.l.b16 %v8032
        %v8411 = vunpack.c.h.b16 %v8032
        %v8412 = vunpack.c.l.b16 %v8033
        %v8413 = vunpack.c.h.b16 %v8033
        %v8414 = vunpack.c.l.b16 %v8034
        %v8415 = vunpack.c.h.b16 %v8034
        %v8416 = vunpack.c.l.b16 %v8035
        %v8417 = vunpack.c.h.b16 %v8035
        %v8418 = vunpack.c.l.b16 %v8036
        %v8419 = vunpack.c.h.b16 %v8036
        %v8420 = vunpack.c.l.b16 %v8037
        %v8421 = vunpack.c.h.b16 %v8037
        %v8422 = vunpack.c.l.b16 %v8038
        %v8423 = vunpack.c.h.b16 %v8038
        %v8424 = vunpack.c.l.b16 %v8039
        %v8425 = vunpack.c.h.b16 %v8039
        %v8426 = vunpack.c.l.b16 %v8040
        %v8427 = vunpack.c.h.b16 %v8040
        %v8428 = vunpack.c.l.b16 %v8041
        %v8429 = vunpack.c.h.b16 %v8041
        %v8430 = vunpack.c.l.b16 %v8042
        %v8431 = vunpack.c.h.b16 %v8042
        %v8432 = vunpack.c.l.b16 %v8043
        %v8433 = vunpack.c.h.b16 %v8043
        %v8434 = vunpack.c.l.b16 %v8044
        %v8435 = vunpack.c.h.b16 %v8044
        %v8436 = vunpack.c.l.b16 %v8045
        %v8437 = vunpack.c.h.b16 %v8045
        %v8438 = vunpack.c.l.b16 %v8046
        %v8439 = vunpack.c.h.b16 %v8046
        %v8440 = vunpack.c.l.b16 %v8047
        %v8441 = vunpack.c.h.b16 %v8047
        %v8442 = vunpack.c.l.b16 %v8048
        %v8443 = vunpack.c.h.b16 %v8048
        %v8444 = vunpack.c.l.b16 %v8049
        %v8445 = vunpack.c.h.b16 %v8049
        %v8446 = vunpack.c.l.b16 %v8050
        %v8447 = vunpack.c.h.b16 %v8050
        %v8448 = vunpack.c.l.b16 %v8051
        %v8449 = vunpack.c.h.b16 %v8051
        %v8450 = vunpack.c.l.b16 %v8052
        %v8451 = vunpack.c.h.b16 %v8052
        %v8452 = vunpack.c.l.b16 %v8053
        %v8453 = vunpack.c.h.b16 %v8053
        %v8454 = vunpack.c.l.b16 %v8054
        %v8455 = vunpack.c.h.b16 %v8054
        %v8456 = vunpack.c.l.b16 %v8055
        %v8457 = vunpack.c.h.b16 %v8055
        %v8458 = vunpack.c.l.b16 %v8056
        %v8459 = vunpack.c.h.b16 %v8056
        %v8460 = vunpack.c.l.b16 %v8057
        %v8461 = vunpack.c.h.b16 %v8057
        %v8462 = vunpack.c.l.b16 %v8058
        %v8463 = vunpack.c.h.b16 %v8058
        %v8464 = vunpack.c.l.b16 %v8059
        %v8465 = vunpack.c.h.b16 %v8059
        %v8466 = vunpack.c.l.b16 %v8060
        %v8467 = vunpack.c.h.b16 %v8060
        %v8468 = vunpack.c.l.b16 %v8061
        %v8469 = vunpack.c.h.b16 %v8061
        %v8470 = vunpack.c.l.b16 %v8062
        %v8471 = vunpack.c.h.b16 %v8062
        %v8472 = vunpack.c.l.b16 %v8063
        %v8473 = vunpack.c.h.b16 %v8063
        %v8474 = vunpack.c.l.b16 %v8064
        %v8475 = vunpack.c.h.b16 %v8064
        %v8476 = vunpack.c.l.b16 %v8065
        %v8477 = vunpack.c.h.b16 %v8065
        %v8478 = vunpack.c.l.b16 %v8066
        %v8479 = vunpack.c.h.b16 %v8066
        %v8480 = vunpack.c.l.b16 %v8067
        %v8481 = vunpack.c.h.b16 %v8067
        %v8482 = vunpack.c.l.b16 %v8068
        %v8483 = vunpack.c.h.b16 %v8068
        %v8484 = vunpack.c.l.b16 %v8069
        %v8485 = vunpack.c.h.b16 %v8069
        %v8486 = vunpack.c.l.b16 %v8070
        %v8487 = vunpack.c.h.b16 %v8070
        %v8488 = vunpack.c.l.b16 %v8071
        %v8489 = vunpack.c.h.b16 %v8071
        %v8490 = vunpack.c.l.b16 %v8072
        %v8491 = vunpack.c.h.b16 %v8072
        %v8492 = vunpack.c.l.b16 %v8073
        %v8493 = vunpack.c.h.b16 %v8073
        %v8494 = vpack.c.b16 %v8242, %v8238
        %v8495 = vpack.c.b16 %v8243, %v8239
        %v8496 = vpack.c.b16 %v8244, %v8240
        %v8497 = vpack.c.b16 %v8245, %v8241
        %v8498 = vpack.c.b16 %v8250, %v8246
        %v8499 = vpack.c.b16 %v8251, %v8247
        %v8500 = vpack.c.b16 %v8252, %v8248
        %v8501 = vpack.c.b16 %v8253, %v8249
        %v8502 = vpack.c.b16 %v8258, %v8254
        %v8503 = vpack.c.b16 %v8259, %v8255
        %v8504 = vpack.c.b16 %v8260, %v8256
        %v8505 = vpack.c.b16 %v8261, %v8257
        %v8506 = vpack.c.b16 %v8266, %v8262
        %v8507 = vpack.c.b16 %v8267, %v8263
        %v8508 = vpack.c.b16 %v8268, %v8264
        %v8509 = vpack.c.b16 %v8269, %v8265
        %v8510 = vpack.c.b16 %v8274, %v8270
        %v8511 = vpack.c.b16 %v8275, %v8271
        %v8512 = vpack.c.b16 %v8276, %v8272
        %v8513 = vpack.c.b16 %v8277, %v8273
        %v8514 = vpack.c.b16 %v8282, %v8278
        %v8515 = vpack.c.b16 %v8283, %v8279
        %v8516 = vpack.c.b16 %v8284, %v8280
        %v8517 = vpack.c.b16 %v8285, %v8281
        %v8518 = vpack.c.b16 %v8290, %v8286
        %v8519 = vpack.c.b16 %v8291, %v8287
        %v8520 = vpack.c.b16 %v8292, %v8288
        %v8521 = vpack.c.b16 %v8293, %v8289
        %v8522 = vpack.c.b16 %v8298, %v8294
        %v8523 = vpack.c.b16 %v8299, %v8295
        %v8524 = vpack.c.b16 %v8300, %v8296
        %v8525 = vpack.c.b16 %v8301, %v8297
        %v8526 = vpack.c.b16 %v8306, %v8302
        %v8527 = vpack.c.b16 %v8307, %v8303
        %v8528 = vpack.c.b16 %v8308, %v8304
        %v8529 = vpack.c.b16 %v8309, %v8305
        %v8530 = vpack.c.b16 %v8314, %v8310
        %v8531 = vpack.c.b16 %v8315, %v8311
        %v8532 = vpack.c.b16 %v8316, %v8312
        %v8533 = vpack.c.b16 %v8317, %v8313
        %v8534 = vpack.c.b16 %v8322, %v8318
        %v8535 = vpack.c.b16 %v8323, %v8319
        %v8536 = vpack.c.b16 %v8324, %v8320
        %v8537 = vpack.c.b16 %v8325, %v8321
        %v8538 = vpack.c.b16 %v8330, %v8326
        %v8539 = vpack.c.b16 %v8331, %v8327
        %v8540 = vpack.c.b16 %v8332, %v8328
        %v8541 = vpack.c.b16 %v8333, %v8329
        %v8542 = vpack.c.b16 %v8338, %v8334
        %v8543 = vpack.c.b16 %v8339, %v8335
        %v8544 = vpack.c.b16 %v8340, %v8336
        %v8545 = vpack.c.b16 %v8341, %v8337
        %v8546 = vpack.c.b16 %v8346, %v8342
        %v8547 = vpack.c.b16 %v8347, %v8343
        %v8548 = vpack.c.b16 %v8348, %v8344
        %v8549 = vpack.c.b16 %v8349, %v8345
        %v8550 = vpack.c.b16 %v8354, %v8350
        %v8551 = vpack.c.b16 %v8355, %v8351
        %v8552 = vpack.c.b16 %v8356, %v8352
        %v8553 = vpack.c.b16 %v8357, %v8353
        %v8554 = vpack.c.b16 %v8362, %v8358
        %v8555 = vpack.c.b16 %v8363, %v8359
        %v8556 = vpack.c.b16 %v8364, %v8360
        %v8557 = vpack.c.b16 %v8365, %v8361
        %v8558 = vpack.c.b16 %v8370, %v8366
        %v8559 = vpack.c.b16 %v8371, %v8367
        %v8560 = vpack.c.b16 %v8372, %v8368
        %v8561 = vpack.c.b16 %v8373, %v8369
        %v8562 = vpack.c.b16 %v8378, %v8374
        %v8563 = vpack.c.b16 %v8379, %v8375
        %v8564 = vpack.c.b16 %v8380, %v8376
        %v8565 = vpack.c.b16 %v8381, %v8377
        %v8566 = vpack.c.b16 %v8386, %v8382
        %v8567 = vpack.c.b16 %v8387, %v8383
        %v8568 = vpack.c.b16 %v8388, %v8384
        %v8569 = vpack.c.b16 %v8389, %v8385
        %v8570 = vpack.c.b16 %v8394, %v8390
        %v8571 = vpack.c.b16 %v8395, %v8391
        %v8572 = vpack.c.b16 %v8396, %v8392
        %v8573 = vpack.c.b16 %v8397, %v8393
        %v8574 = vpack.c.b16 %v8402, %v8398
        %v8575 = vpack.c.b16 %v8403, %v8399
        %v8576 = vpack.c.b16 %v8404, %v8400
        %v8577 = vpack.c.b16 %v8405, %v8401
        %v8578 = vpack.c.b16 %v8410, %v8406
        %v8579 = vpack.c.b16 %v8411, %v8407
        %v8580 = vpack.c.b16 %v8412, %v8408
        %v8581 = vpack.c.b16 %v8413, %v8409
        %v8582 = vpack.c.b16 %v8418, %v8414
        %v8583 = vpack.c.b16 %v8419, %v8415
        %v8584 = vpack.c.b16 %v8420, %v8416
        %v8585 = vpack.c.b16 %v8421, %v8417
        %v8586 = vpack.c.b16 %v8426, %v8422
        %v8587 = vpack.c.b16 %v8427, %v8423
        %v8588 = vpack.c.b16 %v8428, %v8424
        %v8589 = vpack.c.b16 %v8429, %v8425
        %v8590 = vpack.c.b16 %v8434, %v8430
        %v8591 = vpack.c.b16 %v8435, %v8431
        %v8592 = vpack.c.b16 %v8436, %v8432
        %v8593 = vpack.c.b16 %v8437, %v8433
        %v8594 = vpack.c.b16 %v8442, %v8438
        %v8595 = vpack.c.b16 %v8443, %v8439
        %v8596 = vpack.c.b16 %v8444, %v8440
        %v8597 = vpack.c.b16 %v8445, %v8441
        %v8598 = vpack.c.b16 %v8450, %v8446
        %v8599 = vpack.c.b16 %v8451, %v8447
        %v8600 = vpack.c.b16 %v8452, %v8448
        %v8601 = vpack.c.b16 %v8453, %v8449
        %v8602 = vpack.c.b16 %v8458, %v8454
        %v8603 = vpack.c.b16 %v8459, %v8455
        %v8604 = vpack.c.b16 %v8460, %v8456
        %v8605 = vpack.c.b16 %v8461, %v8457
        %v8606 = vpack.c.b16 %v8466, %v8462
        %v8607 = vpack.c.b16 %v8467, %v8463
        %v8608 = vpack.c.b16 %v8468, %v8464
        %v8609 = vpack.c.b16 %v8469, %v8465
        %v8610 = vpack.c.b16 %v8474, %v8470
        %v8611 = vpack.c.b16 %v8475, %v8471
        %v8612 = vpack.c.b16 %v8476, %v8472
        %v8613 = vpack.c.b16 %v8477, %v8473
        %v8614 = vpack.c.b16 %v8482, %v8478
        %v8615 = vpack.c.b16 %v8483, %v8479
        %v8616 = vpack.c.b16 %v8484, %v8480
        %v8617 = vpack.c.b16 %v8485, %v8481
        %v8618 = vpack.c.b16 %v8490, %v8486
        %v8619 = vpack.c.b16 %v8491, %v8487
        %v8620 = vpack.c.b16 %v8492, %v8488
        %v8621 = vpack.c.b16 %v8493, %v8489
        %8750 = vmatprep.subr.bf16.mxu0 %v8495
        %8751 = vmatpush1.bf16.msra.mxu0 %v8494
        %8752 = vmatprep.subr.bf16.mxu0 %v8499
        %8753 = vmatpush1.bf16.msra.mxu0 %v8498
        %8754 = vmatprep.subr.bf16.mxu0 %v8503
        %8755 = vmatpush1.bf16.msra.mxu0 %v8502
        %8756 = vmatprep.subr.bf16.mxu0 %v8507
        %8757 = vmatpush1.bf16.msra.mxu0 %v8506
        %8758 = vmatprep.subr.bf16.mxu0 %v8511
        %8759 = vmatpush1.bf16.msra.mxu0 %v8510
        %8760 = vmatprep.subr.bf16.mxu0 %v8515
        %8761 = vmatpush1.bf16.msra.mxu0 %v8514
        %8762 = vmatprep.subr.bf16.mxu0 %v8519
        %8763 = vmatpush1.bf16.msra.mxu0 %v8518
        %8764 = vmatprep.subr.bf16.mxu0 %v8523
        %8765 = vmatpush1.bf16.msra.mxu0 %v8522
        %8766 = vmatprep.subr.bf16.mxu0 %v8527
        %8767 = vmatpush1.bf16.msra.mxu0 %v8526
        %8768 = vmatprep.subr.bf16.mxu0 %v8531
        %8769 = vmatpush1.bf16.msra.mxu0 %v8530
        %8770 = vmatprep.subr.bf16.mxu0 %v8535
        %8771 = vmatpush1.bf16.msra.mxu0 %v8534
        %8772 = vmatprep.subr.bf16.mxu0 %v8539
        %8773 = vmatpush1.bf16.msra.mxu0 %v8538
        %8774 = vmatprep.subr.bf16.mxu0 %v8543
        %8775 = vmatpush1.bf16.msra.mxu0 %v8542
        %8776 = vmatprep.subr.bf16.mxu0 %v8547
        %8777 = vmatpush1.bf16.msra.mxu0 %v8546
        %8778 = vmatprep.subr.bf16.mxu0 %v8551
        %8779 = vmatpush1.bf16.msra.mxu0 %v8550
        %8780 = vmatprep.subr.bf16.mxu0 %v8555
        %8781 = vmatpush1.bf16.msra.mxu0 %v8554
        %8782 = vmatprep.mubr.bf16.mxu0 %v7938
        %8783 = vmatmul.mubr.bf16.gmra.mrb[0].mxu0 %v7937
        %v8784 = vpop.f32.mrb[0].mxu0
        %v8785 = vadd.f32 %v8097, %v8784
        %v8786 = vpop.f32.mrb[0].mxu0
        %v8787 = vadd.f32 %v8101, %v8786
        %v8788 = vpop.f32.mrb[0].mxu0
        %v8789 = vadd.f32 %v8097, %v8788
        %v8790 = vpop.f32.mrb[0].mxu0
        %v8791 = vadd.f32 %v8101, %v8790
        %8792 = vmatprep.mubr.bf16.mxu0 %v7942
        %8793 = vmatmul.mubr.bf16.gmra.mrb[0].mxu0 %v7941
        %v8794 = vpop.f32.mrb[0].mxu0
        %v8795 = vadd.f32 %v8097, %v8794
        %v8796 = vpop.f32.mrb[0].mxu0
        %v8797 = vadd.f32 %v8101, %v8796
        %v8798 = vpop.f32.mrb[0].mxu0
        %v8799 = vpop.f32.mrb[0].mxu0
        %8800 = vdwg.mxu0
        %8801 = vmatprep.subr.bf16.mxu0 %v8559
        %8802 = vmatpush1.bf16.msra.mxu0 %v8558
        %8803 = vmatprep.subr.bf16.mxu0 %v8563
        %8804 = vmatpush1.bf16.msra.mxu0 %v8562
        %8805 = vmatprep.subr.bf16.mxu0 %v8567
        %8806 = vmatpush1.bf16.msra.mxu0 %v8566
        %8807 = vmatprep.subr.bf16.mxu0 %v8571
        %8808 = vmatpush1.bf16.msra.mxu0 %v8570
        %8809 = vmatprep.subr.bf16.mxu0 %v8575
        %8810 = vmatpush1.bf16.msra.mxu0 %v8574
        %8811 = vmatprep.subr.bf16.mxu0 %v8579
        %8812 = vmatpush1.bf16.msra.mxu0 %v8578
        %8813 = vmatprep.subr.bf16.mxu0 %v8583
        %8814 = vmatpush1.bf16.msra.mxu0 %v8582
        %8815 = vmatprep.subr.bf16.mxu0 %v8587
        %8816 = vmatpush1.bf16.msra.mxu0 %v8586
        %8817 = vmatprep.subr.bf16.mxu0 %v8591
        %8818 = vmatpush1.bf16.msra.mxu0 %v8590
        %8819 = vmatprep.subr.bf16.mxu0 %v8595
        %8820 = vmatpush1.bf16.msra.mxu0 %v8594
        %8821 = vmatprep.subr.bf16.mxu0 %v8599
        %8822 = vmatpush1.bf16.msra.mxu0 %v8598
        %8823 = vmatprep.subr.bf16.mxu0 %v8603
        %8824 = vmatpush1.bf16.msra.mxu0 %v8602
        %8825 = vmatprep.subr.bf16.mxu0 %v8607
        %8826 = vmatpush1.bf16.msra.mxu0 %v8606
        %8827 = vmatprep.subr.bf16.mxu0 %v8611
        %8828 = vmatpush1.bf16.msra.mxu0 %v8610
        %8829 = vmatprep.subr.bf16.mxu0 %v8615
        %8830 = vmatpush1.bf16.msra.mxu0 %v8614
        %8831 = vmatprep.subr.bf16.mxu0 %v8619
        %8832 = vmatpush1.bf16.msra.mxu0 %v8618
        %8833 = vmatprep.mubr.bf16.mxu0 %v7940
        %8834 = vmatmul.mubr.bf16.gmra.mrb[0].mxu0 %v7939
        %v8835 = vpop.f32.mrb[0].mxu0
        %v8836 = vadd.f32 %v8785, %v8835
        %v8837 = vpop.f32.mrb[0].mxu0
        %v8838 = vadd.f32 %v8787, %v8837
        %v8839 = vpop.f32.mrb[0].mxu0
        %v8840 = vadd.f32 %v8789, %v8839
        %v8841 = vpop.f32.mrb[0].mxu0
        %v8842 = vadd.f32 %v8791, %v8841
        %8843 = vmatprep.mubr.bf16.mxu0 %v7944
        %8844 = vmatmul.mubr.bf16.gmra.mrb[0].mxu0 %v7943
        %v8845 = vpop.f32.mrb[0].mxu0
        %v8846 = vadd.f32 %v8795, %v8845
        %v8847 = vpop.f32.mrb[0].mxu0
        %v8848 = vadd.f32 %v8797, %v8847
        %v8849 = vpop.f32.mrb[0].mxu0
        %v8850 = vpop.f32.mrb[0].mxu0
        %8851 = vdwg.mxu0
        %8852 = vmatprep.subr.bf16.mxu0 %v8497
        %8853 = vmatpush1.bf16.msra.mxu0 %v8496
        %8854 = vmatprep.subr.bf16.mxu0 %v8501
        %8855 = vmatpush1.bf16.msra.mxu0 %v8500
        %8856 = vmatprep.subr.bf16.mxu0 %v8505
        %8857 = vmatpush1.bf16.msra.mxu0 %v8504
        %8858 = vmatprep.subr.bf16.mxu0 %v8509
        %8859 = vmatpush1.bf16.msra.mxu0 %v8508
        %8860 = vmatprep.subr.bf16.mxu0 %v8513
        %8861 = vmatpush1.bf16.msra.mxu0 %v8512
        %8862 = vmatprep.subr.bf16.mxu0 %v8517
        %8863 = vmatpush1.bf16.msra.mxu0 %v8516
        %8864 = vmatprep.subr.bf16.mxu0 %v8521
        %8865 = vmatpush1.bf16.msra.mxu0 %v8520
        %8866 = vmatprep.subr.bf16.mxu0 %v8525
        %8867 = vmatpush1.bf16.msra.mxu0 %v8524
        %8868 = vmatprep.subr.bf16.mxu0 %v8529
        %8869 = vmatpush1.bf16.msra.mxu0 %v8528
        %8870 = vmatprep.subr.bf16.mxu0 %v8533
        %8871 = vmatpush1.bf16.msra.mxu0 %v8532
        %8872 = vmatprep.subr.bf16.mxu0 %v8537
        %8873 = vmatpush1.bf16.msra.mxu0 %v8536
        %8874 = vmatprep.subr.bf16.mxu0 %v8541
        %8875 = vmatpush1.bf16.msra.mxu0 %v8540
        %8876 = vmatprep.subr.bf16.mxu0 %v8545
        %8877 = vmatpush1.bf16.msra.mxu0 %v8544
        %8878 = vmatprep.subr.bf16.mxu0 %v8549
        %8879 = vmatpush1.bf16.msra.mxu0 %v8548
        %8880 = vmatprep.subr.bf16.mxu0 %v8553
        %8881 = vmatpush1.bf16.msra.mxu0 %v8552
        %8882 = vmatprep.subr.bf16.mxu0 %v8557
        %8883 = vmatpush1.bf16.msra.mxu0 %v8556
        %8884 = vmatprep.mubr.bf16.mxu0 %v7938
        %8885 = vmatmul.mubr.bf16.gmra.mrb[0].mxu0 %v7937
        %v8886 = vpop.f32.mrb[0].mxu0
        %v8887 = vadd.f32 %v8105, %v8886
        %v8888 = vpop.f32.mrb[0].mxu0
        %v8889 = vadd.f32 %v8109, %v8888
        %v8890 = vpop.f32.mrb[0].mxu0
        %v8891 = vadd.f32 %v8105, %v8890
        %v8892 = vpop.f32.mrb[0].mxu0
        %v8893 = vadd.f32 %v8109, %v8892
        %8894 = vmatprep.mubr.bf16.mxu0 %v7942
        %8895 = vmatmul.mubr.bf16.gmra.mrb[0].mxu0 %v7941
        %v8896 = vpop.f32.mrb[0].mxu0
        %v8897 = vadd.f32 %v8105, %v8896
        %v8898 = vpop.f32.mrb[0].mxu0
        %v8899 = vadd.f32 %v8109, %v8898
        %v8900 = vpop.f32.mrb[0].mxu0
        %v8901 = vpop.f32.mrb[0].mxu0
        %8902 = vdwg.mxu0
        %8903 = vmatprep.subr.bf16.mxu0 %v8561
        %8904 = vmatpush1.bf16.msra.mxu0 %v8560
        %8905 = vmatprep.subr.bf16.mxu0 %v8565
        %8906 = vmatpush1.bf16.msra.mxu0 %v8564
        %8907 = vmatprep.subr.bf16.mxu0 %v8569
        %8908 = vmatpush1.bf16.msra.mxu0 %v8568
        %8909 = vmatprep.subr.bf16.mxu0 %v8573
        %8910 = vmatpush1.bf16.msra.mxu0 %v8572
        %8911 = vmatprep.subr.bf16.mxu0 %v8577
        %8912 = vmatpush1.bf16.msra.mxu0 %v8576
        %8913 = vmatprep.subr.bf16.mxu0 %v8581
        %8914 = vmatpush1.bf16.msra.mxu0 %v8580
        %8915 = vmatprep.subr.bf16.mxu0 %v8585
        %8916 = vmatpush1.bf16.msra.mxu0 %v8584
        %8917 = vmatprep.subr.bf16.mxu0 %v8589
        %8918 = vmatpush1.bf16.msra.mxu0 %v8588
        %8919 = vmatprep.subr.bf16.mxu0 %v8593
        %8920 = vmatpush1.bf16.msra.mxu0 %v8592
        %8921 = vmatprep.subr.bf16.mxu0 %v8597
        %8922 = vmatpush1.bf16.msra.mxu0 %v8596
        %8923 = vmatprep.subr.bf16.mxu0 %v8601
        %8924 = vmatpush1.bf16.msra.mxu0 %v8600
        %8925 = vmatprep.subr.bf16.mxu0 %v8605
        %8926 = vmatpush1.bf16.msra.mxu0 %v8604
        %8927 = vmatprep.subr.bf16.mxu0 %v8609
        %8928 = vmatpush1.bf16.msra.mxu0 %v8608
        %8929 = vmatprep.subr.bf16.mxu0 %v8613
        %8930 = vmatpush1.bf16.msra.mxu0 %v8612
        %8931 = vmatprep.subr.bf16.mxu0 %v8617
        %8932 = vmatpush1.bf16.msra.mxu0 %v8616
        %8933 = vmatprep.subr.bf16.mxu0 %v8621
        %8934 = vmatpush1.bf16.msra.mxu0 %v8620
        %8935 = vmatprep.mubr.bf16.mxu0 %v7940
        %8936 = vmatmul.mubr.bf16.gmra.mrb[0].mxu0 %v7939
        %v8937 = vpop.f32.mrb[0].mxu0
        %v8938 = vadd.f32 %v8887, %v8937
        %v8939 = vpop.f32.mrb[0].mxu0
        %v8940 = vadd.f32 %v8889, %v8939
        %v8941 = vpop.f32.mrb[0].mxu0
        %v8942 = vadd.f32 %v8891, %v8941
        %v8943 = vpop.f32.mrb[0].mxu0
        %v8944 = vadd.f32 %v8893, %v8943
        %8945 = vmatprep.mubr.bf16.mxu0 %v7944
        %8946 = vmatmul.mubr.bf16.gmra.mrb[0].mxu0 %v7943
        %v8947 = vpop.f32.mrb[0].mxu0
        %v8948 = vadd.f32 %v8897, %v8947
        %v8949 = vpop.f32.mrb[0].mxu0
        %v8950 = vadd.f32 %v8899, %v8949
        %v8951 = vpop.f32.mrb[0].mxu0
        %v8952 = vpop.f32.mrb[0].mxu0
        %8953 = vdwg.mxu0
        %v8954 = vmul.f32 %v8836, %v4691
        %v8955 = vmul.f32 %v8838, %v4691
        %v8956 = vmul.f32 %v8938, %v4691
        %v8957 = vmul.f32 %v8940, %v4691
        %v8958 = vmul.f32 %v8840, %v4696
        %v8959 = vmul.f32 %v8842, %v4696
        %v8960 = vmul.f32 %v8942, %v4696
        %v8961 = vmul.f32 %v8944, %v4696
        %v8962 = vmul.f32 %v8846, %v4701
        %v8963 = vmul.f32 %v8848, %v4701
        %v8964 = vmul.f32 %v8948, %v4701
        %v8965 = vmul.f32 %v8950, %v4701
        %v8966 = vadd.f32 %v4715, %v8954
        %v8967 = vadd.f32 %v4716, %v8955
        %v8968 = vadd.f32 %v4717, %v8956
        %v8969 = vadd.f32 %v4718, %v8957
        %v8970 = vadd.f32 %v4719, %v8958
        %v8971 = vadd.f32 %v4720, %v8959
        %v8972 = vadd.f32 %v4721, %v8960
        %v8973 = vadd.f32 %v4722, %v8961
        %v8974 = vadd.f32 %v4723, %v8962
        %v8975 = vadd.f32 %v4724, %v8963
        %v8976 = vadd.f32 %v4725, %v8964
        %v8977 = vadd.f32 %v4726, %v8965
        %8978 = vst [vmem:[%s457] sm:$0xff] %v8966
        %8979 = vst [vmem:[%s457 + $0x8] sm:$0xff] %v8967
        %8980 = vst [vmem:[%s457 + $0x10] sm:$0xff] %v8968
        %8981 = vst [vmem:[%s457 + $0x18] sm:$0xff] %v8969
        %8982 = vst [vmem:[%s457 + $0x20] sm:$0xff] %v8970
        %8983 = vst [vmem:[%s457 + $0x28] sm:$0xff] %v8971
        %8984 = vst [vmem:[%s457 + $0x30] sm:$0xff] %v8972
        %8985 = vst [vmem:[%s457 + $0x38] sm:$0xff] %v8973
        %8986 = vst [vmem:[%s457 + $0x40] sm:$0xf] %v8974
        %8987 = vst [vmem:[%s457 + $0x48] sm:$0xf] %v8975
        %8988 = vst [vmem:[%s457 + $0x50] sm:$0xf] %v8976
        %8989 = vst [vmem:[%s457 + $0x58] sm:$0xf] %v8977
        %s8990 = sand.u32 %s193, 1
        %s8991 = scalar_lea.sflag [#allocation4], %s8990
        %s8992 = sand.u32 %s193, 1
        %s8993 = smul.addr %s8992, 96
        %s8994 = scalar_lea.vmem [#allocation11], %s8993
        %s8995 = sand.u32 %s219, 1
        %s8996 = scalar_lea.sflag [#allocation13], %s8995
        %s8997 = sand.u32 %s219, 1
        %s8998 = smul.addr %s8997, 96
        %s8999 = scalar_lea.vmem [#allocation12], %s8998
        // Predicated region
        $region65: #{tpu_custom_call.1} parent=43 // pred_check
          %p9000 = pneg %p203
        $region66: #{tpu_custom_call.1} parent=43 // pred_check_branch
          %9002 = sbr.rel (%p9000) target = $region68
        $region67: #{tpu_custom_call.1} parent=43 // pred_region
          %s9004 = ssub.s32 1536, 1536
          %9005 = vsyncadd %s8991, %s9004
          %s9006 = smul.addr %s34, 12
          %s9007 = smul.addr %s9006, 128
          %s9008 = scalar_lea.hbm %s6, %s9007
          %s9009 = sshll.u32 %s8994, 4
          %s9010 = int_to_ptr.vmem [resolvable:$true] %s9009
          %9015 = dma.vmem_to_hbm [thread:$0]  %s9010, 1536, %s9008, %s8991, 512, 512, 32
        $region68: #{tpu_custom_call.1} parent=43 // pred_fallthru
          _
        // Predicated region
        $region69: #{tpu_custom_call.1} parent=43 // pred_check
          %p9016 = pneg %p229
        $region70: #{tpu_custom_call.1} parent=43 // pred_check_branch
          %9018 = sbr.rel (%p9016) target = $region72
        $region71: #{tpu_custom_call.1} parent=43 // pred_region
          %s9020 = ssub.s32 1536, 1536
          %9021 = vsyncadd %s8996, %s9020
          %s9022 = smul.addr %s34, 12
          %s9023 = smul.addr %s9022, 128
          %s9024 = scalar_lea.hbm %s7, %s9023
          %s9025 = sshll.u32 %s8999, 4
          %s9026 = int_to_ptr.vmem [resolvable:$true] %s9025
          %9031 = dma.vmem_to_hbm [thread:$0]  %s9026, 1536, %s9024, %s8996, 512, 512, 32
        $region72: #{tpu_custom_call.1} parent=43 // pred_fallthru
          _
      $region44: #{tpu_custom_call.1} parent=5 // pred_fallthru
        _
      %p9032 = scmp.le.s32.totalorder 2, %s29
      // Predicated region
      $region73: #{tpu_custom_call.1} parent=5 // pred_check
        %p9033 = pneg %p9032
      $region74: #{tpu_custom_call.1} parent=5 // pred_check_branch
        %9035 = sbr.rel (%p9033) target = $region76
      $region75: #{tpu_custom_call.1} parent=5 // pred_region
        %s9036 = ssub.s32 %s29, 2
        // Predicated region
        $region77: #{tpu_custom_call.1} parent=75 // pred_check
          %p9037 = pneg %p209
        $region78: #{tpu_custom_call.1} parent=75 // pred_check_branch
          %9039 = sbr.rel (%p9037) target = $region80
        $region79: #{tpu_custom_call.1} parent=75 // pred_region
          %s9040 = sand.u32 %s194, 1
          %s9041 = scalar_lea.sflag [#allocation4], %s9040
          %s9042 = sand.u32 %s194, 1
          %s9043 = smul.addr %s9042, 96
          %s9044 = scalar_lea.vmem [#allocation11], %s9043
          %9045 = dma.done %s9041, 1536
        $region80: #{tpu_custom_call.1} parent=75 // pred_fallthru
          _
        // Predicated region
        $region81: #{tpu_custom_call.1} parent=75 // pred_check
          %p9046 = pneg %p235
        $region82: #{tpu_custom_call.1} parent=75 // pred_check_branch
          %9048 = sbr.rel (%p9046) target = $region84
        $region83: #{tpu_custom_call.1} parent=75 // pred_region
          %s9049 = sand.u32 %s220, 1
          %s9050 = scalar_lea.sflag [#allocation13], %s9049
          %s9051 = sand.u32 %s220, 1
          %s9052 = smul.addr %s9051, 96
          %s9053 = scalar_lea.vmem [#allocation12], %s9052
          %9054 = dma.done %s9050, 1536
        $region84: #{tpu_custom_call.1} parent=75 // pred_fallthru
          _
      $region76: #{tpu_custom_call.1} parent=5 // pred_fallthru
        _
    $region6: #{tpu_custom_call.1} parent=1 // loop_footer
      %s33 = sadd.s32 1, %s29
    $region7: #{tpu_custom_call.1} parent=1 // loop_footer_branch
      %28 = sbr.rel target = $region3
    $region8: #{tpu_custom_call.1} parent=1 // loop_exit
      _
    %9055 = vsyncpa [#allocation3], 1
    %s9056 = scalar_lea.sflag [#allocation3], 1
    %9057 = vsyncpa %s9056, 1
    %9058 = vsyncpa [#allocation6], 1
    %s9059 = scalar_lea.sflag [#allocation6], 1
    %9060 = vsyncpa %s9059, 1
    %9061 = vsyncpa [#allocation9], 1
    %s9062 = scalar_lea.sflag [#allocation9], 1
    %9063 = vsyncpa %s9062, 1
    %9064 = vsyncpa [#allocation4], 1
    %s9065 = scalar_lea.sflag [#allocation4], 1
    %9066 = vsyncpa %s9065, 1
    %9067 = vsyncpa [#allocation13], 1
    %s9068 = scalar_lea.sflag [#allocation13], 1
    %9069 = vsyncpa %s9068, 1

</llo_original>
